<compile_context>
chip_gen: v7x
topology: tpu7x:2x2x1
jax: 0.10.0
libtpu: 0.0.40
codegen_flags: <defaults>
</compile_context>

<pallas_src>
import math
import random
from functools import partial

import jax
import jax.numpy as jnp
from jax.experimental import pallas as pl
from jax.experimental.pallas import tpu as pltpu

# Padded / packed (TPU-friendly) internal geometry.
B_PAD = 8        # sublane width for f32
HP = 32          # per-gate lane stride == padded hidden / embedding width
GATES_W = 4 * HP  # 128 packed gate-output lanes (i|f|g|o), one lane-dense vreg
V_PAD = 128      # fc / logits lanes
NEG_INF = -1e30


def _round_up(x, m):
    return ((x + m - 1) // m) * m


# ----------------------------------------------------------------------------
# Fused Pallas kernel: whole seq2seq forward in one invocation.
# ----------------------------------------------------------------------------
def _seq2seq_kernel(tf_ref, src_ref, trg_ref,
                    enc_emb_ref, dec_emb_ref,
                    enc_wx_ref, enc_wh_ref, enc_b_ref,
                    dec_wx_ref, dec_wh_ref, dec_b_ref,
                    fc_w_ref, fc_b_ref,
                    out_ref,
                    h_ref, c_ref, tok_ref,
                    *, n_layers):
    B = src_ref.shape[1]            # padded batch (8)
    src_len = src_ref.shape[0]
    trg_len = trg_ref.shape[0]
    V = out_ref.shape[2]            # padded vocab lanes (128)

    # resident state init; only outputs[0] needs zeroing (t >= 1 fully written)
    h_ref[...] = jnp.zeros_like(h_ref)
    c_ref[...] = jnp.zeros_like(c_ref)
    out_ref[0] = jnp.zeros((B, V), jnp.float32)

    # ---- hoisted constants (JAX does not CSE broadcast_in_dim) --------------
    enc_iota = jax.lax.broadcasted_iota(jnp.int32, (B, enc_emb_ref.shape[0]), 1)
    dec_iota = jax.lax.broadcasted_iota(jnp.int32, (B, dec_emb_ref.shape[0]), 1)
    argmax_lane = jax.lax.broadcasted_iota(jnp.int32, (B, V), 1
                                           ).astype(jnp.float32)

    def embed(tok, emb_ref, iota):
        # tok: (B, 1) int32 -> (B, HP) f32 via one-hot matmul (gather on the MXU)
        onehot = (tok == iota).astype(jnp.float32)
        return jnp.dot(onehot, emb_ref[...], preferred_element_type=jnp.float32)

    def lstm_stack(x, wx_ref, wh_ref, b_ref):
        # x: (B, HP); runs all layers, updating h/c scratch; returns top-layer h.
        for l in range(n_layers):                     # static unroll over layers
            gates = (jnp.dot(x, wx_ref[l], preferred_element_type=jnp.float32)
                     + jnp.dot(h_ref[l], wh_ref[l],
                               preferred_element_type=jnp.float32)
                     + b_ref[l])                      # (B, 128), lane-dense
            i = jax.nn.sigmoid(gates[:, 0 * HP:1 * HP])
            f = jax.nn.sigmoid(gates[:, 1 * HP:2 * HP])
            g = jnp.tanh(gates[:, 2 * HP:3 * HP])
            o = jax.nn.sigmoid(gates[:, 3 * HP:4 * HP])
            c_new = f * c_ref[l] + i * g
            h_new = o * jnp.tanh(c_new)
            c_ref[l] = c_new
            h_ref[l] = h_new
            x = h_new
        return x

    # ---------------- encoder: fully unrolled, weights stay in VMEM ----------
    for t in range(src_len):
        lstm_stack(embed(src_ref[t], enc_emb_ref, enc_iota),
                   enc_wx_ref, enc_wh_ref, enc_b_ref)

    # ---------------- decoder: argmax / teacher-forced feedback --------------
    tok_ref[...] = trg_ref[0]                         # first input = trg[0]

    for t in range(1, trg_len):
        top = lstm_stack(embed(tok_ref[...], dec_emb_ref, dec_iota),
                         dec_wx_ref, dec_wh_ref, dec_b_ref)
        logits = (jnp.dot(top, fc_w_ref[...], preferred_element_type=jnp.float32)
                  + fc_b_ref[...])                    # (B, V); padded cols -1e30
        out_ref[t] = logits

        if t + 1 < trg_len:                           # last step needs no feedback
            @pl.when(tf_ref[t] > 0)
            def _():
                tok_ref[...] = trg_ref[t]             # teacher forcing

            @pl.when(tf_ref[t] == 0)
            def _():
                # argmax over lanes with first-max tie-break (matches jnp.argmax);
                # padded vocab lanes can never win (-1e30 bias).
                m = jnp.max(logits, axis=1, keepdims=True)
                cand = jnp.where(logits == m, argmax_lane, jnp.float32(V))
                tok_ref[...] = jnp.min(cand, axis=1, keepdims=True
                                       ).astype(jnp.int32)


# ----------------------------------------------------------------------------
# Parameter init: raw (PyTorch-layout) weights + packed kernel weights.
# ----------------------------------------------------------------------------
def _uniform(key, shape, bound):
    return jax.random.uniform(key, shape, jnp.float32, -bound, bound)


def init_params(key, input_dim, output_dim, emb_dim, hid_dim, n_layers):
    assert emb_dim <= HP and hid_dim <= HP and output_dim <= V_PAD
    k = 1.0 / math.sqrt(hid_dim)
    keys = iter(jax.random.split(key, 4 + 8 * n_layers))

    raw = {
        "enc_emb": _uniform(next(keys), (input_dim, emb_dim), 1.0),
        "dec_emb": _uniform(next(keys), (output_dim, emb_dim), 1.0),
        "fc_w": _uniform(next(keys), (hid_dim, output_dim), k),
        "fc_b": _uniform(next(keys), (output_dim,), k),
        "enc_lstm": [], "dec_lstm": [],
        "n_layers": n_layers, "hid_dim": hid_dim, "output_dim": output_dim,
    }
    for name, in0 in (("enc_lstm", emb_dim), ("dec_lstm", emb_dim)):
        for l in range(n_layers):
            in_dim = in0 if l == 0 else hid_dim
            w_ih_t = _uniform(next(keys), (in_dim, 4 * hid_dim), k)
            w_hh_t = _uniform(next(keys), (hid_dim, 4 * hid_dim), k)
            b_ih = _uniform(next(keys), (1, 4 * hid_dim), k)
            b_hh = _uniform(next(keys), (1, 4 * hid_dim), k)
            raw[name].append((w_ih_t, w_hh_t, b_ih + b_hh))

    # ---- packed parameters the Pallas kernel consumes ------------------------
    def pad_emb(tab):
        rows = _round_up(tab.shape[0], 8)
        return (jnp.zeros((rows, HP), jnp.float32)
                .at[:tab.shape[0], :emb_dim].set(tab))

    def pack_gates(w):
        # (rows, 4*hid) -> (rows, 128): gate k lands at lanes [k*HP, k*HP + hid)
        rows = w.shape[0]
        w4 = w.reshape(rows, 4, hid_dim)
        out = jnp.zeros((rows, 4, HP), w.dtype).at[:, :, :hid_dim].set(w4)
        return out.reshape(rows, GATES_W)

    def pad_rows(w):
        return jnp.zeros((HP, w.shape[1]), w.dtype).at[:w.shape[0], :].set(w)

    params = {
        "enc_emb": pad_emb(raw["enc_emb"]),
        "dec_emb": pad_emb(raw["dec_emb"]),
        "fc_w": jnp.zeros((HP, V_PAD), jnp.float32
                          ).at[:hid_dim, :output_dim].set(raw["fc_w"]),
        # padded vocab columns get -1e30 bias so the in-kernel argmax skips them
        "fc_b": jnp.full((1, V_PAD), NEG_INF, jnp.float32
                         ).at[0, :output_dim].set(raw["fc_b"]),
    }
    for name in ("enc", "dec"):
        wx, wh, bb = [], [], []
        for (w_ih_t, w_hh_t, b) in raw[f"{name}_lstm"]:
            wx.append(pad_rows(pack_gates(w_ih_t)))   # (HP, 128)
            wh.append(pad_rows(pack_gates(w_hh_t)))   # (HP, 128)
            bb.append(pack_gates(b))                  # (1, 128)
        params[f"{name}_wx"] = jnp.stack(wx)          # (L, 32, 128)
        params[f"{name}_wh"] = jnp.stack(wh)          # (L, 32, 128)
        params[f"{name}_b"] = jnp.stack(bb)           # (L, 1, 128)
    return params, raw


# ----------------------------------------------------------------------------
# Forward wrappers.
# ----------------------------------------------------------------------------
@jax.jit
def _forward_padded(params, src, trg, tf_flags):
    n_layers = params["enc_wx"].shape[0]
    batch = src.shape[1]
    assert batch <= B_PAD

    def pad_tok(tok):  # (seq, batch) -> (seq, B_PAD, 1) int32 (token 0 padding)
        return (jnp.zeros((tok.shape[0], B_PAD, 1), jnp.int32)
                .at[:, :batch, 0].set(tok.astype(jnp.int32)))

    src_p, trg_p = pad_tok(src), pad_tok(trg)

    kernel = partial(_seq2seq_kernel, n_layers=n_layers)
    out = pl.pallas_call(
        kernel,
        out_shape=jax.ShapeDtypeStruct((trg.shape[0], B_PAD, V_PAD), jnp.float32),
        in_specs=([pl.BlockSpec(memory_space=pltpu.MemorySpace.SMEM)]      # tf flags
                  + [pl.BlockSpec(memory_space=pltpu.MemorySpace.VMEM)] * 12),
        out_specs=pl.BlockSpec(memory_space=pltpu.MemorySpace.VMEM),
        scratch_shapes=[
            pltpu.VMEM((n_layers, B_PAD, HP), jnp.float32),   # h state
            pltpu.VMEM((n_layers, B_PAD, HP), jnp.float32),   # c state
            pltpu.VMEM((B_PAD, 1), jnp.int32),                # decoder input token
        ],
        compiler_params=pltpu.CompilerParams(
            vmem_limit_bytes=32 * 1024 * 1024),
    )(tf_flags, src_p, trg_p,
      params["enc_emb"], params["dec_emb"],
      params["enc_wx"], params["enc_wh"], params["enc_b"],
      params["dec_wx"], params["dec_wh"], params["dec_b"],
      params["fc_w"], params["fc_b"])
    return out


def seq2seq_forward(params, src, trg, output_dim,
                    teacher_forcing_ratio=0.5, seed=0):
    trg_len, batch = trg.shape
    # torch's per-step random.random() teacher forcing: drawn on the host with a
    # seeded RNG (deterministic) and passed to the kernel as SMEM data so jit
    # does not bake the decisions into the compiled graph.
    rng = random.Random(seed)
    flags = [0] + [1 if rng.random() < teacher_forcing_ratio else 0
                   for _ in range(1, trg_len)]
    tf_flags = jnp.asarray(flags, dtype=jnp.int32)
    out = _forward_padded(params, src, trg, tf_flags)
    return out[:, :batch, :output_dim]          # drop batch / vocab padding


# ----------------------------------------------------------------------------
# Pure-JAX reference (unpadded) for correctness validation.
# ----------------------------------------------------------------------------
_P_HI = jax.lax.Precision.HIGHEST


def _reference_forward(raw, src, trg, tf_flags):
    n_layers, hid = raw["n_layers"], raw["hid_dim"]
    src_len, batch = src.shape
    trg_len = trg.shape[0]
    h = [jnp.zeros((batch, hid), jnp.float32) for _ in range(n_layers)]
    c = [jnp.zeros((batch, hid), jnp.float32) for _ in range(n_layers)]

    def cell(x, hl, cl, w_ih_t, w_hh_t, b):
        gates = (jnp.dot(x, w_ih_t, precision=_P_HI)
                 + jnp.dot(hl, w_hh_t, precision=_P_HI) + b)
        i = jax.nn.sigmoid(gates[:, 0 * hid:1 * hid])
        f = jax.nn.sigmoid(gates[:, 1 * hid:2 * hid])
        g = jnp.tanh(gates[:, 2 * hid:3 * hid])
        o = jax.nn.sigmoid(gates[:, 3 * hid:4 * hid])
        cn = f * cl + i * g
        return o * jnp.tanh(cn), cn

    for t in range(src_len):
        x = raw["enc_emb"][src[t]]
        for l in range(n_layers):
            h[l], c[l] = cell(x, h[l], c[l], *raw["enc_lstm"][l])
            x = h[l]

    outputs = [jnp.zeros((batch, raw["output_dim"]), jnp.float32)]
    inp = trg[0]
    for t in range(1, trg_len):
        x = raw["dec_emb"][inp]
        for l in range(n_layers):
            h[l], c[l] = cell(x, h[l], c[l], *raw["dec_lstm"][l])
            x = h[l]
        logits = jnp.dot(x, raw["fc_w"], precision=_P_HI) + raw["fc_b"]
        outputs.append(logits)
        top1 = jnp.argmax(logits, axis=1).astype(trg.dtype)
        inp = jnp.where(tf_flags[t] > 0, trg[t], top1)
    return jnp.stack(outputs)


# ----------------------------------------------------------------------------
if __name__ == "__main__":
    INPUT_DIM = 12    # src vocab
    OUTPUT_DIM = 10   # trg vocab
    EMB_DIM = 16
    HID_DIM = 32
    N_LAYERS = 2
    SRC_LEN = 6
    TRG_LEN = 8
    BATCH = 2

    key = jax.random.PRNGKey(0)
    k_p, k_src, k_trg = jax.random.split(key, 3)
    params, raw = init_params(k_p, INPUT_DIM, OUTPUT_DIM, EMB_DIM, HID_DIM, N_LAYERS)

    src = jax.random.randint(k_src, (SRC_LEN, BATCH), 0, INPUT_DIM, dtype=jnp.int32)
    trg = jax.random.randint(k_trg, (TRG_LEN, BATCH), 0, OUTPUT_DIM, dtype=jnp.int32)

    out = seq2seq_forward(params, src, trg, OUTPUT_DIM,
                          teacher_forcing_ratio=0.5, seed=0)
    out = jax.block_until_ready(out)
    assert out.shape == (TRG_LEN, BATCH, OUTPUT_DIM)

    # validate against the unpadded pure-JAX reference (same teacher-force flags)
    rng = random.Random(0)
    flags = [0] + [1 if rng.random() < 0.5 else 0 for _ in range(1, TRG_LEN)]
    ref = _reference_forward(raw, src, trg, jnp.asarray(flags, jnp.int32))
    assert bool(jnp.allclose(out, ref, atol=2e-3, rtol=2e-3))

    print("KERNEL_OK")
</pallas_src>

<mosaic_0001>
module attributes {stable_mosaic.version = 11 : i64} {
  func.func @_seq2seq_kernel(%arg0: memref<8xi32, #tpu.memory_space<smem>>, %arg1: memref<6x8x1xi32, #tpu.memory_space<vmem>>, %arg2: memref<8x8x1xi32, #tpu.memory_space<vmem>>, %arg3: memref<16x32xf32, #tpu.memory_space<vmem>>, %arg4: memref<16x32xf32, #tpu.memory_space<vmem>>, %arg5: memref<2x32x128xf32, #tpu.memory_space<vmem>>, %arg6: memref<2x32x128xf32, #tpu.memory_space<vmem>>, %arg7: memref<2x1x128xf32, #tpu.memory_space<vmem>>, %arg8: memref<2x32x128xf32, #tpu.memory_space<vmem>>, %arg9: memref<2x32x128xf32, #tpu.memory_space<vmem>>, %arg10: memref<2x1x128xf32, #tpu.memory_space<vmem>>, %arg11: memref<32x128xf32, #tpu.memory_space<vmem>>, %arg12: memref<1x128xf32, #tpu.memory_space<vmem>>, %arg13: memref<8x8x128xf32, #tpu.memory_space<vmem>>, %arg14: memref<2x8x32xf32, #tpu.memory_space<vmem>>, %arg15: memref<2x8x32xf32, #tpu.memory_space<vmem>>, %arg16: memref<8x1xi32, #tpu.memory_space<vmem>>) attributes {dimension_semantics = [], scalar_prefetch = 0 : i64, scratch_operands = 3 : i64, tpu.core_type = #tpu.core_type<tc>} {
    %cst = arith.constant 0.000000e+00 : f32
    %0 = vector.broadcast %cst : f32 to vector<2x8x32xf32>
    %c0 = arith.constant 0 : index
    %c0_0 = arith.constant 0 : index
    %c0_1 = arith.constant 0 : index
    %1 = vector.load %arg14[%c0, %c0_0, %c0_1] : memref<2x8x32xf32, #tpu.memory_space<vmem>>, vector<2x8x32xf32>
    tpu.vector_store %arg14[%c0, %c0_0, %c0_1], %0 {strides = array<i32>} : memref<2x8x32xf32, #tpu.memory_space<vmem>>, vector<2x8x32xf32>,
    %cst_2 = arith.constant 0.000000e+00 : f32
    %2 = vector.broadcast %cst_2 : f32 to vector<2x8x32xf32>
    %c0_3 = arith.constant 0 : index
    %c0_4 = arith.constant 0 : index
    %c0_5 = arith.constant 0 : index
    %3 = vector.load %arg15[%c0_3, %c0_4, %c0_5] : memref<2x8x32xf32, #tpu.memory_space<vmem>>, vector<2x8x32xf32>
    tpu.vector_store %arg15[%c0_3, %c0_4, %c0_5], %2 {strides = array<i32>} : memref<2x8x32xf32, #tpu.memory_space<vmem>>, vector<2x8x32xf32>,
    %cst_6 = arith.constant 0.000000e+00 : f32
    %4 = vector.broadcast %cst_6 : f32 to vector<8x128xf32>
    %c0_7 = arith.constant 0 : index
    %c0_8 = arith.constant 0 : index
    %c0_9 = arith.constant 0 : index
    %5 = vector.load %arg13[%c0_7, %c0_8, %c0_9] : memref<8x8x128xf32, #tpu.memory_space<vmem>>, vector<1x8x128xf32>
    %6 = vector.shape_cast %5 : vector<1x8x128xf32> to vector<8x128xf32>
    %7 = vector.shape_cast %4 : vector<8x128xf32> to vector<1x8x128xf32>
    tpu.vector_store %arg13[%c0_7, %c0_8, %c0_9], %7 {strides = array<i32>} : memref<8x8x128xf32, #tpu.memory_space<vmem>>, vector<1x8x128xf32>,
    %8 = tpu.iota {dimensions = array<i32: 1>} : vector<8x16xi32>
    %9 = tpu.iota {dimensions = array<i32: 1>} : vector<8x16xi32>
    %10 = tpu.iota {dimensions = array<i32: 1>} : vector<8x128xi32>
    %11 = arith.sitofp %10 : vector<8x128xi32> to vector<8x128xf32>
    %c0_10 = arith.constant 0 : index
    %c0_11 = arith.constant 0 : index
    %c0_12 = arith.constant 0 : index
    %12 = vector.load %arg1[%c0_10, %c0_11, %c0_12] : memref<6x8x1xi32, #tpu.memory_space<vmem>>, vector<1x8x1xi32>
    %13 = vector.shape_cast %12 : vector<1x8x1xi32> to vector<8x1xi32>
    %14 = vector.broadcast %13 : vector<8x1xi32> to vector<8x16xi32>
    %15 = arith.cmpi eq, %14, %8 : vector<8x16xi32>
    %16 = arith.extui %15 : vector<8x16xi1> to vector<8x16xi32>
    %17 = arith.sitofp %16 : vector<8x16xi32> to vector<8x16xf32>
    %c0_13 = arith.constant 0 : index
    %c0_14 = arith.constant 0 : index
    %18 = vector.load %arg3[%c0_13, %c0_14] : memref<16x32xf32, #tpu.memory_space<vmem>>, vector<16x32xf32>
    %cst_15 = arith.constant dense<0.000000e+00> : vector<8x32xf32>
    %19 = tpu.matmul %17, %18, %cst_15 {dimension_numbers = #tpu.dot_dimension_numbers<[1], [0], [0], [1], [0, 0, 1, 1], [], []>} : vector<8x16xf32>, vector<16x32xf32>, vector<8x32xf32> -> vector<8x32xf32>
    %c0_16 = arith.constant 0 : index
    %c0_17 = arith.constant 0 : index
    %c0_18 = arith.constant 0 : index
    %20 = vector.load %arg5[%c0_16, %c0_17, %c0_18] : memref<2x32x128xf32, #tpu.memory_space<vmem>>, vector<1x32x128xf32>
    %21 = vector.shape_cast %20 : vector<1x32x128xf32> to vector<32x128xf32>
    %cst_19 = arith.constant dense<0.000000e+00> : vector<8x128xf32>
    %22 = tpu.matmul %19, %21, %cst_19 {dimension_numbers = #tpu.dot_dimension_numbers<[1], [0], [0], [1], [0, 0, 1, 1], [], []>} : vector<8x32xf32>, vector<32x128xf32>, vector<8x128xf32> -> vector<8x128xf32>
    %c0_20 = arith.constant 0 : index
    %c0_21 = arith.constant 0 : index
    %c0_22 = arith.constant 0 : index
    %23 = vector.load %arg14[%c0_20, %c0_21, %c0_22] : memref<2x8x32xf32, #tpu.memory_space<vmem>>, vector<1x8x32xf32>
    %24 = vector.shape_cast %23 : vector<1x8x32xf32> to vector<8x32xf32>
    %c0_23 = arith.constant 0 : index
    %c0_24 = arith.constant 0 : index
    %c0_25 = arith.constant 0 : index
    %25 = vector.load %arg6[%c0_23, %c0_24, %c0_25] : memref<2x32x128xf32, #tpu.memory_space<vmem>>, vector<1x32x128xf32>
    %26 = vector.shape_cast %25 : vector<1x32x128xf32> to vector<32x128xf32>
    %cst_26 = arith.constant dense<0.000000e+00> : vector<8x128xf32>
    %27 = tpu.matmul %24, %26, %cst_26 {dimension_numbers = #tpu.dot_dimension_numbers<[1], [0], [0], [1], [0, 0, 1, 1], [], []>} : vector<8x32xf32>, vector<32x128xf32>, vector<8x128xf32> -> vector<8x128xf32>
    %28 = arith.addf %22, %27 : vector<8x128xf32>
    %c0_27 = arith.constant 0 : index
    %c0_28 = arith.constant 0 : index
    %c0_29 = arith.constant 0 : index
    %29 = vector.load %arg7[%c0_27, %c0_28, %c0_29] : memref<2x1x128xf32, #tpu.memory_space<vmem>>, vector<1x1x128xf32>
    %30 = vector.shape_cast %29 : vector<1x1x128xf32> to vector<1x128xf32>
    %31 = vector.broadcast %30 : vector<1x128xf32> to vector<8x128xf32>
    %32 = arith.addf %28, %31 : vector<8x128xf32>
    %33 = vector.extract_strided_slice %32 {offsets = [0, 0], sizes = [8, 32], strides = [1, 1]} : vector<8x128xf32> to vector<8x32xf32>
    %34 = arith.negf %33 : vector<8x32xf32>
    %35 = math.exp %34 : vector<8x32xf32>
    %cst_30 = arith.constant 1.000000e+00 : f32
    %36 = vector.broadcast %cst_30 : f32 to vector<8x32xf32>
    %37 = arith.addf %36, %35 : vector<8x32xf32>
    %38 = arith.divf %36, %37 : vector<8x32xf32>
    %39 = vector.extract_strided_slice %32 {offsets = [0, 32], sizes = [8, 32], strides = [1, 1]} : vector<8x128xf32> to vector<8x32xf32>
    %40 = arith.negf %39 : vector<8x32xf32>
    %41 = math.exp %40 : vector<8x32xf32>
    %cst_31 = arith.constant 1.000000e+00 : f32
    %42 = vector.broadcast %cst_31 : f32 to vector<8x32xf32>
    %43 = arith.addf %42, %41 : vector<8x32xf32>
    %44 = arith.divf %42, %43 : vector<8x32xf32>
    %45 = vector.extract_strided_slice %32 {offsets = [0, 64], sizes = [8, 32], strides = [1, 1]} : vector<8x128xf32> to vector<8x32xf32>
    %46 = math.tanh %45 : vector<8x32xf32>
    %47 = vector.extract_strided_slice %32 {offsets = [0, 96], sizes = [8, 32], strides = [1, 1]} : vector<8x128xf32> to vector<8x32xf32>
    %48 = arith.negf %47 : vector<8x32xf32>
    %49 = math.exp %48 : vector<8x32xf32>
    %cst_32 = arith.constant 1.000000e+00 : f32
    %50 = vector.broadcast %cst_32 : f32 to vector<8x32xf32>
    %51 = arith.addf %50, %49 : vector<8x32xf32>
    %52 = arith.divf %50, %51 : vector<8x32xf32>
    %c0_33 = arith.constant 0 : index
    %c0_34 = arith.constant 0 : index
    %c0_35 = arith.constant 0 : index
    %53 = vector.load %arg15[%c0_33, %c0_34, %c0_35] : memref<2x8x32xf32, #tpu.memory_space<vmem>>, vector<1x8x32xf32>
    %54 = vector.shape_cast %53 : vector<1x8x32xf32> to vector<8x32xf32>
    %55 = arith.mulf %44, %54 : vector<8x32xf32>
    %56 = arith.mulf %38, %46 : vector<8x32xf32>
    %57 = arith.addf %55, %56 : vector<8x32xf32>
    %58 = math.tanh %57 : vector<8x32xf32>
    %59 = arith.mulf %52, %58 : vector<8x32xf32>
    %c0_36 = arith.constant 0 : index
    %c0_37 = arith.constant 0 : index
    %c0_38 = arith.constant 0 : index
    %60 = vector.load %arg15[%c0_36, %c0_37, %c0_38] : memref<2x8x32xf32, #tpu.memory_space<vmem>>, vector<1x8x32xf32>
    %61 = vector.shape_cast %60 : vector<1x8x32xf32> to vector<8x32xf32>
    %62 = vector.shape_cast %57 : vector<8x32xf32> to vector<1x8x32xf32>
    tpu.vector_store %arg15[%c0_36, %c0_37, %c0_38], %62 {strides = array<i32>} : memref<2x8x32xf32, #tpu.memory_space<vmem>>, vector<1x8x32xf32>,
    %c0_39 = arith.constant 0 : index
    %c0_40 = arith.constant 0 : index
    %c0_41 = arith.constant 0 : index
    %63 = vector.load %arg14[%c0_39, %c0_40, %c0_41] : memref<2x8x32xf32, #tpu.memory_space<vmem>>, vector<1x8x32xf32>
    %64 = vector.shape_cast %63 : vector<1x8x32xf32> to vector<8x32xf32>
    %65 = vector.shape_cast %59 : vector<8x32xf32> to vector<1x8x32xf32>
    tpu.vector_store %arg14[%c0_39, %c0_40, %c0_41], %65 {strides = array<i32>} : memref<2x8x32xf32, #tpu.memory_space<vmem>>, vector<1x8x32xf32>,
    %c1 = arith.constant 1 : index
    %c0_42 = arith.constant 0 : index
    %c0_43 = arith.constant 0 : index
    %66 = vector.load %arg5[%c1, %c0_42, %c0_43] : memref<2x32x128xf32, #tpu.memory_space<vmem>>, vector<1x32x128xf32>
    %67 = vector.shape_cast %66 : vector<1x32x128xf32> to vector<32x128xf32>
    %cst_44 = arith.constant dense<0.000000e+00> : vector<8x128xf32>
    %68 = tpu.matmul %59, %67, %cst_44 {dimension_numbers = #tpu.dot_dimension_numbers<[1], [0], [0], [1], [0, 0, 1, 1], [], []>} : vector<8x32xf32>, vector<32x128xf32>, vector<8x128xf32> -> vector<8x128xf32>
    %c1_45 = arith.constant 1 : index
    %c0_46 = arith.constant 0 : index
    %c0_47 = arith.constant 0 : index
    %69 = vector.load %arg14[%c1_45, %c0_46, %c0_47] : memref<2x8x32xf32, #tpu.memory_space<vmem>>, vector<1x8x32xf32>
    %70 = vector.shape_cast %69 : vector<1x8x32xf32> to vector<8x32xf32>
    %c1_48 = arith.constant 1 : index
    %c0_49 = arith.constant 0 : index
    %c0_50 = arith.constant 0 : index
    %71 = vector.load %arg6[%c1_48, %c0_49, %c0_50] : memref<2x32x128xf32, #tpu.memory_space<vmem>>, vector<1x32x128xf32>
    %72 = vector.shape_cast %71 : vector<1x32x128xf32> to vector<32x128xf32>
    %cst_51 = arith.constant dense<0.000000e+00> : vector<8x128xf32>
    %73 = tpu.matmul %70, %72, %cst_51 {dimension_numbers = #tpu.dot_dimension_numbers<[1], [0], [0], [1], [0, 0, 1, 1], [], []>} : vector<8x32xf32>, vector<32x128xf32>, vector<8x128xf32> -> vector<8x128xf32>
    %74 = arith.addf %68, %73 : vector<8x128xf32>
    %c1_52 = arith.constant 1 : index
    %c0_53 = arith.constant 0 : index
    %c0_54 = arith.constant 0 : index
    %75 = vector.load %arg7[%c1_52, %c0_53, %c0_54] : memref<2x1x128xf32, #tpu.memory_space<vmem>>, vector<1x1x128xf32>
    %76 = vector.shape_cast %75 : vector<1x1x128xf32> to vector<1x128xf32>
    %77 = vector.broadcast %76 : vector<1x128xf32> to vector<8x128xf32>
    %78 = arith.addf %74, %77 : vector<8x128xf32>
    %79 = vector.extract_strided_slice %78 {offsets = [0, 0], sizes = [8, 32], strides = [1, 1]} : vector<8x128xf32> to vector<8x32xf32>
    %80 = arith.negf %79 : vector<8x32xf32>
    %81 = math.exp %80 : vector<8x32xf32>
    %cst_55 = arith.constant 1.000000e+00 : f32
    %82 = vector.broadcast %cst_55 : f32 to vector<8x32xf32>
    %83 = arith.addf %82, %81 : vector<8x32xf32>
    %84 = arith.divf %82, %83 : vector<8x32xf32>
    %85 = vector.extract_strided_slice %78 {offsets = [0, 32], sizes = [8, 32], strides = [1, 1]} : vector<8x128xf32> to vector<8x32xf32>
    %86 = arith.negf %85 : vector<8x32xf32>
    %87 = math.exp %86 : vector<8x32xf32>
    %cst_56 = arith.constant 1.000000e+00 : f32
    %88 = vector.broadcast %cst_56 : f32 to vector<8x32xf32>
    %89 = arith.addf %88, %87 : vector<8x32xf32>
    %90 = arith.divf %88, %89 : vector<8x32xf32>
    %91 = vector.extract_strided_slice %78 {offsets = [0, 64], sizes = [8, 32], strides = [1, 1]} : vector<8x128xf32> to vector<8x32xf32>
    %92 = math.tanh %91 : vector<8x32xf32>
    %93 = vector.extract_strided_slice %78 {offsets = [0, 96], sizes = [8, 32], strides = [1, 1]} : vector<8x128xf32> to vector<8x32xf32>
    %94 = arith.negf %93 : vector<8x32xf32>
    %95 = math.exp %94 : vector<8x32xf32>
    %cst_57 = arith.constant 1.000000e+00 : f32
    %96 = vector.broadcast %cst_57 : f32 to vector<8x32xf32>
    %97 = arith.addf %96, %95 : vector<8x32xf32>
    %98 = arith.divf %96, %97 : vector<8x32xf32>
    %c1_58 = arith.constant 1 : index
    %c0_59 = arith.constant 0 : index
    %c0_60 = arith.constant 0 : index
    %99 = vector.load %arg15[%c1_58, %c0_59, %c0_60] : memref<2x8x32xf32, #tpu.memory_space<vmem>>, vector<1x8x32xf32>
    %100 = vector.shape_cast %99 : vector<1x8x32xf32> to vector<8x32xf32>
    %101 = arith.mulf %90, %100 : vector<8x32xf32>
    %102 = arith.mulf %84, %92 : vector<8x32xf32>
    %103 = arith.addf %101, %102 : vector<8x32xf32>
    %104 = math.tanh %103 : vector<8x32xf32>
    %105 = arith.mulf %98, %104 : vector<8x32xf32>
    %c1_61 = arith.constant 1 : index
    %c0_62 = arith.constant 0 : index
    %c0_63 = arith.constant 0 : index
    %106 = vector.load %arg15[%c1_61, %c0_62, %c0_63] : memref<2x8x32xf32, #tpu.memory_space<vmem>>, vector<1x8x32xf32>
    %107 = vector.shape_cast %106 : vector<1x8x32xf32> to vector<8x32xf32>
    %108 = vector.shape_cast %103 : vector<8x32xf32> to vector<1x8x32xf32>
    tpu.vector_store %arg15[%c1_61, %c0_62, %c0_63], %108 {strides = array<i32>} : memref<2x8x32xf32, #tpu.memory_space<vmem>>, vector<1x8x32xf32>,
    %c1_64 = arith.constant 1 : index
    %c0_65 = arith.constant 0 : index
    %c0_66 = arith.constant 0 : index
    %109 = vector.load %arg14[%c1_64, %c0_65, %c0_66] : memref<2x8x32xf32, #tpu.memory_space<vmem>>, vector<1x8x32xf32>
    %110 = vector.shape_cast %109 : vector<1x8x32xf32> to vector<8x32xf32>
    %111 = vector.shape_cast %105 : vector<8x32xf32> to vector<1x8x32xf32>
    tpu.vector_store %arg14[%c1_64, %c0_65, %c0_66], %111 {strides = array<i32>} : memref<2x8x32xf32, #tpu.memory_space<vmem>>, vector<1x8x32xf32>,
    %c1_67 = arith.constant 1 : index
    %c0_68 = arith.constant 0 : index
    %c0_69 = arith.constant 0 : index
    %112 = vector.load %arg1[%c1_67, %c0_68, %c0_69] : memref<6x8x1xi32, #tpu.memory_space<vmem>>, vector<1x8x1xi32>
    %113 = vector.shape_cast %112 : vector<1x8x1xi32> to vector<8x1xi32>
    %114 = vector.broadcast %113 : vector<8x1xi32> to vector<8x16xi32>
    %115 = arith.cmpi eq, %114, %8 : vector<8x16xi32>
    %116 = arith.extui %115 : vector<8x16xi1> to vector<8x16xi32>
    %117 = arith.sitofp %116 : vector<8x16xi32> to vector<8x16xf32>
    %c0_70 = arith.constant 0 : index
    %c0_71 = arith.constant 0 : index
    %118 = vector.load %arg3[%c0_70, %c0_71] : memref<16x32xf32, #tpu.memory_space<vmem>>, vector<16x32xf32>
    %cst_72 = arith.constant dense<0.000000e+00> : vector<8x32xf32>
    %119 = tpu.matmul %117, %118, %cst_72 {dimension_numbers = #tpu.dot_dimension_numbers<[1], [0], [0], [1], [0, 0, 1, 1], [], []>} : vector<8x16xf32>, vector<16x32xf32>, vector<8x32xf32> -> vector<8x32xf32>
    %c0_73 = arith.constant 0 : index
    %c0_74 = arith.constant 0 : index
    %c0_75 = arith.constant 0 : index
    %120 = vector.load %arg5[%c0_73, %c0_74, %c0_75] : memref<2x32x128xf32, #tpu.memory_space<vmem>>, vector<1x32x128xf32>
    %121 = vector.shape_cast %120 : vector<1x32x128xf32> to vector<32x128xf32>
    %cst_76 = arith.constant dense<0.000000e+00> : vector<8x128xf32>
    %122 = tpu.matmul %119, %121, %cst_76 {dimension_numbers = #tpu.dot_dimension_numbers<[1], [0], [0], [1], [0, 0, 1, 1], [], []>} : vector<8x32xf32>, vector<32x128xf32>, vector<8x128xf32> -> vector<8x128xf32>
    %c0_77 = arith.constant 0 : index
    %c0_78 = arith.constant 0 : index
    %c0_79 = arith.constant 0 : index
    %123 = vector.load %arg14[%c0_77, %c0_78, %c0_79] : memref<2x8x32xf32, #tpu.memory_space<vmem>>, vector<1x8x32xf32>
    %124 = vector.shape_cast %123 : vector<1x8x32xf32> to vector<8x32xf32>
    %c0_80 = arith.constant 0 : index
    %c0_81 = arith.constant 0 : index
    %c0_82 = arith.constant 0 : index
    %125 = vector.load %arg6[%c0_80, %c0_81, %c0_82] : memref<2x32x128xf32, #tpu.memory_space<vmem>>, vector<1x32x128xf32>
    %126 = vector.shape_cast %125 : vector<1x32x128xf32> to vector<32x128xf32>
    %cst_83 = arith.constant dense<0.000000e+00> : vector<8x128xf32>
    %127 = tpu.matmul %124, %126, %cst_83 {dimension_numbers = #tpu.dot_dimension_numbers<[1], [0], [0], [1], [0, 0, 1, 1], [], []>} : vector<8x32xf32>, vector<32x128xf32>, vector<8x128xf32> -> vector<8x128xf32>
    %128 = arith.addf %122, %127 : vector<8x128xf32>
    %c0_84 = arith.constant 0 : index
    %c0_85 = arith.constant 0 : index
    %c0_86 = arith.constant 0 : index
    %129 = vector.load %arg7[%c0_84, %c0_85, %c0_86] : memref<2x1x128xf32, #tpu.memory_space<vmem>>, vector<1x1x128xf32>
    %130 = vector.shape_cast %129 : vector<1x1x128xf32> to vector<1x128xf32>
    %131 = vector.broadcast %130 : vector<1x128xf32> to vector<8x128xf32>
    %132 = arith.addf %128, %131 : vector<8x128xf32>
    %133 = vector.extract_strided_slice %132 {offsets = [0, 0], sizes = [8, 32], strides = [1, 1]} : vector<8x128xf32> to vector<8x32xf32>
    %134 = arith.negf %133 : vector<8x32xf32>
    %135 = math.exp %134 : vector<8x32xf32>
    %cst_87 = arith.constant 1.000000e+00 : f32
    %136 = vector.broadcast %cst_87 : f32 to vector<8x32xf32>
    %137 = arith.addf %136, %135 : vector<8x32xf32>
    %138 = arith.divf %136, %137 : vector<8x32xf32>
    %139 = vector.extract_strided_slice %132 {offsets = [0, 32], sizes = [8, 32], strides = [1, 1]} : vector<8x128xf32> to vector<8x32xf32>
    %140 = arith.negf %139 : vector<8x32xf32>
    %141 = math.exp %140 : vector<8x32xf32>
    %cst_88 = arith.constant 1.000000e+00 : f32
    %142 = vector.broadcast %cst_88 : f32 to vector<8x32xf32>
    %143 = arith.addf %142, %141 : vector<8x32xf32>
    %144 = arith.divf %142, %143 : vector<8x32xf32>
    %145 = vector.extract_strided_slice %132 {offsets = [0, 64], sizes = [8, 32], strides = [1, 1]} : vector<8x128xf32> to vector<8x32xf32>
    %146 = math.tanh %145 : vector<8x32xf32>
    %147 = vector.extract_strided_slice %132 {offsets = [0, 96], sizes = [8, 32], strides = [1, 1]} : vector<8x128xf32> to vector<8x32xf32>
    %148 = arith.negf %147 : vector<8x32xf32>
    %149 = math.exp %148 : vector<8x32xf32>
    %cst_89 = arith.constant 1.000000e+00 : f32
    %150 = vector.broadcast %cst_89 : f32 to vector<8x32xf32>
    %151 = arith.addf %150, %149 : vector<8x32xf32>
    %152 = arith.divf %150, %151 : vector<8x32xf32>
    %c0_90 = arith.constant 0 : index
    %c0_91 = arith.constant 0 : index
    %c0_92 = arith.constant 0 : index
    %153 = vector.load %arg15[%c0_90, %c0_91, %c0_92] : memref<2x8x32xf32, #tpu.memory_space<vmem>>, vector<1x8x32xf32>
    %154 = vector.shape_cast %153 : vector<1x8x32xf32> to vector<8x32xf32>
    %155 = arith.mulf %144, %154 : vector<8x32xf32>
    %156 = arith.mulf %138, %146 : vector<8x32xf32>
    %157 = arith.addf %155, %156 : vector<8x32xf32>
    %158 = math.tanh %157 : vector<8x32xf32>
    %159 = arith.mulf %152, %158 : vector<8x32xf32>
    %c0_93 = arith.constant 0 : index
    %c0_94 = arith.constant 0 : index
    %c0_95 = arith.constant 0 : index
    %160 = vector.load %arg15[%c0_93, %c0_94, %c0_95] : memref<2x8x32xf32, #tpu.memory_space<vmem>>, vector<1x8x32xf32>
    %161 = vector.shape_cast %160 : vector<1x8x32xf32> to vector<8x32xf32>
    %162 = vector.shape_cast %157 : vector<8x32xf32> to vector<1x8x32xf32>
    tpu.vector_store %arg15[%c0_93, %c0_94, %c0_95], %162 {strides = array<i32>} : memref<2x8x32xf32, #tpu.memory_space<vmem>>, vector<1x8x32xf32>,
    %c0_96 = arith.constant 0 : index
    %c0_97 = arith.constant 0 : index
    %c0_98 = arith.constant 0 : index
    %163 = vector.load %arg14[%c0_96, %c0_97, %c0_98] : memref<2x8x32xf32, #tpu.memory_space<vmem>>, vector<1x8x32xf32>
    %164 = vector.shape_cast %163 : vector<1x8x32xf32> to vector<8x32xf32>
    %165 = vector.shape_cast %159 : vector<8x32xf32> to vector<1x8x32xf32>
    tpu.vector_store %arg14[%c0_96, %c0_97, %c0_98], %165 {strides = array<i32>} : memref<2x8x32xf32, #tpu.memory_space<vmem>>, vector<1x8x32xf32>,
    %c1_99 = arith.constant 1 : index
    %c0_100 = arith.constant 0 : index
    %c0_101 = arith.constant 0 : index
    %166 = vector.load %arg5[%c1_99, %c0_100, %c0_101] : memref<2x32x128xf32, #tpu.memory_space<vmem>>, vector<1x32x128xf32>
    %167 = vector.shape_cast %166 : vector<1x32x128xf32> to vector<32x128xf32>
    %cst_102 = arith.constant dense<0.000000e+00> : vector<8x128xf32>
    %168 = tpu.matmul %159, %167, %cst_102 {dimension_numbers = #tpu.dot_dimension_numbers<[1], [0], [0], [1], [0, 0, 1, 1], [], []>} : vector<8x32xf32>, vector<32x128xf32>, vector<8x128xf32> -> vector<8x128xf32>
    %c1_103 = arith.constant 1 : index
    %c0_104 = arith.constant 0 : index
    %c0_105 = arith.constant 0 : index
    %169 = vector.load %arg14[%c1_103, %c0_104, %c0_105] : memref<2x8x32xf32, #tpu.memory_space<vmem>>, vector<1x8x32xf32>
    %170 = vector.shape_cast %169 : vector<1x8x32xf32> to vector<8x32xf32>
    %c1_106 = arith.constant 1 : index
    %c0_107 = arith.constant 0 : index
    %c0_108 = arith.constant 0 : index
    %171 = vector.load %arg6[%c1_106, %c0_107, %c0_108] : memref<2x32x128xf32, #tpu.memory_space<vmem>>, vector<1x32x128xf32>
    %172 = vector.shape_cast %171 : vector<1x32x128xf32> to vector<32x128xf32>
    %cst_109 = arith.constant dense<0.000000e+00> : vector<8x128xf32>
    %173 = tpu.matmul %170, %172, %cst_109 {dimension_numbers = #tpu.dot_dimension_numbers<[1], [0], [0], [1], [0, 0, 1, 1], [], []>} : vector<8x32xf32>, vector<32x128xf32>, vector<8x128xf32> -> vector<8x128xf32>
    %174 = arith.addf %168, %173 : vector<8x128xf32>
    %c1_110 = arith.constant 1 : index
    %c0_111 = arith.constant 0 : index
    %c0_112 = arith.constant 0 : index
    %175 = vector.load %arg7[%c1_110, %c0_111, %c0_112] : memref<2x1x128xf32, #tpu.memory_space<vmem>>, vector<1x1x128xf32>
    %176 = vector.shape_cast %175 : vector<1x1x128xf32> to vector<1x128xf32>
    %177 = vector.broadcast %176 : vector<1x128xf32> to vector<8x128xf32>
    %178 = arith.addf %174, %177 : vector<8x128xf32>
    %179 = vector.extract_strided_slice %178 {offsets = [0, 0], sizes = [8, 32], strides = [1, 1]} : vector<8x128xf32> to vector<8x32xf32>
    %180 = arith.negf %179 : vector<8x32xf32>
    %181 = math.exp %180 : vector<8x32xf32>
    %cst_113 = arith.constant 1.000000e+00 : f32
    %182 = vector.broadcast %cst_113 : f32 to vector<8x32xf32>
    %183 = arith.addf %182, %181 : vector<8x32xf32>
    %184 = arith.divf %182, %183 : vector<8x32xf32>
    %185 = vector.extract_strided_slice %178 {offsets = [0, 32], sizes = [8, 32], strides = [1, 1]} : vector<8x128xf32> to vector<8x32xf32>
    %186 = arith.negf %185 : vector<8x32xf32>
    %187 = math.exp %186 : vector<8x32xf32>
    %cst_114 = arith.constant 1.000000e+00 : f32
    %188 = vector.broadcast %cst_114 : f32 to vector<8x32xf32>
    %189 = arith.addf %188, %187 : vector<8x32xf32>
    %190 = arith.divf %188, %189 : vector<8x32xf32>
    %191 = vector.extract_strided_slice %178 {offsets = [0, 64], sizes = [8, 32], strides = [1, 1]} : vector<8x128xf32> to vector<8x32xf32>
    %192 = math.tanh %191 : vector<8x32xf32>
    %193 = vector.extract_strided_slice %178 {offsets = [0, 96], sizes = [8, 32], strides = [1, 1]} : vector<8x128xf32> to vector<8x32xf32>
    %194 = arith.negf %193 : vector<8x32xf32>
    %195 = math.exp %194 : vector<8x32xf32>
    %cst_115 = arith.constant 1.000000e+00 : f32
    %196 = vector.broadcast %cst_115 : f32 to vector<8x32xf32>
    %197 = arith.addf %196, %195 : vector<8x32xf32>
    %198 = arith.divf %196, %197 : vector<8x32xf32>
    %c1_116 = arith.constant 1 : index
    %c0_117 = arith.constant 0 : index
    %c0_118 = arith.constant 0 : index
    %199 = vector.load %arg15[%c1_116, %c0_117, %c0_118] : memref<2x8x32xf32, #tpu.memory_space<vmem>>, vector<1x8x32xf32>
    %200 = vector.shape_cast %199 : vector<1x8x32xf32> to vector<8x32xf32>
    %201 = arith.mulf %190, %200 : vector<8x32xf32>
    %202 = arith.mulf %184, %192 : vector<8x32xf32>
    %203 = arith.addf %201, %202 : vector<8x32xf32>
    %204 = math.tanh %203 : vector<8x32xf32>
    %205 = arith.mulf %198, %204 : vector<8x32xf32>
    %c1_119 = arith.constant 1 : index
    %c0_120 = arith.constant 0 : index
    %c0_121 = arith.constant 0 : index
    %206 = vector.load %arg15[%c1_119, %c0_120, %c0_121] : memref<2x8x32xf32, #tpu.memory_space<vmem>>, vector<1x8x32xf32>
    %207 = vector.shape_cast %206 : vector<1x8x32xf32> to vector<8x32xf32>
    %208 = vector.shape_cast %203 : vector<8x32xf32> to vector<1x8x32xf32>
    tpu.vector_store %arg15[%c1_119, %c0_120, %c0_121], %208 {strides = array<i32>} : memref<2x8x32xf32, #tpu.memory_space<vmem>>, vector<1x8x32xf32>,
    %c1_122 = arith.constant 1 : index
    %c0_123 = arith.constant 0 : index
    %c0_124 = arith.constant 0 : index
    %209 = vector.load %arg14[%c1_122, %c0_123, %c0_124] : memref<2x8x32xf32, #tpu.memory_space<vmem>>, vector<1x8x32xf32>
    %210 = vector.shape_cast %209 : vector<1x8x32xf32> to vector<8x32xf32>
    %211 = vector.shape_cast %205 : vector<8x32xf32> to vector<1x8x32xf32>
    tpu.vector_store %arg14[%c1_122, %c0_123, %c0_124], %211 {strides = array<i32>} : memref<2x8x32xf32, #tpu.memory_space<vmem>>, vector<1x8x32xf32>,
    %c2 = arith.constant 2 : index
    %c0_125 = arith.constant 0 : index
    %c0_126 = arith.constant 0 : index
    %212 = vector.load %arg1[%c2, %c0_125, %c0_126] : memref<6x8x1xi32, #tpu.memory_space<vmem>>, vector<1x8x1xi32>
    %213 = vector.shape_cast %212 : vector<1x8x1xi32> to vector<8x1xi32>
    %214 = vector.broadcast %213 : vector<8x1xi32> to vector<8x16xi32>
    %215 = arith.cmpi eq, %214, %8 : vector<8x16xi32>
    %216 = arith.extui %215 : vector<8x16xi1> to vector<8x16xi32>
    %217 = arith.sitofp %216 : vector<8x16xi32> to vector<8x16xf32>
    %c0_127 = arith.constant 0 : index
    %c0_128 = arith.constant 0 : index
    %218 = vector.load %arg3[%c0_127, %c0_128] : memref<16x32xf32, #tpu.memory_space<vmem>>, vector<16x32xf32>
    %cst_129 = arith.constant dense<0.000000e+00> : vector<8x32xf32>
    %219 = tpu.matmul %217, %218, %cst_129 {dimension_numbers = #tpu.dot_dimension_numbers<[1], [0], [0], [1], [0, 0, 1, 1], [], []>} : vector<8x16xf32>, vector<16x32xf32>, vector<8x32xf32> -> vector<8x32xf32>
    %c0_130 = arith.constant 0 : index
    %c0_131 = arith.constant 0 : index
    %c0_132 = arith.constant 0 : index
    %220 = vector.load %arg5[%c0_130, %c0_131, %c0_132] : memref<2x32x128xf32, #tpu.memory_space<vmem>>, vector<1x32x128xf32>
    %221 = vector.shape_cast %220 : vector<1x32x128xf32> to vector<32x128xf32>
    %cst_133 = arith.constant dense<0.000000e+00> : vector<8x128xf32>
    %222 = tpu.matmul %219, %221, %cst_133 {dimension_numbers = #tpu.dot_dimension_numbers<[1], [0], [0], [1], [0, 0, 1, 1], [], []>} : vector<8x32xf32>, vector<32x128xf32>, vector<8x128xf32> -> vector<8x128xf32>
    %c0_134 = arith.constant 0 : index
    %c0_135 = arith.constant 0 : index
    %c0_136 = arith.constant 0 : index
    %223 = vector.load %arg14[%c0_134, %c0_135, %c0_136] : memref<2x8x32xf32, #tpu.memory_space<vmem>>, vector<1x8x32xf32>
    %224 = vector.shape_cast %223 : vector<1x8x32xf32> to vector<8x32xf32>
    %c0_137 = arith.constant 0 : index
    %c0_138 = arith.constant 0 : index
    %c0_139 = arith.constant 0 : index
    %225 = vector.load %arg6[%c0_137, %c0_138, %c0_139] : memref<2x32x128xf32, #tpu.memory_space<vmem>>, vector<1x32x128xf32>
    %226 = vector.shape_cast %225 : vector<1x32x128xf32> to vector<32x128xf32>
    %cst_140 = arith.constant dense<0.000000e+00> : vector<8x128xf32>
    %227 = tpu.matmul %224, %226, %cst_140 {dimension_numbers = #tpu.dot_dimension_numbers<[1], [0], [0], [1], [0, 0, 1, 1], [], []>} : vector<8x32xf32>, vector<32x128xf32>, vector<8x128xf32> -> vector<8x128xf32>
    %228 = arith.addf %222, %227 : vector<8x128xf32>
    %c0_141 = arith.constant 0 : index
    %c0_142 = arith.constant 0 : index
    %c0_143 = arith.constant 0 : index
    %229 = vector.load %arg7[%c0_141, %c0_142, %c0_143] : memref<2x1x128xf32, #tpu.memory_space<vmem>>, vector<1x1x128xf32>
    %230 = vector.shape_cast %229 : vector<1x1x128xf32> to vector<1x128xf32>
    %231 = vector.broadcast %230 : vector<1x128xf32> to vector<8x128xf32>
    %232 = arith.addf %228, %231 : vector<8x128xf32>
    %233 = vector.extract_strided_slice %232 {offsets = [0, 0], sizes = [8, 32], strides = [1, 1]} : vector<8x128xf32> to vector<8x32xf32>
    %234 = arith.negf %233 : vector<8x32xf32>
    %235 = math.exp %234 : vector<8x32xf32>
    %cst_144 = arith.constant 1.000000e+00 : f32
    %236 = vector.broadcast %cst_144 : f32 to vector<8x32xf32>
    %237 = arith.addf %236, %235 : vector<8x32xf32>
    %238 = arith.divf %236, %237 : vector<8x32xf32>
    %239 = vector.extract_strided_slice %232 {offsets = [0, 32], sizes = [8, 32], strides = [1, 1]} : vector<8x128xf32> to vector<8x32xf32>
    %240 = arith.negf %239 : vector<8x32xf32>
    %241 = math.exp %240 : vector<8x32xf32>
    %cst_145 = arith.constant 1.000000e+00 : f32
    %242 = vector.broadcast %cst_145 : f32 to vector<8x32xf32>
    %243 = arith.addf %242, %241 : vector<8x32xf32>
    %244 = arith.divf %242, %243 : vector<8x32xf32>
    %245 = vector.extract_strided_slice %232 {offsets = [0, 64], sizes = [8, 32], strides = [1, 1]} : vector<8x128xf32> to vector<8x32xf32>
    %246 = math.tanh %245 : vector<8x32xf32>
    %247 = vector.extract_strided_slice %232 {offsets = [0, 96], sizes = [8, 32], strides = [1, 1]} : vector<8x128xf32> to vector<8x32xf32>
    %248 = arith.negf %247 : vector<8x32xf32>
    %249 = math.exp %248 : vector<8x32xf32>
    %cst_146 = arith.constant 1.000000e+00 : f32
    %250 = vector.broadcast %cst_146 : f32 to vector<8x32xf32>
    %251 = arith.addf %250, %249 : vector<8x32xf32>
    %252 = arith.divf %250, %251 : vector<8x32xf32>
    %c0_147 = arith.constant 0 : index
    %c0_148 = arith.constant 0 : index
    %c0_149 = arith.constant 0 : index
    %253 = vector.load %arg15[%c0_147, %c0_148, %c0_149] : memref<2x8x32xf32, #tpu.memory_space<vmem>>, vector<1x8x32xf32>
    %254 = vector.shape_cast %253 : vector<1x8x32xf32> to vector<8x32xf32>
    %255 = arith.mulf %244, %254 : vector<8x32xf32>
    %256 = arith.mulf %238, %246 : vector<8x32xf32>
    %257 = arith.addf %255, %256 : vector<8x32xf32>
    %258 = math.tanh %257 : vector<8x32xf32>
    %259 = arith.mulf %252, %258 : vector<8x32xf32>
    %c0_150 = arith.constant 0 : index
    %c0_151 = arith.constant 0 : index
    %c0_152 = arith.constant 0 : index
    %260 = vector.load %arg15[%c0_150, %c0_151, %c0_152] : memref<2x8x32xf32, #tpu.memory_space<vmem>>, vector<1x8x32xf32>
    %261 = vector.shape_cast %260 : vector<1x8x32xf32> to vector<8x32xf32>
    %262 = vector.shape_cast %257 : vector<8x32xf32> to vector<1x8x32xf32>
    tpu.vector_store %arg15[%c0_150, %c0_151, %c0_152], %262 {strides = array<i32>} : memref<2x8x32xf32, #tpu.memory_space<vmem>>, vector<1x8x32xf32>,
    %c0_153 = arith.constant 0 : index
    %c0_154 = arith.constant 0 : index
    %c0_155 = arith.constant 0 : index
    %263 = vector.load %arg14[%c0_153, %c0_154, %c0_155] : memref<2x8x32xf32, #tpu.memory_space<vmem>>, vector<1x8x32xf32>
    %264 = vector.shape_cast %263 : vector<1x8x32xf32> to vector<8x32xf32>
    %265 = vector.shape_cast %259 : vector<8x32xf32> to vector<1x8x32xf32>
    tpu.vector_store %arg14[%c0_153, %c0_154, %c0_155], %265 {strides = array<i32>} : memref<2x8x32xf32, #tpu.memory_space<vmem>>, vector<1x8x32xf32>,
    %c1_156 = arith.constant 1 : index
    %c0_157 = arith.constant 0 : index
    %c0_158 = arith.constant 0 : index
    %266 = vector.load %arg5[%c1_156, %c0_157, %c0_158] : memref<2x32x128xf32, #tpu.memory_space<vmem>>, vector<1x32x128xf32>
    %267 = vector.shape_cast %266 : vector<1x32x128xf32> to vector<32x128xf32>
    %cst_159 = arith.constant dense<0.000000e+00> : vector<8x128xf32>
    %268 = tpu.matmul %259, %267, %cst_159 {dimension_numbers = #tpu.dot_dimension_numbers<[1], [0], [0], [1], [0, 0, 1, 1], [], []>} : vector<8x32xf32>, vector<32x128xf32>, vector<8x128xf32> -> vector<8x128xf32>
    %c1_160 = arith.constant 1 : index
    %c0_161 = arith.constant 0 : index
    %c0_162 = arith.constant 0 : index
    %269 = vector.load %arg14[%c1_160, %c0_161, %c0_162] : memref<2x8x32xf32, #tpu.memory_space<vmem>>, vector<1x8x32xf32>
    %270 = vector.shape_cast %269 : vector<1x8x32xf32> to vector<8x32xf32>
    %c1_163 = arith.constant 1 : index
    %c0_164 = arith.constant 0 : index
    %c0_165 = arith.constant 0 : index
    %271 = vector.load %arg6[%c1_163, %c0_164, %c0_165] : memref<2x32x128xf32, #tpu.memory_space<vmem>>, vector<1x32x128xf32>
    %272 = vector.shape_cast %271 : vector<1x32x128xf32> to vector<32x128xf32>
    %cst_166 = arith.constant dense<0.000000e+00> : vector<8x128xf32>
    %273 = tpu.matmul %270, %272, %cst_166 {dimension_numbers = #tpu.dot_dimension_numbers<[1], [0], [0], [1], [0, 0, 1, 1], [], []>} : vector<8x32xf32>, vector<32x128xf32>, vector<8x128xf32> -> vector<8x128xf32>
    %274 = arith.addf %268, %273 : vector<8x128xf32>
    %c1_167 = arith.constant 1 : index
    %c0_168 = arith.constant 0 : index
    %c0_169 = arith.constant 0 : index
    %275 = vector.load %arg7[%c1_167, %c0_168, %c0_169] : memref<2x1x128xf32, #tpu.memory_space<vmem>>, vector<1x1x128xf32>
    %276 = vector.shape_cast %275 : vector<1x1x128xf32> to vector<1x128xf32>
    %277 = vector.broadcast %276 : vector<1x128xf32> to vector<8x128xf32>
    %278 = arith.addf %274, %277 : vector<8x128xf32>
    %279 = vector.extract_strided_slice %278 {offsets = [0, 0], sizes = [8, 32], strides = [1, 1]} : vector<8x128xf32> to vector<8x32xf32>
    %280 = arith.negf %279 : vector<8x32xf32>
    %281 = math.exp %280 : vector<8x32xf32>
    %cst_170 = arith.constant 1.000000e+00 : f32
    %282 = vector.broadcast %cst_170 : f32 to vector<8x32xf32>
    %283 = arith.addf %282, %281 : vector<8x32xf32>
    %284 = arith.divf %282, %283 : vector<8x32xf32>
    %285 = vector.extract_strided_slice %278 {offsets = [0, 32], sizes = [8, 32], strides = [1, 1]} : vector<8x128xf32> to vector<8x32xf32>
    %286 = arith.negf %285 : vector<8x32xf32>
    %287 = math.exp %286 : vector<8x32xf32>
    %cst_171 = arith.constant 1.000000e+00 : f32
    %288 = vector.broadcast %cst_171 : f32 to vector<8x32xf32>
    %289 = arith.addf %288, %287 : vector<8x32xf32>
    %290 = arith.divf %288, %289 : vector<8x32xf32>
    %291 = vector.extract_strided_slice %278 {offsets = [0, 64], sizes = [8, 32], strides = [1, 1]} : vector<8x128xf32> to vector<8x32xf32>
    %292 = math.tanh %291 : vector<8x32xf32>
    %293 = vector.extract_strided_slice %278 {offsets = [0, 96], sizes = [8, 32], strides = [1, 1]} : vector<8x128xf32> to vector<8x32xf32>
    %294 = arith.negf %293 : vector<8x32xf32>
    %295 = math.exp %294 : vector<8x32xf32>
    %cst_172 = arith.constant 1.000000e+00 : f32
    %296 = vector.broadcast %cst_172 : f32 to vector<8x32xf32>
    %297 = arith.addf %296, %295 : vector<8x32xf32>
    %298 = arith.divf %296, %297 : vector<8x32xf32>
    %c1_173 = arith.constant 1 : index
    %c0_174 = arith.constant 0 : index
    %c0_175 = arith.constant 0 : index
    %299 = vector.load %arg15[%c1_173, %c0_174, %c0_175] : memref<2x8x32xf32, #tpu.memory_space<vmem>>, vector<1x8x32xf32>
    %300 = vector.shape_cast %299 : vector<1x8x32xf32> to vector<8x32xf32>
    %301 = arith.mulf %290, %300 : vector<8x32xf32>
    %302 = arith.mulf %284, %292 : vector<8x32xf32>
    %303 = arith.addf %301, %302 : vector<8x32xf32>
    %304 = math.tanh %303 : vector<8x32xf32>
    %305 = arith.mulf %298, %304 : vector<8x32xf32>
    %c1_176 = arith.constant 1 : index
    %c0_177 = arith.constant 0 : index
    %c0_178 = arith.constant 0 : index
    %306 = vector.load %arg15[%c1_176, %c0_177, %c0_178] : memref<2x8x32xf32, #tpu.memory_space<vmem>>, vector<1x8x32xf32>
    %307 = vector.shape_cast %306 : vector<1x8x32xf32> to vector<8x32xf32>
    %308 = vector.shape_cast %303 : vector<8x32xf32> to vector<1x8x32xf32>
    tpu.vector_store %arg15[%c1_176, %c0_177, %c0_178], %308 {strides = array<i32>} : memref<2x8x32xf32, #tpu.memory_space<vmem>>, vector<1x8x32xf32>,
    %c1_179 = arith.constant 1 : index
    %c0_180 = arith.constant 0 : index
    %c0_181 = arith.constant 0 : index
    %309 = vector.load %arg14[%c1_179, %c0_180, %c0_181] : memref<2x8x32xf32, #tpu.memory_space<vmem>>, vector<1x8x32xf32>
    %310 = vector.shape_cast %309 : vector<1x8x32xf32> to vector<8x32xf32>
    %311 = vector.shape_cast %305 : vector<8x32xf32> to vector<1x8x32xf32>
    tpu.vector_store %arg14[%c1_179, %c0_180, %c0_181], %311 {strides = array<i32>} : memref<2x8x32xf32, #tpu.memory_space<vmem>>, vector<1x8x32xf32>,
    %c3 = arith.constant 3 : index
    %c0_182 = arith.constant 0 : index
    %c0_183 = arith.constant 0 : index
    %312 = vector.load %arg1[%c3, %c0_182, %c0_183] : memref<6x8x1xi32, #tpu.memory_space<vmem>>, vector<1x8x1xi32>
    %313 = vector.shape_cast %312 : vector<1x8x1xi32> to vector<8x1xi32>
    %314 = vector.broadcast %313 : vector<8x1xi32> to vector<8x16xi32>
    %315 = arith.cmpi eq, %314, %8 : vector<8x16xi32>
    %316 = arith.extui %315 : vector<8x16xi1> to vector<8x16xi32>
    %317 = arith.sitofp %316 : vector<8x16xi32> to vector<8x16xf32>
    %c0_184 = arith.constant 0 : index
    %c0_185 = arith.constant 0 : index
    %318 = vector.load %arg3[%c0_184, %c0_185] : memref<16x32xf32, #tpu.memory_space<vmem>>, vector<16x32xf32>
    %cst_186 = arith.constant dense<0.000000e+00> : vector<8x32xf32>
    %319 = tpu.matmul %317, %318, %cst_186 {dimension_numbers = #tpu.dot_dimension_numbers<[1], [0], [0], [1], [0, 0, 1, 1], [], []>} : vector<8x16xf32>, vector<16x32xf32>, vector<8x32xf32> -> vector<8x32xf32>
    %c0_187 = arith.constant 0 : index
    %c0_188 = arith.constant 0 : index
    %c0_189 = arith.constant 0 : index
    %320 = vector.load %arg5[%c0_187, %c0_188, %c0_189] : memref<2x32x128xf32, #tpu.memory_space<vmem>>, vector<1x32x128xf32>
    %321 = vector.shape_cast %320 : vector<1x32x128xf32> to vector<32x128xf32>
    %cst_190 = arith.constant dense<0.000000e+00> : vector<8x128xf32>
    %322 = tpu.matmul %319, %321, %cst_190 {dimension_numbers = #tpu.dot_dimension_numbers<[1], [0], [0], [1], [0, 0, 1, 1], [], []>} : vector<8x32xf32>, vector<32x128xf32>, vector<8x128xf32> -> vector<8x128xf32>
    %c0_191 = arith.constant 0 : index
    %c0_192 = arith.constant 0 : index
    %c0_193 = arith.constant 0 : index
    %323 = vector.load %arg14[%c0_191, %c0_192, %c0_193] : memref<2x8x32xf32, #tpu.memory_space<vmem>>, vector<1x8x32xf32>
    %324 = vector.shape_cast %323 : vector<1x8x32xf32> to vector<8x32xf32>
    %c0_194 = arith.constant 0 : index
    %c0_195 = arith.constant 0 : index
    %c0_196 = arith.constant 0 : index
    %325 = vector.load %arg6[%c0_194, %c0_195, %c0_196] : memref<2x32x128xf32, #tpu.memory_space<vmem>>, vector<1x32x128xf32>
    %326 = vector.shape_cast %325 : vector<1x32x128xf32> to vector<32x128xf32>
    %cst_197 = arith.constant dense<0.000000e+00> : vector<8x128xf32>
    %327 = tpu.matmul %324, %326, %cst_197 {dimension_numbers = #tpu.dot_dimension_numbers<[1], [0], [0], [1], [0, 0, 1, 1], [], []>} : vector<8x32xf32>, vector<32x128xf32>, vector<8x128xf32> -> vector<8x128xf32>
    %328 = arith.addf %322, %327 : vector<8x128xf32>
    %c0_198 = arith.constant 0 : index
    %c0_199 = arith.constant 0 : index
    %c0_200 = arith.constant 0 : index
    %329 = vector.load %arg7[%c0_198, %c0_199, %c0_200] : memref<2x1x128xf32, #tpu.memory_space<vmem>>, vector<1x1x128xf32>
    %330 = vector.shape_cast %329 : vector<1x1x128xf32> to vector<1x128xf32>
    %331 = vector.broadcast %330 : vector<1x128xf32> to vector<8x128xf32>
    %332 = arith.addf %328, %331 : vector<8x128xf32>
    %333 = vector.extract_strided_slice %332 {offsets = [0, 0], sizes = [8, 32], strides = [1, 1]} : vector<8x128xf32> to vector<8x32xf32>
    %334 = arith.negf %333 : vector<8x32xf32>
    %335 = math.exp %334 : vector<8x32xf32>
    %cst_201 = arith.constant 1.000000e+00 : f32
    %336 = vector.broadcast %cst_201 : f32 to vector<8x32xf32>
    %337 = arith.addf %336, %335 : vector<8x32xf32>
    %338 = arith.divf %336, %337 : vector<8x32xf32>
    %339 = vector.extract_strided_slice %332 {offsets = [0, 32], sizes = [8, 32], strides = [1, 1]} : vector<8x128xf32> to vector<8x32xf32>
    %340 = arith.negf %339 : vector<8x32xf32>
    %341 = math.exp %340 : vector<8x32xf32>
    %cst_202 = arith.constant 1.000000e+00 : f32
    %342 = vector.broadcast %cst_202 : f32 to vector<8x32xf32>
    %343 = arith.addf %342, %341 : vector<8x32xf32>
    %344 = arith.divf %342, %343 : vector<8x32xf32>
    %345 = vector.extract_strided_slice %332 {offsets = [0, 64], sizes = [8, 32], strides = [1, 1]} : vector<8x128xf32> to vector<8x32xf32>
    %346 = math.tanh %345 : vector<8x32xf32>
    %347 = vector.extract_strided_slice %332 {offsets = [0, 96], sizes = [8, 32], strides = [1, 1]} : vector<8x128xf32> to vector<8x32xf32>
    %348 = arith.negf %347 : vector<8x32xf32>
    %349 = math.exp %348 : vector<8x32xf32>
    %cst_203 = arith.constant 1.000000e+00 : f32
    %350 = vector.broadcast %cst_203 : f32 to vector<8x32xf32>
    %351 = arith.addf %350, %349 : vector<8x32xf32>
    %352 = arith.divf %350, %351 : vector<8x32xf32>
    %c0_204 = arith.constant 0 : index
    %c0_205 = arith.constant 0 : index
    %c0_206 = arith.constant 0 : index
    %353 = vector.load %arg15[%c0_204, %c0_205, %c0_206] : memref<2x8x32xf32, #tpu.memory_space<vmem>>, vector<1x8x32xf32>
    %354 = vector.shape_cast %353 : vector<1x8x32xf32> to vector<8x32xf32>
    %355 = arith.mulf %344, %354 : vector<8x32xf32>
    %356 = arith.mulf %338, %346 : vector<8x32xf32>
    %357 = arith.addf %355, %356 : vector<8x32xf32>
    %358 = math.tanh %357 : vector<8x32xf32>
    %359 = arith.mulf %352, %358 : vector<8x32xf32>
    %c0_207 = arith.constant 0 : index
    %c0_208 = arith.constant 0 : index
    %c0_209 = arith.constant 0 : index
    %360 = vector.load %arg15[%c0_207, %c0_208, %c0_209] : memref<2x8x32xf32, #tpu.memory_space<vmem>>, vector<1x8x32xf32>
    %361 = vector.shape_cast %360 : vector<1x8x32xf32> to vector<8x32xf32>
    %362 = vector.shape_cast %357 : vector<8x32xf32> to vector<1x8x32xf32>
    tpu.vector_store %arg15[%c0_207, %c0_208, %c0_209], %362 {strides = array<i32>} : memref<2x8x32xf32, #tpu.memory_space<vmem>>, vector<1x8x32xf32>,
    %c0_210 = arith.constant 0 : index
    %c0_211 = arith.constant 0 : index
    %c0_212 = arith.constant 0 : index
    %363 = vector.load %arg14[%c0_210, %c0_211, %c0_212] : memref<2x8x32xf32, #tpu.memory_space<vmem>>, vector<1x8x32xf32>
    %364 = vector.shape_cast %363 : vector<1x8x32xf32> to vector<8x32xf32>
    %365 = vector.shape_cast %359 : vector<8x32xf32> to vector<1x8x32xf32>
    tpu.vector_store %arg14[%c0_210, %c0_211, %c0_212], %365 {strides = array<i32>} : memref<2x8x32xf32, #tpu.memory_space<vmem>>, vector<1x8x32xf32>,
    %c1_213 = arith.constant 1 : index
    %c0_214 = arith.constant 0 : index
    %c0_215 = arith.constant 0 : index
    %366 = vector.load %arg5[%c1_213, %c0_214, %c0_215] : memref<2x32x128xf32, #tpu.memory_space<vmem>>, vector<1x32x128xf32>
    %367 = vector.shape_cast %366 : vector<1x32x128xf32> to vector<32x128xf32>
    %cst_216 = arith.constant dense<0.000000e+00> : vector<8x128xf32>
    %368 = tpu.matmul %359, %367, %cst_216 {dimension_numbers = #tpu.dot_dimension_numbers<[1], [0], [0], [1], [0, 0, 1, 1], [], []>} : vector<8x32xf32>, vector<32x128xf32>, vector<8x128xf32> -> vector<8x128xf32>
    %c1_217 = arith.constant 1 : index
    %c0_218 = arith.constant 0 : index
    %c0_219 = arith.constant 0 : index
    %369 = vector.load %arg14[%c1_217, %c0_218, %c0_219] : memref<2x8x32xf32, #tpu.memory_space<vmem>>, vector<1x8x32xf32>
    %370 = vector.shape_cast %369 : vector<1x8x32xf32> to vector<8x32xf32>
    %c1_220 = arith.constant 1 : index
    %c0_221 = arith.constant 0 : index
    %c0_222 = arith.constant 0 : index
    %371 = vector.load %arg6[%c1_220, %c0_221, %c0_222] : memref<2x32x128xf32, #tpu.memory_space<vmem>>, vector<1x32x128xf32>
    %372 = vector.shape_cast %371 : vector<1x32x128xf32> to vector<32x128xf32>
    %cst_223 = arith.constant dense<0.000000e+00> : vector<8x128xf32>
    %373 = tpu.matmul %370, %372, %cst_223 {dimension_numbers = #tpu.dot_dimension_numbers<[1], [0], [0], [1], [0, 0, 1, 1], [], []>} : vector<8x32xf32>, vector<32x128xf32>, vector<8x128xf32> -> vector<8x128xf32>
    %374 = arith.addf %368, %373 : vector<8x128xf32>
    %c1_224 = arith.constant 1 : index
    %c0_225 = arith.constant 0 : index
    %c0_226 = arith.constant 0 : index
    %375 = vector.load %arg7[%c1_224, %c0_225, %c0_226] : memref<2x1x128xf32, #tpu.memory_space<vmem>>, vector<1x1x128xf32>
    %376 = vector.shape_cast %375 : vector<1x1x128xf32> to vector<1x128xf32>
    %377 = vector.broadcast %376 : vector<1x128xf32> to vector<8x128xf32>
    %378 = arith.addf %374, %377 : vector<8x128xf32>
    %379 = vector.extract_strided_slice %378 {offsets = [0, 0], sizes = [8, 32], strides = [1, 1]} : vector<8x128xf32> to vector<8x32xf32>
    %380 = arith.negf %379 : vector<8x32xf32>
    %381 = math.exp %380 : vector<8x32xf32>
    %cst_227 = arith.constant 1.000000e+00 : f32
    %382 = vector.broadcast %cst_227 : f32 to vector<8x32xf32>
    %383 = arith.addf %382, %381 : vector<8x32xf32>
    %384 = arith.divf %382, %383 : vector<8x32xf32>
    %385 = vector.extract_strided_slice %378 {offsets = [0, 32], sizes = [8, 32], strides = [1, 1]} : vector<8x128xf32> to vector<8x32xf32>
    %386 = arith.negf %385 : vector<8x32xf32>
    %387 = math.exp %386 : vector<8x32xf32>
    %cst_228 = arith.constant 1.000000e+00 : f32
    %388 = vector.broadcast %cst_228 : f32 to vector<8x32xf32>
    %389 = arith.addf %388, %387 : vector<8x32xf32>
    %390 = arith.divf %388, %389 : vector<8x32xf32>
    %391 = vector.extract_strided_slice %378 {offsets = [0, 64], sizes = [8, 32], strides = [1, 1]} : vector<8x128xf32> to vector<8x32xf32>
    %392 = math.tanh %391 : vector<8x32xf32>
    %393 = vector.extract_strided_slice %378 {offsets = [0, 96], sizes = [8, 32], strides = [1, 1]} : vector<8x128xf32> to vector<8x32xf32>
    %394 = arith.negf %393 : vector<8x32xf32>
    %395 = math.exp %394 : vector<8x32xf32>
    %cst_229 = arith.constant 1.000000e+00 : f32
    %396 = vector.broadcast %cst_229 : f32 to vector<8x32xf32>
    %397 = arith.addf %396, %395 : vector<8x32xf32>
    %398 = arith.divf %396, %397 : vector<8x32xf32>
    %c1_230 = arith.constant 1 : index
    %c0_231 = arith.constant 0 : index
    %c0_232 = arith.constant 0 : index
    %399 = vector.load %arg15[%c1_230, %c0_231, %c0_232] : memref<2x8x32xf32, #tpu.memory_space<vmem>>, vector<1x8x32xf32>
    %400 = vector.shape_cast %399 : vector<1x8x32xf32> to vector<8x32xf32>
    %401 = arith.mulf %390, %400 : vector<8x32xf32>
    %402 = arith.mulf %384, %392 : vector<8x32xf32>
    %403 = arith.addf %401, %402 : vector<8x32xf32>
    %404 = math.tanh %403 : vector<8x32xf32>
    %405 = arith.mulf %398, %404 : vector<8x32xf32>
    %c1_233 = arith.constant 1 : index
    %c0_234 = arith.constant 0 : index
    %c0_235 = arith.constant 0 : index
    %406 = vector.load %arg15[%c1_233, %c0_234, %c0_235] : memref<2x8x32xf32, #tpu.memory_space<vmem>>, vector<1x8x32xf32>
    %407 = vector.shape_cast %406 : vector<1x8x32xf32> to vector<8x32xf32>
    %408 = vector.shape_cast %403 : vector<8x32xf32> to vector<1x8x32xf32>
    tpu.vector_store %arg15[%c1_233, %c0_234, %c0_235], %408 {strides = array<i32>} : memref<2x8x32xf32, #tpu.memory_space<vmem>>, vector<1x8x32xf32>,
    %c1_236 = arith.constant 1 : index
    %c0_237 = arith.constant 0 : index
    %c0_238 = arith.constant 0 : index
    %409 = vector.load %arg14[%c1_236, %c0_237, %c0_238] : memref<2x8x32xf32, #tpu.memory_space<vmem>>, vector<1x8x32xf32>
    %410 = vector.shape_cast %409 : vector<1x8x32xf32> to vector<8x32xf32>
    %411 = vector.shape_cast %405 : vector<8x32xf32> to vector<1x8x32xf32>
    tpu.vector_store %arg14[%c1_236, %c0_237, %c0_238], %411 {strides = array<i32>} : memref<2x8x32xf32, #tpu.memory_space<vmem>>, vector<1x8x32xf32>,
    %c4 = arith.constant 4 : index
    %c0_239 = arith.constant 0 : index
    %c0_240 = arith.constant 0 : index
    %412 = vector.load %arg1[%c4, %c0_239, %c0_240] : memref<6x8x1xi32, #tpu.memory_space<vmem>>, vector<1x8x1xi32>
    %413 = vector.shape_cast %412 : vector<1x8x1xi32> to vector<8x1xi32>
    %414 = vector.broadcast %413 : vector<8x1xi32> to vector<8x16xi32>
    %415 = arith.cmpi eq, %414, %8 : vector<8x16xi32>
    %416 = arith.extui %415 : vector<8x16xi1> to vector<8x16xi32>
    %417 = arith.sitofp %416 : vector<8x16xi32> to vector<8x16xf32>
    %c0_241 = arith.constant 0 : index
    %c0_242 = arith.constant 0 : index
    %418 = vector.load %arg3[%c0_241, %c0_242] : memref<16x32xf32, #tpu.memory_space<vmem>>, vector<16x32xf32>
    %cst_243 = arith.constant dense<0.000000e+00> : vector<8x32xf32>
    %419 = tpu.matmul %417, %418, %cst_243 {dimension_numbers = #tpu.dot_dimension_numbers<[1], [0], [0], [1], [0, 0, 1, 1], [], []>} : vector<8x16xf32>, vector<16x32xf32>, vector<8x32xf32> -> vector<8x32xf32>
    %c0_244 = arith.constant 0 : index
    %c0_245 = arith.constant 0 : index
    %c0_246 = arith.constant 0 : index
    %420 = vector.load %arg5[%c0_244, %c0_245, %c0_246] : memref<2x32x128xf32, #tpu.memory_space<vmem>>, vector<1x32x128xf32>
    %421 = vector.shape_cast %420 : vector<1x32x128xf32> to vector<32x128xf32>
    %cst_247 = arith.constant dense<0.000000e+00> : vector<8x128xf32>
    %422 = tpu.matmul %419, %421, %cst_247 {dimension_numbers = #tpu.dot_dimension_numbers<[1], [0], [0], [1], [0, 0, 1, 1], [], []>} : vector<8x32xf32>, vector<32x128xf32>, vector<8x128xf32> -> vector<8x128xf32>
    %c0_248 = arith.constant 0 : index
    %c0_249 = arith.constant 0 : index
    %c0_250 = arith.constant 0 : index
    %423 = vector.load %arg14[%c0_248, %c0_249, %c0_250] : memref<2x8x32xf32, #tpu.memory_space<vmem>>, vector<1x8x32xf32>
    %424 = vector.shape_cast %423 : vector<1x8x32xf32> to vector<8x32xf32>
    %c0_251 = arith.constant 0 : index
    %c0_252 = arith.constant 0 : index
    %c0_253 = arith.constant 0 : index
    %425 = vector.load %arg6[%c0_251, %c0_252, %c0_253] : memref<2x32x128xf32, #tpu.memory_space<vmem>>, vector<1x32x128xf32>
    %426 = vector.shape_cast %425 : vector<1x32x128xf32> to vector<32x128xf32>
    %cst_254 = arith.constant dense<0.000000e+00> : vector<8x128xf32>
    %427 = tpu.matmul %424, %426, %cst_254 {dimension_numbers = #tpu.dot_dimension_numbers<[1], [0], [0], [1], [0, 0, 1, 1], [], []>} : vector<8x32xf32>, vector<32x128xf32>, vector<8x128xf32> -> vector<8x128xf32>
    %428 = arith.addf %422, %427 : vector<8x128xf32>
    %c0_255 = arith.constant 0 : index
    %c0_256 = arith.constant 0 : index
    %c0_257 = arith.constant 0 : index
    %429 = vector.load %arg7[%c0_255, %c0_256, %c0_257] : memref<2x1x128xf32, #tpu.memory_space<vmem>>, vector<1x1x128xf32>
    %430 = vector.shape_cast %429 : vector<1x1x128xf32> to vector<1x128xf32>
    %431 = vector.broadcast %430 : vector<1x128xf32> to vector<8x128xf32>
    %432 = arith.addf %428, %431 : vector<8x128xf32>
    %433 = vector.extract_strided_slice %432 {offsets = [0, 0], sizes = [8, 32], strides = [1, 1]} : vector<8x128xf32> to vector<8x32xf32>
    %434 = arith.negf %433 : vector<8x32xf32>
    %435 = math.exp %434 : vector<8x32xf32>
    %cst_258 = arith.constant 1.000000e+00 : f32
    %436 = vector.broadcast %cst_258 : f32 to vector<8x32xf32>
    %437 = arith.addf %436, %435 : vector<8x32xf32>
    %438 = arith.divf %436, %437 : vector<8x32xf32>
    %439 = vector.extract_strided_slice %432 {offsets = [0, 32], sizes = [8, 32], strides = [1, 1]} : vector<8x128xf32> to vector<8x32xf32>
    %440 = arith.negf %439 : vector<8x32xf32>
    %441 = math.exp %440 : vector<8x32xf32>
    %cst_259 = arith.constant 1.000000e+00 : f32
    %442 = vector.broadcast %cst_259 : f32 to vector<8x32xf32>
    %443 = arith.addf %442, %441 : vector<8x32xf32>
    %444 = arith.divf %442, %443 : vector<8x32xf32>
    %445 = vector.extract_strided_slice %432 {offsets = [0, 64], sizes = [8, 32], strides = [1, 1]} : vector<8x128xf32> to vector<8x32xf32>
    %446 = math.tanh %445 : vector<8x32xf32>
    %447 = vector.extract_strided_slice %432 {offsets = [0, 96], sizes = [8, 32], strides = [1, 1]} : vector<8x128xf32> to vector<8x32xf32>
    %448 = arith.negf %447 : vector<8x32xf32>
    %449 = math.exp %448 : vector<8x32xf32>
    %cst_260 = arith.constant 1.000000e+00 : f32
    %450 = vector.broadcast %cst_260 : f32 to vector<8x32xf32>
    %451 = arith.addf %450, %449 : vector<8x32xf32>
    %452 = arith.divf %450, %451 : vector<8x32xf32>
    %c0_261 = arith.constant 0 : index
    %c0_262 = arith.constant 0 : index
    %c0_263 = arith.constant 0 : index
    %453 = vector.load %arg15[%c0_261, %c0_262, %c0_263] : memref<2x8x32xf32, #tpu.memory_space<vmem>>, vector<1x8x32xf32>
    %454 = vector.shape_cast %453 : vector<1x8x32xf32> to vector<8x32xf32>
    %455 = arith.mulf %444, %454 : vector<8x32xf32>
    %456 = arith.mulf %438, %446 : vector<8x32xf32>
    %457 = arith.addf %455, %456 : vector<8x32xf32>
    %458 = math.tanh %457 : vector<8x32xf32>
    %459 = arith.mulf %452, %458 : vector<8x32xf32>
    %c0_264 = arith.constant 0 : index
    %c0_265 = arith.constant 0 : index
    %c0_266 = arith.constant 0 : index
    %460 = vector.load %arg15[%c0_264, %c0_265, %c0_266] : memref<2x8x32xf32, #tpu.memory_space<vmem>>, vector<1x8x32xf32>
    %461 = vector.shape_cast %460 : vector<1x8x32xf32> to vector<8x32xf32>
    %462 = vector.shape_cast %457 : vector<8x32xf32> to vector<1x8x32xf32>
    tpu.vector_store %arg15[%c0_264, %c0_265, %c0_266], %462 {strides = array<i32>} : memref<2x8x32xf32, #tpu.memory_space<vmem>>, vector<1x8x32xf32>,
    %c0_267 = arith.constant 0 : index
    %c0_268 = arith.constant 0 : index
    %c0_269 = arith.constant 0 : index
    %463 = vector.load %arg14[%c0_267, %c0_268, %c0_269] : memref<2x8x32xf32, #tpu.memory_space<vmem>>, vector<1x8x32xf32>
    %464 = vector.shape_cast %463 : vector<1x8x32xf32> to vector<8x32xf32>
    %465 = vector.shape_cast %459 : vector<8x32xf32> to vector<1x8x32xf32>
    tpu.vector_store %arg14[%c0_267, %c0_268, %c0_269], %465 {strides = array<i32>} : memref<2x8x32xf32, #tpu.memory_space<vmem>>, vector<1x8x32xf32>,
    %c1_270 = arith.constant 1 : index
    %c0_271 = arith.constant 0 : index
    %c0_272 = arith.constant 0 : index
    %466 = vector.load %arg5[%c1_270, %c0_271, %c0_272] : memref<2x32x128xf32, #tpu.memory_space<vmem>>, vector<1x32x128xf32>
    %467 = vector.shape_cast %466 : vector<1x32x128xf32> to vector<32x128xf32>
    %cst_273 = arith.constant dense<0.000000e+00> : vector<8x128xf32>
    %468 = tpu.matmul %459, %467, %cst_273 {dimension_numbers = #tpu.dot_dimension_numbers<[1], [0], [0], [1], [0, 0, 1, 1], [], []>} : vector<8x32xf32>, vector<32x128xf32>, vector<8x128xf32> -> vector<8x128xf32>
    %c1_274 = arith.constant 1 : index
    %c0_275 = arith.constant 0 : index
    %c0_276 = arith.constant 0 : index
    %469 = vector.load %arg14[%c1_274, %c0_275, %c0_276] : memref<2x8x32xf32, #tpu.memory_space<vmem>>, vector<1x8x32xf32>
    %470 = vector.shape_cast %469 : vector<1x8x32xf32> to vector<8x32xf32>
    %c1_277 = arith.constant 1 : index
    %c0_278 = arith.constant 0 : index
    %c0_279 = arith.constant 0 : index
    %471 = vector.load %arg6[%c1_277, %c0_278, %c0_279] : memref<2x32x128xf32, #tpu.memory_space<vmem>>, vector<1x32x128xf32>
    %472 = vector.shape_cast %471 : vector<1x32x128xf32> to vector<32x128xf32>
    %cst_280 = arith.constant dense<0.000000e+00> : vector<8x128xf32>
    %473 = tpu.matmul %470, %472, %cst_280 {dimension_numbers = #tpu.dot_dimension_numbers<[1], [0], [0], [1], [0, 0, 1, 1], [], []>} : vector<8x32xf32>, vector<32x128xf32>, vector<8x128xf32> -> vector<8x128xf32>
    %474 = arith.addf %468, %473 : vector<8x128xf32>
    %c1_281 = arith.constant 1 : index
    %c0_282 = arith.constant 0 : index
    %c0_283 = arith.constant 0 : index
    %475 = vector.load %arg7[%c1_281, %c0_282, %c0_283] : memref<2x1x128xf32, #tpu.memory_space<vmem>>, vector<1x1x128xf32>
    %476 = vector.shape_cast %475 : vector<1x1x128xf32> to vector<1x128xf32>
    %477 = vector.broadcast %476 : vector<1x128xf32> to vector<8x128xf32>
    %478 = arith.addf %474, %477 : vector<8x128xf32>
    %479 = vector.extract_strided_slice %478 {offsets = [0, 0], sizes = [8, 32], strides = [1, 1]} : vector<8x128xf32> to vector<8x32xf32>
    %480 = arith.negf %479 : vector<8x32xf32>
    %481 = math.exp %480 : vector<8x32xf32>
    %cst_284 = arith.constant 1.000000e+00 : f32
    %482 = vector.broadcast %cst_284 : f32 to vector<8x32xf32>
    %483 = arith.addf %482, %481 : vector<8x32xf32>
    %484 = arith.divf %482, %483 : vector<8x32xf32>
    %485 = vector.extract_strided_slice %478 {offsets = [0, 32], sizes = [8, 32], strides = [1, 1]} : vector<8x128xf32> to vector<8x32xf32>
    %486 = arith.negf %485 : vector<8x32xf32>
    %487 = math.exp %486 : vector<8x32xf32>
    %cst_285 = arith.constant 1.000000e+00 : f32
    %488 = vector.broadcast %cst_285 : f32 to vector<8x32xf32>
    %489 = arith.addf %488, %487 : vector<8x32xf32>
    %490 = arith.divf %488, %489 : vector<8x32xf32>
    %491 = vector.extract_strided_slice %478 {offsets = [0, 64], sizes = [8, 32], strides = [1, 1]} : vector<8x128xf32> to vector<8x32xf32>
    %492 = math.tanh %491 : vector<8x32xf32>
    %493 = vector.extract_strided_slice %478 {offsets = [0, 96], sizes = [8, 32], strides = [1, 1]} : vector<8x128xf32> to vector<8x32xf32>
    %494 = arith.negf %493 : vector<8x32xf32>
    %495 = math.exp %494 : vector<8x32xf32>
    %cst_286 = arith.constant 1.000000e+00 : f32
    %496 = vector.broadcast %cst_286 : f32 to vector<8x32xf32>
    %497 = arith.addf %496, %495 : vector<8x32xf32>
    %498 = arith.divf %496, %497 : vector<8x32xf32>
    %c1_287 = arith.constant 1 : index
    %c0_288 = arith.constant 0 : index
    %c0_289 = arith.constant 0 : index
    %499 = vector.load %arg15[%c1_287, %c0_288, %c0_289] : memref<2x8x32xf32, #tpu.memory_space<vmem>>, vector<1x8x32xf32>
    %500 = vector.shape_cast %499 : vector<1x8x32xf32> to vector<8x32xf32>
    %501 = arith.mulf %490, %500 : vector<8x32xf32>
    %502 = arith.mulf %484, %492 : vector<8x32xf32>
    %503 = arith.addf %501, %502 : vector<8x32xf32>
    %504 = math.tanh %503 : vector<8x32xf32>
    %505 = arith.mulf %498, %504 : vector<8x32xf32>
    %c1_290 = arith.constant 1 : index
    %c0_291 = arith.constant 0 : index
    %c0_292 = arith.constant 0 : index
    %506 = vector.load %arg15[%c1_290, %c0_291, %c0_292] : memref<2x8x32xf32, #tpu.memory_space<vmem>>, vector<1x8x32xf32>
    %507 = vector.shape_cast %506 : vector<1x8x32xf32> to vector<8x32xf32>
    %508 = vector.shape_cast %503 : vector<8x32xf32> to vector<1x8x32xf32>
    tpu.vector_store %arg15[%c1_290, %c0_291, %c0_292], %508 {strides = array<i32>} : memref<2x8x32xf32, #tpu.memory_space<vmem>>, vector<1x8x32xf32>,
    %c1_293 = arith.constant 1 : index
    %c0_294 = arith.constant 0 : index
    %c0_295 = arith.constant 0 : index
    %509 = vector.load %arg14[%c1_293, %c0_294, %c0_295] : memref<2x8x32xf32, #tpu.memory_space<vmem>>, vector<1x8x32xf32>
    %510 = vector.shape_cast %509 : vector<1x8x32xf32> to vector<8x32xf32>
    %511 = vector.shape_cast %505 : vector<8x32xf32> to vector<1x8x32xf32>
    tpu.vector_store %arg14[%c1_293, %c0_294, %c0_295], %511 {strides = array<i32>} : memref<2x8x32xf32, #tpu.memory_space<vmem>>, vector<1x8x32xf32>,
    %c5 = arith.constant 5 : index
    %c0_296 = arith.constant 0 : index
    %c0_297 = arith.constant 0 : index
    %512 = vector.load %arg1[%c5, %c0_296, %c0_297] : memref<6x8x1xi32, #tpu.memory_space<vmem>>, vector<1x8x1xi32>
    %513 = vector.shape_cast %512 : vector<1x8x1xi32> to vector<8x1xi32>
    %514 = vector.broadcast %513 : vector<8x1xi32> to vector<8x16xi32>
    %515 = arith.cmpi eq, %514, %8 : vector<8x16xi32>
    %516 = arith.extui %515 : vector<8x16xi1> to vector<8x16xi32>
    %517 = arith.sitofp %516 : vector<8x16xi32> to vector<8x16xf32>
    %c0_298 = arith.constant 0 : index
    %c0_299 = arith.constant 0 : index
    %518 = vector.load %arg3[%c0_298, %c0_299] : memref<16x32xf32, #tpu.memory_space<vmem>>, vector<16x32xf32>
    %cst_300 = arith.constant dense<0.000000e+00> : vector<8x32xf32>
    %519 = tpu.matmul %517, %518, %cst_300 {dimension_numbers = #tpu.dot_dimension_numbers<[1], [0], [0], [1], [0, 0, 1, 1], [], []>} : vector<8x16xf32>, vector<16x32xf32>, vector<8x32xf32> -> vector<8x32xf32>
    %c0_301 = arith.constant 0 : index
    %c0_302 = arith.constant 0 : index
    %c0_303 = arith.constant 0 : index
    %520 = vector.load %arg5[%c0_301, %c0_302, %c0_303] : memref<2x32x128xf32, #tpu.memory_space<vmem>>, vector<1x32x128xf32>
    %521 = vector.shape_cast %520 : vector<1x32x128xf32> to vector<32x128xf32>
    %cst_304 = arith.constant dense<0.000000e+00> : vector<8x128xf32>
    %522 = tpu.matmul %519, %521, %cst_304 {dimension_numbers = #tpu.dot_dimension_numbers<[1], [0], [0], [1], [0, 0, 1, 1], [], []>} : vector<8x32xf32>, vector<32x128xf32>, vector<8x128xf32> -> vector<8x128xf32>
    %c0_305 = arith.constant 0 : index
    %c0_306 = arith.constant 0 : index
    %c0_307 = arith.constant 0 : index
    %523 = vector.load %arg14[%c0_305, %c0_306, %c0_307] : memref<2x8x32xf32, #tpu.memory_space<vmem>>, vector<1x8x32xf32>
    %524 = vector.shape_cast %523 : vector<1x8x32xf32> to vector<8x32xf32>
    %c0_308 = arith.constant 0 : index
    %c0_309 = arith.constant 0 : index
    %c0_310 = arith.constant 0 : index
    %525 = vector.load %arg6[%c0_308, %c0_309, %c0_310] : memref<2x32x128xf32, #tpu.memory_space<vmem>>, vector<1x32x128xf32>
    %526 = vector.shape_cast %525 : vector<1x32x128xf32> to vector<32x128xf32>
    %cst_311 = arith.constant dense<0.000000e+00> : vector<8x128xf32>
    %527 = tpu.matmul %524, %526, %cst_311 {dimension_numbers = #tpu.dot_dimension_numbers<[1], [0], [0], [1], [0, 0, 1, 1], [], []>} : vector<8x32xf32>, vector<32x128xf32>, vector<8x128xf32> -> vector<8x128xf32>
    %528 = arith.addf %522, %527 : vector<8x128xf32>
    %c0_312 = arith.constant 0 : index
    %c0_313 = arith.constant 0 : index
    %c0_314 = arith.constant 0 : index
    %529 = vector.load %arg7[%c0_312, %c0_313, %c0_314] : memref<2x1x128xf32, #tpu.memory_space<vmem>>, vector<1x1x128xf32>
    %530 = vector.shape_cast %529 : vector<1x1x128xf32> to vector<1x128xf32>
    %531 = vector.broadcast %530 : vector<1x128xf32> to vector<8x128xf32>
    %532 = arith.addf %528, %531 : vector<8x128xf32>
    %533 = vector.extract_strided_slice %532 {offsets = [0, 0], sizes = [8, 32], strides = [1, 1]} : vector<8x128xf32> to vector<8x32xf32>
    %534 = arith.negf %533 : vector<8x32xf32>
    %535 = math.exp %534 : vector<8x32xf32>
    %cst_315 = arith.constant 1.000000e+00 : f32
    %536 = vector.broadcast %cst_315 : f32 to vector<8x32xf32>
    %537 = arith.addf %536, %535 : vector<8x32xf32>
    %538 = arith.divf %536, %537 : vector<8x32xf32>
    %539 = vector.extract_strided_slice %532 {offsets = [0, 32], sizes = [8, 32], strides = [1, 1]} : vector<8x128xf32> to vector<8x32xf32>
    %540 = arith.negf %539 : vector<8x32xf32>
    %541 = math.exp %540 : vector<8x32xf32>
    %cst_316 = arith.constant 1.000000e+00 : f32
    %542 = vector.broadcast %cst_316 : f32 to vector<8x32xf32>
    %543 = arith.addf %542, %541 : vector<8x32xf32>
    %544 = arith.divf %542, %543 : vector<8x32xf32>
    %545 = vector.extract_strided_slice %532 {offsets = [0, 64], sizes = [8, 32], strides = [1, 1]} : vector<8x128xf32> to vector<8x32xf32>
    %546 = math.tanh %545 : vector<8x32xf32>
    %547 = vector.extract_strided_slice %532 {offsets = [0, 96], sizes = [8, 32], strides = [1, 1]} : vector<8x128xf32> to vector<8x32xf32>
    %548 = arith.negf %547 : vector<8x32xf32>
    %549 = math.exp %548 : vector<8x32xf32>
    %cst_317 = arith.constant 1.000000e+00 : f32
    %550 = vector.broadcast %cst_317 : f32 to vector<8x32xf32>
    %551 = arith.addf %550, %549 : vector<8x32xf32>
    %552 = arith.divf %550, %551 : vector<8x32xf32>
    %c0_318 = arith.constant 0 : index
    %c0_319 = arith.constant 0 : index
    %c0_320 = arith.constant 0 : index
    %553 = vector.load %arg15[%c0_318, %c0_319, %c0_320] : memref<2x8x32xf32, #tpu.memory_space<vmem>>, vector<1x8x32xf32>
    %554 = vector.shape_cast %553 : vector<1x8x32xf32> to vector<8x32xf32>
    %555 = arith.mulf %544, %554 : vector<8x32xf32>
    %556 = arith.mulf %538, %546 : vector<8x32xf32>
    %557 = arith.addf %555, %556 : vector<8x32xf32>
    %558 = math.tanh %557 : vector<8x32xf32>
    %559 = arith.mulf %552, %558 : vector<8x32xf32>
    %c0_321 = arith.constant 0 : index
    %c0_322 = arith.constant 0 : index
    %c0_323 = arith.constant 0 : index
    %560 = vector.load %arg15[%c0_321, %c0_322, %c0_323] : memref<2x8x32xf32, #tpu.memory_space<vmem>>, vector<1x8x32xf32>
    %561 = vector.shape_cast %560 : vector<1x8x32xf32> to vector<8x32xf32>
    %562 = vector.shape_cast %557 : vector<8x32xf32> to vector<1x8x32xf32>
    tpu.vector_store %arg15[%c0_321, %c0_322, %c0_323], %562 {strides = array<i32>} : memref<2x8x32xf32, #tpu.memory_space<vmem>>, vector<1x8x32xf32>,
    %c0_324 = arith.constant 0 : index
    %c0_325 = arith.constant 0 : index
    %c0_326 = arith.constant 0 : index
    %563 = vector.load %arg14[%c0_324, %c0_325, %c0_326] : memref<2x8x32xf32, #tpu.memory_space<vmem>>, vector<1x8x32xf32>
    %564 = vector.shape_cast %563 : vector<1x8x32xf32> to vector<8x32xf32>
    %565 = vector.shape_cast %559 : vector<8x32xf32> to vector<1x8x32xf32>
    tpu.vector_store %arg14[%c0_324, %c0_325, %c0_326], %565 {strides = array<i32>} : memref<2x8x32xf32, #tpu.memory_space<vmem>>, vector<1x8x32xf32>,
    %c1_327 = arith.constant 1 : index
    %c0_328 = arith.constant 0 : index
    %c0_329 = arith.constant 0 : index
    %566 = vector.load %arg5[%c1_327, %c0_328, %c0_329] : memref<2x32x128xf32, #tpu.memory_space<vmem>>, vector<1x32x128xf32>
    %567 = vector.shape_cast %566 : vector<1x32x128xf32> to vector<32x128xf32>
    %cst_330 = arith.constant dense<0.000000e+00> : vector<8x128xf32>
    %568 = tpu.matmul %559, %567, %cst_330 {dimension_numbers = #tpu.dot_dimension_numbers<[1], [0], [0], [1], [0, 0, 1, 1], [], []>} : vector<8x32xf32>, vector<32x128xf32>, vector<8x128xf32> -> vector<8x128xf32>
    %c1_331 = arith.constant 1 : index
    %c0_332 = arith.constant 0 : index
    %c0_333 = arith.constant 0 : index
    %569 = vector.load %arg14[%c1_331, %c0_332, %c0_333] : memref<2x8x32xf32, #tpu.memory_space<vmem>>, vector<1x8x32xf32>
    %570 = vector.shape_cast %569 : vector<1x8x32xf32> to vector<8x32xf32>
    %c1_334 = arith.constant 1 : index
    %c0_335 = arith.constant 0 : index
    %c0_336 = arith.constant 0 : index
    %571 = vector.load %arg6[%c1_334, %c0_335, %c0_336] : memref<2x32x128xf32, #tpu.memory_space<vmem>>, vector<1x32x128xf32>
    %572 = vector.shape_cast %571 : vector<1x32x128xf32> to vector<32x128xf32>
    %cst_337 = arith.constant dense<0.000000e+00> : vector<8x128xf32>
    %573 = tpu.matmul %570, %572, %cst_337 {dimension_numbers = #tpu.dot_dimension_numbers<[1], [0], [0], [1], [0, 0, 1, 1], [], []>} : vector<8x32xf32>, vector<32x128xf32>, vector<8x128xf32> -> vector<8x128xf32>
    %574 = arith.addf %568, %573 : vector<8x128xf32>
    %c1_338 = arith.constant 1 : index
    %c0_339 = arith.constant 0 : index
    %c0_340 = arith.constant 0 : index
    %575 = vector.load %arg7[%c1_338, %c0_339, %c0_340] : memref<2x1x128xf32, #tpu.memory_space<vmem>>, vector<1x1x128xf32>
    %576 = vector.shape_cast %575 : vector<1x1x128xf32> to vector<1x128xf32>
    %577 = vector.broadcast %576 : vector<1x128xf32> to vector<8x128xf32>
    %578 = arith.addf %574, %577 : vector<8x128xf32>
    %579 = vector.extract_strided_slice %578 {offsets = [0, 0], sizes = [8, 32], strides = [1, 1]} : vector<8x128xf32> to vector<8x32xf32>
    %580 = arith.negf %579 : vector<8x32xf32>
    %581 = math.exp %580 : vector<8x32xf32>
    %cst_341 = arith.constant 1.000000e+00 : f32
    %582 = vector.broadcast %cst_341 : f32 to vector<8x32xf32>
    %583 = arith.addf %582, %581 : vector<8x32xf32>
    %584 = arith.divf %582, %583 : vector<8x32xf32>
    %585 = vector.extract_strided_slice %578 {offsets = [0, 32], sizes = [8, 32], strides = [1, 1]} : vector<8x128xf32> to vector<8x32xf32>
    %586 = arith.negf %585 : vector<8x32xf32>
    %587 = math.exp %586 : vector<8x32xf32>
    %cst_342 = arith.constant 1.000000e+00 : f32
    %588 = vector.broadcast %cst_342 : f32 to vector<8x32xf32>
    %589 = arith.addf %588, %587 : vector<8x32xf32>
    %590 = arith.divf %588, %589 : vector<8x32xf32>
    %591 = vector.extract_strided_slice %578 {offsets = [0, 64], sizes = [8, 32], strides = [1, 1]} : vector<8x128xf32> to vector<8x32xf32>
    %592 = math.tanh %591 : vector<8x32xf32>
    %593 = vector.extract_strided_slice %578 {offsets = [0, 96], sizes = [8, 32], strides = [1, 1]} : vector<8x128xf32> to vector<8x32xf32>
    %594 = arith.negf %593 : vector<8x32xf32>
    %595 = math.exp %594 : vector<8x32xf32>
    %cst_343 = arith.constant 1.000000e+00 : f32
    %596 = vector.broadcast %cst_343 : f32 to vector<8x32xf32>
    %597 = arith.addf %596, %595 : vector<8x32xf32>
    %598 = arith.divf %596, %597 : vector<8x32xf32>
    %c1_344 = arith.constant 1 : index
    %c0_345 = arith.constant 0 : index
    %c0_346 = arith.constant 0 : index
    %599 = vector.load %arg15[%c1_344, %c0_345, %c0_346] : memref<2x8x32xf32, #tpu.memory_space<vmem>>, vector<1x8x32xf32>
    %600 = vector.shape_cast %599 : vector<1x8x32xf32> to vector<8x32xf32>
    %601 = arith.mulf %590, %600 : vector<8x32xf32>
    %602 = arith.mulf %584, %592 : vector<8x32xf32>
    %603 = arith.addf %601, %602 : vector<8x32xf32>
    %604 = math.tanh %603 : vector<8x32xf32>
    %605 = arith.mulf %598, %604 : vector<8x32xf32>
    %c1_347 = arith.constant 1 : index
    %c0_348 = arith.constant 0 : index
    %c0_349 = arith.constant 0 : index
    %606 = vector.load %arg15[%c1_347, %c0_348, %c0_349] : memref<2x8x32xf32, #tpu.memory_space<vmem>>, vector<1x8x32xf32>
    %607 = vector.shape_cast %606 : vector<1x8x32xf32> to vector<8x32xf32>
    %608 = vector.shape_cast %603 : vector<8x32xf32> to vector<1x8x32xf32>
    tpu.vector_store %arg15[%c1_347, %c0_348, %c0_349], %608 {strides = array<i32>} : memref<2x8x32xf32, #tpu.memory_space<vmem>>, vector<1x8x32xf32>,
    %c1_350 = arith.constant 1 : index
    %c0_351 = arith.constant 0 : index
    %c0_352 = arith.constant 0 : index
    %609 = vector.load %arg14[%c1_350, %c0_351, %c0_352] : memref<2x8x32xf32, #tpu.memory_space<vmem>>, vector<1x8x32xf32>
    %610 = vector.shape_cast %609 : vector<1x8x32xf32> to vector<8x32xf32>
    %611 = vector.shape_cast %605 : vector<8x32xf32> to vector<1x8x32xf32>
    tpu.vector_store %arg14[%c1_350, %c0_351, %c0_352], %611 {strides = array<i32>} : memref<2x8x32xf32, #tpu.memory_space<vmem>>, vector<1x8x32xf32>,
    %c0_353 = arith.constant 0 : index
    %c0_354 = arith.constant 0 : index
    %c0_355 = arith.constant 0 : index
    %612 = vector.load %arg2[%c0_353, %c0_354, %c0_355] : memref<8x8x1xi32, #tpu.memory_space<vmem>>, vector<1x8x1xi32>
    %613 = vector.shape_cast %612 : vector<1x8x1xi32> to vector<8x1xi32>
    %c0_356 = arith.constant 0 : index
    %c0_357 = arith.constant 0 : index
    %614 = vector.load %arg16[%c0_356, %c0_357] : memref<8x1xi32, #tpu.memory_space<vmem>>, vector<8x1xi32>
    tpu.vector_store %arg16[%c0_356, %c0_357], %613 {strides = array<i32>} : memref<8x1xi32, #tpu.memory_space<vmem>>, vector<8x1xi32>,
    %c0_358 = arith.constant 0 : index
    %c0_359 = arith.constant 0 : index
    %615 = vector.load %arg16[%c0_358, %c0_359] : memref<8x1xi32, #tpu.memory_space<vmem>>, vector<8x1xi32>
    %616 = vector.broadcast %615 : vector<8x1xi32> to vector<8x16xi32>
    %617 = arith.cmpi eq, %616, %9 : vector<8x16xi32>
    %618 = arith.extui %617 : vector<8x16xi1> to vector<8x16xi32>
    %619 = arith.sitofp %618 : vector<8x16xi32> to vector<8x16xf32>
    %c0_360 = arith.constant 0 : index
    %c0_361 = arith.constant 0 : index
    %620 = vector.load %arg4[%c0_360, %c0_361] : memref<16x32xf32, #tpu.memory_space<vmem>>, vector<16x32xf32>
    %cst_362 = arith.constant dense<0.000000e+00> : vector<8x32xf32>
    %621 = tpu.matmul %619, %620, %cst_362 {dimension_numbers = #tpu.dot_dimension_numbers<[1], [0], [0], [1], [0, 0, 1, 1], [], []>} : vector<8x16xf32>, vector<16x32xf32>, vector<8x32xf32> -> vector<8x32xf32>
    %c0_363 = arith.constant 0 : index
    %c0_364 = arith.constant 0 : index
    %c0_365 = arith.constant 0 : index
    %622 = vector.load %arg8[%c0_363, %c0_364, %c0_365] : memref<2x32x128xf32, #tpu.memory_space<vmem>>, vector<1x32x128xf32>
    %623 = vector.shape_cast %622 : vector<1x32x128xf32> to vector<32x128xf32>
    %cst_366 = arith.constant dense<0.000000e+00> : vector<8x128xf32>
    %624 = tpu.matmul %621, %623, %cst_366 {dimension_numbers = #tpu.dot_dimension_numbers<[1], [0], [0], [1], [0, 0, 1, 1], [], []>} : vector<8x32xf32>, vector<32x128xf32>, vector<8x128xf32> -> vector<8x128xf32>
    %c0_367 = arith.constant 0 : index
    %c0_368 = arith.constant 0 : index
    %c0_369 = arith.constant 0 : index
    %625 = vector.load %arg14[%c0_367, %c0_368, %c0_369] : memref<2x8x32xf32, #tpu.memory_space<vmem>>, vector<1x8x32xf32>
    %626 = vector.shape_cast %625 : vector<1x8x32xf32> to vector<8x32xf32>
    %c0_370 = arith.constant 0 : index
    %c0_371 = arith.constant 0 : index
    %c0_372 = arith.constant 0 : index
    %627 = vector.load %arg9[%c0_370, %c0_371, %c0_372] : memref<2x32x128xf32, #tpu.memory_space<vmem>>, vector<1x32x128xf32>
    %628 = vector.shape_cast %627 : vector<1x32x128xf32> to vector<32x128xf32>
    %cst_373 = arith.constant dense<0.000000e+00> : vector<8x128xf32>
    %629 = tpu.matmul %626, %628, %cst_373 {dimension_numbers = #tpu.dot_dimension_numbers<[1], [0], [0], [1], [0, 0, 1, 1], [], []>} : vector<8x32xf32>, vector<32x128xf32>, vector<8x128xf32> -> vector<8x128xf32>
    %630 = arith.addf %624, %629 : vector<8x128xf32>
    %c0_374 = arith.constant 0 : index
    %c0_375 = arith.constant 0 : index
    %c0_376 = arith.constant 0 : index
    %631 = vector.load %arg10[%c0_374, %c0_375, %c0_376] : memref<2x1x128xf32, #tpu.memory_space<vmem>>, vector<1x1x128xf32>
    %632 = vector.shape_cast %631 : vector<1x1x128xf32> to vector<1x128xf32>
    %633 = vector.broadcast %632 : vector<1x128xf32> to vector<8x128xf32>
    %634 = arith.addf %630, %633 : vector<8x128xf32>
    %635 = vector.extract_strided_slice %634 {offsets = [0, 0], sizes = [8, 32], strides = [1, 1]} : vector<8x128xf32> to vector<8x32xf32>
    %636 = arith.negf %635 : vector<8x32xf32>
    %637 = math.exp %636 : vector<8x32xf32>
    %cst_377 = arith.constant 1.000000e+00 : f32
    %638 = vector.broadcast %cst_377 : f32 to vector<8x32xf32>
    %639 = arith.addf %638, %637 : vector<8x32xf32>
    %640 = arith.divf %638, %639 : vector<8x32xf32>
    %641 = vector.extract_strided_slice %634 {offsets = [0, 32], sizes = [8, 32], strides = [1, 1]} : vector<8x128xf32> to vector<8x32xf32>
    %642 = arith.negf %641 : vector<8x32xf32>
    %643 = math.exp %642 : vector<8x32xf32>
    %cst_378 = arith.constant 1.000000e+00 : f32
    %644 = vector.broadcast %cst_378 : f32 to vector<8x32xf32>
    %645 = arith.addf %644, %643 : vector<8x32xf32>
    %646 = arith.divf %644, %645 : vector<8x32xf32>
    %647 = vector.extract_strided_slice %634 {offsets = [0, 64], sizes = [8, 32], strides = [1, 1]} : vector<8x128xf32> to vector<8x32xf32>
    %648 = math.tanh %647 : vector<8x32xf32>
    %649 = vector.extract_strided_slice %634 {offsets = [0, 96], sizes = [8, 32], strides = [1, 1]} : vector<8x128xf32> to vector<8x32xf32>
    %650 = arith.negf %649 : vector<8x32xf32>
    %651 = math.exp %650 : vector<8x32xf32>
    %cst_379 = arith.constant 1.000000e+00 : f32
    %652 = vector.broadcast %cst_379 : f32 to vector<8x32xf32>
    %653 = arith.addf %652, %651 : vector<8x32xf32>
    %654 = arith.divf %652, %653 : vector<8x32xf32>
    %c0_380 = arith.constant 0 : index
    %c0_381 = arith.constant 0 : index
    %c0_382 = arith.constant 0 : index
    %655 = vector.load %arg15[%c0_380, %c0_381, %c0_382] : memref<2x8x32xf32, #tpu.memory_space<vmem>>, vector<1x8x32xf32>
    %656 = vector.shape_cast %655 : vector<1x8x32xf32> to vector<8x32xf32>
    %657 = arith.mulf %646, %656 : vector<8x32xf32>
    %658 = arith.mulf %640, %648 : vector<8x32xf32>
    %659 = arith.addf %657, %658 : vector<8x32xf32>
    %660 = math.tanh %659 : vector<8x32xf32>
    %661 = arith.mulf %654, %660 : vector<8x32xf32>
    %c0_383 = arith.constant 0 : index
    %c0_384 = arith.constant 0 : index
    %c0_385 = arith.constant 0 : index
    %662 = vector.load %arg15[%c0_383, %c0_384, %c0_385] : memref<2x8x32xf32, #tpu.memory_space<vmem>>, vector<1x8x32xf32>
    %663 = vector.shape_cast %662 : vector<1x8x32xf32> to vector<8x32xf32>
    %664 = vector.shape_cast %659 : vector<8x32xf32> to vector<1x8x32xf32>
    tpu.vector_store %arg15[%c0_383, %c0_384, %c0_385], %664 {strides = array<i32>} : memref<2x8x32xf32, #tpu.memory_space<vmem>>, vector<1x8x32xf32>,
    %c0_386 = arith.constant 0 : index
    %c0_387 = arith.constant 0 : index
    %c0_388 = arith.constant 0 : index
    %665 = vector.load %arg14[%c0_386, %c0_387, %c0_388] : memref<2x8x32xf32, #tpu.memory_space<vmem>>, vector<1x8x32xf32>
    %666 = vector.shape_cast %665 : vector<1x8x32xf32> to vector<8x32xf32>
    %667 = vector.shape_cast %661 : vector<8x32xf32> to vector<1x8x32xf32>
    tpu.vector_store %arg14[%c0_386, %c0_387, %c0_388], %667 {strides = array<i32>} : memref<2x8x32xf32, #tpu.memory_space<vmem>>, vector<1x8x32xf32>,
    %c1_389 = arith.constant 1 : index
    %c0_390 = arith.constant 0 : index
    %c0_391 = arith.constant 0 : index
    %668 = vector.load %arg8[%c1_389, %c0_390, %c0_391] : memref<2x32x128xf32, #tpu.memory_space<vmem>>, vector<1x32x128xf32>
    %669 = vector.shape_cast %668 : vector<1x32x128xf32> to vector<32x128xf32>
    %cst_392 = arith.constant dense<0.000000e+00> : vector<8x128xf32>
    %670 = tpu.matmul %661, %669, %cst_392 {dimension_numbers = #tpu.dot_dimension_numbers<[1], [0], [0], [1], [0, 0, 1, 1], [], []>} : vector<8x32xf32>, vector<32x128xf32>, vector<8x128xf32> -> vector<8x128xf32>
    %c1_393 = arith.constant 1 : index
    %c0_394 = arith.constant 0 : index
    %c0_395 = arith.constant 0 : index
    %671 = vector.load %arg14[%c1_393, %c0_394, %c0_395] : memref<2x8x32xf32, #tpu.memory_space<vmem>>, vector<1x8x32xf32>
    %672 = vector.shape_cast %671 : vector<1x8x32xf32> to vector<8x32xf32>
    %c1_396 = arith.constant 1 : index
    %c0_397 = arith.constant 0 : index
    %c0_398 = arith.constant 0 : index
    %673 = vector.load %arg9[%c1_396, %c0_397, %c0_398] : memref<2x32x128xf32, #tpu.memory_space<vmem>>, vector<1x32x128xf32>
    %674 = vector.shape_cast %673 : vector<1x32x128xf32> to vector<32x128xf32>
    %cst_399 = arith.constant dense<0.000000e+00> : vector<8x128xf32>
    %675 = tpu.matmul %672, %674, %cst_399 {dimension_numbers = #tpu.dot_dimension_numbers<[1], [0], [0], [1], [0, 0, 1, 1], [], []>} : vector<8x32xf32>, vector<32x128xf32>, vector<8x128xf32> -> vector<8x128xf32>
    %676 = arith.addf %670, %675 : vector<8x128xf32>
    %c1_400 = arith.constant 1 : index
    %c0_401 = arith.constant 0 : index
    %c0_402 = arith.constant 0 : index
    %677 = vector.load %arg10[%c1_400, %c0_401, %c0_402] : memref<2x1x128xf32, #tpu.memory_space<vmem>>, vector<1x1x128xf32>
    %678 = vector.shape_cast %677 : vector<1x1x128xf32> to vector<1x128xf32>
    %679 = vector.broadcast %678 : vector<1x128xf32> to vector<8x128xf32>
    %680 = arith.addf %676, %679 : vector<8x128xf32>
    %681 = vector.extract_strided_slice %680 {offsets = [0, 0], sizes = [8, 32], strides = [1, 1]} : vector<8x128xf32> to vector<8x32xf32>
    %682 = arith.negf %681 : vector<8x32xf32>
    %683 = math.exp %682 : vector<8x32xf32>
    %cst_403 = arith.constant 1.000000e+00 : f32
    %684 = vector.broadcast %cst_403 : f32 to vector<8x32xf32>
    %685 = arith.addf %684, %683 : vector<8x32xf32>
    %686 = arith.divf %684, %685 : vector<8x32xf32>
    %687 = vector.extract_strided_slice %680 {offsets = [0, 32], sizes = [8, 32], strides = [1, 1]} : vector<8x128xf32> to vector<8x32xf32>
    %688 = arith.negf %687 : vector<8x32xf32>
    %689 = math.exp %688 : vector<8x32xf32>
    %cst_404 = arith.constant 1.000000e+00 : f32
    %690 = vector.broadcast %cst_404 : f32 to vector<8x32xf32>
    %691 = arith.addf %690, %689 : vector<8x32xf32>
    %692 = arith.divf %690, %691 : vector<8x32xf32>
    %693 = vector.extract_strided_slice %680 {offsets = [0, 64], sizes = [8, 32], strides = [1, 1]} : vector<8x128xf32> to vector<8x32xf32>
    %694 = math.tanh %693 : vector<8x32xf32>
    %695 = vector.extract_strided_slice %680 {offsets = [0, 96], sizes = [8, 32], strides = [1, 1]} : vector<8x128xf32> to vector<8x32xf32>
    %696 = arith.negf %695 : vector<8x32xf32>
    %697 = math.exp %696 : vector<8x32xf32>
    %cst_405 = arith.constant 1.000000e+00 : f32
    %698 = vector.broadcast %cst_405 : f32 to vector<8x32xf32>
    %699 = arith.addf %698, %697 : vector<8x32xf32>
    %700 = arith.divf %698, %699 : vector<8x32xf32>
    %c1_406 = arith.constant 1 : index
    %c0_407 = arith.constant 0 : index
    %c0_408 = arith.constant 0 : index
    %701 = vector.load %arg15[%c1_406, %c0_407, %c0_408] : memref<2x8x32xf32, #tpu.memory_space<vmem>>, vector<1x8x32xf32>
    %702 = vector.shape_cast %701 : vector<1x8x32xf32> to vector<8x32xf32>
    %703 = arith.mulf %692, %702 : vector<8x32xf32>
    %704 = arith.mulf %686, %694 : vector<8x32xf32>
    %705 = arith.addf %703, %704 : vector<8x32xf32>
    %706 = math.tanh %705 : vector<8x32xf32>
    %707 = arith.mulf %700, %706 : vector<8x32xf32>
    %c1_409 = arith.constant 1 : index
    %c0_410 = arith.constant 0 : index
    %c0_411 = arith.constant 0 : index
    %708 = vector.load %arg15[%c1_409, %c0_410, %c0_411] : memref<2x8x32xf32, #tpu.memory_space<vmem>>, vector<1x8x32xf32>
    %709 = vector.shape_cast %708 : vector<1x8x32xf32> to vector<8x32xf32>
    %710 = vector.shape_cast %705 : vector<8x32xf32> to vector<1x8x32xf32>
    tpu.vector_store %arg15[%c1_409, %c0_410, %c0_411], %710 {strides = array<i32>} : memref<2x8x32xf32, #tpu.memory_space<vmem>>, vector<1x8x32xf32>,
    %c1_412 = arith.constant 1 : index
    %c0_413 = arith.constant 0 : index
    %c0_414 = arith.constant 0 : index
    %711 = vector.load %arg14[%c1_412, %c0_413, %c0_414] : memref<2x8x32xf32, #tpu.memory_space<vmem>>, vector<1x8x32xf32>
    %712 = vector.shape_cast %711 : vector<1x8x32xf32> to vector<8x32xf32>
    %713 = vector.shape_cast %707 : vector<8x32xf32> to vector<1x8x32xf32>
    tpu.vector_store %arg14[%c1_412, %c0_413, %c0_414], %713 {strides = array<i32>} : memref<2x8x32xf32, #tpu.memory_space<vmem>>, vector<1x8x32xf32>,
    %c0_415 = arith.constant 0 : index
    %c0_416 = arith.constant 0 : index
    %714 = vector.load %arg11[%c0_415, %c0_416] : memref<32x128xf32, #tpu.memory_space<vmem>>, vector<32x128xf32>
    %cst_417 = arith.constant dense<0.000000e+00> : vector<8x128xf32>
    %715 = tpu.matmul %707, %714, %cst_417 {dimension_numbers = #tpu.dot_dimension_numbers<[1], [0], [0], [1], [0, 0, 1, 1], [], []>} : vector<8x32xf32>, vector<32x128xf32>, vector<8x128xf32> -> vector<8x128xf32>
    %c0_418 = arith.constant 0 : index
    %c0_419 = arith.constant 0 : index
    %716 = vector.load %arg12[%c0_418, %c0_419] : memref<1x128xf32, #tpu.memory_space<vmem>>, vector<1x128xf32>
    %717 = vector.broadcast %716 : vector<1x128xf32> to vector<8x128xf32>
    %718 = arith.addf %715, %717 : vector<8x128xf32>
    %c1_420 = arith.constant 1 : index
    %c0_421 = arith.constant 0 : index
    %c0_422 = arith.constant 0 : index
    %719 = vector.load %arg13[%c1_420, %c0_421, %c0_422] : memref<8x8x128xf32, #tpu.memory_space<vmem>>, vector<1x8x128xf32>
    %720 = vector.shape_cast %719 : vector<1x8x128xf32> to vector<8x128xf32>
    %721 = vector.shape_cast %718 : vector<8x128xf32> to vector<1x8x128xf32>
    tpu.vector_store %arg13[%c1_420, %c0_421, %c0_422], %721 {strides = array<i32>} : memref<8x8x128xf32, #tpu.memory_space<vmem>>, vector<1x8x128xf32>,
    %c1_423 = arith.constant 1 : index
    %722 = memref.load %arg0[%c1_423] : memref<8xi32, #tpu.memory_space<smem>>
    %c0_i32 = arith.constant 0 : i32
    %723 = arith.cmpi sgt, %722, %c0_i32 : i32
    %724 = arith.extui %723 : i1 to i32
    %c0_i32_424 = arith.constant 0 : i32
    %725 = arith.cmpi ne, %724, %c0_i32_424 : i32
    scf.if %725 {
      %c1_846 = arith.constant 1 : index
      %c0_847 = arith.constant 0 : index
      %c0_848 = arith.constant 0 : index
      %1412 = vector.load %arg2[%c1_846, %c0_847, %c0_848] : memref<8x8x1xi32, #tpu.memory_space<vmem>>, vector<1x8x1xi32>
      %1413 = vector.shape_cast %1412 : vector<1x8x1xi32> to vector<8x1xi32>
      %c0_849 = arith.constant 0 : index
      %c0_850 = arith.constant 0 : index
      %1414 = vector.load %arg16[%c0_849, %c0_850] : memref<8x1xi32, #tpu.memory_space<vmem>>, vector<8x1xi32>
      tpu.vector_store %arg16[%c0_849, %c0_850], %1413 {strides = array<i32>} : memref<8x1xi32, #tpu.memory_space<vmem>>, vector<8x1xi32>,
    } else {
    }
    %c1_425 = arith.constant 1 : index
    %726 = memref.load %arg0[%c1_425] : memref<8xi32, #tpu.memory_space<smem>>
    %c0_i32_426 = arith.constant 0 : i32
    %727 = arith.cmpi eq, %726, %c0_i32_426 : i32
    %728 = arith.extui %727 : i1 to i32
    %c0_i32_427 = arith.constant 0 : i32
    %729 = arith.cmpi ne, %728, %c0_i32_427 : i32
    scf.if %729 {
      %cst_846 = arith.constant dense<0xFF800000> : vector<8xf32>
      %1412 = vector.multi_reduction <maximumf>, %718, %cst_846 [1] : vector<8x128xf32> to vector<8xf32>
      %1413 = vector.shape_cast %1412 : vector<8xf32> to vector<8x1xf32>
      %1414 = vector.broadcast %1413 : vector<8x1xf32> to vector<8x128xf32>
      %1415 = arith.cmpf oeq, %718, %1414 : vector<8x128xf32>
      %cst_847 = arith.constant 1.280000e+02 : f32
      %1416 = vector.broadcast %cst_847 : f32 to vector<8x128xf32>
      %1417 = arith.select %1415, %11, %1416 : vector<8x128xi1>, vector<8x128xf32>
      %cst_848 = arith.constant dense<0x7F800000> : vector<8xf32>
      %1418 = vector.multi_reduction <minimumf>, %1417, %cst_848 [1] : vector<8x128xf32> to vector<8xf32>
      %1419 = vector.shape_cast %1418 : vector<8xf32> to vector<8x1xf32>
      %1420 = arith.fptosi %1419 : vector<8x1xf32> to vector<8x1xi32>
      %c0_849 = arith.constant 0 : index
      %c0_850 = arith.constant 0 : index
      %1421 = vector.load %arg16[%c0_849, %c0_850] : memref<8x1xi32, #tpu.memory_space<vmem>>, vector<8x1xi32>
      tpu.vector_store %arg16[%c0_849, %c0_850], %1420 {strides = array<i32>} : memref<8x1xi32, #tpu.memory_space<vmem>>, vector<8x1xi32>,
    } else {
    }
    %c0_428 = arith.constant 0 : index
    %c0_429 = arith.constant 0 : index
    %730 = vector.load %arg16[%c0_428, %c0_429] : memref<8x1xi32, #tpu.memory_space<vmem>>, vector<8x1xi32>
    %731 = vector.broadcast %730 : vector<8x1xi32> to vector<8x16xi32>
    %732 = arith.cmpi eq, %731, %9 : vector<8x16xi32>
    %733 = arith.extui %732 : vector<8x16xi1> to vector<8x16xi32>
    %734 = arith.sitofp %733 : vector<8x16xi32> to vector<8x16xf32>
    %c0_430 = arith.constant 0 : index
    %c0_431 = arith.constant 0 : index
    %735 = vector.load %arg4[%c0_430, %c0_431] : memref<16x32xf32, #tpu.memory_space<vmem>>, vector<16x32xf32>
    %cst_432 = arith.constant dense<0.000000e+00> : vector<8x32xf32>
    %736 = tpu.matmul %734, %735, %cst_432 {dimension_numbers = #tpu.dot_dimension_numbers<[1], [0], [0], [1], [0, 0, 1, 1], [], []>} : vector<8x16xf32>, vector<16x32xf32>, vector<8x32xf32> -> vector<8x32xf32>
    %c0_433 = arith.constant 0 : index
    %c0_434 = arith.constant 0 : index
    %c0_435 = arith.constant 0 : index
    %737 = vector.load %arg8[%c0_433, %c0_434, %c0_435] : memref<2x32x128xf32, #tpu.memory_space<vmem>>, vector<1x32x128xf32>
    %738 = vector.shape_cast %737 : vector<1x32x128xf32> to vector<32x128xf32>
    %cst_436 = arith.constant dense<0.000000e+00> : vector<8x128xf32>
    %739 = tpu.matmul %736, %738, %cst_436 {dimension_numbers = #tpu.dot_dimension_numbers<[1], [0], [0], [1], [0, 0, 1, 1], [], []>} : vector<8x32xf32>, vector<32x128xf32>, vector<8x128xf32> -> vector<8x128xf32>
    %c0_437 = arith.constant 0 : index
    %c0_438 = arith.constant 0 : index
    %c0_439 = arith.constant 0 : index
    %740 = vector.load %arg14[%c0_437, %c0_438, %c0_439] : memref<2x8x32xf32, #tpu.memory_space<vmem>>, vector<1x8x32xf32>
    %741 = vector.shape_cast %740 : vector<1x8x32xf32> to vector<8x32xf32>
    %c0_440 = arith.constant 0 : index
    %c0_441 = arith.constant 0 : index
    %c0_442 = arith.constant 0 : index
    %742 = vector.load %arg9[%c0_440, %c0_441, %c0_442] : memref<2x32x128xf32, #tpu.memory_space<vmem>>, vector<1x32x128xf32>
    %743 = vector.shape_cast %742 : vector<1x32x128xf32> to vector<32x128xf32>
    %cst_443 = arith.constant dense<0.000000e+00> : vector<8x128xf32>
    %744 = tpu.matmul %741, %743, %cst_443 {dimension_numbers = #tpu.dot_dimension_numbers<[1], [0], [0], [1], [0, 0, 1, 1], [], []>} : vector<8x32xf32>, vector<32x128xf32>, vector<8x128xf32> -> vector<8x128xf32>
    %745 = arith.addf %739, %744 : vector<8x128xf32>
    %c0_444 = arith.constant 0 : index
    %c0_445 = arith.constant 0 : index
    %c0_446 = arith.constant 0 : index
    %746 = vector.load %arg10[%c0_444, %c0_445, %c0_446] : memref<2x1x128xf32, #tpu.memory_space<vmem>>, vector<1x1x128xf32>
    %747 = vector.shape_cast %746 : vector<1x1x128xf32> to vector<1x128xf32>
    %748 = vector.broadcast %747 : vector<1x128xf32> to vector<8x128xf32>
    %749 = arith.addf %745, %748 : vector<8x128xf32>
    %750 = vector.extract_strided_slice %749 {offsets = [0, 0], sizes = [8, 32], strides = [1, 1]} : vector<8x128xf32> to vector<8x32xf32>
    %751 = arith.negf %750 : vector<8x32xf32>
    %752 = math.exp %751 : vector<8x32xf32>
    %cst_447 = arith.constant 1.000000e+00 : f32
    %753 = vector.broadcast %cst_447 : f32 to vector<8x32xf32>
    %754 = arith.addf %753, %752 : vector<8x32xf32>
    %755 = arith.divf %753, %754 : vector<8x32xf32>
    %756 = vector.extract_strided_slice %749 {offsets = [0, 32], sizes = [8, 32], strides = [1, 1]} : vector<8x128xf32> to vector<8x32xf32>
    %757 = arith.negf %756 : vector<8x32xf32>
    %758 = math.exp %757 : vector<8x32xf32>
    %cst_448 = arith.constant 1.000000e+00 : f32
    %759 = vector.broadcast %cst_448 : f32 to vector<8x32xf32>
    %760 = arith.addf %759, %758 : vector<8x32xf32>
    %761 = arith.divf %759, %760 : vector<8x32xf32>
    %762 = vector.extract_strided_slice %749 {offsets = [0, 64], sizes = [8, 32], strides = [1, 1]} : vector<8x128xf32> to vector<8x32xf32>
    %763 = math.tanh %762 : vector<8x32xf32>
    %764 = vector.extract_strided_slice %749 {offsets = [0, 96], sizes = [8, 32], strides = [1, 1]} : vector<8x128xf32> to vector<8x32xf32>
    %765 = arith.negf %764 : vector<8x32xf32>
    %766 = math.exp %765 : vector<8x32xf32>
    %cst_449 = arith.constant 1.000000e+00 : f32
    %767 = vector.broadcast %cst_449 : f32 to vector<8x32xf32>
    %768 = arith.addf %767, %766 : vector<8x32xf32>
    %769 = arith.divf %767, %768 : vector<8x32xf32>
    %c0_450 = arith.constant 0 : index
    %c0_451 = arith.constant 0 : index
    %c0_452 = arith.constant 0 : index
    %770 = vector.load %arg15[%c0_450, %c0_451, %c0_452] : memref<2x8x32xf32, #tpu.memory_space<vmem>>, vector<1x8x32xf32>
    %771 = vector.shape_cast %770 : vector<1x8x32xf32> to vector<8x32xf32>
    %772 = arith.mulf %761, %771 : vector<8x32xf32>
    %773 = arith.mulf %755, %763 : vector<8x32xf32>
    %774 = arith.addf %772, %773 : vector<8x32xf32>
    %775 = math.tanh %774 : vector<8x32xf32>
    %776 = arith.mulf %769, %775 : vector<8x32xf32>
    %c0_453 = arith.constant 0 : index
    %c0_454 = arith.constant 0 : index
    %c0_455 = arith.constant 0 : index
    %777 = vector.load %arg15[%c0_453, %c0_454, %c0_455] : memref<2x8x32xf32, #tpu.memory_space<vmem>>, vector<1x8x32xf32>
    %778 = vector.shape_cast %777 : vector<1x8x32xf32> to vector<8x32xf32>
    %779 = vector.shape_cast %774 : vector<8x32xf32> to vector<1x8x32xf32>
    tpu.vector_store %arg15[%c0_453, %c0_454, %c0_455], %779 {strides = array<i32>} : memref<2x8x32xf32, #tpu.memory_space<vmem>>, vector<1x8x32xf32>,
    %c0_456 = arith.constant 0 : index
    %c0_457 = arith.constant 0 : index
    %c0_458 = arith.constant 0 : index
    %780 = vector.load %arg14[%c0_456, %c0_457, %c0_458] : memref<2x8x32xf32, #tpu.memory_space<vmem>>, vector<1x8x32xf32>
    %781 = vector.shape_cast %780 : vector<1x8x32xf32> to vector<8x32xf32>
    %782 = vector.shape_cast %776 : vector<8x32xf32> to vector<1x8x32xf32>
    tpu.vector_store %arg14[%c0_456, %c0_457, %c0_458], %782 {strides = array<i32>} : memref<2x8x32xf32, #tpu.memory_space<vmem>>, vector<1x8x32xf32>,
    %c1_459 = arith.constant 1 : index
    %c0_460 = arith.constant 0 : index
    %c0_461 = arith.constant 0 : index
    %783 = vector.load %arg8[%c1_459, %c0_460, %c0_461] : memref<2x32x128xf32, #tpu.memory_space<vmem>>, vector<1x32x128xf32>
    %784 = vector.shape_cast %783 : vector<1x32x128xf32> to vector<32x128xf32>
    %cst_462 = arith.constant dense<0.000000e+00> : vector<8x128xf32>
    %785 = tpu.matmul %776, %784, %cst_462 {dimension_numbers = #tpu.dot_dimension_numbers<[1], [0], [0], [1], [0, 0, 1, 1], [], []>} : vector<8x32xf32>, vector<32x128xf32>, vector<8x128xf32> -> vector<8x128xf32>
    %c1_463 = arith.constant 1 : index
    %c0_464 = arith.constant 0 : index
    %c0_465 = arith.constant 0 : index
    %786 = vector.load %arg14[%c1_463, %c0_464, %c0_465] : memref<2x8x32xf32, #tpu.memory_space<vmem>>, vector<1x8x32xf32>
    %787 = vector.shape_cast %786 : vector<1x8x32xf32> to vector<8x32xf32>
    %c1_466 = arith.constant 1 : index
    %c0_467 = arith.constant 0 : index
    %c0_468 = arith.constant 0 : index
    %788 = vector.load %arg9[%c1_466, %c0_467, %c0_468] : memref<2x32x128xf32, #tpu.memory_space<vmem>>, vector<1x32x128xf32>
    %789 = vector.shape_cast %788 : vector<1x32x128xf32> to vector<32x128xf32>
    %cst_469 = arith.constant dense<0.000000e+00> : vector<8x128xf32>
    %790 = tpu.matmul %787, %789, %cst_469 {dimension_numbers = #tpu.dot_dimension_numbers<[1], [0], [0], [1], [0, 0, 1, 1], [], []>} : vector<8x32xf32>, vector<32x128xf32>, vector<8x128xf32> -> vector<8x128xf32>
    %791 = arith.addf %785, %790 : vector<8x128xf32>
    %c1_470 = arith.constant 1 : index
    %c0_471 = arith.constant 0 : index
    %c0_472 = arith.constant 0 : index
    %792 = vector.load %arg10[%c1_470, %c0_471, %c0_472] : memref<2x1x128xf32, #tpu.memory_space<vmem>>, vector<1x1x128xf32>
    %793 = vector.shape_cast %792 : vector<1x1x128xf32> to vector<1x128xf32>
    %794 = vector.broadcast %793 : vector<1x128xf32> to vector<8x128xf32>
    %795 = arith.addf %791, %794 : vector<8x128xf32>
    %796 = vector.extract_strided_slice %795 {offsets = [0, 0], sizes = [8, 32], strides = [1, 1]} : vector<8x128xf32> to vector<8x32xf32>
    %797 = arith.negf %796 : vector<8x32xf32>
    %798 = math.exp %797 : vector<8x32xf32>
    %cst_473 = arith.constant 1.000000e+00 : f32
    %799 = vector.broadcast %cst_473 : f32 to vector<8x32xf32>
    %800 = arith.addf %799, %798 : vector<8x32xf32>
    %801 = arith.divf %799, %800 : vector<8x32xf32>
    %802 = vector.extract_strided_slice %795 {offsets = [0, 32], sizes = [8, 32], strides = [1, 1]} : vector<8x128xf32> to vector<8x32xf32>
    %803 = arith.negf %802 : vector<8x32xf32>
    %804 = math.exp %803 : vector<8x32xf32>
    %cst_474 = arith.constant 1.000000e+00 : f32
    %805 = vector.broadcast %cst_474 : f32 to vector<8x32xf32>
    %806 = arith.addf %805, %804 : vector<8x32xf32>
    %807 = arith.divf %805, %806 : vector<8x32xf32>
    %808 = vector.extract_strided_slice %795 {offsets = [0, 64], sizes = [8, 32], strides = [1, 1]} : vector<8x128xf32> to vector<8x32xf32>
    %809 = math.tanh %808 : vector<8x32xf32>
    %810 = vector.extract_strided_slice %795 {offsets = [0, 96], sizes = [8, 32], strides = [1, 1]} : vector<8x128xf32> to vector<8x32xf32>
    %811 = arith.negf %810 : vector<8x32xf32>
    %812 = math.exp %811 : vector<8x32xf32>
    %cst_475 = arith.constant 1.000000e+00 : f32
    %813 = vector.broadcast %cst_475 : f32 to vector<8x32xf32>
    %814 = arith.addf %813, %812 : vector<8x32xf32>
    %815 = arith.divf %813, %814 : vector<8x32xf32>
    %c1_476 = arith.constant 1 : index
    %c0_477 = arith.constant 0 : index
    %c0_478 = arith.constant 0 : index
    %816 = vector.load %arg15[%c1_476, %c0_477, %c0_478] : memref<2x8x32xf32, #tpu.memory_space<vmem>>, vector<1x8x32xf32>
    %817 = vector.shape_cast %816 : vector<1x8x32xf32> to vector<8x32xf32>
    %818 = arith.mulf %807, %817 : vector<8x32xf32>
    %819 = arith.mulf %801, %809 : vector<8x32xf32>
    %820 = arith.addf %818, %819 : vector<8x32xf32>
    %821 = math.tanh %820 : vector<8x32xf32>
    %822 = arith.mulf %815, %821 : vector<8x32xf32>
    %c1_479 = arith.constant 1 : index
    %c0_480 = arith.constant 0 : index
    %c0_481 = arith.constant 0 : index
    %823 = vector.load %arg15[%c1_479, %c0_480, %c0_481] : memref<2x8x32xf32, #tpu.memory_space<vmem>>, vector<1x8x32xf32>
    %824 = vector.shape_cast %823 : vector<1x8x32xf32> to vector<8x32xf32>
    %825 = vector.shape_cast %820 : vector<8x32xf32> to vector<1x8x32xf32>
    tpu.vector_store %arg15[%c1_479, %c0_480, %c0_481], %825 {strides = array<i32>} : memref<2x8x32xf32, #tpu.memory_space<vmem>>, vector<1x8x32xf32>,
    %c1_482 = arith.constant 1 : index
    %c0_483 = arith.constant 0 : index
    %c0_484 = arith.constant 0 : index
    %826 = vector.load %arg14[%c1_482, %c0_483, %c0_484] : memref<2x8x32xf32, #tpu.memory_space<vmem>>, vector<1x8x32xf32>
    %827 = vector.shape_cast %826 : vector<1x8x32xf32> to vector<8x32xf32>
    %828 = vector.shape_cast %822 : vector<8x32xf32> to vector<1x8x32xf32>
    tpu.vector_store %arg14[%c1_482, %c0_483, %c0_484], %828 {strides = array<i32>} : memref<2x8x32xf32, #tpu.memory_space<vmem>>, vector<1x8x32xf32>,
    %c0_485 = arith.constant 0 : index
    %c0_486 = arith.constant 0 : index
    %829 = vector.load %arg11[%c0_485, %c0_486] : memref<32x128xf32, #tpu.memory_space<vmem>>, vector<32x128xf32>
    %cst_487 = arith.constant dense<0.000000e+00> : vector<8x128xf32>
    %830 = tpu.matmul %822, %829, %cst_487 {dimension_numbers = #tpu.dot_dimension_numbers<[1], [0], [0], [1], [0, 0, 1, 1], [], []>} : vector<8x32xf32>, vector<32x128xf32>, vector<8x128xf32> -> vector<8x128xf32>
    %c0_488 = arith.constant 0 : index
    %c0_489 = arith.constant 0 : index
    %831 = vector.load %arg12[%c0_488, %c0_489] : memref<1x128xf32, #tpu.memory_space<vmem>>, vector<1x128xf32>
    %832 = vector.broadcast %831 : vector<1x128xf32> to vector<8x128xf32>
    %833 = arith.addf %830, %832 : vector<8x128xf32>
    %c2_490 = arith.constant 2 : index
    %c0_491 = arith.constant 0 : index
    %c0_492 = arith.constant 0 : index
    %834 = vector.load %arg13[%c2_490, %c0_491, %c0_492] : memref<8x8x128xf32, #tpu.memory_space<vmem>>, vector<1x8x128xf32>
    %835 = vector.shape_cast %834 : vector<1x8x128xf32> to vector<8x128xf32>
    %836 = vector.shape_cast %833 : vector<8x128xf32> to vector<1x8x128xf32>
    tpu.vector_store %arg13[%c2_490, %c0_491, %c0_492], %836 {strides = array<i32>} : memref<8x8x128xf32, #tpu.memory_space<vmem>>, vector<1x8x128xf32>,
    %c2_493 = arith.constant 2 : index
    %837 = memref.load %arg0[%c2_493] : memref<8xi32, #tpu.memory_space<smem>>
    %c0_i32_494 = arith.constant 0 : i32
    %838 = arith.cmpi sgt, %837, %c0_i32_494 : i32
    %839 = arith.extui %838 : i1 to i32
    %c0_i32_495 = arith.constant 0 : i32
    %840 = arith.cmpi ne, %839, %c0_i32_495 : i32
    scf.if %840 {
      %c2_846 = arith.constant 2 : index
      %c0_847 = arith.constant 0 : index
      %c0_848 = arith.constant 0 : index
      %1412 = vector.load %arg2[%c2_846, %c0_847, %c0_848] : memref<8x8x1xi32, #tpu.memory_space<vmem>>, vector<1x8x1xi32>
      %1413 = vector.shape_cast %1412 : vector<1x8x1xi32> to vector<8x1xi32>
      %c0_849 = arith.constant 0 : index
      %c0_850 = arith.constant 0 : index
      %1414 = vector.load %arg16[%c0_849, %c0_850] : memref<8x1xi32, #tpu.memory_space<vmem>>, vector<8x1xi32>
      tpu.vector_store %arg16[%c0_849, %c0_850], %1413 {strides = array<i32>} : memref<8x1xi32, #tpu.memory_space<vmem>>, vector<8x1xi32>,
    } else {
    }
    %c2_496 = arith.constant 2 : index
    %841 = memref.load %arg0[%c2_496] : memref<8xi32, #tpu.memory_space<smem>>
    %c0_i32_497 = arith.constant 0 : i32
    %842 = arith.cmpi eq, %841, %c0_i32_497 : i32
    %843 = arith.extui %842 : i1 to i32
    %c0_i32_498 = arith.constant 0 : i32
    %844 = arith.cmpi ne, %843, %c0_i32_498 : i32
    scf.if %844 {
      %cst_846 = arith.constant dense<0xFF800000> : vector<8xf32>
      %1412 = vector.multi_reduction <maximumf>, %833, %cst_846 [1] : vector<8x128xf32> to vector<8xf32>
      %1413 = vector.shape_cast %1412 : vector<8xf32> to vector<8x1xf32>
      %1414 = vector.broadcast %1413 : vector<8x1xf32> to vector<8x128xf32>
      %1415 = arith.cmpf oeq, %833, %1414 : vector<8x128xf32>
      %cst_847 = arith.constant 1.280000e+02 : f32
      %1416 = vector.broadcast %cst_847 : f32 to vector<8x128xf32>
      %1417 = arith.select %1415, %11, %1416 : vector<8x128xi1>, vector<8x128xf32>
      %cst_848 = arith.constant dense<0x7F800000> : vector<8xf32>
      %1418 = vector.multi_reduction <minimumf>, %1417, %cst_848 [1] : vector<8x128xf32> to vector<8xf32>
      %1419 = vector.shape_cast %1418 : vector<8xf32> to vector<8x1xf32>
      %1420 = arith.fptosi %1419 : vector<8x1xf32> to vector<8x1xi32>
      %c0_849 = arith.constant 0 : index
      %c0_850 = arith.constant 0 : index
      %1421 = vector.load %arg16[%c0_849, %c0_850] : memref<8x1xi32, #tpu.memory_space<vmem>>, vector<8x1xi32>
      tpu.vector_store %arg16[%c0_849, %c0_850], %1420 {strides = array<i32>} : memref<8x1xi32, #tpu.memory_space<vmem>>, vector<8x1xi32>,
    } else {
    }
    %c0_499 = arith.constant 0 : index
    %c0_500 = arith.constant 0 : index
    %845 = vector.load %arg16[%c0_499, %c0_500] : memref<8x1xi32, #tpu.memory_space<vmem>>, vector<8x1xi32>
    %846 = vector.broadcast %845 : vector<8x1xi32> to vector<8x16xi32>
    %847 = arith.cmpi eq, %846, %9 : vector<8x16xi32>
    %848 = arith.extui %847 : vector<8x16xi1> to vector<8x16xi32>
    %849 = arith.sitofp %848 : vector<8x16xi32> to vector<8x16xf32>
    %c0_501 = arith.constant 0 : index
    %c0_502 = arith.constant 0 : index
    %850 = vector.load %arg4[%c0_501, %c0_502] : memref<16x32xf32, #tpu.memory_space<vmem>>, vector<16x32xf32>
    %cst_503 = arith.constant dense<0.000000e+00> : vector<8x32xf32>
    %851 = tpu.matmul %849, %850, %cst_503 {dimension_numbers = #tpu.dot_dimension_numbers<[1], [0], [0], [1], [0, 0, 1, 1], [], []>} : vector<8x16xf32>, vector<16x32xf32>, vector<8x32xf32> -> vector<8x32xf32>
    %c0_504 = arith.constant 0 : index
    %c0_505 = arith.constant 0 : index
    %c0_506 = arith.constant 0 : index
    %852 = vector.load %arg8[%c0_504, %c0_505, %c0_506] : memref<2x32x128xf32, #tpu.memory_space<vmem>>, vector<1x32x128xf32>
    %853 = vector.shape_cast %852 : vector<1x32x128xf32> to vector<32x128xf32>
    %cst_507 = arith.constant dense<0.000000e+00> : vector<8x128xf32>
    %854 = tpu.matmul %851, %853, %cst_507 {dimension_numbers = #tpu.dot_dimension_numbers<[1], [0], [0], [1], [0, 0, 1, 1], [], []>} : vector<8x32xf32>, vector<32x128xf32>, vector<8x128xf32> -> vector<8x128xf32>
    %c0_508 = arith.constant 0 : index
    %c0_509 = arith.constant 0 : index
    %c0_510 = arith.constant 0 : index
    %855 = vector.load %arg14[%c0_508, %c0_509, %c0_510] : memref<2x8x32xf32, #tpu.memory_space<vmem>>, vector<1x8x32xf32>
    %856 = vector.shape_cast %855 : vector<1x8x32xf32> to vector<8x32xf32>
    %c0_511 = arith.constant 0 : index
    %c0_512 = arith.constant 0 : index
    %c0_513 = arith.constant 0 : index
    %857 = vector.load %arg9[%c0_511, %c0_512, %c0_513] : memref<2x32x128xf32, #tpu.memory_space<vmem>>, vector<1x32x128xf32>
    %858 = vector.shape_cast %857 : vector<1x32x128xf32> to vector<32x128xf32>
    %cst_514 = arith.constant dense<0.000000e+00> : vector<8x128xf32>
    %859 = tpu.matmul %856, %858, %cst_514 {dimension_numbers = #tpu.dot_dimension_numbers<[1], [0], [0], [1], [0, 0, 1, 1], [], []>} : vector<8x32xf32>, vector<32x128xf32>, vector<8x128xf32> -> vector<8x128xf32>
    %860 = arith.addf %854, %859 : vector<8x128xf32>
    %c0_515 = arith.constant 0 : index
    %c0_516 = arith.constant 0 : index
    %c0_517 = arith.constant 0 : index
    %861 = vector.load %arg10[%c0_515, %c0_516, %c0_517] : memref<2x1x128xf32, #tpu.memory_space<vmem>>, vector<1x1x128xf32>
    %862 = vector.shape_cast %861 : vector<1x1x128xf32> to vector<1x128xf32>
    %863 = vector.broadcast %862 : vector<1x128xf32> to vector<8x128xf32>
    %864 = arith.addf %860, %863 : vector<8x128xf32>
    %865 = vector.extract_strided_slice %864 {offsets = [0, 0], sizes = [8, 32], strides = [1, 1]} : vector<8x128xf32> to vector<8x32xf32>
    %866 = arith.negf %865 : vector<8x32xf32>
    %867 = math.exp %866 : vector<8x32xf32>
    %cst_518 = arith.constant 1.000000e+00 : f32
    %868 = vector.broadcast %cst_518 : f32 to vector<8x32xf32>
    %869 = arith.addf %868, %867 : vector<8x32xf32>
    %870 = arith.divf %868, %869 : vector<8x32xf32>
    %871 = vector.extract_strided_slice %864 {offsets = [0, 32], sizes = [8, 32], strides = [1, 1]} : vector<8x128xf32> to vector<8x32xf32>
    %872 = arith.negf %871 : vector<8x32xf32>
    %873 = math.exp %872 : vector<8x32xf32>
    %cst_519 = arith.constant 1.000000e+00 : f32
    %874 = vector.broadcast %cst_519 : f32 to vector<8x32xf32>
    %875 = arith.addf %874, %873 : vector<8x32xf32>
    %876 = arith.divf %874, %875 : vector<8x32xf32>
    %877 = vector.extract_strided_slice %864 {offsets = [0, 64], sizes = [8, 32], strides = [1, 1]} : vector<8x128xf32> to vector<8x32xf32>
    %878 = math.tanh %877 : vector<8x32xf32>
    %879 = vector.extract_strided_slice %864 {offsets = [0, 96], sizes = [8, 32], strides = [1, 1]} : vector<8x128xf32> to vector<8x32xf32>
    %880 = arith.negf %879 : vector<8x32xf32>
    %881 = math.exp %880 : vector<8x32xf32>
    %cst_520 = arith.constant 1.000000e+00 : f32
    %882 = vector.broadcast %cst_520 : f32 to vector<8x32xf32>
    %883 = arith.addf %882, %881 : vector<8x32xf32>
    %884 = arith.divf %882, %883 : vector<8x32xf32>
    %c0_521 = arith.constant 0 : index
    %c0_522 = arith.constant 0 : index
    %c0_523 = arith.constant 0 : index
    %885 = vector.load %arg15[%c0_521, %c0_522, %c0_523] : memref<2x8x32xf32, #tpu.memory_space<vmem>>, vector<1x8x32xf32>
    %886 = vector.shape_cast %885 : vector<1x8x32xf32> to vector<8x32xf32>
    %887 = arith.mulf %876, %886 : vector<8x32xf32>
    %888 = arith.mulf %870, %878 : vector<8x32xf32>
    %889 = arith.addf %887, %888 : vector<8x32xf32>
    %890 = math.tanh %889 : vector<8x32xf32>
    %891 = arith.mulf %884, %890 : vector<8x32xf32>
    %c0_524 = arith.constant 0 : index
    %c0_525 = arith.constant 0 : index
    %c0_526 = arith.constant 0 : index
    %892 = vector.load %arg15[%c0_524, %c0_525, %c0_526] : memref<2x8x32xf32, #tpu.memory_space<vmem>>, vector<1x8x32xf32>
    %893 = vector.shape_cast %892 : vector<1x8x32xf32> to vector<8x32xf32>
    %894 = vector.shape_cast %889 : vector<8x32xf32> to vector<1x8x32xf32>
    tpu.vector_store %arg15[%c0_524, %c0_525, %c0_526], %894 {strides = array<i32>} : memref<2x8x32xf32, #tpu.memory_space<vmem>>, vector<1x8x32xf32>,
    %c0_527 = arith.constant 0 : index
    %c0_528 = arith.constant 0 : index
    %c0_529 = arith.constant 0 : index
    %895 = vector.load %arg14[%c0_527, %c0_528, %c0_529] : memref<2x8x32xf32, #tpu.memory_space<vmem>>, vector<1x8x32xf32>
    %896 = vector.shape_cast %895 : vector<1x8x32xf32> to vector<8x32xf32>
    %897 = vector.shape_cast %891 : vector<8x32xf32> to vector<1x8x32xf32>
    tpu.vector_store %arg14[%c0_527, %c0_528, %c0_529], %897 {strides = array<i32>} : memref<2x8x32xf32, #tpu.memory_space<vmem>>, vector<1x8x32xf32>,
    %c1_530 = arith.constant 1 : index
    %c0_531 = arith.constant 0 : index
    %c0_532 = arith.constant 0 : index
    %898 = vector.load %arg8[%c1_530, %c0_531, %c0_532] : memref<2x32x128xf32, #tpu.memory_space<vmem>>, vector<1x32x128xf32>
    %899 = vector.shape_cast %898 : vector<1x32x128xf32> to vector<32x128xf32>
    %cst_533 = arith.constant dense<0.000000e+00> : vector<8x128xf32>
    %900 = tpu.matmul %891, %899, %cst_533 {dimension_numbers = #tpu.dot_dimension_numbers<[1], [0], [0], [1], [0, 0, 1, 1], [], []>} : vector<8x32xf32>, vector<32x128xf32>, vector<8x128xf32> -> vector<8x128xf32>
    %c1_534 = arith.constant 1 : index
    %c0_535 = arith.constant 0 : index
    %c0_536 = arith.constant 0 : index
    %901 = vector.load %arg14[%c1_534, %c0_535, %c0_536] : memref<2x8x32xf32, #tpu.memory_space<vmem>>, vector<1x8x32xf32>
    %902 = vector.shape_cast %901 : vector<1x8x32xf32> to vector<8x32xf32>
    %c1_537 = arith.constant 1 : index
    %c0_538 = arith.constant 0 : index
    %c0_539 = arith.constant 0 : index
    %903 = vector.load %arg9[%c1_537, %c0_538, %c0_539] : memref<2x32x128xf32, #tpu.memory_space<vmem>>, vector<1x32x128xf32>
    %904 = vector.shape_cast %903 : vector<1x32x128xf32> to vector<32x128xf32>
    %cst_540 = arith.constant dense<0.000000e+00> : vector<8x128xf32>
    %905 = tpu.matmul %902, %904, %cst_540 {dimension_numbers = #tpu.dot_dimension_numbers<[1], [0], [0], [1], [0, 0, 1, 1], [], []>} : vector<8x32xf32>, vector<32x128xf32>, vector<8x128xf32> -> vector<8x128xf32>
    %906 = arith.addf %900, %905 : vector<8x128xf32>
    %c1_541 = arith.constant 1 : index
    %c0_542 = arith.constant 0 : index
    %c0_543 = arith.constant 0 : index
    %907 = vector.load %arg10[%c1_541, %c0_542, %c0_543] : memref<2x1x128xf32, #tpu.memory_space<vmem>>, vector<1x1x128xf32>
    %908 = vector.shape_cast %907 : vector<1x1x128xf32> to vector<1x128xf32>
    %909 = vector.broadcast %908 : vector<1x128xf32> to vector<8x128xf32>
    %910 = arith.addf %906, %909 : vector<8x128xf32>
    %911 = vector.extract_strided_slice %910 {offsets = [0, 0], sizes = [8, 32], strides = [1, 1]} : vector<8x128xf32> to vector<8x32xf32>
    %912 = arith.negf %911 : vector<8x32xf32>
    %913 = math.exp %912 : vector<8x32xf32>
    %cst_544 = arith.constant 1.000000e+00 : f32
    %914 = vector.broadcast %cst_544 : f32 to vector<8x32xf32>
    %915 = arith.addf %914, %913 : vector<8x32xf32>
    %916 = arith.divf %914, %915 : vector<8x32xf32>
    %917 = vector.extract_strided_slice %910 {offsets = [0, 32], sizes = [8, 32], strides = [1, 1]} : vector<8x128xf32> to vector<8x32xf32>
    %918 = arith.negf %917 : vector<8x32xf32>
    %919 = math.exp %918 : vector<8x32xf32>
    %cst_545 = arith.constant 1.000000e+00 : f32
    %920 = vector.broadcast %cst_545 : f32 to vector<8x32xf32>
    %921 = arith.addf %920, %919 : vector<8x32xf32>
    %922 = arith.divf %920, %921 : vector<8x32xf32>
    %923 = vector.extract_strided_slice %910 {offsets = [0, 64], sizes = [8, 32], strides = [1, 1]} : vector<8x128xf32> to vector<8x32xf32>
    %924 = math.tanh %923 : vector<8x32xf32>
    %925 = vector.extract_strided_slice %910 {offsets = [0, 96], sizes = [8, 32], strides = [1, 1]} : vector<8x128xf32> to vector<8x32xf32>
    %926 = arith.negf %925 : vector<8x32xf32>
    %927 = math.exp %926 : vector<8x32xf32>
    %cst_546 = arith.constant 1.000000e+00 : f32
    %928 = vector.broadcast %cst_546 : f32 to vector<8x32xf32>
    %929 = arith.addf %928, %927 : vector<8x32xf32>
    %930 = arith.divf %928, %929 : vector<8x32xf32>
    %c1_547 = arith.constant 1 : index
    %c0_548 = arith.constant 0 : index
    %c0_549 = arith.constant 0 : index
    %931 = vector.load %arg15[%c1_547, %c0_548, %c0_549] : memref<2x8x32xf32, #tpu.memory_space<vmem>>, vector<1x8x32xf32>
    %932 = vector.shape_cast %931 : vector<1x8x32xf32> to vector<8x32xf32>
    %933 = arith.mulf %922, %932 : vector<8x32xf32>
    %934 = arith.mulf %916, %924 : vector<8x32xf32>
    %935 = arith.addf %933, %934 : vector<8x32xf32>
    %936 = math.tanh %935 : vector<8x32xf32>
    %937 = arith.mulf %930, %936 : vector<8x32xf32>
    %c1_550 = arith.constant 1 : index
    %c0_551 = arith.constant 0 : index
    %c0_552 = arith.constant 0 : index
    %938 = vector.load %arg15[%c1_550, %c0_551, %c0_552] : memref<2x8x32xf32, #tpu.memory_space<vmem>>, vector<1x8x32xf32>
    %939 = vector.shape_cast %938 : vector<1x8x32xf32> to vector<8x32xf32>
    %940 = vector.shape_cast %935 : vector<8x32xf32> to vector<1x8x32xf32>
    tpu.vector_store %arg15[%c1_550, %c0_551, %c0_552], %940 {strides = array<i32>} : memref<2x8x32xf32, #tpu.memory_space<vmem>>, vector<1x8x32xf32>,
    %c1_553 = arith.constant 1 : index
    %c0_554 = arith.constant 0 : index
    %c0_555 = arith.constant 0 : index
    %941 = vector.load %arg14[%c1_553, %c0_554, %c0_555] : memref<2x8x32xf32, #tpu.memory_space<vmem>>, vector<1x8x32xf32>
    %942 = vector.shape_cast %941 : vector<1x8x32xf32> to vector<8x32xf32>
    %943 = vector.shape_cast %937 : vector<8x32xf32> to vector<1x8x32xf32>
    tpu.vector_store %arg14[%c1_553, %c0_554, %c0_555], %943 {strides = array<i32>} : memref<2x8x32xf32, #tpu.memory_space<vmem>>, vector<1x8x32xf32>,
    %c0_556 = arith.constant 0 : index
    %c0_557 = arith.constant 0 : index
    %944 = vector.load %arg11[%c0_556, %c0_557] : memref<32x128xf32, #tpu.memory_space<vmem>>, vector<32x128xf32>
    %cst_558 = arith.constant dense<0.000000e+00> : vector<8x128xf32>
    %945 = tpu.matmul %937, %944, %cst_558 {dimension_numbers = #tpu.dot_dimension_numbers<[1], [0], [0], [1], [0, 0, 1, 1], [], []>} : vector<8x32xf32>, vector<32x128xf32>, vector<8x128xf32> -> vector<8x128xf32>
    %c0_559 = arith.constant 0 : index
    %c0_560 = arith.constant 0 : index
    %946 = vector.load %arg12[%c0_559, %c0_560] : memref<1x128xf32, #tpu.memory_space<vmem>>, vector<1x128xf32>
    %947 = vector.broadcast %946 : vector<1x128xf32> to vector<8x128xf32>
    %948 = arith.addf %945, %947 : vector<8x128xf32>
    %c3_561 = arith.constant 3 : index
    %c0_562 = arith.constant 0 : index
    %c0_563 = arith.constant 0 : index
    %949 = vector.load %arg13[%c3_561, %c0_562, %c0_563] : memref<8x8x128xf32, #tpu.memory_space<vmem>>, vector<1x8x128xf32>
    %950 = vector.shape_cast %949 : vector<1x8x128xf32> to vector<8x128xf32>
    %951 = vector.shape_cast %948 : vector<8x128xf32> to vector<1x8x128xf32>
    tpu.vector_store %arg13[%c3_561, %c0_562, %c0_563], %951 {strides = array<i32>} : memref<8x8x128xf32, #tpu.memory_space<vmem>>, vector<1x8x128xf32>,
    %c3_564 = arith.constant 3 : index
    %952 = memref.load %arg0[%c3_564] : memref<8xi32, #tpu.memory_space<smem>>
    %c0_i32_565 = arith.constant 0 : i32
    %953 = arith.cmpi sgt, %952, %c0_i32_565 : i32
    %954 = arith.extui %953 : i1 to i32
    %c0_i32_566 = arith.constant 0 : i32
    %955 = arith.cmpi ne, %954, %c0_i32_566 : i32
    scf.if %955 {
      %c3_846 = arith.constant 3 : index
      %c0_847 = arith.constant 0 : index
      %c0_848 = arith.constant 0 : index
      %1412 = vector.load %arg2[%c3_846, %c0_847, %c0_848] : memref<8x8x1xi32, #tpu.memory_space<vmem>>, vector<1x8x1xi32>
      %1413 = vector.shape_cast %1412 : vector<1x8x1xi32> to vector<8x1xi32>
      %c0_849 = arith.constant 0 : index
      %c0_850 = arith.constant 0 : index
      %1414 = vector.load %arg16[%c0_849, %c0_850] : memref<8x1xi32, #tpu.memory_space<vmem>>, vector<8x1xi32>
      tpu.vector_store %arg16[%c0_849, %c0_850], %1413 {strides = array<i32>} : memref<8x1xi32, #tpu.memory_space<vmem>>, vector<8x1xi32>,
    } else {
    }
    %c3_567 = arith.constant 3 : index
    %956 = memref.load %arg0[%c3_567] : memref<8xi32, #tpu.memory_space<smem>>
    %c0_i32_568 = arith.constant 0 : i32
    %957 = arith.cmpi eq, %956, %c0_i32_568 : i32
    %958 = arith.extui %957 : i1 to i32
    %c0_i32_569 = arith.constant 0 : i32
    %959 = arith.cmpi ne, %958, %c0_i32_569 : i32
    scf.if %959 {
      %cst_846 = arith.constant dense<0xFF800000> : vector<8xf32>
      %1412 = vector.multi_reduction <maximumf>, %948, %cst_846 [1] : vector<8x128xf32> to vector<8xf32>
      %1413 = vector.shape_cast %1412 : vector<8xf32> to vector<8x1xf32>
      %1414 = vector.broadcast %1413 : vector<8x1xf32> to vector<8x128xf32>
      %1415 = arith.cmpf oeq, %948, %1414 : vector<8x128xf32>
      %cst_847 = arith.constant 1.280000e+02 : f32
      %1416 = vector.broadcast %cst_847 : f32 to vector<8x128xf32>
      %1417 = arith.select %1415, %11, %1416 : vector<8x128xi1>, vector<8x128xf32>
      %cst_848 = arith.constant dense<0x7F800000> : vector<8xf32>
      %1418 = vector.multi_reduction <minimumf>, %1417, %cst_848 [1] : vector<8x128xf32> to vector<8xf32>
      %1419 = vector.shape_cast %1418 : vector<8xf32> to vector<8x1xf32>
      %1420 = arith.fptosi %1419 : vector<8x1xf32> to vector<8x1xi32>
      %c0_849 = arith.constant 0 : index
      %c0_850 = arith.constant 0 : index
      %1421 = vector.load %arg16[%c0_849, %c0_850] : memref<8x1xi32, #tpu.memory_space<vmem>>, vector<8x1xi32>
      tpu.vector_store %arg16[%c0_849, %c0_850], %1420 {strides = array<i32>} : memref<8x1xi32, #tpu.memory_space<vmem>>, vector<8x1xi32>,
    } else {
    }
    %c0_570 = arith.constant 0 : index
    %c0_571 = arith.constant 0 : index
    %960 = vector.load %arg16[%c0_570, %c0_571] : memref<8x1xi32, #tpu.memory_space<vmem>>, vector<8x1xi32>
    %961 = vector.broadcast %960 : vector<8x1xi32> to vector<8x16xi32>
    %962 = arith.cmpi eq, %961, %9 : vector<8x16xi32>
    %963 = arith.extui %962 : vector<8x16xi1> to vector<8x16xi32>
    %964 = arith.sitofp %963 : vector<8x16xi32> to vector<8x16xf32>
    %c0_572 = arith.constant 0 : index
    %c0_573 = arith.constant 0 : index
    %965 = vector.load %arg4[%c0_572, %c0_573] : memref<16x32xf32, #tpu.memory_space<vmem>>, vector<16x32xf32>
    %cst_574 = arith.constant dense<0.000000e+00> : vector<8x32xf32>
    %966 = tpu.matmul %964, %965, %cst_574 {dimension_numbers = #tpu.dot_dimension_numbers<[1], [0], [0], [1], [0, 0, 1, 1], [], []>} : vector<8x16xf32>, vector<16x32xf32>, vector<8x32xf32> -> vector<8x32xf32>
    %c0_575 = arith.constant 0 : index
    %c0_576 = arith.constant 0 : index
    %c0_577 = arith.constant 0 : index
    %967 = vector.load %arg8[%c0_575, %c0_576, %c0_577] : memref<2x32x128xf32, #tpu.memory_space<vmem>>, vector<1x32x128xf32>
    %968 = vector.shape_cast %967 : vector<1x32x128xf32> to vector<32x128xf32>
    %cst_578 = arith.constant dense<0.000000e+00> : vector<8x128xf32>
    %969 = tpu.matmul %966, %968, %cst_578 {dimension_numbers = #tpu.dot_dimension_numbers<[1], [0], [0], [1], [0, 0, 1, 1], [], []>} : vector<8x32xf32>, vector<32x128xf32>, vector<8x128xf32> -> vector<8x128xf32>
    %c0_579 = arith.constant 0 : index
    %c0_580 = arith.constant 0 : index
    %c0_581 = arith.constant 0 : index
    %970 = vector.load %arg14[%c0_579, %c0_580, %c0_581] : memref<2x8x32xf32, #tpu.memory_space<vmem>>, vector<1x8x32xf32>
    %971 = vector.shape_cast %970 : vector<1x8x32xf32> to vector<8x32xf32>
    %c0_582 = arith.constant 0 : index
    %c0_583 = arith.constant 0 : index
    %c0_584 = arith.constant 0 : index
    %972 = vector.load %arg9[%c0_582, %c0_583, %c0_584] : memref<2x32x128xf32, #tpu.memory_space<vmem>>, vector<1x32x128xf32>
    %973 = vector.shape_cast %972 : vector<1x32x128xf32> to vector<32x128xf32>
    %cst_585 = arith.constant dense<0.000000e+00> : vector<8x128xf32>
    %974 = tpu.matmul %971, %973, %cst_585 {dimension_numbers = #tpu.dot_dimension_numbers<[1], [0], [0], [1], [0, 0, 1, 1], [], []>} : vector<8x32xf32>, vector<32x128xf32>, vector<8x128xf32> -> vector<8x128xf32>
    %975 = arith.addf %969, %974 : vector<8x128xf32>
    %c0_586 = arith.constant 0 : index
    %c0_587 = arith.constant 0 : index
    %c0_588 = arith.constant 0 : index
    %976 = vector.load %arg10[%c0_586, %c0_587, %c0_588] : memref<2x1x128xf32, #tpu.memory_space<vmem>>, vector<1x1x128xf32>
    %977 = vector.shape_cast %976 : vector<1x1x128xf32> to vector<1x128xf32>
    %978 = vector.broadcast %977 : vector<1x128xf32> to vector<8x128xf32>
    %979 = arith.addf %975, %978 : vector<8x128xf32>
    %980 = vector.extract_strided_slice %979 {offsets = [0, 0], sizes = [8, 32], strides = [1, 1]} : vector<8x128xf32> to vector<8x32xf32>
    %981 = arith.negf %980 : vector<8x32xf32>
    %982 = math.exp %981 : vector<8x32xf32>
    %cst_589 = arith.constant 1.000000e+00 : f32
    %983 = vector.broadcast %cst_589 : f32 to vector<8x32xf32>
    %984 = arith.addf %983, %982 : vector<8x32xf32>
    %985 = arith.divf %983, %984 : vector<8x32xf32>
    %986 = vector.extract_strided_slice %979 {offsets = [0, 32], sizes = [8, 32], strides = [1, 1]} : vector<8x128xf32> to vector<8x32xf32>
    %987 = arith.negf %986 : vector<8x32xf32>
    %988 = math.exp %987 : vector<8x32xf32>
    %cst_590 = arith.constant 1.000000e+00 : f32
    %989 = vector.broadcast %cst_590 : f32 to vector<8x32xf32>
    %990 = arith.addf %989, %988 : vector<8x32xf32>
    %991 = arith.divf %989, %990 : vector<8x32xf32>
    %992 = vector.extract_strided_slice %979 {offsets = [0, 64], sizes = [8, 32], strides = [1, 1]} : vector<8x128xf32> to vector<8x32xf32>
    %993 = math.tanh %992 : vector<8x32xf32>
    %994 = vector.extract_strided_slice %979 {offsets = [0, 96], sizes = [8, 32], strides = [1, 1]} : vector<8x128xf32> to vector<8x32xf32>
    %995 = arith.negf %994 : vector<8x32xf32>
    %996 = math.exp %995 : vector<8x32xf32>
    %cst_591 = arith.constant 1.000000e+00 : f32
    %997 = vector.broadcast %cst_591 : f32 to vector<8x32xf32>
    %998 = arith.addf %997, %996 : vector<8x32xf32>
    %999 = arith.divf %997, %998 : vector<8x32xf32>
    %c0_592 = arith.constant 0 : index
    %c0_593 = arith.constant 0 : index
    %c0_594 = arith.constant 0 : index
    %1000 = vector.load %arg15[%c0_592, %c0_593, %c0_594] : memref<2x8x32xf32, #tpu.memory_space<vmem>>, vector<1x8x32xf32>
    %1001 = vector.shape_cast %1000 : vector<1x8x32xf32> to vector<8x32xf32>
    %1002 = arith.mulf %991, %1001 : vector<8x32xf32>
    %1003 = arith.mulf %985, %993 : vector<8x32xf32>
    %1004 = arith.addf %1002, %1003 : vector<8x32xf32>
    %1005 = math.tanh %1004 : vector<8x32xf32>
    %1006 = arith.mulf %999, %1005 : vector<8x32xf32>
    %c0_595 = arith.constant 0 : index
    %c0_596 = arith.constant 0 : index
    %c0_597 = arith.constant 0 : index
    %1007 = vector.load %arg15[%c0_595, %c0_596, %c0_597] : memref<2x8x32xf32, #tpu.memory_space<vmem>>, vector<1x8x32xf32>
    %1008 = vector.shape_cast %1007 : vector<1x8x32xf32> to vector<8x32xf32>
    %1009 = vector.shape_cast %1004 : vector<8x32xf32> to vector<1x8x32xf32>
    tpu.vector_store %arg15[%c0_595, %c0_596, %c0_597], %1009 {strides = array<i32>} : memref<2x8x32xf32, #tpu.memory_space<vmem>>, vector<1x8x32xf32>,
    %c0_598 = arith.constant 0 : index
    %c0_599 = arith.constant 0 : index
    %c0_600 = arith.constant 0 : index
    %1010 = vector.load %arg14[%c0_598, %c0_599, %c0_600] : memref<2x8x32xf32, #tpu.memory_space<vmem>>, vector<1x8x32xf32>
    %1011 = vector.shape_cast %1010 : vector<1x8x32xf32> to vector<8x32xf32>
    %1012 = vector.shape_cast %1006 : vector<8x32xf32> to vector<1x8x32xf32>
    tpu.vector_store %arg14[%c0_598, %c0_599, %c0_600], %1012 {strides = array<i32>} : memref<2x8x32xf32, #tpu.memory_space<vmem>>, vector<1x8x32xf32>,
    %c1_601 = arith.constant 1 : index
    %c0_602 = arith.constant 0 : index
    %c0_603 = arith.constant 0 : index
    %1013 = vector.load %arg8[%c1_601, %c0_602, %c0_603] : memref<2x32x128xf32, #tpu.memory_space<vmem>>, vector<1x32x128xf32>
    %1014 = vector.shape_cast %1013 : vector<1x32x128xf32> to vector<32x128xf32>
    %cst_604 = arith.constant dense<0.000000e+00> : vector<8x128xf32>
    %1015 = tpu.matmul %1006, %1014, %cst_604 {dimension_numbers = #tpu.dot_dimension_numbers<[1], [0], [0], [1], [0, 0, 1, 1], [], []>} : vector<8x32xf32>, vector<32x128xf32>, vector<8x128xf32> -> vector<8x128xf32>
    %c1_605 = arith.constant 1 : index
    %c0_606 = arith.constant 0 : index
    %c0_607 = arith.constant 0 : index
    %1016 = vector.load %arg14[%c1_605, %c0_606, %c0_607] : memref<2x8x32xf32, #tpu.memory_space<vmem>>, vector<1x8x32xf32>
    %1017 = vector.shape_cast %1016 : vector<1x8x32xf32> to vector<8x32xf32>
    %c1_608 = arith.constant 1 : index
    %c0_609 = arith.constant 0 : index
    %c0_610 = arith.constant 0 : index
    %1018 = vector.load %arg9[%c1_608, %c0_609, %c0_610] : memref<2x32x128xf32, #tpu.memory_space<vmem>>, vector<1x32x128xf32>
    %1019 = vector.shape_cast %1018 : vector<1x32x128xf32> to vector<32x128xf32>
    %cst_611 = arith.constant dense<0.000000e+00> : vector<8x128xf32>
    %1020 = tpu.matmul %1017, %1019, %cst_611 {dimension_numbers = #tpu.dot_dimension_numbers<[1], [0], [0], [1], [0, 0, 1, 1], [], []>} : vector<8x32xf32>, vector<32x128xf32>, vector<8x128xf32> -> vector<8x128xf32>
    %1021 = arith.addf %1015, %1020 : vector<8x128xf32>
    %c1_612 = arith.constant 1 : index
    %c0_613 = arith.constant 0 : index
    %c0_614 = arith.constant 0 : index
    %1022 = vector.load %arg10[%c1_612, %c0_613, %c0_614] : memref<2x1x128xf32, #tpu.memory_space<vmem>>, vector<1x1x128xf32>
    %1023 = vector.shape_cast %1022 : vector<1x1x128xf32> to vector<1x128xf32>
    %1024 = vector.broadcast %1023 : vector<1x128xf32> to vector<8x128xf32>
    %1025 = arith.addf %1021, %1024 : vector<8x128xf32>
    %1026 = vector.extract_strided_slice %1025 {offsets = [0, 0], sizes = [8, 32], strides = [1, 1]} : vector<8x128xf32> to vector<8x32xf32>
    %1027 = arith.negf %1026 : vector<8x32xf32>
    %1028 = math.exp %1027 : vector<8x32xf32>
    %cst_615 = arith.constant 1.000000e+00 : f32
    %1029 = vector.broadcast %cst_615 : f32 to vector<8x32xf32>
    %1030 = arith.addf %1029, %1028 : vector<8x32xf32>
    %1031 = arith.divf %1029, %1030 : vector<8x32xf32>
    %1032 = vector.extract_strided_slice %1025 {offsets = [0, 32], sizes = [8, 32], strides = [1, 1]} : vector<8x128xf32> to vector<8x32xf32>
    %1033 = arith.negf %1032 : vector<8x32xf32>
    %1034 = math.exp %1033 : vector<8x32xf32>
    %cst_616 = arith.constant 1.000000e+00 : f32
    %1035 = vector.broadcast %cst_616 : f32 to vector<8x32xf32>
    %1036 = arith.addf %1035, %1034 : vector<8x32xf32>
    %1037 = arith.divf %1035, %1036 : vector<8x32xf32>
    %1038 = vector.extract_strided_slice %1025 {offsets = [0, 64], sizes = [8, 32], strides = [1, 1]} : vector<8x128xf32> to vector<8x32xf32>
    %1039 = math.tanh %1038 : vector<8x32xf32>
    %1040 = vector.extract_strided_slice %1025 {offsets = [0, 96], sizes = [8, 32], strides = [1, 1]} : vector<8x128xf32> to vector<8x32xf32>
    %1041 = arith.negf %1040 : vector<8x32xf32>
    %1042 = math.exp %1041 : vector<8x32xf32>
    %cst_617 = arith.constant 1.000000e+00 : f32
    %1043 = vector.broadcast %cst_617 : f32 to vector<8x32xf32>
    %1044 = arith.addf %1043, %1042 : vector<8x32xf32>
    %1045 = arith.divf %1043, %1044 : vector<8x32xf32>
    %c1_618 = arith.constant 1 : index
    %c0_619 = arith.constant 0 : index
    %c0_620 = arith.constant 0 : index
    %1046 = vector.load %arg15[%c1_618, %c0_619, %c0_620] : memref<2x8x32xf32, #tpu.memory_space<vmem>>, vector<1x8x32xf32>
    %1047 = vector.shape_cast %1046 : vector<1x8x32xf32> to vector<8x32xf32>
    %1048 = arith.mulf %1037, %1047 : vector<8x32xf32>
    %1049 = arith.mulf %1031, %1039 : vector<8x32xf32>
    %1050 = arith.addf %1048, %1049 : vector<8x32xf32>
    %1051 = math.tanh %1050 : vector<8x32xf32>
    %1052 = arith.mulf %1045, %1051 : vector<8x32xf32>
    %c1_621 = arith.constant 1 : index
    %c0_622 = arith.constant 0 : index
    %c0_623 = arith.constant 0 : index
    %1053 = vector.load %arg15[%c1_621, %c0_622, %c0_623] : memref<2x8x32xf32, #tpu.memory_space<vmem>>, vector<1x8x32xf32>
    %1054 = vector.shape_cast %1053 : vector<1x8x32xf32> to vector<8x32xf32>
    %1055 = vector.shape_cast %1050 : vector<8x32xf32> to vector<1x8x32xf32>
    tpu.vector_store %arg15[%c1_621, %c0_622, %c0_623], %1055 {strides = array<i32>} : memref<2x8x32xf32, #tpu.memory_space<vmem>>, vector<1x8x32xf32>,
    %c1_624 = arith.constant 1 : index
    %c0_625 = arith.constant 0 : index
    %c0_626 = arith.constant 0 : index
    %1056 = vector.load %arg14[%c1_624, %c0_625, %c0_626] : memref<2x8x32xf32, #tpu.memory_space<vmem>>, vector<1x8x32xf32>
    %1057 = vector.shape_cast %1056 : vector<1x8x32xf32> to vector<8x32xf32>
    %1058 = vector.shape_cast %1052 : vector<8x32xf32> to vector<1x8x32xf32>
    tpu.vector_store %arg14[%c1_624, %c0_625, %c0_626], %1058 {strides = array<i32>} : memref<2x8x32xf32, #tpu.memory_space<vmem>>, vector<1x8x32xf32>,
    %c0_627 = arith.constant 0 : index
    %c0_628 = arith.constant 0 : index
    %1059 = vector.load %arg11[%c0_627, %c0_628] : memref<32x128xf32, #tpu.memory_space<vmem>>, vector<32x128xf32>
    %cst_629 = arith.constant dense<0.000000e+00> : vector<8x128xf32>
    %1060 = tpu.matmul %1052, %1059, %cst_629 {dimension_numbers = #tpu.dot_dimension_numbers<[1], [0], [0], [1], [0, 0, 1, 1], [], []>} : vector<8x32xf32>, vector<32x128xf32>, vector<8x128xf32> -> vector<8x128xf32>
    %c0_630 = arith.constant 0 : index
    %c0_631 = arith.constant 0 : index
    %1061 = vector.load %arg12[%c0_630, %c0_631] : memref<1x128xf32, #tpu.memory_space<vmem>>, vector<1x128xf32>
    %1062 = vector.broadcast %1061 : vector<1x128xf32> to vector<8x128xf32>
    %1063 = arith.addf %1060, %1062 : vector<8x128xf32>
    %c4_632 = arith.constant 4 : index
    %c0_633 = arith.constant 0 : index
    %c0_634 = arith.constant 0 : index
    %1064 = vector.load %arg13[%c4_632, %c0_633, %c0_634] : memref<8x8x128xf32, #tpu.memory_space<vmem>>, vector<1x8x128xf32>
    %1065 = vector.shape_cast %1064 : vector<1x8x128xf32> to vector<8x128xf32>
    %1066 = vector.shape_cast %1063 : vector<8x128xf32> to vector<1x8x128xf32>
    tpu.vector_store %arg13[%c4_632, %c0_633, %c0_634], %1066 {strides = array<i32>} : memref<8x8x128xf32, #tpu.memory_space<vmem>>, vector<1x8x128xf32>,
    %c4_635 = arith.constant 4 : index
    %1067 = memref.load %arg0[%c4_635] : memref<8xi32, #tpu.memory_space<smem>>
    %c0_i32_636 = arith.constant 0 : i32
    %1068 = arith.cmpi sgt, %1067, %c0_i32_636 : i32
    %1069 = arith.extui %1068 : i1 to i32
    %c0_i32_637 = arith.constant 0 : i32
    %1070 = arith.cmpi ne, %1069, %c0_i32_637 : i32
    scf.if %1070 {
      %c4_846 = arith.constant 4 : index
      %c0_847 = arith.constant 0 : index
      %c0_848 = arith.constant 0 : index
      %1412 = vector.load %arg2[%c4_846, %c0_847, %c0_848] : memref<8x8x1xi32, #tpu.memory_space<vmem>>, vector<1x8x1xi32>
      %1413 = vector.shape_cast %1412 : vector<1x8x1xi32> to vector<8x1xi32>
      %c0_849 = arith.constant 0 : index
      %c0_850 = arith.constant 0 : index
      %1414 = vector.load %arg16[%c0_849, %c0_850] : memref<8x1xi32, #tpu.memory_space<vmem>>, vector<8x1xi32>
      tpu.vector_store %arg16[%c0_849, %c0_850], %1413 {strides = array<i32>} : memref<8x1xi32, #tpu.memory_space<vmem>>, vector<8x1xi32>,
    } else {
    }
    %c4_638 = arith.constant 4 : index
    %1071 = memref.load %arg0[%c4_638] : memref<8xi32, #tpu.memory_space<smem>>
    %c0_i32_639 = arith.constant 0 : i32
    %1072 = arith.cmpi eq, %1071, %c0_i32_639 : i32
    %1073 = arith.extui %1072 : i1 to i32
    %c0_i32_640 = arith.constant 0 : i32
    %1074 = arith.cmpi ne, %1073, %c0_i32_640 : i32
    scf.if %1074 {
      %cst_846 = arith.constant dense<0xFF800000> : vector<8xf32>
      %1412 = vector.multi_reduction <maximumf>, %1063, %cst_846 [1] : vector<8x128xf32> to vector<8xf32>
      %1413 = vector.shape_cast %1412 : vector<8xf32> to vector<8x1xf32>
      %1414 = vector.broadcast %1413 : vector<8x1xf32> to vector<8x128xf32>
      %1415 = arith.cmpf oeq, %1063, %1414 : vector<8x128xf32>
      %cst_847 = arith.constant 1.280000e+02 : f32
      %1416 = vector.broadcast %cst_847 : f32 to vector<8x128xf32>
      %1417 = arith.select %1415, %11, %1416 : vector<8x128xi1>, vector<8x128xf32>
      %cst_848 = arith.constant dense<0x7F800000> : vector<8xf32>
      %1418 = vector.multi_reduction <minimumf>, %1417, %cst_848 [1] : vector<8x128xf32> to vector<8xf32>
      %1419 = vector.shape_cast %1418 : vector<8xf32> to vector<8x1xf32>
      %1420 = arith.fptosi %1419 : vector<8x1xf32> to vector<8x1xi32>
      %c0_849 = arith.constant 0 : index
      %c0_850 = arith.constant 0 : index
      %1421 = vector.load %arg16[%c0_849, %c0_850] : memref<8x1xi32, #tpu.memory_space<vmem>>, vector<8x1xi32>
      tpu.vector_store %arg16[%c0_849, %c0_850], %1420 {strides = array<i32>} : memref<8x1xi32, #tpu.memory_space<vmem>>, vector<8x1xi32>,
    } else {
    }
    %c0_641 = arith.constant 0 : index
    %c0_642 = arith.constant 0 : index
    %1075 = vector.load %arg16[%c0_641, %c0_642] : memref<8x1xi32, #tpu.memory_space<vmem>>, vector<8x1xi32>
    %1076 = vector.broadcast %1075 : vector<8x1xi32> to vector<8x16xi32>
    %1077 = arith.cmpi eq, %1076, %9 : vector<8x16xi32>
    %1078 = arith.extui %1077 : vector<8x16xi1> to vector<8x16xi32>
    %1079 = arith.sitofp %1078 : vector<8x16xi32> to vector<8x16xf32>
    %c0_643 = arith.constant 0 : index
    %c0_644 = arith.constant 0 : index
    %1080 = vector.load %arg4[%c0_643, %c0_644] : memref<16x32xf32, #tpu.memory_space<vmem>>, vector<16x32xf32>
    %cst_645 = arith.constant dense<0.000000e+00> : vector<8x32xf32>
    %1081 = tpu.matmul %1079, %1080, %cst_645 {dimension_numbers = #tpu.dot_dimension_numbers<[1], [0], [0], [1], [0, 0, 1, 1], [], []>} : vector<8x16xf32>, vector<16x32xf32>, vector<8x32xf32> -> vector<8x32xf32>
    %c0_646 = arith.constant 0 : index
    %c0_647 = arith.constant 0 : index
    %c0_648 = arith.constant 0 : index
    %1082 = vector.load %arg8[%c0_646, %c0_647, %c0_648] : memref<2x32x128xf32, #tpu.memory_space<vmem>>, vector<1x32x128xf32>
    %1083 = vector.shape_cast %1082 : vector<1x32x128xf32> to vector<32x128xf32>
    %cst_649 = arith.constant dense<0.000000e+00> : vector<8x128xf32>
    %1084 = tpu.matmul %1081, %1083, %cst_649 {dimension_numbers = #tpu.dot_dimension_numbers<[1], [0], [0], [1], [0, 0, 1, 1], [], []>} : vector<8x32xf32>, vector<32x128xf32>, vector<8x128xf32> -> vector<8x128xf32>
    %c0_650 = arith.constant 0 : index
    %c0_651 = arith.constant 0 : index
    %c0_652 = arith.constant 0 : index
    %1085 = vector.load %arg14[%c0_650, %c0_651, %c0_652] : memref<2x8x32xf32, #tpu.memory_space<vmem>>, vector<1x8x32xf32>
    %1086 = vector.shape_cast %1085 : vector<1x8x32xf32> to vector<8x32xf32>
    %c0_653 = arith.constant 0 : index
    %c0_654 = arith.constant 0 : index
    %c0_655 = arith.constant 0 : index
    %1087 = vector.load %arg9[%c0_653, %c0_654, %c0_655] : memref<2x32x128xf32, #tpu.memory_space<vmem>>, vector<1x32x128xf32>
    %1088 = vector.shape_cast %1087 : vector<1x32x128xf32> to vector<32x128xf32>
    %cst_656 = arith.constant dense<0.000000e+00> : vector<8x128xf32>
    %1089 = tpu.matmul %1086, %1088, %cst_656 {dimension_numbers = #tpu.dot_dimension_numbers<[1], [0], [0], [1], [0, 0, 1, 1], [], []>} : vector<8x32xf32>, vector<32x128xf32>, vector<8x128xf32> -> vector<8x128xf32>
    %1090 = arith.addf %1084, %1089 : vector<8x128xf32>
    %c0_657 = arith.constant 0 : index
    %c0_658 = arith.constant 0 : index
    %c0_659 = arith.constant 0 : index
    %1091 = vector.load %arg10[%c0_657, %c0_658, %c0_659] : memref<2x1x128xf32, #tpu.memory_space<vmem>>, vector<1x1x128xf32>
    %1092 = vector.shape_cast %1091 : vector<1x1x128xf32> to vector<1x128xf32>
    %1093 = vector.broadcast %1092 : vector<1x128xf32> to vector<8x128xf32>
    %1094 = arith.addf %1090, %1093 : vector<8x128xf32>
    %1095 = vector.extract_strided_slice %1094 {offsets = [0, 0], sizes = [8, 32], strides = [1, 1]} : vector<8x128xf32> to vector<8x32xf32>
    %1096 = arith.negf %1095 : vector<8x32xf32>
    %1097 = math.exp %1096 : vector<8x32xf32>
    %cst_660 = arith.constant 1.000000e+00 : f32
    %1098 = vector.broadcast %cst_660 : f32 to vector<8x32xf32>
    %1099 = arith.addf %1098, %1097 : vector<8x32xf32>
    %1100 = arith.divf %1098, %1099 : vector<8x32xf32>
    %1101 = vector.extract_strided_slice %1094 {offsets = [0, 32], sizes = [8, 32], strides = [1, 1]} : vector<8x128xf32> to vector<8x32xf32>
    %1102 = arith.negf %1101 : vector<8x32xf32>
    %1103 = math.exp %1102 : vector<8x32xf32>
    %cst_661 = arith.constant 1.000000e+00 : f32
    %1104 = vector.broadcast %cst_661 : f32 to vector<8x32xf32>
    %1105 = arith.addf %1104, %1103 : vector<8x32xf32>
    %1106 = arith.divf %1104, %1105 : vector<8x32xf32>
    %1107 = vector.extract_strided_slice %1094 {offsets = [0, 64], sizes = [8, 32], strides = [1, 1]} : vector<8x128xf32> to vector<8x32xf32>
    %1108 = math.tanh %1107 : vector<8x32xf32>
    %1109 = vector.extract_strided_slice %1094 {offsets = [0, 96], sizes = [8, 32], strides = [1, 1]} : vector<8x128xf32> to vector<8x32xf32>
    %1110 = arith.negf %1109 : vector<8x32xf32>
    %1111 = math.exp %1110 : vector<8x32xf32>
    %cst_662 = arith.constant 1.000000e+00 : f32
    %1112 = vector.broadcast %cst_662 : f32 to vector<8x32xf32>
    %1113 = arith.addf %1112, %1111 : vector<8x32xf32>
    %1114 = arith.divf %1112, %1113 : vector<8x32xf32>
    %c0_663 = arith.constant 0 : index
    %c0_664 = arith.constant 0 : index
    %c0_665 = arith.constant 0 : index
    %1115 = vector.load %arg15[%c0_663, %c0_664, %c0_665] : memref<2x8x32xf32, #tpu.memory_space<vmem>>, vector<1x8x32xf32>
    %1116 = vector.shape_cast %1115 : vector<1x8x32xf32> to vector<8x32xf32>
    %1117 = arith.mulf %1106, %1116 : vector<8x32xf32>
    %1118 = arith.mulf %1100, %1108 : vector<8x32xf32>
    %1119 = arith.addf %1117, %1118 : vector<8x32xf32>
    %1120 = math.tanh %1119 : vector<8x32xf32>
    %1121 = arith.mulf %1114, %1120 : vector<8x32xf32>
    %c0_666 = arith.constant 0 : index
    %c0_667 = arith.constant 0 : index
    %c0_668 = arith.constant 0 : index
    %1122 = vector.load %arg15[%c0_666, %c0_667, %c0_668] : memref<2x8x32xf32, #tpu.memory_space<vmem>>, vector<1x8x32xf32>
    %1123 = vector.shape_cast %1122 : vector<1x8x32xf32> to vector<8x32xf32>
    %1124 = vector.shape_cast %1119 : vector<8x32xf32> to vector<1x8x32xf32>
    tpu.vector_store %arg15[%c0_666, %c0_667, %c0_668], %1124 {strides = array<i32>} : memref<2x8x32xf32, #tpu.memory_space<vmem>>, vector<1x8x32xf32>,
    %c0_669 = arith.constant 0 : index
    %c0_670 = arith.constant 0 : index
    %c0_671 = arith.constant 0 : index
    %1125 = vector.load %arg14[%c0_669, %c0_670, %c0_671] : memref<2x8x32xf32, #tpu.memory_space<vmem>>, vector<1x8x32xf32>
    %1126 = vector.shape_cast %1125 : vector<1x8x32xf32> to vector<8x32xf32>
    %1127 = vector.shape_cast %1121 : vector<8x32xf32> to vector<1x8x32xf32>
    tpu.vector_store %arg14[%c0_669, %c0_670, %c0_671], %1127 {strides = array<i32>} : memref<2x8x32xf32, #tpu.memory_space<vmem>>, vector<1x8x32xf32>,
    %c1_672 = arith.constant 1 : index
    %c0_673 = arith.constant 0 : index
    %c0_674 = arith.constant 0 : index
    %1128 = vector.load %arg8[%c1_672, %c0_673, %c0_674] : memref<2x32x128xf32, #tpu.memory_space<vmem>>, vector<1x32x128xf32>
    %1129 = vector.shape_cast %1128 : vector<1x32x128xf32> to vector<32x128xf32>
    %cst_675 = arith.constant dense<0.000000e+00> : vector<8x128xf32>
    %1130 = tpu.matmul %1121, %1129, %cst_675 {dimension_numbers = #tpu.dot_dimension_numbers<[1], [0], [0], [1], [0, 0, 1, 1], [], []>} : vector<8x32xf32>, vector<32x128xf32>, vector<8x128xf32> -> vector<8x128xf32>
    %c1_676 = arith.constant 1 : index
    %c0_677 = arith.constant 0 : index
    %c0_678 = arith.constant 0 : index
    %1131 = vector.load %arg14[%c1_676, %c0_677, %c0_678] : memref<2x8x32xf32, #tpu.memory_space<vmem>>, vector<1x8x32xf32>
    %1132 = vector.shape_cast %1131 : vector<1x8x32xf32> to vector<8x32xf32>
    %c1_679 = arith.constant 1 : index
    %c0_680 = arith.constant 0 : index
    %c0_681 = arith.constant 0 : index
    %1133 = vector.load %arg9[%c1_679, %c0_680, %c0_681] : memref<2x32x128xf32, #tpu.memory_space<vmem>>, vector<1x32x128xf32>
    %1134 = vector.shape_cast %1133 : vector<1x32x128xf32> to vector<32x128xf32>
    %cst_682 = arith.constant dense<0.000000e+00> : vector<8x128xf32>
    %1135 = tpu.matmul %1132, %1134, %cst_682 {dimension_numbers = #tpu.dot_dimension_numbers<[1], [0], [0], [1], [0, 0, 1, 1], [], []>} : vector<8x32xf32>, vector<32x128xf32>, vector<8x128xf32> -> vector<8x128xf32>
    %1136 = arith.addf %1130, %1135 : vector<8x128xf32>
    %c1_683 = arith.constant 1 : index
    %c0_684 = arith.constant 0 : index
    %c0_685 = arith.constant 0 : index
    %1137 = vector.load %arg10[%c1_683, %c0_684, %c0_685] : memref<2x1x128xf32, #tpu.memory_space<vmem>>, vector<1x1x128xf32>
    %1138 = vector.shape_cast %1137 : vector<1x1x128xf32> to vector<1x128xf32>
    %1139 = vector.broadcast %1138 : vector<1x128xf32> to vector<8x128xf32>
    %1140 = arith.addf %1136, %1139 : vector<8x128xf32>
    %1141 = vector.extract_strided_slice %1140 {offsets = [0, 0], sizes = [8, 32], strides = [1, 1]} : vector<8x128xf32> to vector<8x32xf32>
    %1142 = arith.negf %1141 : vector<8x32xf32>
    %1143 = math.exp %1142 : vector<8x32xf32>
    %cst_686 = arith.constant 1.000000e+00 : f32
    %1144 = vector.broadcast %cst_686 : f32 to vector<8x32xf32>
    %1145 = arith.addf %1144, %1143 : vector<8x32xf32>
    %1146 = arith.divf %1144, %1145 : vector<8x32xf32>
    %1147 = vector.extract_strided_slice %1140 {offsets = [0, 32], sizes = [8, 32], strides = [1, 1]} : vector<8x128xf32> to vector<8x32xf32>
    %1148 = arith.negf %1147 : vector<8x32xf32>
    %1149 = math.exp %1148 : vector<8x32xf32>
    %cst_687 = arith.constant 1.000000e+00 : f32
    %1150 = vector.broadcast %cst_687 : f32 to vector<8x32xf32>
    %1151 = arith.addf %1150, %1149 : vector<8x32xf32>
    %1152 = arith.divf %1150, %1151 : vector<8x32xf32>
    %1153 = vector.extract_strided_slice %1140 {offsets = [0, 64], sizes = [8, 32], strides = [1, 1]} : vector<8x128xf32> to vector<8x32xf32>
    %1154 = math.tanh %1153 : vector<8x32xf32>
    %1155 = vector.extract_strided_slice %1140 {offsets = [0, 96], sizes = [8, 32], strides = [1, 1]} : vector<8x128xf32> to vector<8x32xf32>
    %1156 = arith.negf %1155 : vector<8x32xf32>
    %1157 = math.exp %1156 : vector<8x32xf32>
    %cst_688 = arith.constant 1.000000e+00 : f32
    %1158 = vector.broadcast %cst_688 : f32 to vector<8x32xf32>
    %1159 = arith.addf %1158, %1157 : vector<8x32xf32>
    %1160 = arith.divf %1158, %1159 : vector<8x32xf32>
    %c1_689 = arith.constant 1 : index
    %c0_690 = arith.constant 0 : index
    %c0_691 = arith.constant 0 : index
    %1161 = vector.load %arg15[%c1_689, %c0_690, %c0_691] : memref<2x8x32xf32, #tpu.memory_space<vmem>>, vector<1x8x32xf32>
    %1162 = vector.shape_cast %1161 : vector<1x8x32xf32> to vector<8x32xf32>
    %1163 = arith.mulf %1152, %1162 : vector<8x32xf32>
    %1164 = arith.mulf %1146, %1154 : vector<8x32xf32>
    %1165 = arith.addf %1163, %1164 : vector<8x32xf32>
    %1166 = math.tanh %1165 : vector<8x32xf32>
    %1167 = arith.mulf %1160, %1166 : vector<8x32xf32>
    %c1_692 = arith.constant 1 : index
    %c0_693 = arith.constant 0 : index
    %c0_694 = arith.constant 0 : index
    %1168 = vector.load %arg15[%c1_692, %c0_693, %c0_694] : memref<2x8x32xf32, #tpu.memory_space<vmem>>, vector<1x8x32xf32>
    %1169 = vector.shape_cast %1168 : vector<1x8x32xf32> to vector<8x32xf32>
    %1170 = vector.shape_cast %1165 : vector<8x32xf32> to vector<1x8x32xf32>
    tpu.vector_store %arg15[%c1_692, %c0_693, %c0_694], %1170 {strides = array<i32>} : memref<2x8x32xf32, #tpu.memory_space<vmem>>, vector<1x8x32xf32>,
    %c1_695 = arith.constant 1 : index
    %c0_696 = arith.constant 0 : index
    %c0_697 = arith.constant 0 : index
    %1171 = vector.load %arg14[%c1_695, %c0_696, %c0_697] : memref<2x8x32xf32, #tpu.memory_space<vmem>>, vector<1x8x32xf32>
    %1172 = vector.shape_cast %1171 : vector<1x8x32xf32> to vector<8x32xf32>
    %1173 = vector.shape_cast %1167 : vector<8x32xf32> to vector<1x8x32xf32>
    tpu.vector_store %arg14[%c1_695, %c0_696, %c0_697], %1173 {strides = array<i32>} : memref<2x8x32xf32, #tpu.memory_space<vmem>>, vector<1x8x32xf32>,
    %c0_698 = arith.constant 0 : index
    %c0_699 = arith.constant 0 : index
    %1174 = vector.load %arg11[%c0_698, %c0_699] : memref<32x128xf32, #tpu.memory_space<vmem>>, vector<32x128xf32>
    %cst_700 = arith.constant dense<0.000000e+00> : vector<8x128xf32>
    %1175 = tpu.matmul %1167, %1174, %cst_700 {dimension_numbers = #tpu.dot_dimension_numbers<[1], [0], [0], [1], [0, 0, 1, 1], [], []>} : vector<8x32xf32>, vector<32x128xf32>, vector<8x128xf32> -> vector<8x128xf32>
    %c0_701 = arith.constant 0 : index
    %c0_702 = arith.constant 0 : index
    %1176 = vector.load %arg12[%c0_701, %c0_702] : memref<1x128xf32, #tpu.memory_space<vmem>>, vector<1x128xf32>
    %1177 = vector.broadcast %1176 : vector<1x128xf32> to vector<8x128xf32>
    %1178 = arith.addf %1175, %1177 : vector<8x128xf32>
    %c5_703 = arith.constant 5 : index
    %c0_704 = arith.constant 0 : index
    %c0_705 = arith.constant 0 : index
    %1179 = vector.load %arg13[%c5_703, %c0_704, %c0_705] : memref<8x8x128xf32, #tpu.memory_space<vmem>>, vector<1x8x128xf32>
    %1180 = vector.shape_cast %1179 : vector<1x8x128xf32> to vector<8x128xf32>
    %1181 = vector.shape_cast %1178 : vector<8x128xf32> to vector<1x8x128xf32>
    tpu.vector_store %arg13[%c5_703, %c0_704, %c0_705], %1181 {strides = array<i32>} : memref<8x8x128xf32, #tpu.memory_space<vmem>>, vector<1x8x128xf32>,
    %c5_706 = arith.constant 5 : index
    %1182 = memref.load %arg0[%c5_706] : memref<8xi32, #tpu.memory_space<smem>>
    %c0_i32_707 = arith.constant 0 : i32
    %1183 = arith.cmpi sgt, %1182, %c0_i32_707 : i32
    %1184 = arith.extui %1183 : i1 to i32
    %c0_i32_708 = arith.constant 0 : i32
    %1185 = arith.cmpi ne, %1184, %c0_i32_708 : i32
    scf.if %1185 {
      %c5_846 = arith.constant 5 : index
      %c0_847 = arith.constant 0 : index
      %c0_848 = arith.constant 0 : index
      %1412 = vector.load %arg2[%c5_846, %c0_847, %c0_848] : memref<8x8x1xi32, #tpu.memory_space<vmem>>, vector<1x8x1xi32>
      %1413 = vector.shape_cast %1412 : vector<1x8x1xi32> to vector<8x1xi32>
      %c0_849 = arith.constant 0 : index
      %c0_850 = arith.constant 0 : index
      %1414 = vector.load %arg16[%c0_849, %c0_850] : memref<8x1xi32, #tpu.memory_space<vmem>>, vector<8x1xi32>
      tpu.vector_store %arg16[%c0_849, %c0_850], %1413 {strides = array<i32>} : memref<8x1xi32, #tpu.memory_space<vmem>>, vector<8x1xi32>,
    } else {
    }
    %c5_709 = arith.constant 5 : index
    %1186 = memref.load %arg0[%c5_709] : memref<8xi32, #tpu.memory_space<smem>>
    %c0_i32_710 = arith.constant 0 : i32
    %1187 = arith.cmpi eq, %1186, %c0_i32_710 : i32
    %1188 = arith.extui %1187 : i1 to i32
    %c0_i32_711 = arith.constant 0 : i32
    %1189 = arith.cmpi ne, %1188, %c0_i32_711 : i32
    scf.if %1189 {
      %cst_846 = arith.constant dense<0xFF800000> : vector<8xf32>
      %1412 = vector.multi_reduction <maximumf>, %1178, %cst_846 [1] : vector<8x128xf32> to vector<8xf32>
      %1413 = vector.shape_cast %1412 : vector<8xf32> to vector<8x1xf32>
      %1414 = vector.broadcast %1413 : vector<8x1xf32> to vector<8x128xf32>
      %1415 = arith.cmpf oeq, %1178, %1414 : vector<8x128xf32>
      %cst_847 = arith.constant 1.280000e+02 : f32
      %1416 = vector.broadcast %cst_847 : f32 to vector<8x128xf32>
      %1417 = arith.select %1415, %11, %1416 : vector<8x128xi1>, vector<8x128xf32>
      %cst_848 = arith.constant dense<0x7F800000> : vector<8xf32>
      %1418 = vector.multi_reduction <minimumf>, %1417, %cst_848 [1] : vector<8x128xf32> to vector<8xf32>
      %1419 = vector.shape_cast %1418 : vector<8xf32> to vector<8x1xf32>
      %1420 = arith.fptosi %1419 : vector<8x1xf32> to vector<8x1xi32>
      %c0_849 = arith.constant 0 : index
      %c0_850 = arith.constant 0 : index
      %1421 = vector.load %arg16[%c0_849, %c0_850] : memref<8x1xi32, #tpu.memory_space<vmem>>, vector<8x1xi32>
      tpu.vector_store %arg16[%c0_849, %c0_850], %1420 {strides = array<i32>} : memref<8x1xi32, #tpu.memory_space<vmem>>, vector<8x1xi32>,
    } else {
    }
    %c0_712 = arith.constant 0 : index
    %c0_713 = arith.constant 0 : index
    %1190 = vector.load %arg16[%c0_712, %c0_713] : memref<8x1xi32, #tpu.memory_space<vmem>>, vector<8x1xi32>
    %1191 = vector.broadcast %1190 : vector<8x1xi32> to vector<8x16xi32>
    %1192 = arith.cmpi eq, %1191, %9 : vector<8x16xi32>
    %1193 = arith.extui %1192 : vector<8x16xi1> to vector<8x16xi32>
    %1194 = arith.sitofp %1193 : vector<8x16xi32> to vector<8x16xf32>
    %c0_714 = arith.constant 0 : index
    %c0_715 = arith.constant 0 : index
    %1195 = vector.load %arg4[%c0_714, %c0_715] : memref<16x32xf32, #tpu.memory_space<vmem>>, vector<16x32xf32>
    %cst_716 = arith.constant dense<0.000000e+00> : vector<8x32xf32>
    %1196 = tpu.matmul %1194, %1195, %cst_716 {dimension_numbers = #tpu.dot_dimension_numbers<[1], [0], [0], [1], [0, 0, 1, 1], [], []>} : vector<8x16xf32>, vector<16x32xf32>, vector<8x32xf32> -> vector<8x32xf32>
    %c0_717 = arith.constant 0 : index
    %c0_718 = arith.constant 0 : index
    %c0_719 = arith.constant 0 : index
    %1197 = vector.load %arg8[%c0_717, %c0_718, %c0_719] : memref<2x32x128xf32, #tpu.memory_space<vmem>>, vector<1x32x128xf32>
    %1198 = vector.shape_cast %1197 : vector<1x32x128xf32> to vector<32x128xf32>
    %cst_720 = arith.constant dense<0.000000e+00> : vector<8x128xf32>
    %1199 = tpu.matmul %1196, %1198, %cst_720 {dimension_numbers = #tpu.dot_dimension_numbers<[1], [0], [0], [1], [0, 0, 1, 1], [], []>} : vector<8x32xf32>, vector<32x128xf32>, vector<8x128xf32> -> vector<8x128xf32>
    %c0_721 = arith.constant 0 : index
    %c0_722 = arith.constant 0 : index
    %c0_723 = arith.constant 0 : index
    %1200 = vector.load %arg14[%c0_721, %c0_722, %c0_723] : memref<2x8x32xf32, #tpu.memory_space<vmem>>, vector<1x8x32xf32>
    %1201 = vector.shape_cast %1200 : vector<1x8x32xf32> to vector<8x32xf32>
    %c0_724 = arith.constant 0 : index
    %c0_725 = arith.constant 0 : index
    %c0_726 = arith.constant 0 : index
    %1202 = vector.load %arg9[%c0_724, %c0_725, %c0_726] : memref<2x32x128xf32, #tpu.memory_space<vmem>>, vector<1x32x128xf32>
    %1203 = vector.shape_cast %1202 : vector<1x32x128xf32> to vector<32x128xf32>
    %cst_727 = arith.constant dense<0.000000e+00> : vector<8x128xf32>
    %1204 = tpu.matmul %1201, %1203, %cst_727 {dimension_numbers = #tpu.dot_dimension_numbers<[1], [0], [0], [1], [0, 0, 1, 1], [], []>} : vector<8x32xf32>, vector<32x128xf32>, vector<8x128xf32> -> vector<8x128xf32>
    %1205 = arith.addf %1199, %1204 : vector<8x128xf32>
    %c0_728 = arith.constant 0 : index
    %c0_729 = arith.constant 0 : index
    %c0_730 = arith.constant 0 : index
    %1206 = vector.load %arg10[%c0_728, %c0_729, %c0_730] : memref<2x1x128xf32, #tpu.memory_space<vmem>>, vector<1x1x128xf32>
    %1207 = vector.shape_cast %1206 : vector<1x1x128xf32> to vector<1x128xf32>
    %1208 = vector.broadcast %1207 : vector<1x128xf32> to vector<8x128xf32>
    %1209 = arith.addf %1205, %1208 : vector<8x128xf32>
    %1210 = vector.extract_strided_slice %1209 {offsets = [0, 0], sizes = [8, 32], strides = [1, 1]} : vector<8x128xf32> to vector<8x32xf32>
    %1211 = arith.negf %1210 : vector<8x32xf32>
    %1212 = math.exp %1211 : vector<8x32xf32>
    %cst_731 = arith.constant 1.000000e+00 : f32
    %1213 = vector.broadcast %cst_731 : f32 to vector<8x32xf32>
    %1214 = arith.addf %1213, %1212 : vector<8x32xf32>
    %1215 = arith.divf %1213, %1214 : vector<8x32xf32>
    %1216 = vector.extract_strided_slice %1209 {offsets = [0, 32], sizes = [8, 32], strides = [1, 1]} : vector<8x128xf32> to vector<8x32xf32>
    %1217 = arith.negf %1216 : vector<8x32xf32>
    %1218 = math.exp %1217 : vector<8x32xf32>
    %cst_732 = arith.constant 1.000000e+00 : f32
    %1219 = vector.broadcast %cst_732 : f32 to vector<8x32xf32>
    %1220 = arith.addf %1219, %1218 : vector<8x32xf32>
    %1221 = arith.divf %1219, %1220 : vector<8x32xf32>
    %1222 = vector.extract_strided_slice %1209 {offsets = [0, 64], sizes = [8, 32], strides = [1, 1]} : vector<8x128xf32> to vector<8x32xf32>
    %1223 = math.tanh %1222 : vector<8x32xf32>
    %1224 = vector.extract_strided_slice %1209 {offsets = [0, 96], sizes = [8, 32], strides = [1, 1]} : vector<8x128xf32> to vector<8x32xf32>
    %1225 = arith.negf %1224 : vector<8x32xf32>
    %1226 = math.exp %1225 : vector<8x32xf32>
    %cst_733 = arith.constant 1.000000e+00 : f32
    %1227 = vector.broadcast %cst_733 : f32 to vector<8x32xf32>
    %1228 = arith.addf %1227, %1226 : vector<8x32xf32>
    %1229 = arith.divf %1227, %1228 : vector<8x32xf32>
    %c0_734 = arith.constant 0 : index
    %c0_735 = arith.constant 0 : index
    %c0_736 = arith.constant 0 : index
    %1230 = vector.load %arg15[%c0_734, %c0_735, %c0_736] : memref<2x8x32xf32, #tpu.memory_space<vmem>>, vector<1x8x32xf32>
    %1231 = vector.shape_cast %1230 : vector<1x8x32xf32> to vector<8x32xf32>
    %1232 = arith.mulf %1221, %1231 : vector<8x32xf32>
    %1233 = arith.mulf %1215, %1223 : vector<8x32xf32>
    %1234 = arith.addf %1232, %1233 : vector<8x32xf32>
    %1235 = math.tanh %1234 : vector<8x32xf32>
    %1236 = arith.mulf %1229, %1235 : vector<8x32xf32>
    %c0_737 = arith.constant 0 : index
    %c0_738 = arith.constant 0 : index
    %c0_739 = arith.constant 0 : index
    %1237 = vector.load %arg15[%c0_737, %c0_738, %c0_739] : memref<2x8x32xf32, #tpu.memory_space<vmem>>, vector<1x8x32xf32>
    %1238 = vector.shape_cast %1237 : vector<1x8x32xf32> to vector<8x32xf32>
    %1239 = vector.shape_cast %1234 : vector<8x32xf32> to vector<1x8x32xf32>
    tpu.vector_store %arg15[%c0_737, %c0_738, %c0_739], %1239 {strides = array<i32>} : memref<2x8x32xf32, #tpu.memory_space<vmem>>, vector<1x8x32xf32>,
    %c0_740 = arith.constant 0 : index
    %c0_741 = arith.constant 0 : index
    %c0_742 = arith.constant 0 : index
    %1240 = vector.load %arg14[%c0_740, %c0_741, %c0_742] : memref<2x8x32xf32, #tpu.memory_space<vmem>>, vector<1x8x32xf32>
    %1241 = vector.shape_cast %1240 : vector<1x8x32xf32> to vector<8x32xf32>
    %1242 = vector.shape_cast %1236 : vector<8x32xf32> to vector<1x8x32xf32>
    tpu.vector_store %arg14[%c0_740, %c0_741, %c0_742], %1242 {strides = array<i32>} : memref<2x8x32xf32, #tpu.memory_space<vmem>>, vector<1x8x32xf32>,
    %c1_743 = arith.constant 1 : index
    %c0_744 = arith.constant 0 : index
    %c0_745 = arith.constant 0 : index
    %1243 = vector.load %arg8[%c1_743, %c0_744, %c0_745] : memref<2x32x128xf32, #tpu.memory_space<vmem>>, vector<1x32x128xf32>
    %1244 = vector.shape_cast %1243 : vector<1x32x128xf32> to vector<32x128xf32>
    %cst_746 = arith.constant dense<0.000000e+00> : vector<8x128xf32>
    %1245 = tpu.matmul %1236, %1244, %cst_746 {dimension_numbers = #tpu.dot_dimension_numbers<[1], [0], [0], [1], [0, 0, 1, 1], [], []>} : vector<8x32xf32>, vector<32x128xf32>, vector<8x128xf32> -> vector<8x128xf32>
    %c1_747 = arith.constant 1 : index
    %c0_748 = arith.constant 0 : index
    %c0_749 = arith.constant 0 : index
    %1246 = vector.load %arg14[%c1_747, %c0_748, %c0_749] : memref<2x8x32xf32, #tpu.memory_space<vmem>>, vector<1x8x32xf32>
    %1247 = vector.shape_cast %1246 : vector<1x8x32xf32> to vector<8x32xf32>
    %c1_750 = arith.constant 1 : index
    %c0_751 = arith.constant 0 : index
    %c0_752 = arith.constant 0 : index
    %1248 = vector.load %arg9[%c1_750, %c0_751, %c0_752] : memref<2x32x128xf32, #tpu.memory_space<vmem>>, vector<1x32x128xf32>
    %1249 = vector.shape_cast %1248 : vector<1x32x128xf32> to vector<32x128xf32>
    %cst_753 = arith.constant dense<0.000000e+00> : vector<8x128xf32>
    %1250 = tpu.matmul %1247, %1249, %cst_753 {dimension_numbers = #tpu.dot_dimension_numbers<[1], [0], [0], [1], [0, 0, 1, 1], [], []>} : vector<8x32xf32>, vector<32x128xf32>, vector<8x128xf32> -> vector<8x128xf32>
    %1251 = arith.addf %1245, %1250 : vector<8x128xf32>
    %c1_754 = arith.constant 1 : index
    %c0_755 = arith.constant 0 : index
    %c0_756 = arith.constant 0 : index
    %1252 = vector.load %arg10[%c1_754, %c0_755, %c0_756] : memref<2x1x128xf32, #tpu.memory_space<vmem>>, vector<1x1x128xf32>
    %1253 = vector.shape_cast %1252 : vector<1x1x128xf32> to vector<1x128xf32>
    %1254 = vector.broadcast %1253 : vector<1x128xf32> to vector<8x128xf32>
    %1255 = arith.addf %1251, %1254 : vector<8x128xf32>
    %1256 = vector.extract_strided_slice %1255 {offsets = [0, 0], sizes = [8, 32], strides = [1, 1]} : vector<8x128xf32> to vector<8x32xf32>
    %1257 = arith.negf %1256 : vector<8x32xf32>
    %1258 = math.exp %1257 : vector<8x32xf32>
    %cst_757 = arith.constant 1.000000e+00 : f32
    %1259 = vector.broadcast %cst_757 : f32 to vector<8x32xf32>
    %1260 = arith.addf %1259, %1258 : vector<8x32xf32>
    %1261 = arith.divf %1259, %1260 : vector<8x32xf32>
    %1262 = vector.extract_strided_slice %1255 {offsets = [0, 32], sizes = [8, 32], strides = [1, 1]} : vector<8x128xf32> to vector<8x32xf32>
    %1263 = arith.negf %1262 : vector<8x32xf32>
    %1264 = math.exp %1263 : vector<8x32xf32>
    %cst_758 = arith.constant 1.000000e+00 : f32
    %1265 = vector.broadcast %cst_758 : f32 to vector<8x32xf32>
    %1266 = arith.addf %1265, %1264 : vector<8x32xf32>
    %1267 = arith.divf %1265, %1266 : vector<8x32xf32>
    %1268 = vector.extract_strided_slice %1255 {offsets = [0, 64], sizes = [8, 32], strides = [1, 1]} : vector<8x128xf32> to vector<8x32xf32>
    %1269 = math.tanh %1268 : vector<8x32xf32>
    %1270 = vector.extract_strided_slice %1255 {offsets = [0, 96], sizes = [8, 32], strides = [1, 1]} : vector<8x128xf32> to vector<8x32xf32>
    %1271 = arith.negf %1270 : vector<8x32xf32>
    %1272 = math.exp %1271 : vector<8x32xf32>
    %cst_759 = arith.constant 1.000000e+00 : f32
    %1273 = vector.broadcast %cst_759 : f32 to vector<8x32xf32>
    %1274 = arith.addf %1273, %1272 : vector<8x32xf32>
    %1275 = arith.divf %1273, %1274 : vector<8x32xf32>
    %c1_760 = arith.constant 1 : index
    %c0_761 = arith.constant 0 : index
    %c0_762 = arith.constant 0 : index
    %1276 = vector.load %arg15[%c1_760, %c0_761, %c0_762] : memref<2x8x32xf32, #tpu.memory_space<vmem>>, vector<1x8x32xf32>
    %1277 = vector.shape_cast %1276 : vector<1x8x32xf32> to vector<8x32xf32>
    %1278 = arith.mulf %1267, %1277 : vector<8x32xf32>
    %1279 = arith.mulf %1261, %1269 : vector<8x32xf32>
    %1280 = arith.addf %1278, %1279 : vector<8x32xf32>
    %1281 = math.tanh %1280 : vector<8x32xf32>
    %1282 = arith.mulf %1275, %1281 : vector<8x32xf32>
    %c1_763 = arith.constant 1 : index
    %c0_764 = arith.constant 0 : index
    %c0_765 = arith.constant 0 : index
    %1283 = vector.load %arg15[%c1_763, %c0_764, %c0_765] : memref<2x8x32xf32, #tpu.memory_space<vmem>>, vector<1x8x32xf32>
    %1284 = vector.shape_cast %1283 : vector<1x8x32xf32> to vector<8x32xf32>
    %1285 = vector.shape_cast %1280 : vector<8x32xf32> to vector<1x8x32xf32>
    tpu.vector_store %arg15[%c1_763, %c0_764, %c0_765], %1285 {strides = array<i32>} : memref<2x8x32xf32, #tpu.memory_space<vmem>>, vector<1x8x32xf32>,
    %c1_766 = arith.constant 1 : index
    %c0_767 = arith.constant 0 : index
    %c0_768 = arith.constant 0 : index
    %1286 = vector.load %arg14[%c1_766, %c0_767, %c0_768] : memref<2x8x32xf32, #tpu.memory_space<vmem>>, vector<1x8x32xf32>
    %1287 = vector.shape_cast %1286 : vector<1x8x32xf32> to vector<8x32xf32>
    %1288 = vector.shape_cast %1282 : vector<8x32xf32> to vector<1x8x32xf32>
    tpu.vector_store %arg14[%c1_766, %c0_767, %c0_768], %1288 {strides = array<i32>} : memref<2x8x32xf32, #tpu.memory_space<vmem>>, vector<1x8x32xf32>,
    %c0_769 = arith.constant 0 : index
    %c0_770 = arith.constant 0 : index
    %1289 = vector.load %arg11[%c0_769, %c0_770] : memref<32x128xf32, #tpu.memory_space<vmem>>, vector<32x128xf32>
    %cst_771 = arith.constant dense<0.000000e+00> : vector<8x128xf32>
    %1290 = tpu.matmul %1282, %1289, %cst_771 {dimension_numbers = #tpu.dot_dimension_numbers<[1], [0], [0], [1], [0, 0, 1, 1], [], []>} : vector<8x32xf32>, vector<32x128xf32>, vector<8x128xf32> -> vector<8x128xf32>
    %c0_772 = arith.constant 0 : index
    %c0_773 = arith.constant 0 : index
    %1291 = vector.load %arg12[%c0_772, %c0_773] : memref<1x128xf32, #tpu.memory_space<vmem>>, vector<1x128xf32>
    %1292 = vector.broadcast %1291 : vector<1x128xf32> to vector<8x128xf32>
    %1293 = arith.addf %1290, %1292 : vector<8x128xf32>
    %c6 = arith.constant 6 : index
    %c0_774 = arith.constant 0 : index
    %c0_775 = arith.constant 0 : index
    %1294 = vector.load %arg13[%c6, %c0_774, %c0_775] : memref<8x8x128xf32, #tpu.memory_space<vmem>>, vector<1x8x128xf32>
    %1295 = vector.shape_cast %1294 : vector<1x8x128xf32> to vector<8x128xf32>
    %1296 = vector.shape_cast %1293 : vector<8x128xf32> to vector<1x8x128xf32>
    tpu.vector_store %arg13[%c6, %c0_774, %c0_775], %1296 {strides = array<i32>} : memref<8x8x128xf32, #tpu.memory_space<vmem>>, vector<1x8x128xf32>,
    %c6_776 = arith.constant 6 : index
    %1297 = memref.load %arg0[%c6_776] : memref<8xi32, #tpu.memory_space<smem>>
    %c0_i32_777 = arith.constant 0 : i32
    %1298 = arith.cmpi sgt, %1297, %c0_i32_777 : i32
    %1299 = arith.extui %1298 : i1 to i32
    %c0_i32_778 = arith.constant 0 : i32
    %1300 = arith.cmpi ne, %1299, %c0_i32_778 : i32
    scf.if %1300 {
      %c6_846 = arith.constant 6 : index
      %c0_847 = arith.constant 0 : index
      %c0_848 = arith.constant 0 : index
      %1412 = vector.load %arg2[%c6_846, %c0_847, %c0_848] : memref<8x8x1xi32, #tpu.memory_space<vmem>>, vector<1x8x1xi32>
      %1413 = vector.shape_cast %1412 : vector<1x8x1xi32> to vector<8x1xi32>
      %c0_849 = arith.constant 0 : index
      %c0_850 = arith.constant 0 : index
      %1414 = vector.load %arg16[%c0_849, %c0_850] : memref<8x1xi32, #tpu.memory_space<vmem>>, vector<8x1xi32>
      tpu.vector_store %arg16[%c0_849, %c0_850], %1413 {strides = array<i32>} : memref<8x1xi32, #tpu.memory_space<vmem>>, vector<8x1xi32>,
    } else {
    }
    %c6_779 = arith.constant 6 : index
    %1301 = memref.load %arg0[%c6_779] : memref<8xi32, #tpu.memory_space<smem>>
    %c0_i32_780 = arith.constant 0 : i32
    %1302 = arith.cmpi eq, %1301, %c0_i32_780 : i32
    %1303 = arith.extui %1302 : i1 to i32
    %c0_i32_781 = arith.constant 0 : i32
    %1304 = arith.cmpi ne, %1303, %c0_i32_781 : i32
    scf.if %1304 {
      %cst_846 = arith.constant dense<0xFF800000> : vector<8xf32>
      %1412 = vector.multi_reduction <maximumf>, %1293, %cst_846 [1] : vector<8x128xf32> to vector<8xf32>
      %1413 = vector.shape_cast %1412 : vector<8xf32> to vector<8x1xf32>
      %1414 = vector.broadcast %1413 : vector<8x1xf32> to vector<8x128xf32>
      %1415 = arith.cmpf oeq, %1293, %1414 : vector<8x128xf32>
      %cst_847 = arith.constant 1.280000e+02 : f32
      %1416 = vector.broadcast %cst_847 : f32 to vector<8x128xf32>
      %1417 = arith.select %1415, %11, %1416 : vector<8x128xi1>, vector<8x128xf32>
      %cst_848 = arith.constant dense<0x7F800000> : vector<8xf32>
      %1418 = vector.multi_reduction <minimumf>, %1417, %cst_848 [1] : vector<8x128xf32> to vector<8xf32>
      %1419 = vector.shape_cast %1418 : vector<8xf32> to vector<8x1xf32>
      %1420 = arith.fptosi %1419 : vector<8x1xf32> to vector<8x1xi32>
      %c0_849 = arith.constant 0 : index
      %c0_850 = arith.constant 0 : index
      %1421 = vector.load %arg16[%c0_849, %c0_850] : memref<8x1xi32, #tpu.memory_space<vmem>>, vector<8x1xi32>
      tpu.vector_store %arg16[%c0_849, %c0_850], %1420 {strides = array<i32>} : memref<8x1xi32, #tpu.memory_space<vmem>>, vector<8x1xi32>,
    } else {
    }
    %c0_782 = arith.constant 0 : index
    %c0_783 = arith.constant 0 : index
    %1305 = vector.load %arg16[%c0_782, %c0_783] : memref<8x1xi32, #tpu.memory_space<vmem>>, vector<8x1xi32>
    %1306 = vector.broadcast %1305 : vector<8x1xi32> to vector<8x16xi32>
    %1307 = arith.cmpi eq, %1306, %9 : vector<8x16xi32>
    %1308 = arith.extui %1307 : vector<8x16xi1> to vector<8x16xi32>
    %1309 = arith.sitofp %1308 : vector<8x16xi32> to vector<8x16xf32>
    %c0_784 = arith.constant 0 : index
    %c0_785 = arith.constant 0 : index
    %1310 = vector.load %arg4[%c0_784, %c0_785] : memref<16x32xf32, #tpu.memory_space<vmem>>, vector<16x32xf32>
    %cst_786 = arith.constant dense<0.000000e+00> : vector<8x32xf32>
    %1311 = tpu.matmul %1309, %1310, %cst_786 {dimension_numbers = #tpu.dot_dimension_numbers<[1], [0], [0], [1], [0, 0, 1, 1], [], []>} : vector<8x16xf32>, vector<16x32xf32>, vector<8x32xf32> -> vector<8x32xf32>
    %c0_787 = arith.constant 0 : index
    %c0_788 = arith.constant 0 : index
    %c0_789 = arith.constant 0 : index
    %1312 = vector.load %arg8[%c0_787, %c0_788, %c0_789] : memref<2x32x128xf32, #tpu.memory_space<vmem>>, vector<1x32x128xf32>
    %1313 = vector.shape_cast %1312 : vector<1x32x128xf32> to vector<32x128xf32>
    %cst_790 = arith.constant dense<0.000000e+00> : vector<8x128xf32>
    %1314 = tpu.matmul %1311, %1313, %cst_790 {dimension_numbers = #tpu.dot_dimension_numbers<[1], [0], [0], [1], [0, 0, 1, 1], [], []>} : vector<8x32xf32>, vector<32x128xf32>, vector<8x128xf32> -> vector<8x128xf32>
    %c0_791 = arith.constant 0 : index
    %c0_792 = arith.constant 0 : index
    %c0_793 = arith.constant 0 : index
    %1315 = vector.load %arg14[%c0_791, %c0_792, %c0_793] : memref<2x8x32xf32, #tpu.memory_space<vmem>>, vector<1x8x32xf32>
    %1316 = vector.shape_cast %1315 : vector<1x8x32xf32> to vector<8x32xf32>
    %c0_794 = arith.constant 0 : index
    %c0_795 = arith.constant 0 : index
    %c0_796 = arith.constant 0 : index
    %1317 = vector.load %arg9[%c0_794, %c0_795, %c0_796] : memref<2x32x128xf32, #tpu.memory_space<vmem>>, vector<1x32x128xf32>
    %1318 = vector.shape_cast %1317 : vector<1x32x128xf32> to vector<32x128xf32>
    %cst_797 = arith.constant dense<0.000000e+00> : vector<8x128xf32>
    %1319 = tpu.matmul %1316, %1318, %cst_797 {dimension_numbers = #tpu.dot_dimension_numbers<[1], [0], [0], [1], [0, 0, 1, 1], [], []>} : vector<8x32xf32>, vector<32x128xf32>, vector<8x128xf32> -> vector<8x128xf32>
    %1320 = arith.addf %1314, %1319 : vector<8x128xf32>
    %c0_798 = arith.constant 0 : index
    %c0_799 = arith.constant 0 : index
    %c0_800 = arith.constant 0 : index
    %1321 = vector.load %arg10[%c0_798, %c0_799, %c0_800] : memref<2x1x128xf32, #tpu.memory_space<vmem>>, vector<1x1x128xf32>
    %1322 = vector.shape_cast %1321 : vector<1x1x128xf32> to vector<1x128xf32>
    %1323 = vector.broadcast %1322 : vector<1x128xf32> to vector<8x128xf32>
    %1324 = arith.addf %1320, %1323 : vector<8x128xf32>
    %1325 = vector.extract_strided_slice %1324 {offsets = [0, 0], sizes = [8, 32], strides = [1, 1]} : vector<8x128xf32> to vector<8x32xf32>
    %1326 = arith.negf %1325 : vector<8x32xf32>
    %1327 = math.exp %1326 : vector<8x32xf32>
    %cst_801 = arith.constant 1.000000e+00 : f32
    %1328 = vector.broadcast %cst_801 : f32 to vector<8x32xf32>
    %1329 = arith.addf %1328, %1327 : vector<8x32xf32>
    %1330 = arith.divf %1328, %1329 : vector<8x32xf32>
    %1331 = vector.extract_strided_slice %1324 {offsets = [0, 32], sizes = [8, 32], strides = [1, 1]} : vector<8x128xf32> to vector<8x32xf32>
    %1332 = arith.negf %1331 : vector<8x32xf32>
    %1333 = math.exp %1332 : vector<8x32xf32>
    %cst_802 = arith.constant 1.000000e+00 : f32
    %1334 = vector.broadcast %cst_802 : f32 to vector<8x32xf32>
    %1335 = arith.addf %1334, %1333 : vector<8x32xf32>
    %1336 = arith.divf %1334, %1335 : vector<8x32xf32>
    %1337 = vector.extract_strided_slice %1324 {offsets = [0, 64], sizes = [8, 32], strides = [1, 1]} : vector<8x128xf32> to vector<8x32xf32>
    %1338 = math.tanh %1337 : vector<8x32xf32>
    %1339 = vector.extract_strided_slice %1324 {offsets = [0, 96], sizes = [8, 32], strides = [1, 1]} : vector<8x128xf32> to vector<8x32xf32>
    %1340 = arith.negf %1339 : vector<8x32xf32>
    %1341 = math.exp %1340 : vector<8x32xf32>
    %cst_803 = arith.constant 1.000000e+00 : f32
    %1342 = vector.broadcast %cst_803 : f32 to vector<8x32xf32>
    %1343 = arith.addf %1342, %1341 : vector<8x32xf32>
    %1344 = arith.divf %1342, %1343 : vector<8x32xf32>
    %c0_804 = arith.constant 0 : index
    %c0_805 = arith.constant 0 : index
    %c0_806 = arith.constant 0 : index
    %1345 = vector.load %arg15[%c0_804, %c0_805, %c0_806] : memref<2x8x32xf32, #tpu.memory_space<vmem>>, vector<1x8x32xf32>
    %1346 = vector.shape_cast %1345 : vector<1x8x32xf32> to vector<8x32xf32>
    %1347 = arith.mulf %1336, %1346 : vector<8x32xf32>
    %1348 = arith.mulf %1330, %1338 : vector<8x32xf32>
    %1349 = arith.addf %1347, %1348 : vector<8x32xf32>
    %1350 = math.tanh %1349 : vector<8x32xf32>
    %1351 = arith.mulf %1344, %1350 : vector<8x32xf32>
    %c0_807 = arith.constant 0 : index
    %c0_808 = arith.constant 0 : index
    %c0_809 = arith.constant 0 : index
    %1352 = vector.load %arg15[%c0_807, %c0_808, %c0_809] : memref<2x8x32xf32, #tpu.memory_space<vmem>>, vector<1x8x32xf32>
    %1353 = vector.shape_cast %1352 : vector<1x8x32xf32> to vector<8x32xf32>
    %1354 = vector.shape_cast %1349 : vector<8x32xf32> to vector<1x8x32xf32>
    tpu.vector_store %arg15[%c0_807, %c0_808, %c0_809], %1354 {strides = array<i32>} : memref<2x8x32xf32, #tpu.memory_space<vmem>>, vector<1x8x32xf32>,
    %c0_810 = arith.constant 0 : index
    %c0_811 = arith.constant 0 : index
    %c0_812 = arith.constant 0 : index
    %1355 = vector.load %arg14[%c0_810, %c0_811, %c0_812] : memref<2x8x32xf32, #tpu.memory_space<vmem>>, vector<1x8x32xf32>
    %1356 = vector.shape_cast %1355 : vector<1x8x32xf32> to vector<8x32xf32>
    %1357 = vector.shape_cast %1351 : vector<8x32xf32> to vector<1x8x32xf32>
    tpu.vector_store %arg14[%c0_810, %c0_811, %c0_812], %1357 {strides = array<i32>} : memref<2x8x32xf32, #tpu.memory_space<vmem>>, vector<1x8x32xf32>,
    %c1_813 = arith.constant 1 : index
    %c0_814 = arith.constant 0 : index
    %c0_815 = arith.constant 0 : index
    %1358 = vector.load %arg8[%c1_813, %c0_814, %c0_815] : memref<2x32x128xf32, #tpu.memory_space<vmem>>, vector<1x32x128xf32>
    %1359 = vector.shape_cast %1358 : vector<1x32x128xf32> to vector<32x128xf32>
    %cst_816 = arith.constant dense<0.000000e+00> : vector<8x128xf32>
    %1360 = tpu.matmul %1351, %1359, %cst_816 {dimension_numbers = #tpu.dot_dimension_numbers<[1], [0], [0], [1], [0, 0, 1, 1], [], []>} : vector<8x32xf32>, vector<32x128xf32>, vector<8x128xf32> -> vector<8x128xf32>
    %c1_817 = arith.constant 1 : index
    %c0_818 = arith.constant 0 : index
    %c0_819 = arith.constant 0 : index
    %1361 = vector.load %arg14[%c1_817, %c0_818, %c0_819] : memref<2x8x32xf32, #tpu.memory_space<vmem>>, vector<1x8x32xf32>
    %1362 = vector.shape_cast %1361 : vector<1x8x32xf32> to vector<8x32xf32>
    %c1_820 = arith.constant 1 : index
    %c0_821 = arith.constant 0 : index
    %c0_822 = arith.constant 0 : index
    %1363 = vector.load %arg9[%c1_820, %c0_821, %c0_822] : memref<2x32x128xf32, #tpu.memory_space<vmem>>, vector<1x32x128xf32>
    %1364 = vector.shape_cast %1363 : vector<1x32x128xf32> to vector<32x128xf32>
    %cst_823 = arith.constant dense<0.000000e+00> : vector<8x128xf32>
    %1365 = tpu.matmul %1362, %1364, %cst_823 {dimension_numbers = #tpu.dot_dimension_numbers<[1], [0], [0], [1], [0, 0, 1, 1], [], []>} : vector<8x32xf32>, vector<32x128xf32>, vector<8x128xf32> -> vector<8x128xf32>
    %1366 = arith.addf %1360, %1365 : vector<8x128xf32>
    %c1_824 = arith.constant 1 : index
    %c0_825 = arith.constant 0 : index
    %c0_826 = arith.constant 0 : index
    %1367 = vector.load %arg10[%c1_824, %c0_825, %c0_826] : memref<2x1x128xf32, #tpu.memory_space<vmem>>, vector<1x1x128xf32>
    %1368 = vector.shape_cast %1367 : vector<1x1x128xf32> to vector<1x128xf32>
    %1369 = vector.broadcast %1368 : vector<1x128xf32> to vector<8x128xf32>
    %1370 = arith.addf %1366, %1369 : vector<8x128xf32>
    %1371 = vector.extract_strided_slice %1370 {offsets = [0, 0], sizes = [8, 32], strides = [1, 1]} : vector<8x128xf32> to vector<8x32xf32>
    %1372 = arith.negf %1371 : vector<8x32xf32>
    %1373 = math.exp %1372 : vector<8x32xf32>
    %cst_827 = arith.constant 1.000000e+00 : f32
    %1374 = vector.broadcast %cst_827 : f32 to vector<8x32xf32>
    %1375 = arith.addf %1374, %1373 : vector<8x32xf32>
    %1376 = arith.divf %1374, %1375 : vector<8x32xf32>
    %1377 = vector.extract_strided_slice %1370 {offsets = [0, 32], sizes = [8, 32], strides = [1, 1]} : vector<8x128xf32> to vector<8x32xf32>
    %1378 = arith.negf %1377 : vector<8x32xf32>
    %1379 = math.exp %1378 : vector<8x32xf32>
    %cst_828 = arith.constant 1.000000e+00 : f32
    %1380 = vector.broadcast %cst_828 : f32 to vector<8x32xf32>
    %1381 = arith.addf %1380, %1379 : vector<8x32xf32>
    %1382 = arith.divf %1380, %1381 : vector<8x32xf32>
    %1383 = vector.extract_strided_slice %1370 {offsets = [0, 64], sizes = [8, 32], strides = [1, 1]} : vector<8x128xf32> to vector<8x32xf32>
    %1384 = math.tanh %1383 : vector<8x32xf32>
    %1385 = vector.extract_strided_slice %1370 {offsets = [0, 96], sizes = [8, 32], strides = [1, 1]} : vector<8x128xf32> to vector<8x32xf32>
    %1386 = arith.negf %1385 : vector<8x32xf32>
    %1387 = math.exp %1386 : vector<8x32xf32>
    %cst_829 = arith.constant 1.000000e+00 : f32
    %1388 = vector.broadcast %cst_829 : f32 to vector<8x32xf32>
    %1389 = arith.addf %1388, %1387 : vector<8x32xf32>
    %1390 = arith.divf %1388, %1389 : vector<8x32xf32>
    %c1_830 = arith.constant 1 : index
    %c0_831 = arith.constant 0 : index
    %c0_832 = arith.constant 0 : index
    %1391 = vector.load %arg15[%c1_830, %c0_831, %c0_832] : memref<2x8x32xf32, #tpu.memory_space<vmem>>, vector<1x8x32xf32>
    %1392 = vector.shape_cast %1391 : vector<1x8x32xf32> to vector<8x32xf32>
    %1393 = arith.mulf %1382, %1392 : vector<8x32xf32>
    %1394 = arith.mulf %1376, %1384 : vector<8x32xf32>
    %1395 = arith.addf %1393, %1394 : vector<8x32xf32>
    %1396 = math.tanh %1395 : vector<8x32xf32>
    %1397 = arith.mulf %1390, %1396 : vector<8x32xf32>
    %c1_833 = arith.constant 1 : index
    %c0_834 = arith.constant 0 : index
    %c0_835 = arith.constant 0 : index
    %1398 = vector.load %arg15[%c1_833, %c0_834, %c0_835] : memref<2x8x32xf32, #tpu.memory_space<vmem>>, vector<1x8x32xf32>
    %1399 = vector.shape_cast %1398 : vector<1x8x32xf32> to vector<8x32xf32>
    %1400 = vector.shape_cast %1395 : vector<8x32xf32> to vector<1x8x32xf32>
    tpu.vector_store %arg15[%c1_833, %c0_834, %c0_835], %1400 {strides = array<i32>} : memref<2x8x32xf32, #tpu.memory_space<vmem>>, vector<1x8x32xf32>,
    %c1_836 = arith.constant 1 : index
    %c0_837 = arith.constant 0 : index
    %c0_838 = arith.constant 0 : index
    %1401 = vector.load %arg14[%c1_836, %c0_837, %c0_838] : memref<2x8x32xf32, #tpu.memory_space<vmem>>, vector<1x8x32xf32>
    %1402 = vector.shape_cast %1401 : vector<1x8x32xf32> to vector<8x32xf32>
    %1403 = vector.shape_cast %1397 : vector<8x32xf32> to vector<1x8x32xf32>
    tpu.vector_store %arg14[%c1_836, %c0_837, %c0_838], %1403 {strides = array<i32>} : memref<2x8x32xf32, #tpu.memory_space<vmem>>, vector<1x8x32xf32>,
    %c0_839 = arith.constant 0 : index
    %c0_840 = arith.constant 0 : index
    %1404 = vector.load %arg11[%c0_839, %c0_840] : memref<32x128xf32, #tpu.memory_space<vmem>>, vector<32x128xf32>
    %cst_841 = arith.constant dense<0.000000e+00> : vector<8x128xf32>
    %1405 = tpu.matmul %1397, %1404, %cst_841 {dimension_numbers = #tpu.dot_dimension_numbers<[1], [0], [0], [1], [0, 0, 1, 1], [], []>} : vector<8x32xf32>, vector<32x128xf32>, vector<8x128xf32> -> vector<8x128xf32>
    %c0_842 = arith.constant 0 : index
    %c0_843 = arith.constant 0 : index
    %1406 = vector.load %arg12[%c0_842, %c0_843] : memref<1x128xf32, #tpu.memory_space<vmem>>, vector<1x128xf32>
    %1407 = vector.broadcast %1406 : vector<1x128xf32> to vector<8x128xf32>
    %1408 = arith.addf %1405, %1407 : vector<8x128xf32>
    %c7 = arith.constant 7 : index
    %c0_844 = arith.constant 0 : index
    %c0_845 = arith.constant 0 : index
    %1409 = vector.load %arg13[%c7, %c0_844, %c0_845] : memref<8x8x128xf32, #tpu.memory_space<vmem>>, vector<1x8x128xf32>
    %1410 = vector.shape_cast %1409 : vector<1x8x128xf32> to vector<8x128xf32>
    %1411 = vector.shape_cast %1408 : vector<8x128xf32> to vector<1x8x128xf32>
    tpu.vector_store %arg13[%c7, %c0_844, %c0_845], %1411 {strides = array<i32>} : memref<8x8x128xf32, #tpu.memory_space<vmem>>, vector<1x8x128xf32>,
    return
  }
}

</mosaic_0001>

<llo_original>
// kernel: _forward_padded.1
$region0: #{_forward_padded.1}
  #allocation0 [shape = 'u32[]', space=smem, size = 0x4, offset = 0x4, fixed_abs, tag = 'smem constant byte address 0x4 - core index']
  #allocation1 [shape = 'u32[144,128]{1,0:T(1,128)}', space=vmem, size = 0x12000, scoped, tag = 'internal scratch']
  #allocation2 [shape = 'f32[2,8,32]{2,1,0:T(8,128)}', space=vmem, size = 0x2000, scoped, tag = 'scratch operand']
  #allocation3 [shape = 'f32[2,8,32]{2,1,0:T(8,128)}', space=vmem, size = 0x2000, scoped, tag = 'scratch operand']
  #allocation4 [shape = 's32[8,1]{1,0:T(8,128)}', space=vmem, size = 0x1000, scoped, tag = 'scratch operand']
  %s0 = inlined_call_operand.vmem [shape: s32[8], index: 0, kind: input, shape index: {}]
  %s1 = inlined_call_operand.vmem [shape: s32[6,8,1], index: 1, kind: input, shape index: {}]
  %s2 = inlined_call_operand.vmem [shape: s32[8,8,1], index: 2, kind: input, shape index: {}]
  %s3 = inlined_call_operand.hbm [shape: f32[16,32], index: 3, kind: input, shape index: {}]
  %s4 = inlined_call_operand.hbm [shape: f32[16,32], index: 4, kind: input, shape index: {}]
  %s5 = inlined_call_operand.vmem [shape: f32[2,32,128], index: 5, kind: input, shape index: {}]
  %s6 = inlined_call_operand.vmem [shape: f32[2,32,128], index: 6, kind: input, shape index: {}]
  %s7 = inlined_call_operand.vmem [shape: f32[2,1,128], index: 7, kind: input, shape index: {}]
  %s8 = inlined_call_operand.vmem [shape: f32[2,32,128], index: 8, kind: input, shape index: {}]
  %s9 = inlined_call_operand.hbm [shape: f32[2,32,128], index: 9, kind: input, shape index: {}]
  %s10 = inlined_call_operand.hbm [shape: f32[2,1,128], index: 10, kind: input, shape index: {}]
  %s11 = inlined_call_operand.hbm [shape: f32[32,128], index: 11, kind: input, shape index: {}]
  %s12 = inlined_call_operand.vmem [shape: f32[1,128], index: 12, kind: input, shape index: {}]
  %s13 = inlined_call_operand.hbm [shape: f32[8,8,128], index: 13, kind: output, shape index: {}]
  %s14 = sld [smem:[#allocation0]]
  $region134: #{_forward_padded.1} parent=0
    _
  %s16 = ssub.s32 1, %s14
  %s17 = scalar_select 0, %s16, %s14
  $region1: #{_forward_padded.1} parent=0
    #allocation5 [shape = 'u8[512]{0}', space=smem, size = 0x200, scoped, tag = 'input window, operand 0, single buffered']
    #allocation6 [shape = 's32[1]{0}', space=sflag, size = 0x4, scoped, tag = 'scoped memory for _forward_padded.1']
    #allocation7 [shape = 's32[1]{0}', space=sflag, size = 0x4, scoped, tag = 'scoped memory for _forward_padded.1']
    #allocation8 [shape = 's32[1]{0}', space=sflag, size = 0x4, scoped, tag = 'scoped memory for _forward_padded.1']
    #allocation9 [shape = 'u8[8192]{0}', space=vmem, size = 0x2000, scoped, tag = 'input window, operand 3, single buffered']
    #allocation10 [shape = 'u8[8192]{0}', space=vmem, size = 0x2000, scoped, tag = 'input window, operand 4, single buffered']
    #allocation11 [shape = 's32[1]{0}', space=sflag, size = 0x4, scoped, tag = 'scoped memory for _forward_padded.1']
    #allocation12 [shape = 'u8[32768]{0}', space=vmem, size = 0x8000, scoped, tag = 'input window, operand 9, single buffered']
    #allocation13 [shape = 'u8[1024]{0}', space=vmem, size = 0x400, scoped, tag = 'input window, operand 10, single buffered']
    #allocation14 [shape = 's32[1]{0}', space=sflag, size = 0x4, scoped, tag = 'scoped memory for _forward_padded.1']
    #allocation15 [shape = 'u8[16384]{0}', space=vmem, size = 0x4000, scoped, tag = 'input window, operand 11, single buffered']
    #allocation16 [shape = 'u8[32768]{0}', space=vmem, size = 0x8000, scoped, tag = 'output window, operand 0, single buffered']
    %18 = vsyncpa [#allocation8], 0
    %19 = vsyncpa [#allocation6], 0
    %20 = vsyncpa [#allocation11], 0
    %21 = vsyncpa [#allocation14], 0
    %22 = vsyncpa [#allocation7], 0
    // Predicated region
    $region2: #{_forward_padded.1} parent=1 // pred_check
      _
    $region3: #{_forward_padded.1} parent=1 // pred_check_branch
      %24 = sbr.rel (0) target = $region5
    $region4: #{_forward_padded.1} parent=1 // pred_region
      %s26 = ssub.s32 16, 16
      %27 = vsyncadd [#allocation8], %s26
      %s29 = sshll.u32 %s0, 4
      %s30 = int_to_ptr.vmem [resolvable:$true] %s29
      %32 = dma.vmem_to_smem %s30, 16, [#allocation5], [#allocation8]
    $region5: #{_forward_padded.1} parent=1 // pred_fallthru
      _
    // Predicated region
    $region6: #{_forward_padded.1} parent=1 // pred_check
      _
    $region7: #{_forward_padded.1} parent=1 // pred_check_branch
      %34 = sbr.rel (0) target = $region9
    $region8: #{_forward_padded.1} parent=1 // pred_region
      _
    $region9: #{_forward_padded.1} parent=1 // pred_fallthru
      _
    // Predicated region
    $region10: #{_forward_padded.1} parent=1 // pred_check
      _
    $region11: #{_forward_padded.1} parent=1 // pred_check_branch
      %36 = sbr.rel (0) target = $region13
    $region12: #{_forward_padded.1} parent=1 // pred_region
      _
    $region13: #{_forward_padded.1} parent=1 // pred_fallthru
      _
    // Predicated region
    $region14: #{_forward_padded.1} parent=1 // pred_check
      _
    $region15: #{_forward_padded.1} parent=1 // pred_check_branch
      %38 = sbr.rel (0) target = $region17
    $region16: #{_forward_padded.1} parent=1 // pred_region
      %s40 = ssub.s32 256, 256
      %41 = vsyncadd [#allocation6], %s40
      %s42 = sshll.u32 [#allocation9], 4
      %s43 = int_to_ptr.vmem [resolvable:$true] %s42
      %48 = dma.hbm_to_vmem [thread:$0]  %s3, 256, %s43, [#allocation6], 128, 128, 8
    $region17: #{_forward_padded.1} parent=1 // pred_fallthru
      _
    // Predicated region
    $region18: #{_forward_padded.1} parent=1 // pred_check
      _
    $region19: #{_forward_padded.1} parent=1 // pred_check_branch
      %50 = sbr.rel (0) target = $region21
    $region20: #{_forward_padded.1} parent=1 // pred_region
      %s52 = ssub.s32 256, 256
      %53 = vsyncadd [#allocation11], %s52
      %s54 = sshll.u32 [#allocation10], 4
      %s55 = int_to_ptr.vmem [resolvable:$true] %s54
      %60 = dma.hbm_to_vmem [thread:$0]  %s4, 256, %s55, [#allocation11], 128, 128, 8
    $region21: #{_forward_padded.1} parent=1 // pred_fallthru
      _
    // Predicated region
    $region22: #{_forward_padded.1} parent=1 // pred_check
      _
    $region23: #{_forward_padded.1} parent=1 // pred_check_branch
      %62 = sbr.rel (0) target = $region25
    $region24: #{_forward_padded.1} parent=1 // pred_region
      _
    $region25: #{_forward_padded.1} parent=1 // pred_fallthru
      _
    // Predicated region
    $region26: #{_forward_padded.1} parent=1 // pred_check
      _
    $region27: #{_forward_padded.1} parent=1 // pred_check_branch
      %64 = sbr.rel (0) target = $region29
    $region28: #{_forward_padded.1} parent=1 // pred_region
      _
    $region29: #{_forward_padded.1} parent=1 // pred_fallthru
      _
    // Predicated region
    $region30: #{_forward_padded.1} parent=1 // pred_check
      _
    $region31: #{_forward_padded.1} parent=1 // pred_check_branch
      %66 = sbr.rel (0) target = $region33
    $region32: #{_forward_padded.1} parent=1 // pred_region
      _
    $region33: #{_forward_padded.1} parent=1 // pred_fallthru
      _
    // Predicated region
    $region34: #{_forward_padded.1} parent=1 // pred_check
      _
    $region35: #{_forward_padded.1} parent=1 // pred_check_branch
      %68 = sbr.rel (0) target = $region37
    $region36: #{_forward_padded.1} parent=1 // pred_region
      _
    $region37: #{_forward_padded.1} parent=1 // pred_fallthru
      _
    // Predicated region
    $region38: #{_forward_padded.1} parent=1 // pred_check
      _
    $region39: #{_forward_padded.1} parent=1 // pred_check_branch
      %70 = sbr.rel (0) target = $region41
    $region40: #{_forward_padded.1} parent=1 // pred_region
      %s72 = ssub.s32 1024, 1024
      %73 = vsyncadd [#allocation11], %s72
      %s74 = sshll.u32 [#allocation12], 4
      %s75 = int_to_ptr.vmem [resolvable:$true] %s74
      %80 = dma.hbm_to_vmem [thread:$0]  %s9, 1024, %s75, [#allocation11], 128, 128, 8
    $region41: #{_forward_padded.1} parent=1 // pred_fallthru
      _
    // Predicated region
    $region42: #{_forward_padded.1} parent=1 // pred_check
      _
    $region43: #{_forward_padded.1} parent=1 // pred_check_branch
      %82 = sbr.rel (0) target = $region45
    $region44: #{_forward_padded.1} parent=1 // pred_region
      %s84 = ssub.s32 32, 32
      %85 = vsyncadd [#allocation14], %s84
      %s86 = sshll.u32 [#allocation13], 4
      %s87 = int_to_ptr.vmem [resolvable:$true] %s86
      %92 = dma.hbm_to_vmem [thread:$0]  %s10, 32, %s87, [#allocation14], 16, 16, 1
    $region45: #{_forward_padded.1} parent=1 // pred_fallthru
      _
    // Predicated region
    $region46: #{_forward_padded.1} parent=1 // pred_check
      _
    $region47: #{_forward_padded.1} parent=1 // pred_check_branch
      %94 = sbr.rel (0) target = $region49
    $region48: #{_forward_padded.1} parent=1 // pred_region
      %s96 = ssub.s32 512, 512
      %97 = vsyncadd [#allocation14], %s96
      %s98 = sshll.u32 [#allocation15], 4
      %s99 = int_to_ptr.vmem [resolvable:$true] %s98
      %104 = dma.hbm_to_vmem [thread:$0]  %s11, 512, %s99, [#allocation14], 128, 128, 8
    $region49: #{_forward_padded.1} parent=1 // pred_fallthru
      _
    // Predicated region
    $region50: #{_forward_padded.1} parent=1 // pred_check
      _
    $region51: #{_forward_padded.1} parent=1 // pred_check_branch
      %106 = sbr.rel (0) target = $region53
    $region52: #{_forward_padded.1} parent=1 // pred_region
      _
    $region53: #{_forward_padded.1} parent=1 // pred_fallthru
      _
    // Predicated region
    $region54: #{_forward_padded.1} parent=1 // pred_check
      _
    $region55: #{_forward_padded.1} parent=1 // pred_check_branch
      %108 = sbr.rel (0) target = $region57
    $region56: #{_forward_padded.1} parent=1 // pred_region
      %109 = dma.done [#allocation8], 16
    $region57: #{_forward_padded.1} parent=1 // pred_fallthru
      _
    // Predicated region
    $region58: #{_forward_padded.1} parent=1 // pred_check
      _
    $region59: #{_forward_padded.1} parent=1 // pred_check_branch
      %111 = sbr.rel (0) target = $region61
    $region60: #{_forward_padded.1} parent=1 // pred_region
      %112 = dma.done [#allocation6], 256
    $region61: #{_forward_padded.1} parent=1 // pred_fallthru
      _
    // Predicated region
    $region62: #{_forward_padded.1} parent=1 // pred_check
      _
    $region63: #{_forward_padded.1} parent=1 // pred_check_branch
      %114 = sbr.rel (0) target = $region65
    $region64: #{_forward_padded.1} parent=1 // pred_region
      %115 = dma.done [#allocation11], 256
    $region65: #{_forward_padded.1} parent=1 // pred_fallthru
      _
    // Predicated region
    $region66: #{_forward_padded.1} parent=1 // pred_check
      _
    $region67: #{_forward_padded.1} parent=1 // pred_check_branch
      %117 = sbr.rel (0) target = $region69
    $region68: #{_forward_padded.1} parent=1 // pred_region
      %118 = dma.done [#allocation11], 1024
    $region69: #{_forward_padded.1} parent=1 // pred_fallthru
      _
    // Predicated region
    $region70: #{_forward_padded.1} parent=1 // pred_check
      _
    $region71: #{_forward_padded.1} parent=1 // pred_check_branch
      %120 = sbr.rel (0) target = $region73
    $region72: #{_forward_padded.1} parent=1 // pred_region
      %121 = dma.done [#allocation14], 32
    $region73: #{_forward_padded.1} parent=1 // pred_fallthru
      _
    // Predicated region
    $region74: #{_forward_padded.1} parent=1 // pred_check
      _
    $region75: #{_forward_padded.1} parent=1 // pred_check_branch
      %123 = sbr.rel (0) target = $region77
    $region76: #{_forward_padded.1} parent=1 // pred_region
      %124 = dma.done [#allocation14], 512
    $region77: #{_forward_padded.1} parent=1 // pred_fallthru
      _
    %125 = sfence
    %vm126 = vcmask 261120
    %127 = vst.msk [vmem:[#allocation2] sm:$0xff] %vm126, 0.0
    %128 = vst.msk [vmem:[#allocation2 + $0x8] sm:$0xff] %vm126, 0.0
    %129 = vst.msk [vmem:[#allocation3] sm:$0xff] %vm126, 0.0
    %130 = vst.msk [vmem:[#allocation3 + $0x8] sm:$0xff] %vm126, 0.0
    %131 = vst [vmem:[#allocation16] sm:$0xff] 0.0
    %v132 = vlaneseq
    %v133 = vand.u32 %v132, 127
    %v134 = vcvt.s32.f32 %v133
    %v135 = vld [vmem:[%s1] sm:$0xff]
    %136 = vset.pattern.permute.xlu0 0
    %137 = vperm.xlu0 %136, %v135
    %v138 = vpop.permute.xlu0 %137
    %vm139 = vcmp.eq.s32.totalorder %v138, %v133
    %v140 = vsel %vm139, 1, 0
    %v141 = vcvt.s32.f32 %v140
    %v142 = vld [vmem:[#allocation9] sm:$0xff]
    %v143 = vld [vmem:[#allocation9 + $0x8] sm:$0xff]
    %vm144 = vcmask 130048
    %v146 = vsel %vm144, %v141, 0
    %148 = vmatprep.subr.mxu0 0.0
    %149 = vmatpush1.msra.mxu0 %v142
    %150 = vmatprep.subr.mxu0 0.0
    %151 = vmatpush1.msra.mxu0 %v143
    %152 = vmatprep.subr.mxu0 0.0
    %153 = vmatpush1.msra.mxu0 0.0
    %154 = vmatprep.subr.mxu0 0.0
    %155 = vmatpush1.msra.mxu0 0.0
    %156 = vmatprep.subr.mxu0 0.0
    %157 = vmatpush1.msra.mxu0 0.0
    %158 = vmatprep.subr.mxu0 0.0
    %159 = vmatpush1.msra.mxu0 0.0
    %160 = vmatprep.subr.mxu0 0.0
    %161 = vmatpush1.msra.mxu0 0.0
    %162 = vmatprep.subr.mxu0 0.0
    %163 = vmatpush1.msra.mxu0 0.0
    %164 = vmatprep.subr.mxu0 0.0
    %165 = vmatpush1.msra.mxu0 0.0
    %166 = vmatprep.subr.mxu0 0.0
    %167 = vmatpush1.msra.mxu0 0.0
    %168 = vmatprep.subr.mxu0 0.0
    %169 = vmatpush1.msra.mxu0 0.0
    %170 = vmatprep.subr.mxu0 0.0
    %171 = vmatpush1.msra.mxu0 0.0
    %172 = vmatprep.subr.mxu0 0.0
    %173 = vmatpush1.msra.mxu0 0.0
    %174 = vmatprep.subr.mxu0 0.0
    %175 = vmatpush1.msra.mxu0 0.0
    %176 = vmatprep.subr.mxu0 0.0
    %177 = vmatpush1.msra.mxu0 0.0
    %178 = vmatprep.subr.mxu0 0.0
    %179 = vmatpush1.msra.mxu0 0.0
    %180 = vmatprep.subr.mxu0 0.0
    %181 = vmatpush1.msra.mxu0 0.0
    %182 = vmatprep.subr.mxu0 0.0
    %183 = vmatpush1.msra.mxu0 0.0
    %184 = vmatprep.subr.mxu0 0.0
    %185 = vmatpush1.msra.mxu0 0.0
    %186 = vmatprep.subr.mxu0 0.0
    %187 = vmatpush1.msra.mxu0 0.0
    %188 = vmatprep.subr.mxu0 0.0
    %189 = vmatpush1.msra.mxu0 0.0
    %190 = vmatprep.subr.mxu0 0.0
    %191 = vmatpush1.msra.mxu0 0.0
    %192 = vmatprep.subr.mxu0 0.0
    %193 = vmatpush1.msra.mxu0 0.0
    %194 = vmatprep.subr.mxu0 0.0
    %195 = vmatpush1.msra.mxu0 0.0
    %196 = vmatprep.subr.mxu0 0.0
    %197 = vmatpush1.msra.mxu0 0.0
    %198 = vmatprep.subr.mxu0 0.0
    %199 = vmatpush1.msra.mxu0 0.0
    %200 = vmatprep.subr.mxu0 0.0
    %201 = vmatpush1.msra.mxu0 0.0
    %202 = vmatprep.subr.mxu0 0.0
    %203 = vmatpush1.msra.mxu0 0.0
    %204 = vmatprep.subr.mxu0 0.0
    %205 = vmatpush1.msra.mxu0 0.0
    %206 = vmatprep.subr.mxu0 0.0
    %207 = vmatpush1.msra.mxu0 0.0
    %208 = vmatprep.subr.mxu0 0.0
    %209 = vmatpush1.msra.mxu0 0.0
    %210 = vmatprep.subr.mxu0 0.0
    %211 = vmatpush1.msra.mxu0 0.0
    %212 = vmatprep.mubr.f32.mxu0 0.0
    %213 = vmatmul.mubr.f32.gmra.mrb[0].mxu0 %v146
    %v214 = vpop.f32.mrb[0].mxu0
    %v215 = vadd.f32 0.0, %v214
    %v216 = vpop.f32.mrb[0].mxu0
    %217 = vdwg.mxu0
    %v218 = vld [vmem:[%s5] sm:$0xff]
    %v219 = vld [vmem:[%s5 + $0x8] sm:$0xff]
    %v220 = vld [vmem:[%s5 + $0x10] sm:$0xff]
    %v221 = vld [vmem:[%s5 + $0x18] sm:$0xff]
    %v222 = vld [vmem:[#allocation2] sm:$0xff]
    %v223 = vld [vmem:[%s6] sm:$0xff]
    %v224 = vld [vmem:[%s6 + $0x8] sm:$0xff]
    %v225 = vld [vmem:[%s6 + $0x10] sm:$0xff]
    %v226 = vld [vmem:[%s6 + $0x18] sm:$0xff]
    %v228 = vsel %vm126, %v222, 0
    %230 = vmatprep.subr.mxu0 0.0
    %231 = vmatpush1.msra.mxu0 %v223
    %232 = vmatprep.subr.mxu0 0.0
    %233 = vmatpush1.msra.mxu0 %v224
    %234 = vmatprep.subr.mxu0 0.0
    %235 = vmatpush1.msra.mxu0 %v225
    %236 = vmatprep.subr.mxu0 0.0
    %237 = vmatpush1.msra.mxu0 %v226
    %238 = vmatprep.subr.mxu0 0.0
    %239 = vmatpush1.msra.mxu0 0.0
    %240 = vmatprep.subr.mxu0 0.0
    %241 = vmatpush1.msra.mxu0 0.0
    %242 = vmatprep.subr.mxu0 0.0
    %243 = vmatpush1.msra.mxu0 0.0
    %244 = vmatprep.subr.mxu0 0.0
    %245 = vmatpush1.msra.mxu0 0.0
    %246 = vmatprep.subr.mxu0 0.0
    %247 = vmatpush1.msra.mxu0 0.0
    %248 = vmatprep.subr.mxu0 0.0
    %249 = vmatpush1.msra.mxu0 0.0
    %250 = vmatprep.subr.mxu0 0.0
    %251 = vmatpush1.msra.mxu0 0.0
    %252 = vmatprep.subr.mxu0 0.0
    %253 = vmatpush1.msra.mxu0 0.0
    %254 = vmatprep.subr.mxu0 0.0
    %255 = vmatpush1.msra.mxu0 0.0
    %256 = vmatprep.subr.mxu0 0.0
    %257 = vmatpush1.msra.mxu0 0.0
    %258 = vmatprep.subr.mxu0 0.0
    %259 = vmatpush1.msra.mxu0 0.0
    %260 = vmatprep.subr.mxu0 0.0
    %261 = vmatpush1.msra.mxu0 0.0
    %262 = vmatprep.subr.mxu0 0.0
    %263 = vmatpush1.msra.mxu0 0.0
    %264 = vmatprep.subr.mxu0 0.0
    %265 = vmatpush1.msra.mxu0 0.0
    %266 = vmatprep.subr.mxu0 0.0
    %267 = vmatpush1.msra.mxu0 0.0
    %268 = vmatprep.subr.mxu0 0.0
    %269 = vmatpush1.msra.mxu0 0.0
    %270 = vmatprep.subr.mxu0 0.0
    %271 = vmatpush1.msra.mxu0 0.0
    %272 = vmatprep.subr.mxu0 0.0
    %273 = vmatpush1.msra.mxu0 0.0
    %274 = vmatprep.subr.mxu0 0.0
    %275 = vmatpush1.msra.mxu0 0.0
    %276 = vmatprep.subr.mxu0 0.0
    %277 = vmatpush1.msra.mxu0 0.0
    %278 = vmatprep.subr.mxu0 0.0
    %279 = vmatpush1.msra.mxu0 0.0
    %280 = vmatprep.subr.mxu0 0.0
    %281 = vmatpush1.msra.mxu0 0.0
    %282 = vmatprep.subr.mxu0 0.0
    %283 = vmatpush1.msra.mxu0 0.0
    %284 = vmatprep.subr.mxu0 0.0
    %285 = vmatpush1.msra.mxu0 0.0
    %286 = vmatprep.subr.mxu0 0.0
    %287 = vmatpush1.msra.mxu0 0.0
    %288 = vmatprep.subr.mxu0 0.0
    %289 = vmatpush1.msra.mxu0 0.0
    %290 = vmatprep.subr.mxu0 0.0
    %291 = vmatpush1.msra.mxu0 0.0
    %292 = vmatprep.subr.mxu0 0.0
    %293 = vmatpush1.msra.mxu0 0.0
    %294 = vmatprep.mubr.f32.mxu0 0.0
    %295 = vmatmul.mubr.f32.gmra.mrb[0].mxu0 %v228
    %v296 = vpop.f32.mrb[0].mxu0
    %v297 = vadd.f32 0.0, %v296
    %v298 = vpop.f32.mrb[0].mxu0
    %299 = vdwg.mxu0
    %v301 = vsel %vm126, %v215, 0
    %303 = vmatprep.subr.mxu0 0.0
    %304 = vmatpush1.msra.mxu0 %v218
    %305 = vmatprep.subr.mxu0 0.0
    %306 = vmatpush1.msra.mxu0 %v219
    %307 = vmatprep.subr.mxu0 0.0
    %308 = vmatpush1.msra.mxu0 %v220
    %309 = vmatprep.subr.mxu0 0.0
    %310 = vmatpush1.msra.mxu0 %v221
    %311 = vmatprep.subr.mxu0 0.0
    %312 = vmatpush1.msra.mxu0 0.0
    %313 = vmatprep.subr.mxu0 0.0
    %314 = vmatpush1.msra.mxu0 0.0
    %315 = vmatprep.subr.mxu0 0.0
    %316 = vmatpush1.msra.mxu0 0.0
    %317 = vmatprep.subr.mxu0 0.0
    %318 = vmatpush1.msra.mxu0 0.0
    %319 = vmatprep.subr.mxu0 0.0
    %320 = vmatpush1.msra.mxu0 0.0
    %321 = vmatprep.subr.mxu0 0.0
    %322 = vmatpush1.msra.mxu0 0.0
    %323 = vmatprep.subr.mxu0 0.0
    %324 = vmatpush1.msra.mxu0 0.0
    %325 = vmatprep.subr.mxu0 0.0
    %326 = vmatpush1.msra.mxu0 0.0
    %327 = vmatprep.subr.mxu0 0.0
    %328 = vmatpush1.msra.mxu0 0.0
    %329 = vmatprep.subr.mxu0 0.0
    %330 = vmatpush1.msra.mxu0 0.0
    %331 = vmatprep.subr.mxu0 0.0
    %332 = vmatpush1.msra.mxu0 0.0
    %333 = vmatprep.subr.mxu0 0.0
    %334 = vmatpush1.msra.mxu0 0.0
    %335 = vmatprep.subr.mxu0 0.0
    %336 = vmatpush1.msra.mxu0 0.0
    %337 = vmatprep.subr.mxu0 0.0
    %338 = vmatpush1.msra.mxu0 0.0
    %339 = vmatprep.subr.mxu0 0.0
    %340 = vmatpush1.msra.mxu0 0.0
    %341 = vmatprep.subr.mxu0 0.0
    %342 = vmatpush1.msra.mxu0 0.0
    %343 = vmatprep.subr.mxu0 0.0
    %344 = vmatpush1.msra.mxu0 0.0
    %345 = vmatprep.subr.mxu0 0.0
    %346 = vmatpush1.msra.mxu0 0.0
    %347 = vmatprep.subr.mxu0 0.0
    %348 = vmatpush1.msra.mxu0 0.0
    %349 = vmatprep.subr.mxu0 0.0
    %350 = vmatpush1.msra.mxu0 0.0
    %351 = vmatprep.subr.mxu0 0.0
    %352 = vmatpush1.msra.mxu0 0.0
    %353 = vmatprep.subr.mxu0 0.0
    %354 = vmatpush1.msra.mxu0 0.0
    %355 = vmatprep.subr.mxu0 0.0
    %356 = vmatpush1.msra.mxu0 0.0
    %357 = vmatprep.subr.mxu0 0.0
    %358 = vmatpush1.msra.mxu0 0.0
    %359 = vmatprep.subr.mxu0 0.0
    %360 = vmatpush1.msra.mxu0 0.0
    %361 = vmatprep.subr.mxu0 0.0
    %362 = vmatpush1.msra.mxu0 0.0
    %363 = vmatprep.subr.mxu0 0.0
    %364 = vmatpush1.msra.mxu0 0.0
    %365 = vmatprep.subr.mxu0 0.0
    %366 = vmatpush1.msra.mxu0 0.0
    %367 = vmatprep.mubr.f32.mxu0 0.0
    %368 = vmatmul.mubr.f32.gmra.mrb[0].mxu0 %v301
    %v369 = vpop.f32.mrb[0].mxu0
    %v370 = vadd.f32 %v297, %v369
    %v371 = vpop.f32.mrb[0].mxu0
    %372 = vdwg.mxu0
    %v373 = vld [vmem:[%s7] sm:$0x1]
    %v375 = vlaneseq
    %v376 = vshrl.u32 %v375, 7
    %v377 = vsub.s32 0, %v376
    %v378 = vrot.slane %v373, %v377
    %v380 = vadd.f32 %v370, %v378
    %v381 = vxor.u32 %v380, 2147483648
    %v382 = vmul.f32 %v381, 1.442695
    %v383 = vpow.pop %v382
    %v384 = vadd.f32 %v383, 1.0
    %v385 = vrcp.pop %v384
    %v386 = vmul.f32 1.0, %v385
    %v387 = vtanh.pop %v380
    %v388 = vld [vmem:[#allocation3] sm:$0xff]
    %390 = vrot.lane.b32.xlu0 %v388, 32
    %v391 = vpop.permute.xlu0 %390
    %v393 = vmul.f32 %v386, %v391
    %395 = vrot.lane.b32.xlu0 %v387, 64
    %v396 = vpop.permute.xlu0 %395
    %v398 = vmul.f32 %v386, %v396
    %400 = vrot.lane.b32.xlu0 %v398, 32
    %v401 = vpop.permute.xlu0 %400
    %v403 = vadd.f32 %v393, %v401
    %v404 = vtanh.pop %v403
    %406 = vrot.lane.b32.xlu0 %v404, 64
    %v407 = vpop.permute.xlu0 %406
    %v409 = vmul.f32 %v386, %v407
    %411 = vrot.lane.b32.xlu0 %v403, 96
    %v412 = vpop.permute.xlu0 %411
    %414 = vst.msk [vmem:[#allocation3] sm:$0xff] %vm126, %v412
    %416 = vrot.lane.b32.xlu0 %v409, 32
    %v417 = vpop.permute.xlu0 %416
    %419 = vst.msk [vmem:[#allocation2] sm:$0xff] %vm126, %v417
    %s420 = scalar_lea.vmem %s5, 32
    %v421 = vld [vmem:[%s420] sm:$0xff]
    %v422 = vld [vmem:[%s420 + $0x8] sm:$0xff]
    %v423 = vld [vmem:[%s420 + $0x10] sm:$0xff]
    %v424 = vld [vmem:[%s420 + $0x18] sm:$0xff]
    %s425 = scalar_lea.vmem [#allocation2], 8
    %v426 = vld [vmem:[%s425] sm:$0xff]
    %s427 = scalar_lea.vmem %s6, 32
    %v428 = vld [vmem:[%s427] sm:$0xff]
    %v429 = vld [vmem:[%s427 + $0x8] sm:$0xff]
    %v430 = vld [vmem:[%s427 + $0x10] sm:$0xff]
    %v431 = vld [vmem:[%s427 + $0x18] sm:$0xff]
    %v433 = vsel %vm126, %v426, 0
    %435 = vmatprep.subr.mxu0 0.0
    %436 = vmatpush1.msra.mxu0 %v428
    %437 = vmatprep.subr.mxu0 0.0
    %438 = vmatpush1.msra.mxu0 %v429
    %439 = vmatprep.subr.mxu0 0.0
    %440 = vmatpush1.msra.mxu0 %v430
    %441 = vmatprep.subr.mxu0 0.0
    %442 = vmatpush1.msra.mxu0 %v431
    %443 = vmatprep.subr.mxu0 0.0
    %444 = vmatpush1.msra.mxu0 0.0
    %445 = vmatprep.subr.mxu0 0.0
    %446 = vmatpush1.msra.mxu0 0.0
    %447 = vmatprep.subr.mxu0 0.0
    %448 = vmatpush1.msra.mxu0 0.0
    %449 = vmatprep.subr.mxu0 0.0
    %450 = vmatpush1.msra.mxu0 0.0
    %451 = vmatprep.subr.mxu0 0.0
    %452 = vmatpush1.msra.mxu0 0.0
    %453 = vmatprep.subr.mxu0 0.0
    %454 = vmatpush1.msra.mxu0 0.0
    %455 = vmatprep.subr.mxu0 0.0
    %456 = vmatpush1.msra.mxu0 0.0
    %457 = vmatprep.subr.mxu0 0.0
    %458 = vmatpush1.msra.mxu0 0.0
    %459 = vmatprep.subr.mxu0 0.0
    %460 = vmatpush1.msra.mxu0 0.0
    %461 = vmatprep.subr.mxu0 0.0
    %462 = vmatpush1.msra.mxu0 0.0
    %463 = vmatprep.subr.mxu0 0.0
    %464 = vmatpush1.msra.mxu0 0.0
    %465 = vmatprep.subr.mxu0 0.0
    %466 = vmatpush1.msra.mxu0 0.0
    %467 = vmatprep.subr.mxu0 0.0
    %468 = vmatpush1.msra.mxu0 0.0
    %469 = vmatprep.subr.mxu0 0.0
    %470 = vmatpush1.msra.mxu0 0.0
    %471 = vmatprep.subr.mxu0 0.0
    %472 = vmatpush1.msra.mxu0 0.0
    %473 = vmatprep.subr.mxu0 0.0
    %474 = vmatpush1.msra.mxu0 0.0
    %475 = vmatprep.subr.mxu0 0.0
    %476 = vmatpush1.msra.mxu0 0.0
    %477 = vmatprep.subr.mxu0 0.0
    %478 = vmatpush1.msra.mxu0 0.0
    %479 = vmatprep.subr.mxu0 0.0
    %480 = vmatpush1.msra.mxu0 0.0
    %481 = vmatprep.subr.mxu0 0.0
    %482 = vmatpush1.msra.mxu0 0.0
    %483 = vmatprep.subr.mxu0 0.0
    %484 = vmatpush1.msra.mxu0 0.0
    %485 = vmatprep.subr.mxu0 0.0
    %486 = vmatpush1.msra.mxu0 0.0
    %487 = vmatprep.subr.mxu0 0.0
    %488 = vmatpush1.msra.mxu0 0.0
    %489 = vmatprep.subr.mxu0 0.0
    %490 = vmatpush1.msra.mxu0 0.0
    %491 = vmatprep.subr.mxu0 0.0
    %492 = vmatpush1.msra.mxu0 0.0
    %493 = vmatprep.subr.mxu0 0.0
    %494 = vmatpush1.msra.mxu0 0.0
    %495 = vmatprep.subr.mxu0 0.0
    %496 = vmatpush1.msra.mxu0 0.0
    %497 = vmatprep.subr.mxu0 0.0
    %498 = vmatpush1.msra.mxu0 0.0
    %499 = vmatprep.mubr.f32.mxu0 0.0
    %500 = vmatmul.mubr.f32.gmra.mrb[0].mxu0 %v433
    %v501 = vpop.f32.mrb[0].mxu0
    %v502 = vadd.f32 0.0, %v501
    %v503 = vpop.f32.mrb[0].mxu0
    %504 = vdwg.mxu0
    %v505 = vsel %vm126, %v417, 0
    %507 = vmatprep.subr.mxu0 0.0
    %508 = vmatpush1.msra.mxu0 %v421
    %509 = vmatprep.subr.mxu0 0.0
    %510 = vmatpush1.msra.mxu0 %v422
    %511 = vmatprep.subr.mxu0 0.0
    %512 = vmatpush1.msra.mxu0 %v423
    %513 = vmatprep.subr.mxu0 0.0
    %514 = vmatpush1.msra.mxu0 %v424
    %515 = vmatprep.subr.mxu0 0.0
    %516 = vmatpush1.msra.mxu0 0.0
    %517 = vmatprep.subr.mxu0 0.0
    %518 = vmatpush1.msra.mxu0 0.0
    %519 = vmatprep.subr.mxu0 0.0
    %520 = vmatpush1.msra.mxu0 0.0
    %521 = vmatprep.subr.mxu0 0.0
    %522 = vmatpush1.msra.mxu0 0.0
    %523 = vmatprep.subr.mxu0 0.0
    %524 = vmatpush1.msra.mxu0 0.0
    %525 = vmatprep.subr.mxu0 0.0
    %526 = vmatpush1.msra.mxu0 0.0
    %527 = vmatprep.subr.mxu0 0.0
    %528 = vmatpush1.msra.mxu0 0.0
    %529 = vmatprep.subr.mxu0 0.0
    %530 = vmatpush1.msra.mxu0 0.0
    %531 = vmatprep.subr.mxu0 0.0
    %532 = vmatpush1.msra.mxu0 0.0
    %533 = vmatprep.subr.mxu0 0.0
    %534 = vmatpush1.msra.mxu0 0.0
    %535 = vmatprep.subr.mxu0 0.0
    %536 = vmatpush1.msra.mxu0 0.0
    %537 = vmatprep.subr.mxu0 0.0
    %538 = vmatpush1.msra.mxu0 0.0
    %539 = vmatprep.subr.mxu0 0.0
    %540 = vmatpush1.msra.mxu0 0.0
    %541 = vmatprep.subr.mxu0 0.0
    %542 = vmatpush1.msra.mxu0 0.0
    %543 = vmatprep.subr.mxu0 0.0
    %544 = vmatpush1.msra.mxu0 0.0
    %545 = vmatprep.subr.mxu0 0.0
    %546 = vmatpush1.msra.mxu0 0.0
    %547 = vmatprep.subr.mxu0 0.0
    %548 = vmatpush1.msra.mxu0 0.0
    %549 = vmatprep.subr.mxu0 0.0
    %550 = vmatpush1.msra.mxu0 0.0
    %551 = vmatprep.subr.mxu0 0.0
    %552 = vmatpush1.msra.mxu0 0.0
    %553 = vmatprep.subr.mxu0 0.0
    %554 = vmatpush1.msra.mxu0 0.0
    %555 = vmatprep.subr.mxu0 0.0
    %556 = vmatpush1.msra.mxu0 0.0
    %557 = vmatprep.subr.mxu0 0.0
    %558 = vmatpush1.msra.mxu0 0.0
    %559 = vmatprep.subr.mxu0 0.0
    %560 = vmatpush1.msra.mxu0 0.0
    %561 = vmatprep.subr.mxu0 0.0
    %562 = vmatpush1.msra.mxu0 0.0
    %563 = vmatprep.subr.mxu0 0.0
    %564 = vmatpush1.msra.mxu0 0.0
    %565 = vmatprep.subr.mxu0 0.0
    %566 = vmatpush1.msra.mxu0 0.0
    %567 = vmatprep.subr.mxu0 0.0
    %568 = vmatpush1.msra.mxu0 0.0
    %569 = vmatprep.subr.mxu0 0.0
    %570 = vmatpush1.msra.mxu0 0.0
    %571 = vmatprep.mubr.f32.mxu0 0.0
    %572 = vmatmul.mubr.f32.gmra.mrb[0].mxu0 %v505
    %v573 = vpop.f32.mrb[0].mxu0
    %v574 = vadd.f32 %v502, %v573
    %v575 = vpop.f32.mrb[0].mxu0
    %576 = vdwg.mxu0
    %s577 = scalar_lea.vmem %s7, 1
    %v578 = vld [vmem:[%s577] sm:$0x1]
    %v580 = vlaneseq
    %v581 = vshrl.u32 %v580, 7
    %v582 = vsub.s32 0, %v581
    %v583 = vrot.slane %v578, %v582
    %v585 = vadd.f32 %v574, %v583
    %v586 = vxor.u32 %v585, 2147483648
    %v587 = vmul.f32 %v586, 1.442695
    %v588 = vpow.pop %v587
    %v589 = vadd.f32 %v588, 1.0
    %v590 = vrcp.pop %v589
    %v591 = vmul.f32 1.0, %v590
    %v592 = vtanh.pop %v585
    %s593 = scalar_lea.vmem [#allocation3], 8
    %v594 = vld [vmem:[%s593] sm:$0xff]
    %596 = vrot.lane.b32.xlu0 %v594, 32
    %v597 = vpop.permute.xlu0 %596
    %v599 = vmul.f32 %v591, %v597
    %601 = vrot.lane.b32.xlu0 %v592, 64
    %v602 = vpop.permute.xlu0 %601
    %v604 = vmul.f32 %v591, %v602
    %606 = vrot.lane.b32.xlu0 %v604, 32
    %v607 = vpop.permute.xlu0 %606
    %v609 = vadd.f32 %v599, %v607
    %v610 = vtanh.pop %v609
    %612 = vrot.lane.b32.xlu0 %v610, 64
    %v613 = vpop.permute.xlu0 %612
    %v615 = vmul.f32 %v591, %v613
    %617 = vrot.lane.b32.xlu0 %v609, 96
    %v618 = vpop.permute.xlu0 %617
    %620 = vst.msk [vmem:[%s593] sm:$0xff] %vm126, %v618
    %622 = vrot.lane.b32.xlu0 %v615, 32
    %v623 = vpop.permute.xlu0 %622
    %625 = vst.msk [vmem:[%s425] sm:$0xff] %vm126, %v623
    %s626 = scalar_lea.vmem %s1, 8
    %v627 = vld [vmem:[%s626] sm:$0xff]
    %628 = vset.pattern.permute.xlu0 0
    %629 = vperm.xlu0 %628, %v627
    %v630 = vpop.permute.xlu0 %629
    %vm631 = vcmp.eq.s32.totalorder %v630, %v133
    %v632 = vsel %vm631, 1, 0
    %v633 = vcvt.s32.f32 %v632
    %v634 = vld [vmem:[#allocation9] sm:$0xff]
    %v635 = vld [vmem:[#allocation9 + $0x8] sm:$0xff]
    %v637 = vsel %vm144, %v633, 0
    %639 = vmatprep.subr.mxu0 0.0
    %640 = vmatpush1.msra.mxu0 %v634
    %641 = vmatprep.subr.mxu0 0.0
    %642 = vmatpush1.msra.mxu0 %v635
    %643 = vmatprep.subr.mxu0 0.0
    %644 = vmatpush1.msra.mxu0 0.0
    %645 = vmatprep.subr.mxu0 0.0
    %646 = vmatpush1.msra.mxu0 0.0
    %647 = vmatprep.subr.mxu0 0.0
    %648 = vmatpush1.msra.mxu0 0.0
    %649 = vmatprep.subr.mxu0 0.0
    %650 = vmatpush1.msra.mxu0 0.0
    %651 = vmatprep.subr.mxu0 0.0
    %652 = vmatpush1.msra.mxu0 0.0
    %653 = vmatprep.subr.mxu0 0.0
    %654 = vmatpush1.msra.mxu0 0.0
    %655 = vmatprep.subr.mxu0 0.0
    %656 = vmatpush1.msra.mxu0 0.0
    %657 = vmatprep.subr.mxu0 0.0
    %658 = vmatpush1.msra.mxu0 0.0
    %659 = vmatprep.subr.mxu0 0.0
    %660 = vmatpush1.msra.mxu0 0.0
    %661 = vmatprep.subr.mxu0 0.0
    %662 = vmatpush1.msra.mxu0 0.0
    %663 = vmatprep.subr.mxu0 0.0
    %664 = vmatpush1.msra.mxu0 0.0
    %665 = vmatprep.subr.mxu0 0.0
    %666 = vmatpush1.msra.mxu0 0.0
    %667 = vmatprep.subr.mxu0 0.0
    %668 = vmatpush1.msra.mxu0 0.0
    %669 = vmatprep.subr.mxu0 0.0
    %670 = vmatpush1.msra.mxu0 0.0
    %671 = vmatprep.subr.mxu0 0.0
    %672 = vmatpush1.msra.mxu0 0.0
    %673 = vmatprep.subr.mxu0 0.0
    %674 = vmatpush1.msra.mxu0 0.0
    %675 = vmatprep.subr.mxu0 0.0
    %676 = vmatpush1.msra.mxu0 0.0
    %677 = vmatprep.subr.mxu0 0.0
    %678 = vmatpush1.msra.mxu0 0.0
    %679 = vmatprep.subr.mxu0 0.0
    %680 = vmatpush1.msra.mxu0 0.0
    %681 = vmatprep.subr.mxu0 0.0
    %682 = vmatpush1.msra.mxu0 0.0
    %683 = vmatprep.subr.mxu0 0.0
    %684 = vmatpush1.msra.mxu0 0.0
    %685 = vmatprep.subr.mxu0 0.0
    %686 = vmatpush1.msra.mxu0 0.0
    %687 = vmatprep.subr.mxu0 0.0
    %688 = vmatpush1.msra.mxu0 0.0
    %689 = vmatprep.subr.mxu0 0.0
    %690 = vmatpush1.msra.mxu0 0.0
    %691 = vmatprep.subr.mxu0 0.0
    %692 = vmatpush1.msra.mxu0 0.0
    %693 = vmatprep.subr.mxu0 0.0
    %694 = vmatpush1.msra.mxu0 0.0
    %695 = vmatprep.subr.mxu0 0.0
    %696 = vmatpush1.msra.mxu0 0.0
    %697 = vmatprep.subr.mxu0 0.0
    %698 = vmatpush1.msra.mxu0 0.0
    %699 = vmatprep.subr.mxu0 0.0
    %700 = vmatpush1.msra.mxu0 0.0
    %701 = vmatprep.subr.mxu0 0.0
    %702 = vmatpush1.msra.mxu0 0.0
    %703 = vmatprep.mubr.f32.mxu0 0.0
    %704 = vmatmul.mubr.f32.gmra.mrb[0].mxu0 %v637
    %v705 = vpop.f32.mrb[0].mxu0
    %v706 = vadd.f32 0.0, %v705
    %v707 = vpop.f32.mrb[0].mxu0
    %708 = vdwg.mxu0
    %v709 = vld [vmem:[%s5] sm:$0xff]
    %v710 = vld [vmem:[%s5 + $0x8] sm:$0xff]
    %v711 = vld [vmem:[%s5 + $0x10] sm:$0xff]
    %v712 = vld [vmem:[%s5 + $0x18] sm:$0xff]
    %v713 = vld [vmem:[#allocation2] sm:$0xff]
    %v714 = vld [vmem:[%s6] sm:$0xff]
    %v715 = vld [vmem:[%s6 + $0x8] sm:$0xff]
    %v716 = vld [vmem:[%s6 + $0x10] sm:$0xff]
    %v717 = vld [vmem:[%s6 + $0x18] sm:$0xff]
    %v719 = vsel %vm126, %v713, 0
    %721 = vmatprep.subr.mxu0 0.0
    %722 = vmatpush1.msra.mxu0 %v714
    %723 = vmatprep.subr.mxu0 0.0
    %724 = vmatpush1.msra.mxu0 %v715
    %725 = vmatprep.subr.mxu0 0.0
    %726 = vmatpush1.msra.mxu0 %v716
    %727 = vmatprep.subr.mxu0 0.0
    %728 = vmatpush1.msra.mxu0 %v717
    %729 = vmatprep.subr.mxu0 0.0
    %730 = vmatpush1.msra.mxu0 0.0
    %731 = vmatprep.subr.mxu0 0.0
    %732 = vmatpush1.msra.mxu0 0.0
    %733 = vmatprep.subr.mxu0 0.0
    %734 = vmatpush1.msra.mxu0 0.0
    %735 = vmatprep.subr.mxu0 0.0
    %736 = vmatpush1.msra.mxu0 0.0
    %737 = vmatprep.subr.mxu0 0.0
    %738 = vmatpush1.msra.mxu0 0.0
    %739 = vmatprep.subr.mxu0 0.0
    %740 = vmatpush1.msra.mxu0 0.0
    %741 = vmatprep.subr.mxu0 0.0
    %742 = vmatpush1.msra.mxu0 0.0
    %743 = vmatprep.subr.mxu0 0.0
    %744 = vmatpush1.msra.mxu0 0.0
    %745 = vmatprep.subr.mxu0 0.0
    %746 = vmatpush1.msra.mxu0 0.0
    %747 = vmatprep.subr.mxu0 0.0
    %748 = vmatpush1.msra.mxu0 0.0
    %749 = vmatprep.subr.mxu0 0.0
    %750 = vmatpush1.msra.mxu0 0.0
    %751 = vmatprep.subr.mxu0 0.0
    %752 = vmatpush1.msra.mxu0 0.0
    %753 = vmatprep.subr.mxu0 0.0
    %754 = vmatpush1.msra.mxu0 0.0
    %755 = vmatprep.subr.mxu0 0.0
    %756 = vmatpush1.msra.mxu0 0.0
    %757 = vmatprep.subr.mxu0 0.0
    %758 = vmatpush1.msra.mxu0 0.0
    %759 = vmatprep.subr.mxu0 0.0
    %760 = vmatpush1.msra.mxu0 0.0
    %761 = vmatprep.subr.mxu0 0.0
    %762 = vmatpush1.msra.mxu0 0.0
    %763 = vmatprep.subr.mxu0 0.0
    %764 = vmatpush1.msra.mxu0 0.0
    %765 = vmatprep.subr.mxu0 0.0
    %766 = vmatpush1.msra.mxu0 0.0
    %767 = vmatprep.subr.mxu0 0.0
    %768 = vmatpush1.msra.mxu0 0.0
    %769 = vmatprep.subr.mxu0 0.0
    %770 = vmatpush1.msra.mxu0 0.0
    %771 = vmatprep.subr.mxu0 0.0
    %772 = vmatpush1.msra.mxu0 0.0
    %773 = vmatprep.subr.mxu0 0.0
    %774 = vmatpush1.msra.mxu0 0.0
    %775 = vmatprep.subr.mxu0 0.0
    %776 = vmatpush1.msra.mxu0 0.0
    %777 = vmatprep.subr.mxu0 0.0
    %778 = vmatpush1.msra.mxu0 0.0
    %779 = vmatprep.subr.mxu0 0.0
    %780 = vmatpush1.msra.mxu0 0.0
    %781 = vmatprep.subr.mxu0 0.0
    %782 = vmatpush1.msra.mxu0 0.0
    %783 = vmatprep.subr.mxu0 0.0
    %784 = vmatpush1.msra.mxu0 0.0
    %785 = vmatprep.mubr.f32.mxu0 0.0
    %786 = vmatmul.mubr.f32.gmra.mrb[0].mxu0 %v719
    %v787 = vpop.f32.mrb[0].mxu0
    %v788 = vadd.f32 0.0, %v787
    %v789 = vpop.f32.mrb[0].mxu0
    %790 = vdwg.mxu0
    %v792 = vsel %vm126, %v706, 0
    %794 = vmatprep.subr.mxu0 0.0
    %795 = vmatpush1.msra.mxu0 %v709
    %796 = vmatprep.subr.mxu0 0.0
    %797 = vmatpush1.msra.mxu0 %v710
    %798 = vmatprep.subr.mxu0 0.0
    %799 = vmatpush1.msra.mxu0 %v711
    %800 = vmatprep.subr.mxu0 0.0
    %801 = vmatpush1.msra.mxu0 %v712
    %802 = vmatprep.subr.mxu0 0.0
    %803 = vmatpush1.msra.mxu0 0.0
    %804 = vmatprep.subr.mxu0 0.0
    %805 = vmatpush1.msra.mxu0 0.0
    %806 = vmatprep.subr.mxu0 0.0
    %807 = vmatpush1.msra.mxu0 0.0
    %808 = vmatprep.subr.mxu0 0.0
    %809 = vmatpush1.msra.mxu0 0.0
    %810 = vmatprep.subr.mxu0 0.0
    %811 = vmatpush1.msra.mxu0 0.0
    %812 = vmatprep.subr.mxu0 0.0
    %813 = vmatpush1.msra.mxu0 0.0
    %814 = vmatprep.subr.mxu0 0.0
    %815 = vmatpush1.msra.mxu0 0.0
    %816 = vmatprep.subr.mxu0 0.0
    %817 = vmatpush1.msra.mxu0 0.0
    %818 = vmatprep.subr.mxu0 0.0
    %819 = vmatpush1.msra.mxu0 0.0
    %820 = vmatprep.subr.mxu0 0.0
    %821 = vmatpush1.msra.mxu0 0.0
    %822 = vmatprep.subr.mxu0 0.0
    %823 = vmatpush1.msra.mxu0 0.0
    %824 = vmatprep.subr.mxu0 0.0
    %825 = vmatpush1.msra.mxu0 0.0
    %826 = vmatprep.subr.mxu0 0.0
    %827 = vmatpush1.msra.mxu0 0.0
    %828 = vmatprep.subr.mxu0 0.0
    %829 = vmatpush1.msra.mxu0 0.0
    %830 = vmatprep.subr.mxu0 0.0
    %831 = vmatpush1.msra.mxu0 0.0
    %832 = vmatprep.subr.mxu0 0.0
    %833 = vmatpush1.msra.mxu0 0.0
    %834 = vmatprep.subr.mxu0 0.0
    %835 = vmatpush1.msra.mxu0 0.0
    %836 = vmatprep.subr.mxu0 0.0
    %837 = vmatpush1.msra.mxu0 0.0
    %838 = vmatprep.subr.mxu0 0.0
    %839 = vmatpush1.msra.mxu0 0.0
    %840 = vmatprep.subr.mxu0 0.0
    %841 = vmatpush1.msra.mxu0 0.0
    %842 = vmatprep.subr.mxu0 0.0
    %843 = vmatpush1.msra.mxu0 0.0
    %844 = vmatprep.subr.mxu0 0.0
    %845 = vmatpush1.msra.mxu0 0.0
    %846 = vmatprep.subr.mxu0 0.0
    %847 = vmatpush1.msra.mxu0 0.0
    %848 = vmatprep.subr.mxu0 0.0
    %849 = vmatpush1.msra.mxu0 0.0
    %850 = vmatprep.subr.mxu0 0.0
    %851 = vmatpush1.msra.mxu0 0.0
    %852 = vmatprep.subr.mxu0 0.0
    %853 = vmatpush1.msra.mxu0 0.0
    %854 = vmatprep.subr.mxu0 0.0
    %855 = vmatpush1.msra.mxu0 0.0
    %856 = vmatprep.subr.mxu0 0.0
    %857 = vmatpush1.msra.mxu0 0.0
    %858 = vmatprep.mubr.f32.mxu0 0.0
    %859 = vmatmul.mubr.f32.gmra.mrb[0].mxu0 %v792
    %v860 = vpop.f32.mrb[0].mxu0
    %v861 = vadd.f32 %v788, %v860
    %v862 = vpop.f32.mrb[0].mxu0
    %863 = vdwg.mxu0
    %v864 = vld [vmem:[%s7] sm:$0x1]
    %v866 = vlaneseq
    %v867 = vshrl.u32 %v866, 7
    %v868 = vsub.s32 0, %v867
    %v869 = vrot.slane %v864, %v868
    %v871 = vadd.f32 %v861, %v869
    %v872 = vxor.u32 %v871, 2147483648
    %v873 = vmul.f32 %v872, 1.442695
    %v874 = vpow.pop %v873
    %v875 = vadd.f32 %v874, 1.0
    %v876 = vrcp.pop %v875
    %v877 = vmul.f32 1.0, %v876
    %v878 = vtanh.pop %v871
    %v879 = vld [vmem:[#allocation3] sm:$0xff]
    %881 = vrot.lane.b32.xlu0 %v879, 32
    %v882 = vpop.permute.xlu0 %881
    %v884 = vmul.f32 %v877, %v882
    %886 = vrot.lane.b32.xlu0 %v878, 64
    %v887 = vpop.permute.xlu0 %886
    %v889 = vmul.f32 %v877, %v887
    %891 = vrot.lane.b32.xlu0 %v889, 32
    %v892 = vpop.permute.xlu0 %891
    %v894 = vadd.f32 %v884, %v892
    %v895 = vtanh.pop %v894
    %897 = vrot.lane.b32.xlu0 %v895, 64
    %v898 = vpop.permute.xlu0 %897
    %v900 = vmul.f32 %v877, %v898
    %902 = vrot.lane.b32.xlu0 %v894, 96
    %v903 = vpop.permute.xlu0 %902
    %905 = vst.msk [vmem:[#allocation3] sm:$0xff] %vm126, %v903
    %907 = vrot.lane.b32.xlu0 %v900, 32
    %v908 = vpop.permute.xlu0 %907
    %910 = vst.msk [vmem:[#allocation2] sm:$0xff] %vm126, %v908
    %v911 = vld [vmem:[%s420] sm:$0xff]
    %v912 = vld [vmem:[%s420 + $0x8] sm:$0xff]
    %v913 = vld [vmem:[%s420 + $0x10] sm:$0xff]
    %v914 = vld [vmem:[%s420 + $0x18] sm:$0xff]
    %v915 = vld [vmem:[%s425] sm:$0xff]
    %v916 = vld [vmem:[%s427] sm:$0xff]
    %v917 = vld [vmem:[%s427 + $0x8] sm:$0xff]
    %v918 = vld [vmem:[%s427 + $0x10] sm:$0xff]
    %v919 = vld [vmem:[%s427 + $0x18] sm:$0xff]
    %v921 = vsel %vm126, %v915, 0
    %923 = vmatprep.subr.mxu0 0.0
    %924 = vmatpush1.msra.mxu0 %v916
    %925 = vmatprep.subr.mxu0 0.0
    %926 = vmatpush1.msra.mxu0 %v917
    %927 = vmatprep.subr.mxu0 0.0
    %928 = vmatpush1.msra.mxu0 %v918
    %929 = vmatprep.subr.mxu0 0.0
    %930 = vmatpush1.msra.mxu0 %v919
    %931 = vmatprep.subr.mxu0 0.0
    %932 = vmatpush1.msra.mxu0 0.0
    %933 = vmatprep.subr.mxu0 0.0
    %934 = vmatpush1.msra.mxu0 0.0
    %935 = vmatprep.subr.mxu0 0.0
    %936 = vmatpush1.msra.mxu0 0.0
    %937 = vmatprep.subr.mxu0 0.0
    %938 = vmatpush1.msra.mxu0 0.0
    %939 = vmatprep.subr.mxu0 0.0
    %940 = vmatpush1.msra.mxu0 0.0
    %941 = vmatprep.subr.mxu0 0.0
    %942 = vmatpush1.msra.mxu0 0.0
    %943 = vmatprep.subr.mxu0 0.0
    %944 = vmatpush1.msra.mxu0 0.0
    %945 = vmatprep.subr.mxu0 0.0
    %946 = vmatpush1.msra.mxu0 0.0
    %947 = vmatprep.subr.mxu0 0.0
    %948 = vmatpush1.msra.mxu0 0.0
    %949 = vmatprep.subr.mxu0 0.0
    %950 = vmatpush1.msra.mxu0 0.0
    %951 = vmatprep.subr.mxu0 0.0
    %952 = vmatpush1.msra.mxu0 0.0
    %953 = vmatprep.subr.mxu0 0.0
    %954 = vmatpush1.msra.mxu0 0.0
    %955 = vmatprep.subr.mxu0 0.0
    %956 = vmatpush1.msra.mxu0 0.0
    %957 = vmatprep.subr.mxu0 0.0
    %958 = vmatpush1.msra.mxu0 0.0
    %959 = vmatprep.subr.mxu0 0.0
    %960 = vmatpush1.msra.mxu0 0.0
    %961 = vmatprep.subr.mxu0 0.0
    %962 = vmatpush1.msra.mxu0 0.0
    %963 = vmatprep.subr.mxu0 0.0
    %964 = vmatpush1.msra.mxu0 0.0
    %965 = vmatprep.subr.mxu0 0.0
    %966 = vmatpush1.msra.mxu0 0.0
    %967 = vmatprep.subr.mxu0 0.0
    %968 = vmatpush1.msra.mxu0 0.0
    %969 = vmatprep.subr.mxu0 0.0
    %970 = vmatpush1.msra.mxu0 0.0
    %971 = vmatprep.subr.mxu0 0.0
    %972 = vmatpush1.msra.mxu0 0.0
    %973 = vmatprep.subr.mxu0 0.0
    %974 = vmatpush1.msra.mxu0 0.0
    %975 = vmatprep.subr.mxu0 0.0
    %976 = vmatpush1.msra.mxu0 0.0
    %977 = vmatprep.subr.mxu0 0.0
    %978 = vmatpush1.msra.mxu0 0.0
    %979 = vmatprep.subr.mxu0 0.0
    %980 = vmatpush1.msra.mxu0 0.0
    %981 = vmatprep.subr.mxu0 0.0
    %982 = vmatpush1.msra.mxu0 0.0
    %983 = vmatprep.subr.mxu0 0.0
    %984 = vmatpush1.msra.mxu0 0.0
    %985 = vmatprep.subr.mxu0 0.0
    %986 = vmatpush1.msra.mxu0 0.0
    %987 = vmatprep.mubr.f32.mxu0 0.0
    %988 = vmatmul.mubr.f32.gmra.mrb[0].mxu0 %v921
    %v989 = vpop.f32.mrb[0].mxu0
    %v990 = vadd.f32 0.0, %v989
    %v991 = vpop.f32.mrb[0].mxu0
    %992 = vdwg.mxu0
    %v993 = vsel %vm126, %v908, 0
    %995 = vmatprep.subr.mxu0 0.0
    %996 = vmatpush1.msra.mxu0 %v911
    %997 = vmatprep.subr.mxu0 0.0
    %998 = vmatpush1.msra.mxu0 %v912
    %999 = vmatprep.subr.mxu0 0.0
    %1000 = vmatpush1.msra.mxu0 %v913
    %1001 = vmatprep.subr.mxu0 0.0
    %1002 = vmatpush1.msra.mxu0 %v914
    %1003 = vmatprep.subr.mxu0 0.0
    %1004 = vmatpush1.msra.mxu0 0.0
    %1005 = vmatprep.subr.mxu0 0.0
    %1006 = vmatpush1.msra.mxu0 0.0
    %1007 = vmatprep.subr.mxu0 0.0
    %1008 = vmatpush1.msra.mxu0 0.0
    %1009 = vmatprep.subr.mxu0 0.0
    %1010 = vmatpush1.msra.mxu0 0.0
    %1011 = vmatprep.subr.mxu0 0.0
    %1012 = vmatpush1.msra.mxu0 0.0
    %1013 = vmatprep.subr.mxu0 0.0
    %1014 = vmatpush1.msra.mxu0 0.0
    %1015 = vmatprep.subr.mxu0 0.0
    %1016 = vmatpush1.msra.mxu0 0.0
    %1017 = vmatprep.subr.mxu0 0.0
    %1018 = vmatpush1.msra.mxu0 0.0
    %1019 = vmatprep.subr.mxu0 0.0
    %1020 = vmatpush1.msra.mxu0 0.0
    %1021 = vmatprep.subr.mxu0 0.0
    %1022 = vmatpush1.msra.mxu0 0.0
    %1023 = vmatprep.subr.mxu0 0.0
    %1024 = vmatpush1.msra.mxu0 0.0
    %1025 = vmatprep.subr.mxu0 0.0
    %1026 = vmatpush1.msra.mxu0 0.0
    %1027 = vmatprep.subr.mxu0 0.0
    %1028 = vmatpush1.msra.mxu0 0.0
    %1029 = vmatprep.subr.mxu0 0.0
    %1030 = vmatpush1.msra.mxu0 0.0
    %1031 = vmatprep.subr.mxu0 0.0
    %1032 = vmatpush1.msra.mxu0 0.0
    %1033 = vmatprep.subr.mxu0 0.0
    %1034 = vmatpush1.msra.mxu0 0.0
    %1035 = vmatprep.subr.mxu0 0.0
    %1036 = vmatpush1.msra.mxu0 0.0
    %1037 = vmatprep.subr.mxu0 0.0
    %1038 = vmatpush1.msra.mxu0 0.0
    %1039 = vmatprep.subr.mxu0 0.0
    %1040 = vmatpush1.msra.mxu0 0.0
    %1041 = vmatprep.subr.mxu0 0.0
    %1042 = vmatpush1.msra.mxu0 0.0
    %1043 = vmatprep.subr.mxu0 0.0
    %1044 = vmatpush1.msra.mxu0 0.0
    %1045 = vmatprep.subr.mxu0 0.0
    %1046 = vmatpush1.msra.mxu0 0.0
    %1047 = vmatprep.subr.mxu0 0.0
    %1048 = vmatpush1.msra.mxu0 0.0
    %1049 = vmatprep.subr.mxu0 0.0
    %1050 = vmatpush1.msra.mxu0 0.0
    %1051 = vmatprep.subr.mxu0 0.0
    %1052 = vmatpush1.msra.mxu0 0.0
    %1053 = vmatprep.subr.mxu0 0.0
    %1054 = vmatpush1.msra.mxu0 0.0
    %1055 = vmatprep.subr.mxu0 0.0
    %1056 = vmatpush1.msra.mxu0 0.0
    %1057 = vmatprep.subr.mxu0 0.0
    %1058 = vmatpush1.msra.mxu0 0.0
    %1059 = vmatprep.mubr.f32.mxu0 0.0
    %1060 = vmatmul.mubr.f32.gmra.mrb[0].mxu0 %v993
    %v1061 = vpop.f32.mrb[0].mxu0
    %v1062 = vadd.f32 %v990, %v1061
    %v1063 = vpop.f32.mrb[0].mxu0
    %1064 = vdwg.mxu0
    %v1065 = vld [vmem:[%s577] sm:$0x1]
    %v1067 = vlaneseq
    %v1068 = vshrl.u32 %v1067, 7
    %v1069 = vsub.s32 0, %v1068
    %v1070 = vrot.slane %v1065, %v1069
    %v1072 = vadd.f32 %v1062, %v1070
    %v1073 = vxor.u32 %v1072, 2147483648
    %v1074 = vmul.f32 %v1073, 1.442695
    %v1075 = vpow.pop %v1074
    %v1076 = vadd.f32 %v1075, 1.0
    %v1077 = vrcp.pop %v1076
    %v1078 = vmul.f32 1.0, %v1077
    %v1079 = vtanh.pop %v1072
    %v1080 = vld [vmem:[%s593] sm:$0xff]
    %1082 = vrot.lane.b32.xlu0 %v1080, 32
    %v1083 = vpop.permute.xlu0 %1082
    %v1085 = vmul.f32 %v1078, %v1083
    %1087 = vrot.lane.b32.xlu0 %v1079, 64
    %v1088 = vpop.permute.xlu0 %1087
    %v1090 = vmul.f32 %v1078, %v1088
    %1092 = vrot.lane.b32.xlu0 %v1090, 32
    %v1093 = vpop.permute.xlu0 %1092
    %v1095 = vadd.f32 %v1085, %v1093
    %v1096 = vtanh.pop %v1095
    %1098 = vrot.lane.b32.xlu0 %v1096, 64
    %v1099 = vpop.permute.xlu0 %1098
    %v1101 = vmul.f32 %v1078, %v1099
    %1103 = vrot.lane.b32.xlu0 %v1095, 96
    %v1104 = vpop.permute.xlu0 %1103
    %1106 = vst.msk [vmem:[%s593] sm:$0xff] %vm126, %v1104
    %1108 = vrot.lane.b32.xlu0 %v1101, 32
    %v1109 = vpop.permute.xlu0 %1108
    %1111 = vst.msk [vmem:[%s425] sm:$0xff] %vm126, %v1109
    %s1112 = scalar_lea.vmem %s1, 16
    %v1113 = vld [vmem:[%s1112] sm:$0xff]
    %1114 = vset.pattern.permute.xlu0 0
    %1115 = vperm.xlu0 %1114, %v1113
    %v1116 = vpop.permute.xlu0 %1115
    %vm1117 = vcmp.eq.s32.totalorder %v1116, %v133
    %v1118 = vsel %vm1117, 1, 0
    %v1119 = vcvt.s32.f32 %v1118
    %v1120 = vld [vmem:[#allocation9] sm:$0xff]
    %v1121 = vld [vmem:[#allocation9 + $0x8] sm:$0xff]
    %v1123 = vsel %vm144, %v1119, 0
    %1125 = vmatprep.subr.mxu0 0.0
    %1126 = vmatpush1.msra.mxu0 %v1120
    %1127 = vmatprep.subr.mxu0 0.0
    %1128 = vmatpush1.msra.mxu0 %v1121
    %1129 = vmatprep.subr.mxu0 0.0
    %1130 = vmatpush1.msra.mxu0 0.0
    %1131 = vmatprep.subr.mxu0 0.0
    %1132 = vmatpush1.msra.mxu0 0.0
    %1133 = vmatprep.subr.mxu0 0.0
    %1134 = vmatpush1.msra.mxu0 0.0
    %1135 = vmatprep.subr.mxu0 0.0
    %1136 = vmatpush1.msra.mxu0 0.0
    %1137 = vmatprep.subr.mxu0 0.0
    %1138 = vmatpush1.msra.mxu0 0.0
    %1139 = vmatprep.subr.mxu0 0.0
    %1140 = vmatpush1.msra.mxu0 0.0
    %1141 = vmatprep.subr.mxu0 0.0
    %1142 = vmatpush1.msra.mxu0 0.0
    %1143 = vmatprep.subr.mxu0 0.0
    %1144 = vmatpush1.msra.mxu0 0.0
    %1145 = vmatprep.subr.mxu0 0.0
    %1146 = vmatpush1.msra.mxu0 0.0
    %1147 = vmatprep.subr.mxu0 0.0
    %1148 = vmatpush1.msra.mxu0 0.0
    %1149 = vmatprep.subr.mxu0 0.0
    %1150 = vmatpush1.msra.mxu0 0.0
    %1151 = vmatprep.subr.mxu0 0.0
    %1152 = vmatpush1.msra.mxu0 0.0
    %1153 = vmatprep.subr.mxu0 0.0
    %1154 = vmatpush1.msra.mxu0 0.0
    %1155 = vmatprep.subr.mxu0 0.0
    %1156 = vmatpush1.msra.mxu0 0.0
    %1157 = vmatprep.subr.mxu0 0.0
    %1158 = vmatpush1.msra.mxu0 0.0
    %1159 = vmatprep.subr.mxu0 0.0
    %1160 = vmatpush1.msra.mxu0 0.0
    %1161 = vmatprep.subr.mxu0 0.0
    %1162 = vmatpush1.msra.mxu0 0.0
    %1163 = vmatprep.subr.mxu0 0.0
    %1164 = vmatpush1.msra.mxu0 0.0
    %1165 = vmatprep.subr.mxu0 0.0
    %1166 = vmatpush1.msra.mxu0 0.0
    %1167 = vmatprep.subr.mxu0 0.0
    %1168 = vmatpush1.msra.mxu0 0.0
    %1169 = vmatprep.subr.mxu0 0.0
    %1170 = vmatpush1.msra.mxu0 0.0
    %1171 = vmatprep.subr.mxu0 0.0
    %1172 = vmatpush1.msra.mxu0 0.0
    %1173 = vmatprep.subr.mxu0 0.0
    %1174 = vmatpush1.msra.mxu0 0.0
    %1175 = vmatprep.subr.mxu0 0.0
    %1176 = vmatpush1.msra.mxu0 0.0
    %1177 = vmatprep.subr.mxu0 0.0
    %1178 = vmatpush1.msra.mxu0 0.0
    %1179 = vmatprep.subr.mxu0 0.0
    %1180 = vmatpush1.msra.mxu0 0.0
    %1181 = vmatprep.subr.mxu0 0.0
    %1182 = vmatpush1.msra.mxu0 0.0
    %1183 = vmatprep.subr.mxu0 0.0
    %1184 = vmatpush1.msra.mxu0 0.0
    %1185 = vmatprep.subr.mxu0 0.0
    %1186 = vmatpush1.msra.mxu0 0.0
    %1187 = vmatprep.subr.mxu0 0.0
    %1188 = vmatpush1.msra.mxu0 0.0
    %1189 = vmatprep.mubr.f32.mxu0 0.0
    %1190 = vmatmul.mubr.f32.gmra.mrb[0].mxu0 %v1123
    %v1191 = vpop.f32.mrb[0].mxu0
    %v1192 = vadd.f32 0.0, %v1191
    %v1193 = vpop.f32.mrb[0].mxu0
    %1194 = vdwg.mxu0
    %v1195 = vld [vmem:[%s5] sm:$0xff]
    %v1196 = vld [vmem:[%s5 + $0x8] sm:$0xff]
    %v1197 = vld [vmem:[%s5 + $0x10] sm:$0xff]
    %v1198 = vld [vmem:[%s5 + $0x18] sm:$0xff]
    %v1199 = vld [vmem:[#allocation2] sm:$0xff]
    %v1200 = vld [vmem:[%s6] sm:$0xff]
    %v1201 = vld [vmem:[%s6 + $0x8] sm:$0xff]
    %v1202 = vld [vmem:[%s6 + $0x10] sm:$0xff]
    %v1203 = vld [vmem:[%s6 + $0x18] sm:$0xff]
    %v1205 = vsel %vm126, %v1199, 0
    %1207 = vmatprep.subr.mxu0 0.0
    %1208 = vmatpush1.msra.mxu0 %v1200
    %1209 = vmatprep.subr.mxu0 0.0
    %1210 = vmatpush1.msra.mxu0 %v1201
    %1211 = vmatprep.subr.mxu0 0.0
    %1212 = vmatpush1.msra.mxu0 %v1202
    %1213 = vmatprep.subr.mxu0 0.0
    %1214 = vmatpush1.msra.mxu0 %v1203
    %1215 = vmatprep.subr.mxu0 0.0
    %1216 = vmatpush1.msra.mxu0 0.0
    %1217 = vmatprep.subr.mxu0 0.0
    %1218 = vmatpush1.msra.mxu0 0.0
    %1219 = vmatprep.subr.mxu0 0.0
    %1220 = vmatpush1.msra.mxu0 0.0
    %1221 = vmatprep.subr.mxu0 0.0
    %1222 = vmatpush1.msra.mxu0 0.0
    %1223 = vmatprep.subr.mxu0 0.0
    %1224 = vmatpush1.msra.mxu0 0.0
    %1225 = vmatprep.subr.mxu0 0.0
    %1226 = vmatpush1.msra.mxu0 0.0
    %1227 = vmatprep.subr.mxu0 0.0
    %1228 = vmatpush1.msra.mxu0 0.0
    %1229 = vmatprep.subr.mxu0 0.0
    %1230 = vmatpush1.msra.mxu0 0.0
    %1231 = vmatprep.subr.mxu0 0.0
    %1232 = vmatpush1.msra.mxu0 0.0
    %1233 = vmatprep.subr.mxu0 0.0
    %1234 = vmatpush1.msra.mxu0 0.0
    %1235 = vmatprep.subr.mxu0 0.0
    %1236 = vmatpush1.msra.mxu0 0.0
    %1237 = vmatprep.subr.mxu0 0.0
    %1238 = vmatpush1.msra.mxu0 0.0
    %1239 = vmatprep.subr.mxu0 0.0
    %1240 = vmatpush1.msra.mxu0 0.0
    %1241 = vmatprep.subr.mxu0 0.0
    %1242 = vmatpush1.msra.mxu0 0.0
    %1243 = vmatprep.subr.mxu0 0.0
    %1244 = vmatpush1.msra.mxu0 0.0
    %1245 = vmatprep.subr.mxu0 0.0
    %1246 = vmatpush1.msra.mxu0 0.0
    %1247 = vmatprep.subr.mxu0 0.0
    %1248 = vmatpush1.msra.mxu0 0.0
    %1249 = vmatprep.subr.mxu0 0.0
    %1250 = vmatpush1.msra.mxu0 0.0
    %1251 = vmatprep.subr.mxu0 0.0
    %1252 = vmatpush1.msra.mxu0 0.0
    %1253 = vmatprep.subr.mxu0 0.0
    %1254 = vmatpush1.msra.mxu0 0.0
    %1255 = vmatprep.subr.mxu0 0.0
    %1256 = vmatpush1.msra.mxu0 0.0
    %1257 = vmatprep.subr.mxu0 0.0
    %1258 = vmatpush1.msra.mxu0 0.0
    %1259 = vmatprep.subr.mxu0 0.0
    %1260 = vmatpush1.msra.mxu0 0.0
    %1261 = vmatprep.subr.mxu0 0.0
    %1262 = vmatpush1.msra.mxu0 0.0
    %1263 = vmatprep.subr.mxu0 0.0
    %1264 = vmatpush1.msra.mxu0 0.0
    %1265 = vmatprep.subr.mxu0 0.0
    %1266 = vmatpush1.msra.mxu0 0.0
    %1267 = vmatprep.subr.mxu0 0.0
    %1268 = vmatpush1.msra.mxu0 0.0
    %1269 = vmatprep.subr.mxu0 0.0
    %1270 = vmatpush1.msra.mxu0 0.0
    %1271 = vmatprep.mubr.f32.mxu0 0.0
    %1272 = vmatmul.mubr.f32.gmra.mrb[0].mxu0 %v1205
    %v1273 = vpop.f32.mrb[0].mxu0
    %v1274 = vadd.f32 0.0, %v1273
    %v1275 = vpop.f32.mrb[0].mxu0
    %1276 = vdwg.mxu0
    %v1278 = vsel %vm126, %v1192, 0
    %1280 = vmatprep.subr.mxu0 0.0
    %1281 = vmatpush1.msra.mxu0 %v1195
    %1282 = vmatprep.subr.mxu0 0.0
    %1283 = vmatpush1.msra.mxu0 %v1196
    %1284 = vmatprep.subr.mxu0 0.0
    %1285 = vmatpush1.msra.mxu0 %v1197
    %1286 = vmatprep.subr.mxu0 0.0
    %1287 = vmatpush1.msra.mxu0 %v1198
    %1288 = vmatprep.subr.mxu0 0.0
    %1289 = vmatpush1.msra.mxu0 0.0
    %1290 = vmatprep.subr.mxu0 0.0
    %1291 = vmatpush1.msra.mxu0 0.0
    %1292 = vmatprep.subr.mxu0 0.0
    %1293 = vmatpush1.msra.mxu0 0.0
    %1294 = vmatprep.subr.mxu0 0.0
    %1295 = vmatpush1.msra.mxu0 0.0
    %1296 = vmatprep.subr.mxu0 0.0
    %1297 = vmatpush1.msra.mxu0 0.0
    %1298 = vmatprep.subr.mxu0 0.0
    %1299 = vmatpush1.msra.mxu0 0.0
    %1300 = vmatprep.subr.mxu0 0.0
    %1301 = vmatpush1.msra.mxu0 0.0
    %1302 = vmatprep.subr.mxu0 0.0
    %1303 = vmatpush1.msra.mxu0 0.0
    %1304 = vmatprep.subr.mxu0 0.0
    %1305 = vmatpush1.msra.mxu0 0.0
    %1306 = vmatprep.subr.mxu0 0.0
    %1307 = vmatpush1.msra.mxu0 0.0
    %1308 = vmatprep.subr.mxu0 0.0
    %1309 = vmatpush1.msra.mxu0 0.0
    %1310 = vmatprep.subr.mxu0 0.0
    %1311 = vmatpush1.msra.mxu0 0.0
    %1312 = vmatprep.subr.mxu0 0.0
    %1313 = vmatpush1.msra.mxu0 0.0
    %1314 = vmatprep.subr.mxu0 0.0
    %1315 = vmatpush1.msra.mxu0 0.0
    %1316 = vmatprep.subr.mxu0 0.0
    %1317 = vmatpush1.msra.mxu0 0.0
    %1318 = vmatprep.subr.mxu0 0.0
    %1319 = vmatpush1.msra.mxu0 0.0
    %1320 = vmatprep.subr.mxu0 0.0
    %1321 = vmatpush1.msra.mxu0 0.0
    %1322 = vmatprep.subr.mxu0 0.0
    %1323 = vmatpush1.msra.mxu0 0.0
    %1324 = vmatprep.subr.mxu0 0.0
    %1325 = vmatpush1.msra.mxu0 0.0
    %1326 = vmatprep.subr.mxu0 0.0
    %1327 = vmatpush1.msra.mxu0 0.0
    %1328 = vmatprep.subr.mxu0 0.0
    %1329 = vmatpush1.msra.mxu0 0.0
    %1330 = vmatprep.subr.mxu0 0.0
    %1331 = vmatpush1.msra.mxu0 0.0
    %1332 = vmatprep.subr.mxu0 0.0
    %1333 = vmatpush1.msra.mxu0 0.0
    %1334 = vmatprep.subr.mxu0 0.0
    %1335 = vmatpush1.msra.mxu0 0.0
    %1336 = vmatprep.subr.mxu0 0.0
    %1337 = vmatpush1.msra.mxu0 0.0
    %1338 = vmatprep.subr.mxu0 0.0
    %1339 = vmatpush1.msra.mxu0 0.0
    %1340 = vmatprep.subr.mxu0 0.0
    %1341 = vmatpush1.msra.mxu0 0.0
    %1342 = vmatprep.subr.mxu0 0.0
    %1343 = vmatpush1.msra.mxu0 0.0
    %1344 = vmatprep.mubr.f32.mxu0 0.0
    %1345 = vmatmul.mubr.f32.gmra.mrb[0].mxu0 %v1278
    %v1346 = vpop.f32.mrb[0].mxu0
    %v1347 = vadd.f32 %v1274, %v1346
    %v1348 = vpop.f32.mrb[0].mxu0
    %1349 = vdwg.mxu0
    %v1350 = vld [vmem:[%s7] sm:$0x1]
    %v1352 = vlaneseq
    %v1353 = vshrl.u32 %v1352, 7
    %v1354 = vsub.s32 0, %v1353
    %v1355 = vrot.slane %v1350, %v1354
    %v1357 = vadd.f32 %v1347, %v1355
    %v1358 = vxor.u32 %v1357, 2147483648
    %v1359 = vmul.f32 %v1358, 1.442695
    %v1360 = vpow.pop %v1359
    %v1361 = vadd.f32 %v1360, 1.0
    %v1362 = vrcp.pop %v1361
    %v1363 = vmul.f32 1.0, %v1362
    %v1364 = vtanh.pop %v1357
    %v1365 = vld [vmem:[#allocation3] sm:$0xff]
    %1367 = vrot.lane.b32.xlu0 %v1365, 32
    %v1368 = vpop.permute.xlu0 %1367
    %v1370 = vmul.f32 %v1363, %v1368
    %1372 = vrot.lane.b32.xlu0 %v1364, 64
    %v1373 = vpop.permute.xlu0 %1372
    %v1375 = vmul.f32 %v1363, %v1373
    %1377 = vrot.lane.b32.xlu0 %v1375, 32
    %v1378 = vpop.permute.xlu0 %1377
    %v1380 = vadd.f32 %v1370, %v1378
    %v1381 = vtanh.pop %v1380
    %1383 = vrot.lane.b32.xlu0 %v1381, 64
    %v1384 = vpop.permute.xlu0 %1383
    %v1386 = vmul.f32 %v1363, %v1384
    %1388 = vrot.lane.b32.xlu0 %v1380, 96
    %v1389 = vpop.permute.xlu0 %1388
    %1391 = vst.msk [vmem:[#allocation3] sm:$0xff] %vm126, %v1389
    %1393 = vrot.lane.b32.xlu0 %v1386, 32
    %v1394 = vpop.permute.xlu0 %1393
    %1396 = vst.msk [vmem:[#allocation2] sm:$0xff] %vm126, %v1394
    %v1397 = vld [vmem:[%s420] sm:$0xff]
    %v1398 = vld [vmem:[%s420 + $0x8] sm:$0xff]
    %v1399 = vld [vmem:[%s420 + $0x10] sm:$0xff]
    %v1400 = vld [vmem:[%s420 + $0x18] sm:$0xff]
    %v1401 = vld [vmem:[%s425] sm:$0xff]
    %v1402 = vld [vmem:[%s427] sm:$0xff]
    %v1403 = vld [vmem:[%s427 + $0x8] sm:$0xff]
    %v1404 = vld [vmem:[%s427 + $0x10] sm:$0xff]
    %v1405 = vld [vmem:[%s427 + $0x18] sm:$0xff]
    %v1407 = vsel %vm126, %v1401, 0
    %1409 = vmatprep.subr.mxu0 0.0
    %1410 = vmatpush1.msra.mxu0 %v1402
    %1411 = vmatprep.subr.mxu0 0.0
    %1412 = vmatpush1.msra.mxu0 %v1403
    %1413 = vmatprep.subr.mxu0 0.0
    %1414 = vmatpush1.msra.mxu0 %v1404
    %1415 = vmatprep.subr.mxu0 0.0
    %1416 = vmatpush1.msra.mxu0 %v1405
    %1417 = vmatprep.subr.mxu0 0.0
    %1418 = vmatpush1.msra.mxu0 0.0
    %1419 = vmatprep.subr.mxu0 0.0
    %1420 = vmatpush1.msra.mxu0 0.0
    %1421 = vmatprep.subr.mxu0 0.0
    %1422 = vmatpush1.msra.mxu0 0.0
    %1423 = vmatprep.subr.mxu0 0.0
    %1424 = vmatpush1.msra.mxu0 0.0
    %1425 = vmatprep.subr.mxu0 0.0
    %1426 = vmatpush1.msra.mxu0 0.0
    %1427 = vmatprep.subr.mxu0 0.0
    %1428 = vmatpush1.msra.mxu0 0.0
    %1429 = vmatprep.subr.mxu0 0.0
    %1430 = vmatpush1.msra.mxu0 0.0
    %1431 = vmatprep.subr.mxu0 0.0
    %1432 = vmatpush1.msra.mxu0 0.0
    %1433 = vmatprep.subr.mxu0 0.0
    %1434 = vmatpush1.msra.mxu0 0.0
    %1435 = vmatprep.subr.mxu0 0.0
    %1436 = vmatpush1.msra.mxu0 0.0
    %1437 = vmatprep.subr.mxu0 0.0
    %1438 = vmatpush1.msra.mxu0 0.0
    %1439 = vmatprep.subr.mxu0 0.0
    %1440 = vmatpush1.msra.mxu0 0.0
    %1441 = vmatprep.subr.mxu0 0.0
    %1442 = vmatpush1.msra.mxu0 0.0
    %1443 = vmatprep.subr.mxu0 0.0
    %1444 = vmatpush1.msra.mxu0 0.0
    %1445 = vmatprep.subr.mxu0 0.0
    %1446 = vmatpush1.msra.mxu0 0.0
    %1447 = vmatprep.subr.mxu0 0.0
    %1448 = vmatpush1.msra.mxu0 0.0
    %1449 = vmatprep.subr.mxu0 0.0
    %1450 = vmatpush1.msra.mxu0 0.0
    %1451 = vmatprep.subr.mxu0 0.0
    %1452 = vmatpush1.msra.mxu0 0.0
    %1453 = vmatprep.subr.mxu0 0.0
    %1454 = vmatpush1.msra.mxu0 0.0
    %1455 = vmatprep.subr.mxu0 0.0
    %1456 = vmatpush1.msra.mxu0 0.0
    %1457 = vmatprep.subr.mxu0 0.0
    %1458 = vmatpush1.msra.mxu0 0.0
    %1459 = vmatprep.subr.mxu0 0.0
    %1460 = vmatpush1.msra.mxu0 0.0
    %1461 = vmatprep.subr.mxu0 0.0
    %1462 = vmatpush1.msra.mxu0 0.0
    %1463 = vmatprep.subr.mxu0 0.0
    %1464 = vmatpush1.msra.mxu0 0.0
    %1465 = vmatprep.subr.mxu0 0.0
    %1466 = vmatpush1.msra.mxu0 0.0
    %1467 = vmatprep.subr.mxu0 0.0
    %1468 = vmatpush1.msra.mxu0 0.0
    %1469 = vmatprep.subr.mxu0 0.0
    %1470 = vmatpush1.msra.mxu0 0.0
    %1471 = vmatprep.subr.mxu0 0.0
    %1472 = vmatpush1.msra.mxu0 0.0
    %1473 = vmatprep.mubr.f32.mxu0 0.0
    %1474 = vmatmul.mubr.f32.gmra.mrb[0].mxu0 %v1407
    %v1475 = vpop.f32.mrb[0].mxu0
    %v1476 = vadd.f32 0.0, %v1475
    %v1477 = vpop.f32.mrb[0].mxu0
    %1478 = vdwg.mxu0
    %v1479 = vsel %vm126, %v1394, 0
    %1481 = vmatprep.subr.mxu0 0.0
    %1482 = vmatpush1.msra.mxu0 %v1397
    %1483 = vmatprep.subr.mxu0 0.0
    %1484 = vmatpush1.msra.mxu0 %v1398
    %1485 = vmatprep.subr.mxu0 0.0
    %1486 = vmatpush1.msra.mxu0 %v1399
    %1487 = vmatprep.subr.mxu0 0.0
    %1488 = vmatpush1.msra.mxu0 %v1400
    %1489 = vmatprep.subr.mxu0 0.0
    %1490 = vmatpush1.msra.mxu0 0.0
    %1491 = vmatprep.subr.mxu0 0.0
    %1492 = vmatpush1.msra.mxu0 0.0
    %1493 = vmatprep.subr.mxu0 0.0
    %1494 = vmatpush1.msra.mxu0 0.0
    %1495 = vmatprep.subr.mxu0 0.0
    %1496 = vmatpush1.msra.mxu0 0.0
    %1497 = vmatprep.subr.mxu0 0.0
    %1498 = vmatpush1.msra.mxu0 0.0
    %1499 = vmatprep.subr.mxu0 0.0
    %1500 = vmatpush1.msra.mxu0 0.0
    %1501 = vmatprep.subr.mxu0 0.0
    %1502 = vmatpush1.msra.mxu0 0.0
    %1503 = vmatprep.subr.mxu0 0.0
    %1504 = vmatpush1.msra.mxu0 0.0
    %1505 = vmatprep.subr.mxu0 0.0
    %1506 = vmatpush1.msra.mxu0 0.0
    %1507 = vmatprep.subr.mxu0 0.0
    %1508 = vmatpush1.msra.mxu0 0.0
    %1509 = vmatprep.subr.mxu0 0.0
    %1510 = vmatpush1.msra.mxu0 0.0
    %1511 = vmatprep.subr.mxu0 0.0
    %1512 = vmatpush1.msra.mxu0 0.0
    %1513 = vmatprep.subr.mxu0 0.0
    %1514 = vmatpush1.msra.mxu0 0.0
    %1515 = vmatprep.subr.mxu0 0.0
    %1516 = vmatpush1.msra.mxu0 0.0
    %1517 = vmatprep.subr.mxu0 0.0
    %1518 = vmatpush1.msra.mxu0 0.0
    %1519 = vmatprep.subr.mxu0 0.0
    %1520 = vmatpush1.msra.mxu0 0.0
    %1521 = vmatprep.subr.mxu0 0.0
    %1522 = vmatpush1.msra.mxu0 0.0
    %1523 = vmatprep.subr.mxu0 0.0
    %1524 = vmatpush1.msra.mxu0 0.0
    %1525 = vmatprep.subr.mxu0 0.0
    %1526 = vmatpush1.msra.mxu0 0.0
    %1527 = vmatprep.subr.mxu0 0.0
    %1528 = vmatpush1.msra.mxu0 0.0
    %1529 = vmatprep.subr.mxu0 0.0
    %1530 = vmatpush1.msra.mxu0 0.0
    %1531 = vmatprep.subr.mxu0 0.0
    %1532 = vmatpush1.msra.mxu0 0.0
    %1533 = vmatprep.subr.mxu0 0.0
    %1534 = vmatpush1.msra.mxu0 0.0
    %1535 = vmatprep.subr.mxu0 0.0
    %1536 = vmatpush1.msra.mxu0 0.0
    %1537 = vmatprep.subr.mxu0 0.0
    %1538 = vmatpush1.msra.mxu0 0.0
    %1539 = vmatprep.subr.mxu0 0.0
    %1540 = vmatpush1.msra.mxu0 0.0
    %1541 = vmatprep.subr.mxu0 0.0
    %1542 = vmatpush1.msra.mxu0 0.0
    %1543 = vmatprep.subr.mxu0 0.0
    %1544 = vmatpush1.msra.mxu0 0.0
    %1545 = vmatprep.mubr.f32.mxu0 0.0
    %1546 = vmatmul.mubr.f32.gmra.mrb[0].mxu0 %v1479
    %v1547 = vpop.f32.mrb[0].mxu0
    %v1548 = vadd.f32 %v1476, %v1547
    %v1549 = vpop.f32.mrb[0].mxu0
    %1550 = vdwg.mxu0
    %v1551 = vld [vmem:[%s577] sm:$0x1]
    %v1553 = vlaneseq
    %v1554 = vshrl.u32 %v1553, 7
    %v1555 = vsub.s32 0, %v1554
    %v1556 = vrot.slane %v1551, %v1555
    %v1558 = vadd.f32 %v1548, %v1556
    %v1559 = vxor.u32 %v1558, 2147483648
    %v1560 = vmul.f32 %v1559, 1.442695
    %v1561 = vpow.pop %v1560
    %v1562 = vadd.f32 %v1561, 1.0
    %v1563 = vrcp.pop %v1562
    %v1564 = vmul.f32 1.0, %v1563
    %v1565 = vtanh.pop %v1558
    %v1566 = vld [vmem:[%s593] sm:$0xff]
    %1568 = vrot.lane.b32.xlu0 %v1566, 32
    %v1569 = vpop.permute.xlu0 %1568
    %v1571 = vmul.f32 %v1564, %v1569
    %1573 = vrot.lane.b32.xlu0 %v1565, 64
    %v1574 = vpop.permute.xlu0 %1573
    %v1576 = vmul.f32 %v1564, %v1574
    %1578 = vrot.lane.b32.xlu0 %v1576, 32
    %v1579 = vpop.permute.xlu0 %1578
    %v1581 = vadd.f32 %v1571, %v1579
    %v1582 = vtanh.pop %v1581
    %1584 = vrot.lane.b32.xlu0 %v1582, 64
    %v1585 = vpop.permute.xlu0 %1584
    %v1587 = vmul.f32 %v1564, %v1585
    %1589 = vrot.lane.b32.xlu0 %v1581, 96
    %v1590 = vpop.permute.xlu0 %1589
    %1592 = vst.msk [vmem:[%s593] sm:$0xff] %vm126, %v1590
    %1594 = vrot.lane.b32.xlu0 %v1587, 32
    %v1595 = vpop.permute.xlu0 %1594
    %1597 = vst.msk [vmem:[%s425] sm:$0xff] %vm126, %v1595
    %s1598 = scalar_lea.vmem %s1, 24
    %v1599 = vld [vmem:[%s1598] sm:$0xff]
    %1600 = vset.pattern.permute.xlu0 0
    %1601 = vperm.xlu0 %1600, %v1599
    %v1602 = vpop.permute.xlu0 %1601
    %vm1603 = vcmp.eq.s32.totalorder %v1602, %v133
    %v1604 = vsel %vm1603, 1, 0
    %v1605 = vcvt.s32.f32 %v1604
    %v1606 = vld [vmem:[#allocation9] sm:$0xff]
    %v1607 = vld [vmem:[#allocation9 + $0x8] sm:$0xff]
    %v1609 = vsel %vm144, %v1605, 0
    %1611 = vmatprep.subr.mxu0 0.0
    %1612 = vmatpush1.msra.mxu0 %v1606
    %1613 = vmatprep.subr.mxu0 0.0
    %1614 = vmatpush1.msra.mxu0 %v1607
    %1615 = vmatprep.subr.mxu0 0.0
    %1616 = vmatpush1.msra.mxu0 0.0
    %1617 = vmatprep.subr.mxu0 0.0
    %1618 = vmatpush1.msra.mxu0 0.0
    %1619 = vmatprep.subr.mxu0 0.0
    %1620 = vmatpush1.msra.mxu0 0.0
    %1621 = vmatprep.subr.mxu0 0.0
    %1622 = vmatpush1.msra.mxu0 0.0
    %1623 = vmatprep.subr.mxu0 0.0
    %1624 = vmatpush1.msra.mxu0 0.0
    %1625 = vmatprep.subr.mxu0 0.0
    %1626 = vmatpush1.msra.mxu0 0.0
    %1627 = vmatprep.subr.mxu0 0.0
    %1628 = vmatpush1.msra.mxu0 0.0
    %1629 = vmatprep.subr.mxu0 0.0
    %1630 = vmatpush1.msra.mxu0 0.0
    %1631 = vmatprep.subr.mxu0 0.0
    %1632 = vmatpush1.msra.mxu0 0.0
    %1633 = vmatprep.subr.mxu0 0.0
    %1634 = vmatpush1.msra.mxu0 0.0
    %1635 = vmatprep.subr.mxu0 0.0
    %1636 = vmatpush1.msra.mxu0 0.0
    %1637 = vmatprep.subr.mxu0 0.0
    %1638 = vmatpush1.msra.mxu0 0.0
    %1639 = vmatprep.subr.mxu0 0.0
    %1640 = vmatpush1.msra.mxu0 0.0
    %1641 = vmatprep.subr.mxu0 0.0
    %1642 = vmatpush1.msra.mxu0 0.0
    %1643 = vmatprep.subr.mxu0 0.0
    %1644 = vmatpush1.msra.mxu0 0.0
    %1645 = vmatprep.subr.mxu0 0.0
    %1646 = vmatpush1.msra.mxu0 0.0
    %1647 = vmatprep.subr.mxu0 0.0
    %1648 = vmatpush1.msra.mxu0 0.0
    %1649 = vmatprep.subr.mxu0 0.0
    %1650 = vmatpush1.msra.mxu0 0.0
    %1651 = vmatprep.subr.mxu0 0.0
    %1652 = vmatpush1.msra.mxu0 0.0
    %1653 = vmatprep.subr.mxu0 0.0
    %1654 = vmatpush1.msra.mxu0 0.0
    %1655 = vmatprep.subr.mxu0 0.0
    %1656 = vmatpush1.msra.mxu0 0.0
    %1657 = vmatprep.subr.mxu0 0.0
    %1658 = vmatpush1.msra.mxu0 0.0
    %1659 = vmatprep.subr.mxu0 0.0
    %1660 = vmatpush1.msra.mxu0 0.0
    %1661 = vmatprep.subr.mxu0 0.0
    %1662 = vmatpush1.msra.mxu0 0.0
    %1663 = vmatprep.subr.mxu0 0.0
    %1664 = vmatpush1.msra.mxu0 0.0
    %1665 = vmatprep.subr.mxu0 0.0
    %1666 = vmatpush1.msra.mxu0 0.0
    %1667 = vmatprep.subr.mxu0 0.0
    %1668 = vmatpush1.msra.mxu0 0.0
    %1669 = vmatprep.subr.mxu0 0.0
    %1670 = vmatpush1.msra.mxu0 0.0
    %1671 = vmatprep.subr.mxu0 0.0
    %1672 = vmatpush1.msra.mxu0 0.0
    %1673 = vmatprep.subr.mxu0 0.0
    %1674 = vmatpush1.msra.mxu0 0.0
    %1675 = vmatprep.mubr.f32.mxu0 0.0
    %1676 = vmatmul.mubr.f32.gmra.mrb[0].mxu0 %v1609
    %v1677 = vpop.f32.mrb[0].mxu0
    %v1678 = vadd.f32 0.0, %v1677
    %v1679 = vpop.f32.mrb[0].mxu0
    %1680 = vdwg.mxu0
    %v1681 = vld [vmem:[%s5] sm:$0xff]
    %v1682 = vld [vmem:[%s5 + $0x8] sm:$0xff]
    %v1683 = vld [vmem:[%s5 + $0x10] sm:$0xff]
    %v1684 = vld [vmem:[%s5 + $0x18] sm:$0xff]
    %v1685 = vld [vmem:[#allocation2] sm:$0xff]
    %v1686 = vld [vmem:[%s6] sm:$0xff]
    %v1687 = vld [vmem:[%s6 + $0x8] sm:$0xff]
    %v1688 = vld [vmem:[%s6 + $0x10] sm:$0xff]
    %v1689 = vld [vmem:[%s6 + $0x18] sm:$0xff]
    %v1691 = vsel %vm126, %v1685, 0
    %1693 = vmatprep.subr.mxu0 0.0
    %1694 = vmatpush1.msra.mxu0 %v1686
    %1695 = vmatprep.subr.mxu0 0.0
    %1696 = vmatpush1.msra.mxu0 %v1687
    %1697 = vmatprep.subr.mxu0 0.0
    %1698 = vmatpush1.msra.mxu0 %v1688
    %1699 = vmatprep.subr.mxu0 0.0
    %1700 = vmatpush1.msra.mxu0 %v1689
    %1701 = vmatprep.subr.mxu0 0.0
    %1702 = vmatpush1.msra.mxu0 0.0
    %1703 = vmatprep.subr.mxu0 0.0
    %1704 = vmatpush1.msra.mxu0 0.0
    %1705 = vmatprep.subr.mxu0 0.0
    %1706 = vmatpush1.msra.mxu0 0.0
    %1707 = vmatprep.subr.mxu0 0.0
    %1708 = vmatpush1.msra.mxu0 0.0
    %1709 = vmatprep.subr.mxu0 0.0
    %1710 = vmatpush1.msra.mxu0 0.0
    %1711 = vmatprep.subr.mxu0 0.0
    %1712 = vmatpush1.msra.mxu0 0.0
    %1713 = vmatprep.subr.mxu0 0.0
    %1714 = vmatpush1.msra.mxu0 0.0
    %1715 = vmatprep.subr.mxu0 0.0
    %1716 = vmatpush1.msra.mxu0 0.0
    %1717 = vmatprep.subr.mxu0 0.0
    %1718 = vmatpush1.msra.mxu0 0.0
    %1719 = vmatprep.subr.mxu0 0.0
    %1720 = vmatpush1.msra.mxu0 0.0
    %1721 = vmatprep.subr.mxu0 0.0
    %1722 = vmatpush1.msra.mxu0 0.0
    %1723 = vmatprep.subr.mxu0 0.0
    %1724 = vmatpush1.msra.mxu0 0.0
    %1725 = vmatprep.subr.mxu0 0.0
    %1726 = vmatpush1.msra.mxu0 0.0
    %1727 = vmatprep.subr.mxu0 0.0
    %1728 = vmatpush1.msra.mxu0 0.0
    %1729 = vmatprep.subr.mxu0 0.0
    %1730 = vmatpush1.msra.mxu0 0.0
    %1731 = vmatprep.subr.mxu0 0.0
    %1732 = vmatpush1.msra.mxu0 0.0
    %1733 = vmatprep.subr.mxu0 0.0
    %1734 = vmatpush1.msra.mxu0 0.0
    %1735 = vmatprep.subr.mxu0 0.0
    %1736 = vmatpush1.msra.mxu0 0.0
    %1737 = vmatprep.subr.mxu0 0.0
    %1738 = vmatpush1.msra.mxu0 0.0
    %1739 = vmatprep.subr.mxu0 0.0
    %1740 = vmatpush1.msra.mxu0 0.0
    %1741 = vmatprep.subr.mxu0 0.0
    %1742 = vmatpush1.msra.mxu0 0.0
    %1743 = vmatprep.subr.mxu0 0.0
    %1744 = vmatpush1.msra.mxu0 0.0
    %1745 = vmatprep.subr.mxu0 0.0
    %1746 = vmatpush1.msra.mxu0 0.0
    %1747 = vmatprep.subr.mxu0 0.0
    %1748 = vmatpush1.msra.mxu0 0.0
    %1749 = vmatprep.subr.mxu0 0.0
    %1750 = vmatpush1.msra.mxu0 0.0
    %1751 = vmatprep.subr.mxu0 0.0
    %1752 = vmatpush1.msra.mxu0 0.0
    %1753 = vmatprep.subr.mxu0 0.0
    %1754 = vmatpush1.msra.mxu0 0.0
    %1755 = vmatprep.subr.mxu0 0.0
    %1756 = vmatpush1.msra.mxu0 0.0
    %1757 = vmatprep.mubr.f32.mxu0 0.0
    %1758 = vmatmul.mubr.f32.gmra.mrb[0].mxu0 %v1691
    %v1759 = vpop.f32.mrb[0].mxu0
    %v1760 = vadd.f32 0.0, %v1759
    %v1761 = vpop.f32.mrb[0].mxu0
    %1762 = vdwg.mxu0
    %v1764 = vsel %vm126, %v1678, 0
    %1766 = vmatprep.subr.mxu0 0.0
    %1767 = vmatpush1.msra.mxu0 %v1681
    %1768 = vmatprep.subr.mxu0 0.0
    %1769 = vmatpush1.msra.mxu0 %v1682
    %1770 = vmatprep.subr.mxu0 0.0
    %1771 = vmatpush1.msra.mxu0 %v1683
    %1772 = vmatprep.subr.mxu0 0.0
    %1773 = vmatpush1.msra.mxu0 %v1684
    %1774 = vmatprep.subr.mxu0 0.0
    %1775 = vmatpush1.msra.mxu0 0.0
    %1776 = vmatprep.subr.mxu0 0.0
    %1777 = vmatpush1.msra.mxu0 0.0
    %1778 = vmatprep.subr.mxu0 0.0
    %1779 = vmatpush1.msra.mxu0 0.0
    %1780 = vmatprep.subr.mxu0 0.0
    %1781 = vmatpush1.msra.mxu0 0.0
    %1782 = vmatprep.subr.mxu0 0.0
    %1783 = vmatpush1.msra.mxu0 0.0
    %1784 = vmatprep.subr.mxu0 0.0
    %1785 = vmatpush1.msra.mxu0 0.0
    %1786 = vmatprep.subr.mxu0 0.0
    %1787 = vmatpush1.msra.mxu0 0.0
    %1788 = vmatprep.subr.mxu0 0.0
    %1789 = vmatpush1.msra.mxu0 0.0
    %1790 = vmatprep.subr.mxu0 0.0
    %1791 = vmatpush1.msra.mxu0 0.0
    %1792 = vmatprep.subr.mxu0 0.0
    %1793 = vmatpush1.msra.mxu0 0.0
    %1794 = vmatprep.subr.mxu0 0.0
    %1795 = vmatpush1.msra.mxu0 0.0
    %1796 = vmatprep.subr.mxu0 0.0
    %1797 = vmatpush1.msra.mxu0 0.0
    %1798 = vmatprep.subr.mxu0 0.0
    %1799 = vmatpush1.msra.mxu0 0.0
    %1800 = vmatprep.subr.mxu0 0.0
    %1801 = vmatpush1.msra.mxu0 0.0
    %1802 = vmatprep.subr.mxu0 0.0
    %1803 = vmatpush1.msra.mxu0 0.0
    %1804 = vmatprep.subr.mxu0 0.0
    %1805 = vmatpush1.msra.mxu0 0.0
    %1806 = vmatprep.subr.mxu0 0.0
    %1807 = vmatpush1.msra.mxu0 0.0
    %1808 = vmatprep.subr.mxu0 0.0
    %1809 = vmatpush1.msra.mxu0 0.0
    %1810 = vmatprep.subr.mxu0 0.0
    %1811 = vmatpush1.msra.mxu0 0.0
    %1812 = vmatprep.subr.mxu0 0.0
    %1813 = vmatpush1.msra.mxu0 0.0
    %1814 = vmatprep.subr.mxu0 0.0
    %1815 = vmatpush1.msra.mxu0 0.0
    %1816 = vmatprep.subr.mxu0 0.0
    %1817 = vmatpush1.msra.mxu0 0.0
    %1818 = vmatprep.subr.mxu0 0.0
    %1819 = vmatpush1.msra.mxu0 0.0
    %1820 = vmatprep.subr.mxu0 0.0
    %1821 = vmatpush1.msra.mxu0 0.0
    %1822 = vmatprep.subr.mxu0 0.0
    %1823 = vmatpush1.msra.mxu0 0.0
    %1824 = vmatprep.subr.mxu0 0.0
    %1825 = vmatpush1.msra.mxu0 0.0
    %1826 = vmatprep.subr.mxu0 0.0
    %1827 = vmatpush1.msra.mxu0 0.0
    %1828 = vmatprep.subr.mxu0 0.0
    %1829 = vmatpush1.msra.mxu0 0.0
    %1830 = vmatprep.mubr.f32.mxu0 0.0
    %1831 = vmatmul.mubr.f32.gmra.mrb[0].mxu0 %v1764
    %v1832 = vpop.f32.mrb[0].mxu0
    %v1833 = vadd.f32 %v1760, %v1832
    %v1834 = vpop.f32.mrb[0].mxu0
    %1835 = vdwg.mxu0
    %v1836 = vld [vmem:[%s7] sm:$0x1]
    %v1838 = vlaneseq
    %v1839 = vshrl.u32 %v1838, 7
    %v1840 = vsub.s32 0, %v1839
    %v1841 = vrot.slane %v1836, %v1840
    %v1843 = vadd.f32 %v1833, %v1841
    %v1844 = vxor.u32 %v1843, 2147483648
    %v1845 = vmul.f32 %v1844, 1.442695
    %v1846 = vpow.pop %v1845
    %v1847 = vadd.f32 %v1846, 1.0
    %v1848 = vrcp.pop %v1847
    %v1849 = vmul.f32 1.0, %v1848
    %v1850 = vtanh.pop %v1843
    %v1851 = vld [vmem:[#allocation3] sm:$0xff]
    %1853 = vrot.lane.b32.xlu0 %v1851, 32
    %v1854 = vpop.permute.xlu0 %1853
    %v1856 = vmul.f32 %v1849, %v1854
    %1858 = vrot.lane.b32.xlu0 %v1850, 64
    %v1859 = vpop.permute.xlu0 %1858
    %v1861 = vmul.f32 %v1849, %v1859
    %1863 = vrot.lane.b32.xlu0 %v1861, 32
    %v1864 = vpop.permute.xlu0 %1863
    %v1866 = vadd.f32 %v1856, %v1864
    %v1867 = vtanh.pop %v1866
    %1869 = vrot.lane.b32.xlu0 %v1867, 64
    %v1870 = vpop.permute.xlu0 %1869
    %v1872 = vmul.f32 %v1849, %v1870
    %1874 = vrot.lane.b32.xlu0 %v1866, 96
    %v1875 = vpop.permute.xlu0 %1874
    %1877 = vst.msk [vmem:[#allocation3] sm:$0xff] %vm126, %v1875
    %1879 = vrot.lane.b32.xlu0 %v1872, 32
    %v1880 = vpop.permute.xlu0 %1879
    %1882 = vst.msk [vmem:[#allocation2] sm:$0xff] %vm126, %v1880
    %v1883 = vld [vmem:[%s420] sm:$0xff]
    %v1884 = vld [vmem:[%s420 + $0x8] sm:$0xff]
    %v1885 = vld [vmem:[%s420 + $0x10] sm:$0xff]
    %v1886 = vld [vmem:[%s420 + $0x18] sm:$0xff]
    %v1887 = vld [vmem:[%s425] sm:$0xff]
    %v1888 = vld [vmem:[%s427] sm:$0xff]
    %v1889 = vld [vmem:[%s427 + $0x8] sm:$0xff]
    %v1890 = vld [vmem:[%s427 + $0x10] sm:$0xff]
    %v1891 = vld [vmem:[%s427 + $0x18] sm:$0xff]
    %v1893 = vsel %vm126, %v1887, 0
    %1895 = vmatprep.subr.mxu0 0.0
    %1896 = vmatpush1.msra.mxu0 %v1888
    %1897 = vmatprep.subr.mxu0 0.0
    %1898 = vmatpush1.msra.mxu0 %v1889
    %1899 = vmatprep.subr.mxu0 0.0
    %1900 = vmatpush1.msra.mxu0 %v1890
    %1901 = vmatprep.subr.mxu0 0.0
    %1902 = vmatpush1.msra.mxu0 %v1891
    %1903 = vmatprep.subr.mxu0 0.0
    %1904 = vmatpush1.msra.mxu0 0.0
    %1905 = vmatprep.subr.mxu0 0.0
    %1906 = vmatpush1.msra.mxu0 0.0
    %1907 = vmatprep.subr.mxu0 0.0
    %1908 = vmatpush1.msra.mxu0 0.0
    %1909 = vmatprep.subr.mxu0 0.0
    %1910 = vmatpush1.msra.mxu0 0.0
    %1911 = vmatprep.subr.mxu0 0.0
    %1912 = vmatpush1.msra.mxu0 0.0
    %1913 = vmatprep.subr.mxu0 0.0
    %1914 = vmatpush1.msra.mxu0 0.0
    %1915 = vmatprep.subr.mxu0 0.0
    %1916 = vmatpush1.msra.mxu0 0.0
    %1917 = vmatprep.subr.mxu0 0.0
    %1918 = vmatpush1.msra.mxu0 0.0
    %1919 = vmatprep.subr.mxu0 0.0
    %1920 = vmatpush1.msra.mxu0 0.0
    %1921 = vmatprep.subr.mxu0 0.0
    %1922 = vmatpush1.msra.mxu0 0.0
    %1923 = vmatprep.subr.mxu0 0.0
    %1924 = vmatpush1.msra.mxu0 0.0
    %1925 = vmatprep.subr.mxu0 0.0
    %1926 = vmatpush1.msra.mxu0 0.0
    %1927 = vmatprep.subr.mxu0 0.0
    %1928 = vmatpush1.msra.mxu0 0.0
    %1929 = vmatprep.subr.mxu0 0.0
    %1930 = vmatpush1.msra.mxu0 0.0
    %1931 = vmatprep.subr.mxu0 0.0
    %1932 = vmatpush1.msra.mxu0 0.0
    %1933 = vmatprep.subr.mxu0 0.0
    %1934 = vmatpush1.msra.mxu0 0.0
    %1935 = vmatprep.subr.mxu0 0.0
    %1936 = vmatpush1.msra.mxu0 0.0
    %1937 = vmatprep.subr.mxu0 0.0
    %1938 = vmatpush1.msra.mxu0 0.0
    %1939 = vmatprep.subr.mxu0 0.0
    %1940 = vmatpush1.msra.mxu0 0.0
    %1941 = vmatprep.subr.mxu0 0.0
    %1942 = vmatpush1.msra.mxu0 0.0
    %1943 = vmatprep.subr.mxu0 0.0
    %1944 = vmatpush1.msra.mxu0 0.0
    %1945 = vmatprep.subr.mxu0 0.0
    %1946 = vmatpush1.msra.mxu0 0.0
    %1947 = vmatprep.subr.mxu0 0.0
    %1948 = vmatpush1.msra.mxu0 0.0
    %1949 = vmatprep.subr.mxu0 0.0
    %1950 = vmatpush1.msra.mxu0 0.0
    %1951 = vmatprep.subr.mxu0 0.0
    %1952 = vmatpush1.msra.mxu0 0.0
    %1953 = vmatprep.subr.mxu0 0.0
    %1954 = vmatpush1.msra.mxu0 0.0
    %1955 = vmatprep.subr.mxu0 0.0
    %1956 = vmatpush1.msra.mxu0 0.0
    %1957 = vmatprep.subr.mxu0 0.0
    %1958 = vmatpush1.msra.mxu0 0.0
    %1959 = vmatprep.mubr.f32.mxu0 0.0
    %1960 = vmatmul.mubr.f32.gmra.mrb[0].mxu0 %v1893
    %v1961 = vpop.f32.mrb[0].mxu0
    %v1962 = vadd.f32 0.0, %v1961
    %v1963 = vpop.f32.mrb[0].mxu0
    %1964 = vdwg.mxu0
    %v1965 = vsel %vm126, %v1880, 0
    %1967 = vmatprep.subr.mxu0 0.0
    %1968 = vmatpush1.msra.mxu0 %v1883
    %1969 = vmatprep.subr.mxu0 0.0
    %1970 = vmatpush1.msra.mxu0 %v1884
    %1971 = vmatprep.subr.mxu0 0.0
    %1972 = vmatpush1.msra.mxu0 %v1885
    %1973 = vmatprep.subr.mxu0 0.0
    %1974 = vmatpush1.msra.mxu0 %v1886
    %1975 = vmatprep.subr.mxu0 0.0
    %1976 = vmatpush1.msra.mxu0 0.0
    %1977 = vmatprep.subr.mxu0 0.0
    %1978 = vmatpush1.msra.mxu0 0.0
    %1979 = vmatprep.subr.mxu0 0.0
    %1980 = vmatpush1.msra.mxu0 0.0
    %1981 = vmatprep.subr.mxu0 0.0
    %1982 = vmatpush1.msra.mxu0 0.0
    %1983 = vmatprep.subr.mxu0 0.0
    %1984 = vmatpush1.msra.mxu0 0.0
    %1985 = vmatprep.subr.mxu0 0.0
    %1986 = vmatpush1.msra.mxu0 0.0
    %1987 = vmatprep.subr.mxu0 0.0
    %1988 = vmatpush1.msra.mxu0 0.0
    %1989 = vmatprep.subr.mxu0 0.0
    %1990 = vmatpush1.msra.mxu0 0.0
    %1991 = vmatprep.subr.mxu0 0.0
    %1992 = vmatpush1.msra.mxu0 0.0
    %1993 = vmatprep.subr.mxu0 0.0
    %1994 = vmatpush1.msra.mxu0 0.0
    %1995 = vmatprep.subr.mxu0 0.0
    %1996 = vmatpush1.msra.mxu0 0.0
    %1997 = vmatprep.subr.mxu0 0.0
    %1998 = vmatpush1.msra.mxu0 0.0
    %1999 = vmatprep.subr.mxu0 0.0
    %2000 = vmatpush1.msra.mxu0 0.0
    %2001 = vmatprep.subr.mxu0 0.0
    %2002 = vmatpush1.msra.mxu0 0.0
    %2003 = vmatprep.subr.mxu0 0.0
    %2004 = vmatpush1.msra.mxu0 0.0
    %2005 = vmatprep.subr.mxu0 0.0
    %2006 = vmatpush1.msra.mxu0 0.0
    %2007 = vmatprep.subr.mxu0 0.0
    %2008 = vmatpush1.msra.mxu0 0.0
    %2009 = vmatprep.subr.mxu0 0.0
    %2010 = vmatpush1.msra.mxu0 0.0
    %2011 = vmatprep.subr.mxu0 0.0
    %2012 = vmatpush1.msra.mxu0 0.0
    %2013 = vmatprep.subr.mxu0 0.0
    %2014 = vmatpush1.msra.mxu0 0.0
    %2015 = vmatprep.subr.mxu0 0.0
    %2016 = vmatpush1.msra.mxu0 0.0
    %2017 = vmatprep.subr.mxu0 0.0
    %2018 = vmatpush1.msra.mxu0 0.0
    %2019 = vmatprep.subr.mxu0 0.0
    %2020 = vmatpush1.msra.mxu0 0.0
    %2021 = vmatprep.subr.mxu0 0.0
    %2022 = vmatpush1.msra.mxu0 0.0
    %2023 = vmatprep.subr.mxu0 0.0
    %2024 = vmatpush1.msra.mxu0 0.0
    %2025 = vmatprep.subr.mxu0 0.0
    %2026 = vmatpush1.msra.mxu0 0.0
    %2027 = vmatprep.subr.mxu0 0.0
    %2028 = vmatpush1.msra.mxu0 0.0
    %2029 = vmatprep.subr.mxu0 0.0
    %2030 = vmatpush1.msra.mxu0 0.0
    %2031 = vmatprep.mubr.f32.mxu0 0.0
    %2032 = vmatmul.mubr.f32.gmra.mrb[0].mxu0 %v1965
    %v2033 = vpop.f32.mrb[0].mxu0
    %v2034 = vadd.f32 %v1962, %v2033
    %v2035 = vpop.f32.mrb[0].mxu0
    %2036 = vdwg.mxu0
    %v2037 = vld [vmem:[%s577] sm:$0x1]
    %v2039 = vlaneseq
    %v2040 = vshrl.u32 %v2039, 7
    %v2041 = vsub.s32 0, %v2040
    %v2042 = vrot.slane %v2037, %v2041
    %v2044 = vadd.f32 %v2034, %v2042
    %v2045 = vxor.u32 %v2044, 2147483648
    %v2046 = vmul.f32 %v2045, 1.442695
    %v2047 = vpow.pop %v2046
    %v2048 = vadd.f32 %v2047, 1.0
    %v2049 = vrcp.pop %v2048
    %v2050 = vmul.f32 1.0, %v2049
    %v2051 = vtanh.pop %v2044
    %v2052 = vld [vmem:[%s593] sm:$0xff]
    %2054 = vrot.lane.b32.xlu0 %v2052, 32
    %v2055 = vpop.permute.xlu0 %2054
    %v2057 = vmul.f32 %v2050, %v2055
    %2059 = vrot.lane.b32.xlu0 %v2051, 64
    %v2060 = vpop.permute.xlu0 %2059
    %v2062 = vmul.f32 %v2050, %v2060
    %2064 = vrot.lane.b32.xlu0 %v2062, 32
    %v2065 = vpop.permute.xlu0 %2064
    %v2067 = vadd.f32 %v2057, %v2065
    %v2068 = vtanh.pop %v2067
    %2070 = vrot.lane.b32.xlu0 %v2068, 64
    %v2071 = vpop.permute.xlu0 %2070
    %v2073 = vmul.f32 %v2050, %v2071
    %2075 = vrot.lane.b32.xlu0 %v2067, 96
    %v2076 = vpop.permute.xlu0 %2075
    %2078 = vst.msk [vmem:[%s593] sm:$0xff] %vm126, %v2076
    %2080 = vrot.lane.b32.xlu0 %v2073, 32
    %v2081 = vpop.permute.xlu0 %2080
    %2083 = vst.msk [vmem:[%s425] sm:$0xff] %vm126, %v2081
    %s2084 = scalar_lea.vmem %s1, 32
    %v2085 = vld [vmem:[%s2084] sm:$0xff]
    %2086 = vset.pattern.permute.xlu0 0
    %2087 = vperm.xlu0 %2086, %v2085
    %v2088 = vpop.permute.xlu0 %2087
    %vm2089 = vcmp.eq.s32.totalorder %v2088, %v133
    %v2090 = vsel %vm2089, 1, 0
    %v2091 = vcvt.s32.f32 %v2090
    %v2092 = vld [vmem:[#allocation9] sm:$0xff]
    %v2093 = vld [vmem:[#allocation9 + $0x8] sm:$0xff]
    %v2095 = vsel %vm144, %v2091, 0
    %2097 = vmatprep.subr.mxu0 0.0
    %2098 = vmatpush1.msra.mxu0 %v2092
    %2099 = vmatprep.subr.mxu0 0.0
    %2100 = vmatpush1.msra.mxu0 %v2093
    %2101 = vmatprep.subr.mxu0 0.0
    %2102 = vmatpush1.msra.mxu0 0.0
    %2103 = vmatprep.subr.mxu0 0.0
    %2104 = vmatpush1.msra.mxu0 0.0
    %2105 = vmatprep.subr.mxu0 0.0
    %2106 = vmatpush1.msra.mxu0 0.0
    %2107 = vmatprep.subr.mxu0 0.0
    %2108 = vmatpush1.msra.mxu0 0.0
    %2109 = vmatprep.subr.mxu0 0.0
    %2110 = vmatpush1.msra.mxu0 0.0
    %2111 = vmatprep.subr.mxu0 0.0
    %2112 = vmatpush1.msra.mxu0 0.0
    %2113 = vmatprep.subr.mxu0 0.0
    %2114 = vmatpush1.msra.mxu0 0.0
    %2115 = vmatprep.subr.mxu0 0.0
    %2116 = vmatpush1.msra.mxu0 0.0
    %2117 = vmatprep.subr.mxu0 0.0
    %2118 = vmatpush1.msra.mxu0 0.0
    %2119 = vmatprep.subr.mxu0 0.0
    %2120 = vmatpush1.msra.mxu0 0.0
    %2121 = vmatprep.subr.mxu0 0.0
    %2122 = vmatpush1.msra.mxu0 0.0
    %2123 = vmatprep.subr.mxu0 0.0
    %2124 = vmatpush1.msra.mxu0 0.0
    %2125 = vmatprep.subr.mxu0 0.0
    %2126 = vmatpush1.msra.mxu0 0.0
    %2127 = vmatprep.subr.mxu0 0.0
    %2128 = vmatpush1.msra.mxu0 0.0
    %2129 = vmatprep.subr.mxu0 0.0
    %2130 = vmatpush1.msra.mxu0 0.0
    %2131 = vmatprep.subr.mxu0 0.0
    %2132 = vmatpush1.msra.mxu0 0.0
    %2133 = vmatprep.subr.mxu0 0.0
    %2134 = vmatpush1.msra.mxu0 0.0
    %2135 = vmatprep.subr.mxu0 0.0
    %2136 = vmatpush1.msra.mxu0 0.0
    %2137 = vmatprep.subr.mxu0 0.0
    %2138 = vmatpush1.msra.mxu0 0.0
    %2139 = vmatprep.subr.mxu0 0.0
    %2140 = vmatpush1.msra.mxu0 0.0
    %2141 = vmatprep.subr.mxu0 0.0
    %2142 = vmatpush1.msra.mxu0 0.0
    %2143 = vmatprep.subr.mxu0 0.0
    %2144 = vmatpush1.msra.mxu0 0.0
    %2145 = vmatprep.subr.mxu0 0.0
    %2146 = vmatpush1.msra.mxu0 0.0
    %2147 = vmatprep.subr.mxu0 0.0
    %2148 = vmatpush1.msra.mxu0 0.0
    %2149 = vmatprep.subr.mxu0 0.0
    %2150 = vmatpush1.msra.mxu0 0.0
    %2151 = vmatprep.subr.mxu0 0.0
    %2152 = vmatpush1.msra.mxu0 0.0
    %2153 = vmatprep.subr.mxu0 0.0
    %2154 = vmatpush1.msra.mxu0 0.0
    %2155 = vmatprep.subr.mxu0 0.0
    %2156 = vmatpush1.msra.mxu0 0.0
    %2157 = vmatprep.subr.mxu0 0.0
    %2158 = vmatpush1.msra.mxu0 0.0
    %2159 = vmatprep.subr.mxu0 0.0
    %2160 = vmatpush1.msra.mxu0 0.0
    %2161 = vmatprep.mubr.f32.mxu0 0.0
    %2162 = vmatmul.mubr.f32.gmra.mrb[0].mxu0 %v2095
    %v2163 = vpop.f32.mrb[0].mxu0
    %v2164 = vadd.f32 0.0, %v2163
    %v2165 = vpop.f32.mrb[0].mxu0
    %2166 = vdwg.mxu0
    %v2167 = vld [vmem:[%s5] sm:$0xff]
    %v2168 = vld [vmem:[%s5 + $0x8] sm:$0xff]
    %v2169 = vld [vmem:[%s5 + $0x10] sm:$0xff]
    %v2170 = vld [vmem:[%s5 + $0x18] sm:$0xff]
    %v2171 = vld [vmem:[#allocation2] sm:$0xff]
    %v2172 = vld [vmem:[%s6] sm:$0xff]
    %v2173 = vld [vmem:[%s6 + $0x8] sm:$0xff]
    %v2174 = vld [vmem:[%s6 + $0x10] sm:$0xff]
    %v2175 = vld [vmem:[%s6 + $0x18] sm:$0xff]
    %v2177 = vsel %vm126, %v2171, 0
    %2179 = vmatprep.subr.mxu0 0.0
    %2180 = vmatpush1.msra.mxu0 %v2172
    %2181 = vmatprep.subr.mxu0 0.0
    %2182 = vmatpush1.msra.mxu0 %v2173
    %2183 = vmatprep.subr.mxu0 0.0
    %2184 = vmatpush1.msra.mxu0 %v2174
    %2185 = vmatprep.subr.mxu0 0.0
    %2186 = vmatpush1.msra.mxu0 %v2175
    %2187 = vmatprep.subr.mxu0 0.0
    %2188 = vmatpush1.msra.mxu0 0.0
    %2189 = vmatprep.subr.mxu0 0.0
    %2190 = vmatpush1.msra.mxu0 0.0
    %2191 = vmatprep.subr.mxu0 0.0
    %2192 = vmatpush1.msra.mxu0 0.0
    %2193 = vmatprep.subr.mxu0 0.0
    %2194 = vmatpush1.msra.mxu0 0.0
    %2195 = vmatprep.subr.mxu0 0.0
    %2196 = vmatpush1.msra.mxu0 0.0
    %2197 = vmatprep.subr.mxu0 0.0
    %2198 = vmatpush1.msra.mxu0 0.0
    %2199 = vmatprep.subr.mxu0 0.0
    %2200 = vmatpush1.msra.mxu0 0.0
    %2201 = vmatprep.subr.mxu0 0.0
    %2202 = vmatpush1.msra.mxu0 0.0
    %2203 = vmatprep.subr.mxu0 0.0
    %2204 = vmatpush1.msra.mxu0 0.0
    %2205 = vmatprep.subr.mxu0 0.0
    %2206 = vmatpush1.msra.mxu0 0.0
    %2207 = vmatprep.subr.mxu0 0.0
    %2208 = vmatpush1.msra.mxu0 0.0
    %2209 = vmatprep.subr.mxu0 0.0
    %2210 = vmatpush1.msra.mxu0 0.0
    %2211 = vmatprep.subr.mxu0 0.0
    %2212 = vmatpush1.msra.mxu0 0.0
    %2213 = vmatprep.subr.mxu0 0.0
    %2214 = vmatpush1.msra.mxu0 0.0
    %2215 = vmatprep.subr.mxu0 0.0
    %2216 = vmatpush1.msra.mxu0 0.0
    %2217 = vmatprep.subr.mxu0 0.0
    %2218 = vmatpush1.msra.mxu0 0.0
    %2219 = vmatprep.subr.mxu0 0.0
    %2220 = vmatpush1.msra.mxu0 0.0
    %2221 = vmatprep.subr.mxu0 0.0
    %2222 = vmatpush1.msra.mxu0 0.0
    %2223 = vmatprep.subr.mxu0 0.0
    %2224 = vmatpush1.msra.mxu0 0.0
    %2225 = vmatprep.subr.mxu0 0.0
    %2226 = vmatpush1.msra.mxu0 0.0
    %2227 = vmatprep.subr.mxu0 0.0
    %2228 = vmatpush1.msra.mxu0 0.0
    %2229 = vmatprep.subr.mxu0 0.0
    %2230 = vmatpush1.msra.mxu0 0.0
    %2231 = vmatprep.subr.mxu0 0.0
    %2232 = vmatpush1.msra.mxu0 0.0
    %2233 = vmatprep.subr.mxu0 0.0
    %2234 = vmatpush1.msra.mxu0 0.0
    %2235 = vmatprep.subr.mxu0 0.0
    %2236 = vmatpush1.msra.mxu0 0.0
    %2237 = vmatprep.subr.mxu0 0.0
    %2238 = vmatpush1.msra.mxu0 0.0
    %2239 = vmatprep.subr.mxu0 0.0
    %2240 = vmatpush1.msra.mxu0 0.0
    %2241 = vmatprep.subr.mxu0 0.0
    %2242 = vmatpush1.msra.mxu0 0.0
    %2243 = vmatprep.mubr.f32.mxu0 0.0
    %2244 = vmatmul.mubr.f32.gmra.mrb[0].mxu0 %v2177
    %v2245 = vpop.f32.mrb[0].mxu0
    %v2246 = vadd.f32 0.0, %v2245
    %v2247 = vpop.f32.mrb[0].mxu0
    %2248 = vdwg.mxu0
    %v2250 = vsel %vm126, %v2164, 0
    %2252 = vmatprep.subr.mxu0 0.0
    %2253 = vmatpush1.msra.mxu0 %v2167
    %2254 = vmatprep.subr.mxu0 0.0
    %2255 = vmatpush1.msra.mxu0 %v2168
    %2256 = vmatprep.subr.mxu0 0.0
    %2257 = vmatpush1.msra.mxu0 %v2169
    %2258 = vmatprep.subr.mxu0 0.0
    %2259 = vmatpush1.msra.mxu0 %v2170
    %2260 = vmatprep.subr.mxu0 0.0
    %2261 = vmatpush1.msra.mxu0 0.0
    %2262 = vmatprep.subr.mxu0 0.0
    %2263 = vmatpush1.msra.mxu0 0.0
    %2264 = vmatprep.subr.mxu0 0.0
    %2265 = vmatpush1.msra.mxu0 0.0
    %2266 = vmatprep.subr.mxu0 0.0
    %2267 = vmatpush1.msra.mxu0 0.0
    %2268 = vmatprep.subr.mxu0 0.0
    %2269 = vmatpush1.msra.mxu0 0.0
    %2270 = vmatprep.subr.mxu0 0.0
    %2271 = vmatpush1.msra.mxu0 0.0
    %2272 = vmatprep.subr.mxu0 0.0
    %2273 = vmatpush1.msra.mxu0 0.0
    %2274 = vmatprep.subr.mxu0 0.0
    %2275 = vmatpush1.msra.mxu0 0.0
    %2276 = vmatprep.subr.mxu0 0.0
    %2277 = vmatpush1.msra.mxu0 0.0
    %2278 = vmatprep.subr.mxu0 0.0
    %2279 = vmatpush1.msra.mxu0 0.0
    %2280 = vmatprep.subr.mxu0 0.0
    %2281 = vmatpush1.msra.mxu0 0.0
    %2282 = vmatprep.subr.mxu0 0.0
    %2283 = vmatpush1.msra.mxu0 0.0
    %2284 = vmatprep.subr.mxu0 0.0
    %2285 = vmatpush1.msra.mxu0 0.0
    %2286 = vmatprep.subr.mxu0 0.0
    %2287 = vmatpush1.msra.mxu0 0.0
    %2288 = vmatprep.subr.mxu0 0.0
    %2289 = vmatpush1.msra.mxu0 0.0
    %2290 = vmatprep.subr.mxu0 0.0
    %2291 = vmatpush1.msra.mxu0 0.0
    %2292 = vmatprep.subr.mxu0 0.0
    %2293 = vmatpush1.msra.mxu0 0.0
    %2294 = vmatprep.subr.mxu0 0.0
    %2295 = vmatpush1.msra.mxu0 0.0
    %2296 = vmatprep.subr.mxu0 0.0
    %2297 = vmatpush1.msra.mxu0 0.0
    %2298 = vmatprep.subr.mxu0 0.0
    %2299 = vmatpush1.msra.mxu0 0.0
    %2300 = vmatprep.subr.mxu0 0.0
    %2301 = vmatpush1.msra.mxu0 0.0
    %2302 = vmatprep.subr.mxu0 0.0
    %2303 = vmatpush1.msra.mxu0 0.0
    %2304 = vmatprep.subr.mxu0 0.0
    %2305 = vmatpush1.msra.mxu0 0.0
    %2306 = vmatprep.subr.mxu0 0.0
    %2307 = vmatpush1.msra.mxu0 0.0
    %2308 = vmatprep.subr.mxu0 0.0
    %2309 = vmatpush1.msra.mxu0 0.0
    %2310 = vmatprep.subr.mxu0 0.0
    %2311 = vmatpush1.msra.mxu0 0.0
    %2312 = vmatprep.subr.mxu0 0.0
    %2313 = vmatpush1.msra.mxu0 0.0
    %2314 = vmatprep.subr.mxu0 0.0
    %2315 = vmatpush1.msra.mxu0 0.0
    %2316 = vmatprep.mubr.f32.mxu0 0.0
    %2317 = vmatmul.mubr.f32.gmra.mrb[0].mxu0 %v2250
    %v2318 = vpop.f32.mrb[0].mxu0
    %v2319 = vadd.f32 %v2246, %v2318
    %v2320 = vpop.f32.mrb[0].mxu0
    %2321 = vdwg.mxu0
    %v2322 = vld [vmem:[%s7] sm:$0x1]
    %v2324 = vlaneseq
    %v2325 = vshrl.u32 %v2324, 7
    %v2326 = vsub.s32 0, %v2325
    %v2327 = vrot.slane %v2322, %v2326
    %v2329 = vadd.f32 %v2319, %v2327
    %v2330 = vxor.u32 %v2329, 2147483648
    %v2331 = vmul.f32 %v2330, 1.442695
    %v2332 = vpow.pop %v2331
    %v2333 = vadd.f32 %v2332, 1.0
    %v2334 = vrcp.pop %v2333
    %v2335 = vmul.f32 1.0, %v2334
    %v2336 = vtanh.pop %v2329
    %v2337 = vld [vmem:[#allocation3] sm:$0xff]
    %2339 = vrot.lane.b32.xlu0 %v2337, 32
    %v2340 = vpop.permute.xlu0 %2339
    %v2342 = vmul.f32 %v2335, %v2340
    %2344 = vrot.lane.b32.xlu0 %v2336, 64
    %v2345 = vpop.permute.xlu0 %2344
    %v2347 = vmul.f32 %v2335, %v2345
    %2349 = vrot.lane.b32.xlu0 %v2347, 32
    %v2350 = vpop.permute.xlu0 %2349
    %v2352 = vadd.f32 %v2342, %v2350
    %v2353 = vtanh.pop %v2352
    %2355 = vrot.lane.b32.xlu0 %v2353, 64
    %v2356 = vpop.permute.xlu0 %2355
    %v2358 = vmul.f32 %v2335, %v2356
    %2360 = vrot.lane.b32.xlu0 %v2352, 96
    %v2361 = vpop.permute.xlu0 %2360
    %2363 = vst.msk [vmem:[#allocation3] sm:$0xff] %vm126, %v2361
    %2365 = vrot.lane.b32.xlu0 %v2358, 32
    %v2366 = vpop.permute.xlu0 %2365
    %2368 = vst.msk [vmem:[#allocation2] sm:$0xff] %vm126, %v2366
    %v2369 = vld [vmem:[%s420] sm:$0xff]
    %v2370 = vld [vmem:[%s420 + $0x8] sm:$0xff]
    %v2371 = vld [vmem:[%s420 + $0x10] sm:$0xff]
    %v2372 = vld [vmem:[%s420 + $0x18] sm:$0xff]
    %v2373 = vld [vmem:[%s425] sm:$0xff]
    %v2374 = vld [vmem:[%s427] sm:$0xff]
    %v2375 = vld [vmem:[%s427 + $0x8] sm:$0xff]
    %v2376 = vld [vmem:[%s427 + $0x10] sm:$0xff]
    %v2377 = vld [vmem:[%s427 + $0x18] sm:$0xff]
    %v2379 = vsel %vm126, %v2373, 0
    %2381 = vmatprep.subr.mxu0 0.0
    %2382 = vmatpush1.msra.mxu0 %v2374
    %2383 = vmatprep.subr.mxu0 0.0
    %2384 = vmatpush1.msra.mxu0 %v2375
    %2385 = vmatprep.subr.mxu0 0.0
    %2386 = vmatpush1.msra.mxu0 %v2376
    %2387 = vmatprep.subr.mxu0 0.0
    %2388 = vmatpush1.msra.mxu0 %v2377
    %2389 = vmatprep.subr.mxu0 0.0
    %2390 = vmatpush1.msra.mxu0 0.0
    %2391 = vmatprep.subr.mxu0 0.0
    %2392 = vmatpush1.msra.mxu0 0.0
    %2393 = vmatprep.subr.mxu0 0.0
    %2394 = vmatpush1.msra.mxu0 0.0
    %2395 = vmatprep.subr.mxu0 0.0
    %2396 = vmatpush1.msra.mxu0 0.0
    %2397 = vmatprep.subr.mxu0 0.0
    %2398 = vmatpush1.msra.mxu0 0.0
    %2399 = vmatprep.subr.mxu0 0.0
    %2400 = vmatpush1.msra.mxu0 0.0
    %2401 = vmatprep.subr.mxu0 0.0
    %2402 = vmatpush1.msra.mxu0 0.0
    %2403 = vmatprep.subr.mxu0 0.0
    %2404 = vmatpush1.msra.mxu0 0.0
    %2405 = vmatprep.subr.mxu0 0.0
    %2406 = vmatpush1.msra.mxu0 0.0
    %2407 = vmatprep.subr.mxu0 0.0
    %2408 = vmatpush1.msra.mxu0 0.0
    %2409 = vmatprep.subr.mxu0 0.0
    %2410 = vmatpush1.msra.mxu0 0.0
    %2411 = vmatprep.subr.mxu0 0.0
    %2412 = vmatpush1.msra.mxu0 0.0
    %2413 = vmatprep.subr.mxu0 0.0
    %2414 = vmatpush1.msra.mxu0 0.0
    %2415 = vmatprep.subr.mxu0 0.0
    %2416 = vmatpush1.msra.mxu0 0.0
    %2417 = vmatprep.subr.mxu0 0.0
    %2418 = vmatpush1.msra.mxu0 0.0
    %2419 = vmatprep.subr.mxu0 0.0
    %2420 = vmatpush1.msra.mxu0 0.0
    %2421 = vmatprep.subr.mxu0 0.0
    %2422 = vmatpush1.msra.mxu0 0.0
    %2423 = vmatprep.subr.mxu0 0.0
    %2424 = vmatpush1.msra.mxu0 0.0
    %2425 = vmatprep.subr.mxu0 0.0
    %2426 = vmatpush1.msra.mxu0 0.0
    %2427 = vmatprep.subr.mxu0 0.0
    %2428 = vmatpush1.msra.mxu0 0.0
    %2429 = vmatprep.subr.mxu0 0.0
    %2430 = vmatpush1.msra.mxu0 0.0
    %2431 = vmatprep.subr.mxu0 0.0
    %2432 = vmatpush1.msra.mxu0 0.0
    %2433 = vmatprep.subr.mxu0 0.0
    %2434 = vmatpush1.msra.mxu0 0.0
    %2435 = vmatprep.subr.mxu0 0.0
    %2436 = vmatpush1.msra.mxu0 0.0
    %2437 = vmatprep.subr.mxu0 0.0
    %2438 = vmatpush1.msra.mxu0 0.0
    %2439 = vmatprep.subr.mxu0 0.0
    %2440 = vmatpush1.msra.mxu0 0.0
    %2441 = vmatprep.subr.mxu0 0.0
    %2442 = vmatpush1.msra.mxu0 0.0
    %2443 = vmatprep.subr.mxu0 0.0
    %2444 = vmatpush1.msra.mxu0 0.0
    %2445 = vmatprep.mubr.f32.mxu0 0.0
    %2446 = vmatmul.mubr.f32.gmra.mrb[0].mxu0 %v2379
    %v2447 = vpop.f32.mrb[0].mxu0
    %v2448 = vadd.f32 0.0, %v2447
    %v2449 = vpop.f32.mrb[0].mxu0
    %2450 = vdwg.mxu0
    %v2451 = vsel %vm126, %v2366, 0
    %2453 = vmatprep.subr.mxu0 0.0
    %2454 = vmatpush1.msra.mxu0 %v2369
    %2455 = vmatprep.subr.mxu0 0.0
    %2456 = vmatpush1.msra.mxu0 %v2370
    %2457 = vmatprep.subr.mxu0 0.0
    %2458 = vmatpush1.msra.mxu0 %v2371
    %2459 = vmatprep.subr.mxu0 0.0
    %2460 = vmatpush1.msra.mxu0 %v2372
    %2461 = vmatprep.subr.mxu0 0.0
    %2462 = vmatpush1.msra.mxu0 0.0
    %2463 = vmatprep.subr.mxu0 0.0
    %2464 = vmatpush1.msra.mxu0 0.0
    %2465 = vmatprep.subr.mxu0 0.0
    %2466 = vmatpush1.msra.mxu0 0.0
    %2467 = vmatprep.subr.mxu0 0.0
    %2468 = vmatpush1.msra.mxu0 0.0
    %2469 = vmatprep.subr.mxu0 0.0
    %2470 = vmatpush1.msra.mxu0 0.0
    %2471 = vmatprep.subr.mxu0 0.0
    %2472 = vmatpush1.msra.mxu0 0.0
    %2473 = vmatprep.subr.mxu0 0.0
    %2474 = vmatpush1.msra.mxu0 0.0
    %2475 = vmatprep.subr.mxu0 0.0
    %2476 = vmatpush1.msra.mxu0 0.0
    %2477 = vmatprep.subr.mxu0 0.0
    %2478 = vmatpush1.msra.mxu0 0.0
    %2479 = vmatprep.subr.mxu0 0.0
    %2480 = vmatpush1.msra.mxu0 0.0
    %2481 = vmatprep.subr.mxu0 0.0
    %2482 = vmatpush1.msra.mxu0 0.0
    %2483 = vmatprep.subr.mxu0 0.0
    %2484 = vmatpush1.msra.mxu0 0.0
    %2485 = vmatprep.subr.mxu0 0.0
    %2486 = vmatpush1.msra.mxu0 0.0
    %2487 = vmatprep.subr.mxu0 0.0
    %2488 = vmatpush1.msra.mxu0 0.0
    %2489 = vmatprep.subr.mxu0 0.0
    %2490 = vmatpush1.msra.mxu0 0.0
    %2491 = vmatprep.subr.mxu0 0.0
    %2492 = vmatpush1.msra.mxu0 0.0
    %2493 = vmatprep.subr.mxu0 0.0
    %2494 = vmatpush1.msra.mxu0 0.0
    %2495 = vmatprep.subr.mxu0 0.0
    %2496 = vmatpush1.msra.mxu0 0.0
    %2497 = vmatprep.subr.mxu0 0.0
    %2498 = vmatpush1.msra.mxu0 0.0
    %2499 = vmatprep.subr.mxu0 0.0
    %2500 = vmatpush1.msra.mxu0 0.0
    %2501 = vmatprep.subr.mxu0 0.0
    %2502 = vmatpush1.msra.mxu0 0.0
    %2503 = vmatprep.subr.mxu0 0.0
    %2504 = vmatpush1.msra.mxu0 0.0
    %2505 = vmatprep.subr.mxu0 0.0
    %2506 = vmatpush1.msra.mxu0 0.0
    %2507 = vmatprep.subr.mxu0 0.0
    %2508 = vmatpush1.msra.mxu0 0.0
    %2509 = vmatprep.subr.mxu0 0.0
    %2510 = vmatpush1.msra.mxu0 0.0
    %2511 = vmatprep.subr.mxu0 0.0
    %2512 = vmatpush1.msra.mxu0 0.0
    %2513 = vmatprep.subr.mxu0 0.0
    %2514 = vmatpush1.msra.mxu0 0.0
    %2515 = vmatprep.subr.mxu0 0.0
    %2516 = vmatpush1.msra.mxu0 0.0
    %2517 = vmatprep.mubr.f32.mxu0 0.0
    %2518 = vmatmul.mubr.f32.gmra.mrb[0].mxu0 %v2451
    %v2519 = vpop.f32.mrb[0].mxu0
    %v2520 = vadd.f32 %v2448, %v2519
    %v2521 = vpop.f32.mrb[0].mxu0
    %2522 = vdwg.mxu0
    %v2523 = vld [vmem:[%s577] sm:$0x1]
    %v2525 = vlaneseq
    %v2526 = vshrl.u32 %v2525, 7
    %v2527 = vsub.s32 0, %v2526
    %v2528 = vrot.slane %v2523, %v2527
    %v2530 = vadd.f32 %v2520, %v2528
    %v2531 = vxor.u32 %v2530, 2147483648
    %v2532 = vmul.f32 %v2531, 1.442695
    %v2533 = vpow.pop %v2532
    %v2534 = vadd.f32 %v2533, 1.0
    %v2535 = vrcp.pop %v2534
    %v2536 = vmul.f32 1.0, %v2535
    %v2537 = vtanh.pop %v2530
    %v2538 = vld [vmem:[%s593] sm:$0xff]
    %2540 = vrot.lane.b32.xlu0 %v2538, 32
    %v2541 = vpop.permute.xlu0 %2540
    %v2543 = vmul.f32 %v2536, %v2541
    %2545 = vrot.lane.b32.xlu0 %v2537, 64
    %v2546 = vpop.permute.xlu0 %2545
    %v2548 = vmul.f32 %v2536, %v2546
    %2550 = vrot.lane.b32.xlu0 %v2548, 32
    %v2551 = vpop.permute.xlu0 %2550
    %v2553 = vadd.f32 %v2543, %v2551
    %v2554 = vtanh.pop %v2553
    %2556 = vrot.lane.b32.xlu0 %v2554, 64
    %v2557 = vpop.permute.xlu0 %2556
    %v2559 = vmul.f32 %v2536, %v2557
    %2561 = vrot.lane.b32.xlu0 %v2553, 96
    %v2562 = vpop.permute.xlu0 %2561
    %2564 = vst.msk [vmem:[%s593] sm:$0xff] %vm126, %v2562
    %2566 = vrot.lane.b32.xlu0 %v2559, 32
    %v2567 = vpop.permute.xlu0 %2566
    %2569 = vst.msk [vmem:[%s425] sm:$0xff] %vm126, %v2567
    %s2570 = scalar_lea.vmem %s1, 40
    %v2571 = vld [vmem:[%s2570] sm:$0xff]
    %2572 = vset.pattern.permute.xlu0 0
    %2573 = vperm.xlu0 %2572, %v2571
    %v2574 = vpop.permute.xlu0 %2573
    %vm2575 = vcmp.eq.s32.totalorder %v2574, %v133
    %v2576 = vsel %vm2575, 1, 0
    %v2577 = vcvt.s32.f32 %v2576
    %v2578 = vld [vmem:[#allocation9] sm:$0xff]
    %v2579 = vld [vmem:[#allocation9 + $0x8] sm:$0xff]
    %v2581 = vsel %vm144, %v2577, 0
    %2583 = vmatprep.subr.mxu0 0.0
    %2584 = vmatpush1.msra.mxu0 %v2578
    %2585 = vmatprep.subr.mxu0 0.0
    %2586 = vmatpush1.msra.mxu0 %v2579
    %2587 = vmatprep.subr.mxu0 0.0
    %2588 = vmatpush1.msra.mxu0 0.0
    %2589 = vmatprep.subr.mxu0 0.0
    %2590 = vmatpush1.msra.mxu0 0.0
    %2591 = vmatprep.subr.mxu0 0.0
    %2592 = vmatpush1.msra.mxu0 0.0
    %2593 = vmatprep.subr.mxu0 0.0
    %2594 = vmatpush1.msra.mxu0 0.0
    %2595 = vmatprep.subr.mxu0 0.0
    %2596 = vmatpush1.msra.mxu0 0.0
    %2597 = vmatprep.subr.mxu0 0.0
    %2598 = vmatpush1.msra.mxu0 0.0
    %2599 = vmatprep.subr.mxu0 0.0
    %2600 = vmatpush1.msra.mxu0 0.0
    %2601 = vmatprep.subr.mxu0 0.0
    %2602 = vmatpush1.msra.mxu0 0.0
    %2603 = vmatprep.subr.mxu0 0.0
    %2604 = vmatpush1.msra.mxu0 0.0
    %2605 = vmatprep.subr.mxu0 0.0
    %2606 = vmatpush1.msra.mxu0 0.0
    %2607 = vmatprep.subr.mxu0 0.0
    %2608 = vmatpush1.msra.mxu0 0.0
    %2609 = vmatprep.subr.mxu0 0.0
    %2610 = vmatpush1.msra.mxu0 0.0
    %2611 = vmatprep.subr.mxu0 0.0
    %2612 = vmatpush1.msra.mxu0 0.0
    %2613 = vmatprep.subr.mxu0 0.0
    %2614 = vmatpush1.msra.mxu0 0.0
    %2615 = vmatprep.subr.mxu0 0.0
    %2616 = vmatpush1.msra.mxu0 0.0
    %2617 = vmatprep.subr.mxu0 0.0
    %2618 = vmatpush1.msra.mxu0 0.0
    %2619 = vmatprep.subr.mxu0 0.0
    %2620 = vmatpush1.msra.mxu0 0.0
    %2621 = vmatprep.subr.mxu0 0.0
    %2622 = vmatpush1.msra.mxu0 0.0
    %2623 = vmatprep.subr.mxu0 0.0
    %2624 = vmatpush1.msra.mxu0 0.0
    %2625 = vmatprep.subr.mxu0 0.0
    %2626 = vmatpush1.msra.mxu0 0.0
    %2627 = vmatprep.subr.mxu0 0.0
    %2628 = vmatpush1.msra.mxu0 0.0
    %2629 = vmatprep.subr.mxu0 0.0
    %2630 = vmatpush1.msra.mxu0 0.0
    %2631 = vmatprep.subr.mxu0 0.0
    %2632 = vmatpush1.msra.mxu0 0.0
    %2633 = vmatprep.subr.mxu0 0.0
    %2634 = vmatpush1.msra.mxu0 0.0
    %2635 = vmatprep.subr.mxu0 0.0
    %2636 = vmatpush1.msra.mxu0 0.0
    %2637 = vmatprep.subr.mxu0 0.0
    %2638 = vmatpush1.msra.mxu0 0.0
    %2639 = vmatprep.subr.mxu0 0.0
    %2640 = vmatpush1.msra.mxu0 0.0
    %2641 = vmatprep.subr.mxu0 0.0
    %2642 = vmatpush1.msra.mxu0 0.0
    %2643 = vmatprep.subr.mxu0 0.0
    %2644 = vmatpush1.msra.mxu0 0.0
    %2645 = vmatprep.subr.mxu0 0.0
    %2646 = vmatpush1.msra.mxu0 0.0
    %2647 = vmatprep.mubr.f32.mxu0 0.0
    %2648 = vmatmul.mubr.f32.gmra.mrb[0].mxu0 %v2581
    %v2649 = vpop.f32.mrb[0].mxu0
    %v2650 = vadd.f32 0.0, %v2649
    %v2651 = vpop.f32.mrb[0].mxu0
    %2652 = vdwg.mxu0
    %v2653 = vld [vmem:[%s5] sm:$0xff]
    %v2654 = vld [vmem:[%s5 + $0x8] sm:$0xff]
    %v2655 = vld [vmem:[%s5 + $0x10] sm:$0xff]
    %v2656 = vld [vmem:[%s5 + $0x18] sm:$0xff]
    %v2657 = vld [vmem:[#allocation2] sm:$0xff]
    %v2658 = vld [vmem:[%s6] sm:$0xff]
    %v2659 = vld [vmem:[%s6 + $0x8] sm:$0xff]
    %v2660 = vld [vmem:[%s6 + $0x10] sm:$0xff]
    %v2661 = vld [vmem:[%s6 + $0x18] sm:$0xff]
    %v2663 = vsel %vm126, %v2657, 0
    %2665 = vmatprep.subr.mxu0 0.0
    %2666 = vmatpush1.msra.mxu0 %v2658
    %2667 = vmatprep.subr.mxu0 0.0
    %2668 = vmatpush1.msra.mxu0 %v2659
    %2669 = vmatprep.subr.mxu0 0.0
    %2670 = vmatpush1.msra.mxu0 %v2660
    %2671 = vmatprep.subr.mxu0 0.0
    %2672 = vmatpush1.msra.mxu0 %v2661
    %2673 = vmatprep.subr.mxu0 0.0
    %2674 = vmatpush1.msra.mxu0 0.0
    %2675 = vmatprep.subr.mxu0 0.0
    %2676 = vmatpush1.msra.mxu0 0.0
    %2677 = vmatprep.subr.mxu0 0.0
    %2678 = vmatpush1.msra.mxu0 0.0
    %2679 = vmatprep.subr.mxu0 0.0
    %2680 = vmatpush1.msra.mxu0 0.0
    %2681 = vmatprep.subr.mxu0 0.0
    %2682 = vmatpush1.msra.mxu0 0.0
    %2683 = vmatprep.subr.mxu0 0.0
    %2684 = vmatpush1.msra.mxu0 0.0
    %2685 = vmatprep.subr.mxu0 0.0
    %2686 = vmatpush1.msra.mxu0 0.0
    %2687 = vmatprep.subr.mxu0 0.0
    %2688 = vmatpush1.msra.mxu0 0.0
    %2689 = vmatprep.subr.mxu0 0.0
    %2690 = vmatpush1.msra.mxu0 0.0
    %2691 = vmatprep.subr.mxu0 0.0
    %2692 = vmatpush1.msra.mxu0 0.0
    %2693 = vmatprep.subr.mxu0 0.0
    %2694 = vmatpush1.msra.mxu0 0.0
    %2695 = vmatprep.subr.mxu0 0.0
    %2696 = vmatpush1.msra.mxu0 0.0
    %2697 = vmatprep.subr.mxu0 0.0
    %2698 = vmatpush1.msra.mxu0 0.0
    %2699 = vmatprep.subr.mxu0 0.0
    %2700 = vmatpush1.msra.mxu0 0.0
    %2701 = vmatprep.subr.mxu0 0.0
    %2702 = vmatpush1.msra.mxu0 0.0
    %2703 = vmatprep.subr.mxu0 0.0
    %2704 = vmatpush1.msra.mxu0 0.0
    %2705 = vmatprep.subr.mxu0 0.0
    %2706 = vmatpush1.msra.mxu0 0.0
    %2707 = vmatprep.subr.mxu0 0.0
    %2708 = vmatpush1.msra.mxu0 0.0
    %2709 = vmatprep.subr.mxu0 0.0
    %2710 = vmatpush1.msra.mxu0 0.0
    %2711 = vmatprep.subr.mxu0 0.0
    %2712 = vmatpush1.msra.mxu0 0.0
    %2713 = vmatprep.subr.mxu0 0.0
    %2714 = vmatpush1.msra.mxu0 0.0
    %2715 = vmatprep.subr.mxu0 0.0
    %2716 = vmatpush1.msra.mxu0 0.0
    %2717 = vmatprep.subr.mxu0 0.0
    %2718 = vmatpush1.msra.mxu0 0.0
    %2719 = vmatprep.subr.mxu0 0.0
    %2720 = vmatpush1.msra.mxu0 0.0
    %2721 = vmatprep.subr.mxu0 0.0
    %2722 = vmatpush1.msra.mxu0 0.0
    %2723 = vmatprep.subr.mxu0 0.0
    %2724 = vmatpush1.msra.mxu0 0.0
    %2725 = vmatprep.subr.mxu0 0.0
    %2726 = vmatpush1.msra.mxu0 0.0
    %2727 = vmatprep.subr.mxu0 0.0
    %2728 = vmatpush1.msra.mxu0 0.0
    %2729 = vmatprep.mubr.f32.mxu0 0.0
    %2730 = vmatmul.mubr.f32.gmra.mrb[0].mxu0 %v2663
    %v2731 = vpop.f32.mrb[0].mxu0
    %v2732 = vadd.f32 0.0, %v2731
    %v2733 = vpop.f32.mrb[0].mxu0
    %2734 = vdwg.mxu0
    %v2736 = vsel %vm126, %v2650, 0
    %2738 = vmatprep.subr.mxu0 0.0
    %2739 = vmatpush1.msra.mxu0 %v2653
    %2740 = vmatprep.subr.mxu0 0.0
    %2741 = vmatpush1.msra.mxu0 %v2654
    %2742 = vmatprep.subr.mxu0 0.0
    %2743 = vmatpush1.msra.mxu0 %v2655
    %2744 = vmatprep.subr.mxu0 0.0
    %2745 = vmatpush1.msra.mxu0 %v2656
    %2746 = vmatprep.subr.mxu0 0.0
    %2747 = vmatpush1.msra.mxu0 0.0
    %2748 = vmatprep.subr.mxu0 0.0
    %2749 = vmatpush1.msra.mxu0 0.0
    %2750 = vmatprep.subr.mxu0 0.0
    %2751 = vmatpush1.msra.mxu0 0.0
    %2752 = vmatprep.subr.mxu0 0.0
    %2753 = vmatpush1.msra.mxu0 0.0
    %2754 = vmatprep.subr.mxu0 0.0
    %2755 = vmatpush1.msra.mxu0 0.0
    %2756 = vmatprep.subr.mxu0 0.0
    %2757 = vmatpush1.msra.mxu0 0.0
    %2758 = vmatprep.subr.mxu0 0.0
    %2759 = vmatpush1.msra.mxu0 0.0
    %2760 = vmatprep.subr.mxu0 0.0
    %2761 = vmatpush1.msra.mxu0 0.0
    %2762 = vmatprep.subr.mxu0 0.0
    %2763 = vmatpush1.msra.mxu0 0.0
    %2764 = vmatprep.subr.mxu0 0.0
    %2765 = vmatpush1.msra.mxu0 0.0
    %2766 = vmatprep.subr.mxu0 0.0
    %2767 = vmatpush1.msra.mxu0 0.0
    %2768 = vmatprep.subr.mxu0 0.0
    %2769 = vmatpush1.msra.mxu0 0.0
    %2770 = vmatprep.subr.mxu0 0.0
    %2771 = vmatpush1.msra.mxu0 0.0
    %2772 = vmatprep.subr.mxu0 0.0
    %2773 = vmatpush1.msra.mxu0 0.0
    %2774 = vmatprep.subr.mxu0 0.0
    %2775 = vmatpush1.msra.mxu0 0.0
    %2776 = vmatprep.subr.mxu0 0.0
    %2777 = vmatpush1.msra.mxu0 0.0
    %2778 = vmatprep.subr.mxu0 0.0
    %2779 = vmatpush1.msra.mxu0 0.0
    %2780 = vmatprep.subr.mxu0 0.0
    %2781 = vmatpush1.msra.mxu0 0.0
    %2782 = vmatprep.subr.mxu0 0.0
    %2783 = vmatpush1.msra.mxu0 0.0
    %2784 = vmatprep.subr.mxu0 0.0
    %2785 = vmatpush1.msra.mxu0 0.0
    %2786 = vmatprep.subr.mxu0 0.0
    %2787 = vmatpush1.msra.mxu0 0.0
    %2788 = vmatprep.subr.mxu0 0.0
    %2789 = vmatpush1.msra.mxu0 0.0
    %2790 = vmatprep.subr.mxu0 0.0
    %2791 = vmatpush1.msra.mxu0 0.0
    %2792 = vmatprep.subr.mxu0 0.0
    %2793 = vmatpush1.msra.mxu0 0.0
    %2794 = vmatprep.subr.mxu0 0.0
    %2795 = vmatpush1.msra.mxu0 0.0
    %2796 = vmatprep.subr.mxu0 0.0
    %2797 = vmatpush1.msra.mxu0 0.0
    %2798 = vmatprep.subr.mxu0 0.0
    %2799 = vmatpush1.msra.mxu0 0.0
    %2800 = vmatprep.subr.mxu0 0.0
    %2801 = vmatpush1.msra.mxu0 0.0
    %2802 = vmatprep.mubr.f32.mxu0 0.0
    %2803 = vmatmul.mubr.f32.gmra.mrb[0].mxu0 %v2736
    %v2804 = vpop.f32.mrb[0].mxu0
    %v2805 = vadd.f32 %v2732, %v2804
    %v2806 = vpop.f32.mrb[0].mxu0
    %2807 = vdwg.mxu0
    %v2808 = vld [vmem:[%s7] sm:$0x1]
    %v2810 = vlaneseq
    %v2811 = vshrl.u32 %v2810, 7
    %v2812 = vsub.s32 0, %v2811
    %v2813 = vrot.slane %v2808, %v2812
    %v2815 = vadd.f32 %v2805, %v2813
    %v2816 = vxor.u32 %v2815, 2147483648
    %v2817 = vmul.f32 %v2816, 1.442695
    %v2818 = vpow.pop %v2817
    %v2819 = vadd.f32 %v2818, 1.0
    %v2820 = vrcp.pop %v2819
    %v2821 = vmul.f32 1.0, %v2820
    %v2822 = vtanh.pop %v2815
    %v2823 = vld [vmem:[#allocation3] sm:$0xff]
    %2825 = vrot.lane.b32.xlu0 %v2823, 32
    %v2826 = vpop.permute.xlu0 %2825
    %v2828 = vmul.f32 %v2821, %v2826
    %2830 = vrot.lane.b32.xlu0 %v2822, 64
    %v2831 = vpop.permute.xlu0 %2830
    %v2833 = vmul.f32 %v2821, %v2831
    %2835 = vrot.lane.b32.xlu0 %v2833, 32
    %v2836 = vpop.permute.xlu0 %2835
    %v2838 = vadd.f32 %v2828, %v2836
    %v2839 = vtanh.pop %v2838
    %2841 = vrot.lane.b32.xlu0 %v2839, 64
    %v2842 = vpop.permute.xlu0 %2841
    %v2844 = vmul.f32 %v2821, %v2842
    %2846 = vrot.lane.b32.xlu0 %v2838, 96
    %v2847 = vpop.permute.xlu0 %2846
    %2849 = vst.msk [vmem:[#allocation3] sm:$0xff] %vm126, %v2847
    %2851 = vrot.lane.b32.xlu0 %v2844, 32
    %v2852 = vpop.permute.xlu0 %2851
    %2854 = vst.msk [vmem:[#allocation2] sm:$0xff] %vm126, %v2852
    %v2855 = vld [vmem:[%s420] sm:$0xff]
    %v2856 = vld [vmem:[%s420 + $0x8] sm:$0xff]
    %v2857 = vld [vmem:[%s420 + $0x10] sm:$0xff]
    %v2858 = vld [vmem:[%s420 + $0x18] sm:$0xff]
    %v2859 = vld [vmem:[%s425] sm:$0xff]
    %v2860 = vld [vmem:[%s427] sm:$0xff]
    %v2861 = vld [vmem:[%s427 + $0x8] sm:$0xff]
    %v2862 = vld [vmem:[%s427 + $0x10] sm:$0xff]
    %v2863 = vld [vmem:[%s427 + $0x18] sm:$0xff]
    %v2865 = vsel %vm126, %v2859, 0
    %2867 = vmatprep.subr.mxu0 0.0
    %2868 = vmatpush1.msra.mxu0 %v2860
    %2869 = vmatprep.subr.mxu0 0.0
    %2870 = vmatpush1.msra.mxu0 %v2861
    %2871 = vmatprep.subr.mxu0 0.0
    %2872 = vmatpush1.msra.mxu0 %v2862
    %2873 = vmatprep.subr.mxu0 0.0
    %2874 = vmatpush1.msra.mxu0 %v2863
    %2875 = vmatprep.subr.mxu0 0.0
    %2876 = vmatpush1.msra.mxu0 0.0
    %2877 = vmatprep.subr.mxu0 0.0
    %2878 = vmatpush1.msra.mxu0 0.0
    %2879 = vmatprep.subr.mxu0 0.0
    %2880 = vmatpush1.msra.mxu0 0.0
    %2881 = vmatprep.subr.mxu0 0.0
    %2882 = vmatpush1.msra.mxu0 0.0
    %2883 = vmatprep.subr.mxu0 0.0
    %2884 = vmatpush1.msra.mxu0 0.0
    %2885 = vmatprep.subr.mxu0 0.0
    %2886 = vmatpush1.msra.mxu0 0.0
    %2887 = vmatprep.subr.mxu0 0.0
    %2888 = vmatpush1.msra.mxu0 0.0
    %2889 = vmatprep.subr.mxu0 0.0
    %2890 = vmatpush1.msra.mxu0 0.0
    %2891 = vmatprep.subr.mxu0 0.0
    %2892 = vmatpush1.msra.mxu0 0.0
    %2893 = vmatprep.subr.mxu0 0.0
    %2894 = vmatpush1.msra.mxu0 0.0
    %2895 = vmatprep.subr.mxu0 0.0
    %2896 = vmatpush1.msra.mxu0 0.0
    %2897 = vmatprep.subr.mxu0 0.0
    %2898 = vmatpush1.msra.mxu0 0.0
    %2899 = vmatprep.subr.mxu0 0.0
    %2900 = vmatpush1.msra.mxu0 0.0
    %2901 = vmatprep.subr.mxu0 0.0
    %2902 = vmatpush1.msra.mxu0 0.0
    %2903 = vmatprep.subr.mxu0 0.0
    %2904 = vmatpush1.msra.mxu0 0.0
    %2905 = vmatprep.subr.mxu0 0.0
    %2906 = vmatpush1.msra.mxu0 0.0
    %2907 = vmatprep.subr.mxu0 0.0
    %2908 = vmatpush1.msra.mxu0 0.0
    %2909 = vmatprep.subr.mxu0 0.0
    %2910 = vmatpush1.msra.mxu0 0.0
    %2911 = vmatprep.subr.mxu0 0.0
    %2912 = vmatpush1.msra.mxu0 0.0
    %2913 = vmatprep.subr.mxu0 0.0
    %2914 = vmatpush1.msra.mxu0 0.0
    %2915 = vmatprep.subr.mxu0 0.0
    %2916 = vmatpush1.msra.mxu0 0.0
    %2917 = vmatprep.subr.mxu0 0.0
    %2918 = vmatpush1.msra.mxu0 0.0
    %2919 = vmatprep.subr.mxu0 0.0
    %2920 = vmatpush1.msra.mxu0 0.0
    %2921 = vmatprep.subr.mxu0 0.0
    %2922 = vmatpush1.msra.mxu0 0.0
    %2923 = vmatprep.subr.mxu0 0.0
    %2924 = vmatpush1.msra.mxu0 0.0
    %2925 = vmatprep.subr.mxu0 0.0
    %2926 = vmatpush1.msra.mxu0 0.0
    %2927 = vmatprep.subr.mxu0 0.0
    %2928 = vmatpush1.msra.mxu0 0.0
    %2929 = vmatprep.subr.mxu0 0.0
    %2930 = vmatpush1.msra.mxu0 0.0
    %2931 = vmatprep.mubr.f32.mxu0 0.0
    %2932 = vmatmul.mubr.f32.gmra.mrb[0].mxu0 %v2865
    %v2933 = vpop.f32.mrb[0].mxu0
    %v2934 = vadd.f32 0.0, %v2933
    %v2935 = vpop.f32.mrb[0].mxu0
    %2936 = vdwg.mxu0
    %v2937 = vsel %vm126, %v2852, 0
    %2939 = vmatprep.subr.mxu0 0.0
    %2940 = vmatpush1.msra.mxu0 %v2855
    %2941 = vmatprep.subr.mxu0 0.0
    %2942 = vmatpush1.msra.mxu0 %v2856
    %2943 = vmatprep.subr.mxu0 0.0
    %2944 = vmatpush1.msra.mxu0 %v2857
    %2945 = vmatprep.subr.mxu0 0.0
    %2946 = vmatpush1.msra.mxu0 %v2858
    %2947 = vmatprep.subr.mxu0 0.0
    %2948 = vmatpush1.msra.mxu0 0.0
    %2949 = vmatprep.subr.mxu0 0.0
    %2950 = vmatpush1.msra.mxu0 0.0
    %2951 = vmatprep.subr.mxu0 0.0
    %2952 = vmatpush1.msra.mxu0 0.0
    %2953 = vmatprep.subr.mxu0 0.0
    %2954 = vmatpush1.msra.mxu0 0.0
    %2955 = vmatprep.subr.mxu0 0.0
    %2956 = vmatpush1.msra.mxu0 0.0
    %2957 = vmatprep.subr.mxu0 0.0
    %2958 = vmatpush1.msra.mxu0 0.0
    %2959 = vmatprep.subr.mxu0 0.0
    %2960 = vmatpush1.msra.mxu0 0.0
    %2961 = vmatprep.subr.mxu0 0.0
    %2962 = vmatpush1.msra.mxu0 0.0
    %2963 = vmatprep.subr.mxu0 0.0
    %2964 = vmatpush1.msra.mxu0 0.0
    %2965 = vmatprep.subr.mxu0 0.0
    %2966 = vmatpush1.msra.mxu0 0.0
    %2967 = vmatprep.subr.mxu0 0.0
    %2968 = vmatpush1.msra.mxu0 0.0
    %2969 = vmatprep.subr.mxu0 0.0
    %2970 = vmatpush1.msra.mxu0 0.0
    %2971 = vmatprep.subr.mxu0 0.0
    %2972 = vmatpush1.msra.mxu0 0.0
    %2973 = vmatprep.subr.mxu0 0.0
    %2974 = vmatpush1.msra.mxu0 0.0
    %2975 = vmatprep.subr.mxu0 0.0
    %2976 = vmatpush1.msra.mxu0 0.0
    %2977 = vmatprep.subr.mxu0 0.0
    %2978 = vmatpush1.msra.mxu0 0.0
    %2979 = vmatprep.subr.mxu0 0.0
    %2980 = vmatpush1.msra.mxu0 0.0
    %2981 = vmatprep.subr.mxu0 0.0
    %2982 = vmatpush1.msra.mxu0 0.0
    %2983 = vmatprep.subr.mxu0 0.0
    %2984 = vmatpush1.msra.mxu0 0.0
    %2985 = vmatprep.subr.mxu0 0.0
    %2986 = vmatpush1.msra.mxu0 0.0
    %2987 = vmatprep.subr.mxu0 0.0
    %2988 = vmatpush1.msra.mxu0 0.0
    %2989 = vmatprep.subr.mxu0 0.0
    %2990 = vmatpush1.msra.mxu0 0.0
    %2991 = vmatprep.subr.mxu0 0.0
    %2992 = vmatpush1.msra.mxu0 0.0
    %2993 = vmatprep.subr.mxu0 0.0
    %2994 = vmatpush1.msra.mxu0 0.0
    %2995 = vmatprep.subr.mxu0 0.0
    %2996 = vmatpush1.msra.mxu0 0.0
    %2997 = vmatprep.subr.mxu0 0.0
    %2998 = vmatpush1.msra.mxu0 0.0
    %2999 = vmatprep.subr.mxu0 0.0
    %3000 = vmatpush1.msra.mxu0 0.0
    %3001 = vmatprep.subr.mxu0 0.0
    %3002 = vmatpush1.msra.mxu0 0.0
    %3003 = vmatprep.mubr.f32.mxu0 0.0
    %3004 = vmatmul.mubr.f32.gmra.mrb[0].mxu0 %v2937
    %v3005 = vpop.f32.mrb[0].mxu0
    %v3006 = vadd.f32 %v2934, %v3005
    %v3007 = vpop.f32.mrb[0].mxu0
    %3008 = vdwg.mxu0
    %v3009 = vld [vmem:[%s577] sm:$0x1]
    %v3011 = vlaneseq
    %v3012 = vshrl.u32 %v3011, 7
    %v3013 = vsub.s32 0, %v3012
    %v3014 = vrot.slane %v3009, %v3013
    %v3016 = vadd.f32 %v3006, %v3014
    %v3017 = vxor.u32 %v3016, 2147483648
    %v3018 = vmul.f32 %v3017, 1.442695
    %v3019 = vpow.pop %v3018
    %v3020 = vadd.f32 %v3019, 1.0
    %v3021 = vrcp.pop %v3020
    %v3022 = vmul.f32 1.0, %v3021
    %v3023 = vtanh.pop %v3016
    %v3024 = vld [vmem:[%s593] sm:$0xff]
    %3026 = vrot.lane.b32.xlu0 %v3024, 32
    %v3027 = vpop.permute.xlu0 %3026
    %v3029 = vmul.f32 %v3022, %v3027
    %3031 = vrot.lane.b32.xlu0 %v3023, 64
    %v3032 = vpop.permute.xlu0 %3031
    %v3034 = vmul.f32 %v3022, %v3032
    %3036 = vrot.lane.b32.xlu0 %v3034, 32
    %v3037 = vpop.permute.xlu0 %3036
    %v3039 = vadd.f32 %v3029, %v3037
    %v3040 = vtanh.pop %v3039
    %3042 = vrot.lane.b32.xlu0 %v3040, 64
    %v3043 = vpop.permute.xlu0 %3042
    %v3045 = vmul.f32 %v3022, %v3043
    %3047 = vrot.lane.b32.xlu0 %v3039, 96
    %v3048 = vpop.permute.xlu0 %3047
    %3050 = vst.msk [vmem:[%s593] sm:$0xff] %vm126, %v3048
    %3052 = vrot.lane.b32.xlu0 %v3045, 32
    %v3053 = vpop.permute.xlu0 %3052
    %3055 = vst.msk [vmem:[%s425] sm:$0xff] %vm126, %v3053
    %v3056 = vld [vmem:[%s2] sm:$0xff]
    %vm3057 = vcmask 7168
    %3058 = vst.msk [vmem:[#allocation4] sm:$0xff] %vm3057, %v3056
    %v3059 = vld [vmem:[#allocation4] sm:$0xff]
    %3060 = vset.pattern.permute.xlu0 0
    %3061 = vperm.xlu0 %3060, %v3059
    %v3062 = vpop.permute.xlu0 %3061
    %vm3063 = vcmp.eq.s32.totalorder %v3062, %v133
    %v3064 = vsel %vm3063, 1, 0
    %v3065 = vcvt.s32.f32 %v3064
    %v3066 = vld [vmem:[#allocation10] sm:$0xff]
    %v3067 = vld [vmem:[#allocation10 + $0x8] sm:$0xff]
    %v3069 = vsel %vm144, %v3065, 0
    %3071 = vmatprep.subr.mxu0 0.0
    %3072 = vmatpush1.msra.mxu0 %v3066
    %3073 = vmatprep.subr.mxu0 0.0
    %3074 = vmatpush1.msra.mxu0 %v3067
    %3075 = vmatprep.subr.mxu0 0.0
    %3076 = vmatpush1.msra.mxu0 0.0
    %3077 = vmatprep.subr.mxu0 0.0
    %3078 = vmatpush1.msra.mxu0 0.0
    %3079 = vmatprep.subr.mxu0 0.0
    %3080 = vmatpush1.msra.mxu0 0.0
    %3081 = vmatprep.subr.mxu0 0.0
    %3082 = vmatpush1.msra.mxu0 0.0
    %3083 = vmatprep.subr.mxu0 0.0
    %3084 = vmatpush1.msra.mxu0 0.0
    %3085 = vmatprep.subr.mxu0 0.0
    %3086 = vmatpush1.msra.mxu0 0.0
    %3087 = vmatprep.subr.mxu0 0.0
    %3088 = vmatpush1.msra.mxu0 0.0
    %3089 = vmatprep.subr.mxu0 0.0
    %3090 = vmatpush1.msra.mxu0 0.0
    %3091 = vmatprep.subr.mxu0 0.0
    %3092 = vmatpush1.msra.mxu0 0.0
    %3093 = vmatprep.subr.mxu0 0.0
    %3094 = vmatpush1.msra.mxu0 0.0
    %3095 = vmatprep.subr.mxu0 0.0
    %3096 = vmatpush1.msra.mxu0 0.0
    %3097 = vmatprep.subr.mxu0 0.0
    %3098 = vmatpush1.msra.mxu0 0.0
    %3099 = vmatprep.subr.mxu0 0.0
    %3100 = vmatpush1.msra.mxu0 0.0
    %3101 = vmatprep.subr.mxu0 0.0
    %3102 = vmatpush1.msra.mxu0 0.0
    %3103 = vmatprep.subr.mxu0 0.0
    %3104 = vmatpush1.msra.mxu0 0.0
    %3105 = vmatprep.subr.mxu0 0.0
    %3106 = vmatpush1.msra.mxu0 0.0
    %3107 = vmatprep.subr.mxu0 0.0
    %3108 = vmatpush1.msra.mxu0 0.0
    %3109 = vmatprep.subr.mxu0 0.0
    %3110 = vmatpush1.msra.mxu0 0.0
    %3111 = vmatprep.subr.mxu0 0.0
    %3112 = vmatpush1.msra.mxu0 0.0
    %3113 = vmatprep.subr.mxu0 0.0
    %3114 = vmatpush1.msra.mxu0 0.0
    %3115 = vmatprep.subr.mxu0 0.0
    %3116 = vmatpush1.msra.mxu0 0.0
    %3117 = vmatprep.subr.mxu0 0.0
    %3118 = vmatpush1.msra.mxu0 0.0
    %3119 = vmatprep.subr.mxu0 0.0
    %3120 = vmatpush1.msra.mxu0 0.0
    %3121 = vmatprep.subr.mxu0 0.0
    %3122 = vmatpush1.msra.mxu0 0.0
    %3123 = vmatprep.subr.mxu0 0.0
    %3124 = vmatpush1.msra.mxu0 0.0
    %3125 = vmatprep.subr.mxu0 0.0
    %3126 = vmatpush1.msra.mxu0 0.0
    %3127 = vmatprep.subr.mxu0 0.0
    %3128 = vmatpush1.msra.mxu0 0.0
    %3129 = vmatprep.subr.mxu0 0.0
    %3130 = vmatpush1.msra.mxu0 0.0
    %3131 = vmatprep.subr.mxu0 0.0
    %3132 = vmatpush1.msra.mxu0 0.0
    %3133 = vmatprep.subr.mxu0 0.0
    %3134 = vmatpush1.msra.mxu0 0.0
    %3135 = vmatprep.mubr.f32.mxu0 0.0
    %3136 = vmatmul.mubr.f32.gmra.mrb[0].mxu0 %v3069
    %v3137 = vpop.f32.mrb[0].mxu0
    %v3138 = vadd.f32 0.0, %v3137
    %v3139 = vpop.f32.mrb[0].mxu0
    %3140 = vdwg.mxu0
    %v3141 = vld [vmem:[%s8] sm:$0xff]
    %v3142 = vld [vmem:[%s8 + $0x8] sm:$0xff]
    %v3143 = vld [vmem:[%s8 + $0x10] sm:$0xff]
    %v3144 = vld [vmem:[%s8 + $0x18] sm:$0xff]
    %v3145 = vld [vmem:[#allocation2] sm:$0xff]
    %v3146 = vld [vmem:[#allocation12] sm:$0xff]
    %v3147 = vld [vmem:[#allocation12 + $0x8] sm:$0xff]
    %v3148 = vld [vmem:[#allocation12 + $0x10] sm:$0xff]
    %v3149 = vld [vmem:[#allocation12 + $0x18] sm:$0xff]
    %v3151 = vsel %vm126, %v3145, 0
    %3153 = vmatprep.subr.mxu0 0.0
    %3154 = vmatpush1.msra.mxu0 %v3146
    %3155 = vmatprep.subr.mxu0 0.0
    %3156 = vmatpush1.msra.mxu0 %v3147
    %3157 = vmatprep.subr.mxu0 0.0
    %3158 = vmatpush1.msra.mxu0 %v3148
    %3159 = vmatprep.subr.mxu0 0.0
    %3160 = vmatpush1.msra.mxu0 %v3149
    %3161 = vmatprep.subr.mxu0 0.0
    %3162 = vmatpush1.msra.mxu0 0.0
    %3163 = vmatprep.subr.mxu0 0.0
    %3164 = vmatpush1.msra.mxu0 0.0
    %3165 = vmatprep.subr.mxu0 0.0
    %3166 = vmatpush1.msra.mxu0 0.0
    %3167 = vmatprep.subr.mxu0 0.0
    %3168 = vmatpush1.msra.mxu0 0.0
    %3169 = vmatprep.subr.mxu0 0.0
    %3170 = vmatpush1.msra.mxu0 0.0
    %3171 = vmatprep.subr.mxu0 0.0
    %3172 = vmatpush1.msra.mxu0 0.0
    %3173 = vmatprep.subr.mxu0 0.0
    %3174 = vmatpush1.msra.mxu0 0.0
    %3175 = vmatprep.subr.mxu0 0.0
    %3176 = vmatpush1.msra.mxu0 0.0
    %3177 = vmatprep.subr.mxu0 0.0
    %3178 = vmatpush1.msra.mxu0 0.0
    %3179 = vmatprep.subr.mxu0 0.0
    %3180 = vmatpush1.msra.mxu0 0.0
    %3181 = vmatprep.subr.mxu0 0.0
    %3182 = vmatpush1.msra.mxu0 0.0
    %3183 = vmatprep.subr.mxu0 0.0
    %3184 = vmatpush1.msra.mxu0 0.0
    %3185 = vmatprep.subr.mxu0 0.0
    %3186 = vmatpush1.msra.mxu0 0.0
    %3187 = vmatprep.subr.mxu0 0.0
    %3188 = vmatpush1.msra.mxu0 0.0
    %3189 = vmatprep.subr.mxu0 0.0
    %3190 = vmatpush1.msra.mxu0 0.0
    %3191 = vmatprep.subr.mxu0 0.0
    %3192 = vmatpush1.msra.mxu0 0.0
    %3193 = vmatprep.subr.mxu0 0.0
    %3194 = vmatpush1.msra.mxu0 0.0
    %3195 = vmatprep.subr.mxu0 0.0
    %3196 = vmatpush1.msra.mxu0 0.0
    %3197 = vmatprep.subr.mxu0 0.0
    %3198 = vmatpush1.msra.mxu0 0.0
    %3199 = vmatprep.subr.mxu0 0.0
    %3200 = vmatpush1.msra.mxu0 0.0
    %3201 = vmatprep.subr.mxu0 0.0
    %3202 = vmatpush1.msra.mxu0 0.0
    %3203 = vmatprep.subr.mxu0 0.0
    %3204 = vmatpush1.msra.mxu0 0.0
    %3205 = vmatprep.subr.mxu0 0.0
    %3206 = vmatpush1.msra.mxu0 0.0
    %3207 = vmatprep.subr.mxu0 0.0
    %3208 = vmatpush1.msra.mxu0 0.0
    %3209 = vmatprep.subr.mxu0 0.0
    %3210 = vmatpush1.msra.mxu0 0.0
    %3211 = vmatprep.subr.mxu0 0.0
    %3212 = vmatpush1.msra.mxu0 0.0
    %3213 = vmatprep.subr.mxu0 0.0
    %3214 = vmatpush1.msra.mxu0 0.0
    %3215 = vmatprep.subr.mxu0 0.0
    %3216 = vmatpush1.msra.mxu0 0.0
    %3217 = vmatprep.mubr.f32.mxu0 0.0
    %3218 = vmatmul.mubr.f32.gmra.mrb[0].mxu0 %v3151
    %v3219 = vpop.f32.mrb[0].mxu0
    %v3220 = vadd.f32 0.0, %v3219
    %v3221 = vpop.f32.mrb[0].mxu0
    %3222 = vdwg.mxu0
    %v3224 = vsel %vm126, %v3138, 0
    %3226 = vmatprep.subr.mxu0 0.0
    %3227 = vmatpush1.msra.mxu0 %v3141
    %3228 = vmatprep.subr.mxu0 0.0
    %3229 = vmatpush1.msra.mxu0 %v3142
    %3230 = vmatprep.subr.mxu0 0.0
    %3231 = vmatpush1.msra.mxu0 %v3143
    %3232 = vmatprep.subr.mxu0 0.0
    %3233 = vmatpush1.msra.mxu0 %v3144
    %3234 = vmatprep.subr.mxu0 0.0
    %3235 = vmatpush1.msra.mxu0 0.0
    %3236 = vmatprep.subr.mxu0 0.0
    %3237 = vmatpush1.msra.mxu0 0.0
    %3238 = vmatprep.subr.mxu0 0.0
    %3239 = vmatpush1.msra.mxu0 0.0
    %3240 = vmatprep.subr.mxu0 0.0
    %3241 = vmatpush1.msra.mxu0 0.0
    %3242 = vmatprep.subr.mxu0 0.0
    %3243 = vmatpush1.msra.mxu0 0.0
    %3244 = vmatprep.subr.mxu0 0.0
    %3245 = vmatpush1.msra.mxu0 0.0
    %3246 = vmatprep.subr.mxu0 0.0
    %3247 = vmatpush1.msra.mxu0 0.0
    %3248 = vmatprep.subr.mxu0 0.0
    %3249 = vmatpush1.msra.mxu0 0.0
    %3250 = vmatprep.subr.mxu0 0.0
    %3251 = vmatpush1.msra.mxu0 0.0
    %3252 = vmatprep.subr.mxu0 0.0
    %3253 = vmatpush1.msra.mxu0 0.0
    %3254 = vmatprep.subr.mxu0 0.0
    %3255 = vmatpush1.msra.mxu0 0.0
    %3256 = vmatprep.subr.mxu0 0.0
    %3257 = vmatpush1.msra.mxu0 0.0
    %3258 = vmatprep.subr.mxu0 0.0
    %3259 = vmatpush1.msra.mxu0 0.0
    %3260 = vmatprep.subr.mxu0 0.0
    %3261 = vmatpush1.msra.mxu0 0.0
    %3262 = vmatprep.subr.mxu0 0.0
    %3263 = vmatpush1.msra.mxu0 0.0
    %3264 = vmatprep.subr.mxu0 0.0
    %3265 = vmatpush1.msra.mxu0 0.0
    %3266 = vmatprep.subr.mxu0 0.0
    %3267 = vmatpush1.msra.mxu0 0.0
    %3268 = vmatprep.subr.mxu0 0.0
    %3269 = vmatpush1.msra.mxu0 0.0
    %3270 = vmatprep.subr.mxu0 0.0
    %3271 = vmatpush1.msra.mxu0 0.0
    %3272 = vmatprep.subr.mxu0 0.0
    %3273 = vmatpush1.msra.mxu0 0.0
    %3274 = vmatprep.subr.mxu0 0.0
    %3275 = vmatpush1.msra.mxu0 0.0
    %3276 = vmatprep.subr.mxu0 0.0
    %3277 = vmatpush1.msra.mxu0 0.0
    %3278 = vmatprep.subr.mxu0 0.0
    %3279 = vmatpush1.msra.mxu0 0.0
    %3280 = vmatprep.subr.mxu0 0.0
    %3281 = vmatpush1.msra.mxu0 0.0
    %3282 = vmatprep.subr.mxu0 0.0
    %3283 = vmatpush1.msra.mxu0 0.0
    %3284 = vmatprep.subr.mxu0 0.0
    %3285 = vmatpush1.msra.mxu0 0.0
    %3286 = vmatprep.subr.mxu0 0.0
    %3287 = vmatpush1.msra.mxu0 0.0
    %3288 = vmatprep.subr.mxu0 0.0
    %3289 = vmatpush1.msra.mxu0 0.0
    %3290 = vmatprep.mubr.f32.mxu0 0.0
    %3291 = vmatmul.mubr.f32.gmra.mrb[0].mxu0 %v3224
    %v3292 = vpop.f32.mrb[0].mxu0
    %v3293 = vadd.f32 %v3220, %v3292
    %v3294 = vpop.f32.mrb[0].mxu0
    %3295 = vdwg.mxu0
    %v3296 = vld [vmem:[#allocation13] sm:$0x1]
    %v3298 = vlaneseq
    %v3299 = vshrl.u32 %v3298, 7
    %v3300 = vsub.s32 0, %v3299
    %v3301 = vrot.slane %v3296, %v3300
    %v3303 = vadd.f32 %v3293, %v3301
    %v3304 = vxor.u32 %v3303, 2147483648
    %v3305 = vmul.f32 %v3304, 1.442695
    %v3306 = vpow.pop %v3305
    %v3307 = vadd.f32 %v3306, 1.0
    %v3308 = vrcp.pop %v3307
    %v3309 = vmul.f32 1.0, %v3308
    %v3310 = vtanh.pop %v3303
    %v3311 = vld [vmem:[#allocation3] sm:$0xff]
    %3313 = vrot.lane.b32.xlu0 %v3311, 32
    %v3314 = vpop.permute.xlu0 %3313
    %v3316 = vmul.f32 %v3309, %v3314
    %3318 = vrot.lane.b32.xlu0 %v3310, 64
    %v3319 = vpop.permute.xlu0 %3318
    %v3321 = vmul.f32 %v3309, %v3319
    %3323 = vrot.lane.b32.xlu0 %v3321, 32
    %v3324 = vpop.permute.xlu0 %3323
    %v3326 = vadd.f32 %v3316, %v3324
    %v3327 = vtanh.pop %v3326
    %3329 = vrot.lane.b32.xlu0 %v3327, 64
    %v3330 = vpop.permute.xlu0 %3329
    %v3332 = vmul.f32 %v3309, %v3330
    %3334 = vrot.lane.b32.xlu0 %v3326, 96
    %v3335 = vpop.permute.xlu0 %3334
    %3337 = vst.msk [vmem:[#allocation3] sm:$0xff] %vm126, %v3335
    %3339 = vrot.lane.b32.xlu0 %v3332, 32
    %v3340 = vpop.permute.xlu0 %3339
    %3342 = vst.msk [vmem:[#allocation2] sm:$0xff] %vm126, %v3340
    %s3343 = scalar_lea.vmem %s8, 32
    %v3344 = vld [vmem:[%s3343] sm:$0xff]
    %v3345 = vld [vmem:[%s3343 + $0x8] sm:$0xff]
    %v3346 = vld [vmem:[%s3343 + $0x10] sm:$0xff]
    %v3347 = vld [vmem:[%s3343 + $0x18] sm:$0xff]
    %v3348 = vld [vmem:[%s425] sm:$0xff]
    %s3349 = scalar_lea.vmem [#allocation12], 32
    %v3350 = vld [vmem:[%s3349] sm:$0xff]
    %v3351 = vld [vmem:[%s3349 + $0x8] sm:$0xff]
    %v3352 = vld [vmem:[%s3349 + $0x10] sm:$0xff]
    %v3353 = vld [vmem:[%s3349 + $0x18] sm:$0xff]
    %v3355 = vsel %vm126, %v3348, 0
    %3357 = vmatprep.subr.mxu0 0.0
    %3358 = vmatpush1.msra.mxu0 %v3350
    %3359 = vmatprep.subr.mxu0 0.0
    %3360 = vmatpush1.msra.mxu0 %v3351
    %3361 = vmatprep.subr.mxu0 0.0
    %3362 = vmatpush1.msra.mxu0 %v3352
    %3363 = vmatprep.subr.mxu0 0.0
    %3364 = vmatpush1.msra.mxu0 %v3353
    %3365 = vmatprep.subr.mxu0 0.0
    %3366 = vmatpush1.msra.mxu0 0.0
    %3367 = vmatprep.subr.mxu0 0.0
    %3368 = vmatpush1.msra.mxu0 0.0
    %3369 = vmatprep.subr.mxu0 0.0
    %3370 = vmatpush1.msra.mxu0 0.0
    %3371 = vmatprep.subr.mxu0 0.0
    %3372 = vmatpush1.msra.mxu0 0.0
    %3373 = vmatprep.subr.mxu0 0.0
    %3374 = vmatpush1.msra.mxu0 0.0
    %3375 = vmatprep.subr.mxu0 0.0
    %3376 = vmatpush1.msra.mxu0 0.0
    %3377 = vmatprep.subr.mxu0 0.0
    %3378 = vmatpush1.msra.mxu0 0.0
    %3379 = vmatprep.subr.mxu0 0.0
    %3380 = vmatpush1.msra.mxu0 0.0
    %3381 = vmatprep.subr.mxu0 0.0
    %3382 = vmatpush1.msra.mxu0 0.0
    %3383 = vmatprep.subr.mxu0 0.0
    %3384 = vmatpush1.msra.mxu0 0.0
    %3385 = vmatprep.subr.mxu0 0.0
    %3386 = vmatpush1.msra.mxu0 0.0
    %3387 = vmatprep.subr.mxu0 0.0
    %3388 = vmatpush1.msra.mxu0 0.0
    %3389 = vmatprep.subr.mxu0 0.0
    %3390 = vmatpush1.msra.mxu0 0.0
    %3391 = vmatprep.subr.mxu0 0.0
    %3392 = vmatpush1.msra.mxu0 0.0
    %3393 = vmatprep.subr.mxu0 0.0
    %3394 = vmatpush1.msra.mxu0 0.0
    %3395 = vmatprep.subr.mxu0 0.0
    %3396 = vmatpush1.msra.mxu0 0.0
    %3397 = vmatprep.subr.mxu0 0.0
    %3398 = vmatpush1.msra.mxu0 0.0
    %3399 = vmatprep.subr.mxu0 0.0
    %3400 = vmatpush1.msra.mxu0 0.0
    %3401 = vmatprep.subr.mxu0 0.0
    %3402 = vmatpush1.msra.mxu0 0.0
    %3403 = vmatprep.subr.mxu0 0.0
    %3404 = vmatpush1.msra.mxu0 0.0
    %3405 = vmatprep.subr.mxu0 0.0
    %3406 = vmatpush1.msra.mxu0 0.0
    %3407 = vmatprep.subr.mxu0 0.0
    %3408 = vmatpush1.msra.mxu0 0.0
    %3409 = vmatprep.subr.mxu0 0.0
    %3410 = vmatpush1.msra.mxu0 0.0
    %3411 = vmatprep.subr.mxu0 0.0
    %3412 = vmatpush1.msra.mxu0 0.0
    %3413 = vmatprep.subr.mxu0 0.0
    %3414 = vmatpush1.msra.mxu0 0.0
    %3415 = vmatprep.subr.mxu0 0.0
    %3416 = vmatpush1.msra.mxu0 0.0
    %3417 = vmatprep.subr.mxu0 0.0
    %3418 = vmatpush1.msra.mxu0 0.0
    %3419 = vmatprep.subr.mxu0 0.0
    %3420 = vmatpush1.msra.mxu0 0.0
    %3421 = vmatprep.mubr.f32.mxu0 0.0
    %3422 = vmatmul.mubr.f32.gmra.mrb[0].mxu0 %v3355
    %v3423 = vpop.f32.mrb[0].mxu0
    %v3424 = vadd.f32 0.0, %v3423
    %v3425 = vpop.f32.mrb[0].mxu0
    %3426 = vdwg.mxu0
    %v3427 = vsel %vm126, %v3340, 0
    %3429 = vmatprep.subr.mxu0 0.0
    %3430 = vmatpush1.msra.mxu0 %v3344
    %3431 = vmatprep.subr.mxu0 0.0
    %3432 = vmatpush1.msra.mxu0 %v3345
    %3433 = vmatprep.subr.mxu0 0.0
    %3434 = vmatpush1.msra.mxu0 %v3346
    %3435 = vmatprep.subr.mxu0 0.0
    %3436 = vmatpush1.msra.mxu0 %v3347
    %3437 = vmatprep.subr.mxu0 0.0
    %3438 = vmatpush1.msra.mxu0 0.0
    %3439 = vmatprep.subr.mxu0 0.0
    %3440 = vmatpush1.msra.mxu0 0.0
    %3441 = vmatprep.subr.mxu0 0.0
    %3442 = vmatpush1.msra.mxu0 0.0
    %3443 = vmatprep.subr.mxu0 0.0
    %3444 = vmatpush1.msra.mxu0 0.0
    %3445 = vmatprep.subr.mxu0 0.0
    %3446 = vmatpush1.msra.mxu0 0.0
    %3447 = vmatprep.subr.mxu0 0.0
    %3448 = vmatpush1.msra.mxu0 0.0
    %3449 = vmatprep.subr.mxu0 0.0
    %3450 = vmatpush1.msra.mxu0 0.0
    %3451 = vmatprep.subr.mxu0 0.0
    %3452 = vmatpush1.msra.mxu0 0.0
    %3453 = vmatprep.subr.mxu0 0.0
    %3454 = vmatpush1.msra.mxu0 0.0
    %3455 = vmatprep.subr.mxu0 0.0
    %3456 = vmatpush1.msra.mxu0 0.0
    %3457 = vmatprep.subr.mxu0 0.0
    %3458 = vmatpush1.msra.mxu0 0.0
    %3459 = vmatprep.subr.mxu0 0.0
    %3460 = vmatpush1.msra.mxu0 0.0
    %3461 = vmatprep.subr.mxu0 0.0
    %3462 = vmatpush1.msra.mxu0 0.0
    %3463 = vmatprep.subr.mxu0 0.0
    %3464 = vmatpush1.msra.mxu0 0.0
    %3465 = vmatprep.subr.mxu0 0.0
    %3466 = vmatpush1.msra.mxu0 0.0
    %3467 = vmatprep.subr.mxu0 0.0
    %3468 = vmatpush1.msra.mxu0 0.0
    %3469 = vmatprep.subr.mxu0 0.0
    %3470 = vmatpush1.msra.mxu0 0.0
    %3471 = vmatprep.subr.mxu0 0.0
    %3472 = vmatpush1.msra.mxu0 0.0
    %3473 = vmatprep.subr.mxu0 0.0
    %3474 = vmatpush1.msra.mxu0 0.0
    %3475 = vmatprep.subr.mxu0 0.0
    %3476 = vmatpush1.msra.mxu0 0.0
    %3477 = vmatprep.subr.mxu0 0.0
    %3478 = vmatpush1.msra.mxu0 0.0
    %3479 = vmatprep.subr.mxu0 0.0
    %3480 = vmatpush1.msra.mxu0 0.0
    %3481 = vmatprep.subr.mxu0 0.0
    %3482 = vmatpush1.msra.mxu0 0.0
    %3483 = vmatprep.subr.mxu0 0.0
    %3484 = vmatpush1.msra.mxu0 0.0
    %3485 = vmatprep.subr.mxu0 0.0
    %3486 = vmatpush1.msra.mxu0 0.0
    %3487 = vmatprep.subr.mxu0 0.0
    %3488 = vmatpush1.msra.mxu0 0.0
    %3489 = vmatprep.subr.mxu0 0.0
    %3490 = vmatpush1.msra.mxu0 0.0
    %3491 = vmatprep.subr.mxu0 0.0
    %3492 = vmatpush1.msra.mxu0 0.0
    %3493 = vmatprep.mubr.f32.mxu0 0.0
    %3494 = vmatmul.mubr.f32.gmra.mrb[0].mxu0 %v3427
    %v3495 = vpop.f32.mrb[0].mxu0
    %v3496 = vadd.f32 %v3424, %v3495
    %v3497 = vpop.f32.mrb[0].mxu0
    %3498 = vdwg.mxu0
    %s3499 = scalar_lea.vmem [#allocation13], 1
    %v3500 = vld [vmem:[%s3499] sm:$0x1]
    %v3502 = vlaneseq
    %v3503 = vshrl.u32 %v3502, 7
    %v3504 = vsub.s32 0, %v3503
    %v3505 = vrot.slane %v3500, %v3504
    %v3507 = vadd.f32 %v3496, %v3505
    %v3508 = vxor.u32 %v3507, 2147483648
    %v3509 = vmul.f32 %v3508, 1.442695
    %v3510 = vpow.pop %v3509
    %v3511 = vadd.f32 %v3510, 1.0
    %v3512 = vrcp.pop %v3511
    %v3513 = vmul.f32 1.0, %v3512
    %v3514 = vtanh.pop %v3507
    %v3515 = vld [vmem:[%s593] sm:$0xff]
    %3517 = vrot.lane.b32.xlu0 %v3515, 32
    %v3518 = vpop.permute.xlu0 %3517
    %v3520 = vmul.f32 %v3513, %v3518
    %3522 = vrot.lane.b32.xlu0 %v3514, 64
    %v3523 = vpop.permute.xlu0 %3522
    %v3525 = vmul.f32 %v3513, %v3523
    %3527 = vrot.lane.b32.xlu0 %v3525, 32
    %v3528 = vpop.permute.xlu0 %3527
    %v3530 = vadd.f32 %v3520, %v3528
    %v3531 = vtanh.pop %v3530
    %3533 = vrot.lane.b32.xlu0 %v3531, 64
    %v3534 = vpop.permute.xlu0 %3533
    %v3536 = vmul.f32 %v3513, %v3534
    %3538 = vrot.lane.b32.xlu0 %v3530, 96
    %v3539 = vpop.permute.xlu0 %3538
    %3541 = vst.msk [vmem:[%s593] sm:$0xff] %vm126, %v3539
    %3543 = vrot.lane.b32.xlu0 %v3536, 32
    %v3544 = vpop.permute.xlu0 %3543
    %3546 = vst.msk [vmem:[%s425] sm:$0xff] %vm126, %v3544
    %v3547 = vld [vmem:[#allocation15] sm:$0xff]
    %v3548 = vld [vmem:[#allocation15 + $0x8] sm:$0xff]
    %v3549 = vld [vmem:[#allocation15 + $0x10] sm:$0xff]
    %v3550 = vld [vmem:[#allocation15 + $0x18] sm:$0xff]
    %v3551 = vld [vmem:[%s12] sm:$0x1]
    %v3553 = vlaneseq
    %v3554 = vshrl.u32 %v3553, 7
    %v3555 = vsub.s32 0, %v3554
    %v3556 = vrot.slane %v3551, %v3555
    %v3558 = vsel %vm126, %v3544, 0
    %3560 = vmatprep.subr.mxu0 0.0
    %3561 = vmatpush1.msra.mxu0 %v3547
    %3562 = vmatprep.subr.mxu0 0.0
    %3563 = vmatpush1.msra.mxu0 %v3548
    %3564 = vmatprep.subr.mxu0 0.0
    %3565 = vmatpush1.msra.mxu0 %v3549
    %3566 = vmatprep.subr.mxu0 0.0
    %3567 = vmatpush1.msra.mxu0 %v3550
    %3568 = vmatprep.subr.mxu0 0.0
    %3569 = vmatpush1.msra.mxu0 0.0
    %3570 = vmatprep.subr.mxu0 0.0
    %3571 = vmatpush1.msra.mxu0 0.0
    %3572 = vmatprep.subr.mxu0 0.0
    %3573 = vmatpush1.msra.mxu0 0.0
    %3574 = vmatprep.subr.mxu0 0.0
    %3575 = vmatpush1.msra.mxu0 0.0
    %3576 = vmatprep.subr.mxu0 0.0
    %3577 = vmatpush1.msra.mxu0 0.0
    %3578 = vmatprep.subr.mxu0 0.0
    %3579 = vmatpush1.msra.mxu0 0.0
    %3580 = vmatprep.subr.mxu0 0.0
    %3581 = vmatpush1.msra.mxu0 0.0
    %3582 = vmatprep.subr.mxu0 0.0
    %3583 = vmatpush1.msra.mxu0 0.0
    %3584 = vmatprep.subr.mxu0 0.0
    %3585 = vmatpush1.msra.mxu0 0.0
    %3586 = vmatprep.subr.mxu0 0.0
    %3587 = vmatpush1.msra.mxu0 0.0
    %3588 = vmatprep.subr.mxu0 0.0
    %3589 = vmatpush1.msra.mxu0 0.0
    %3590 = vmatprep.subr.mxu0 0.0
    %3591 = vmatpush1.msra.mxu0 0.0
    %3592 = vmatprep.subr.mxu0 0.0
    %3593 = vmatpush1.msra.mxu0 0.0
    %3594 = vmatprep.subr.mxu0 0.0
    %3595 = vmatpush1.msra.mxu0 0.0
    %3596 = vmatprep.subr.mxu0 0.0
    %3597 = vmatpush1.msra.mxu0 0.0
    %3598 = vmatprep.subr.mxu0 0.0
    %3599 = vmatpush1.msra.mxu0 0.0
    %3600 = vmatprep.subr.mxu0 0.0
    %3601 = vmatpush1.msra.mxu0 0.0
    %3602 = vmatprep.subr.mxu0 0.0
    %3603 = vmatpush1.msra.mxu0 0.0
    %3604 = vmatprep.subr.mxu0 0.0
    %3605 = vmatpush1.msra.mxu0 0.0
    %3606 = vmatprep.subr.mxu0 0.0
    %3607 = vmatpush1.msra.mxu0 0.0
    %3608 = vmatprep.subr.mxu0 0.0
    %3609 = vmatpush1.msra.mxu0 0.0
    %3610 = vmatprep.subr.mxu0 0.0
    %3611 = vmatpush1.msra.mxu0 0.0
    %3612 = vmatprep.subr.mxu0 0.0
    %3613 = vmatpush1.msra.mxu0 0.0
    %3614 = vmatprep.subr.mxu0 0.0
    %3615 = vmatpush1.msra.mxu0 0.0
    %3616 = vmatprep.subr.mxu0 0.0
    %3617 = vmatpush1.msra.mxu0 0.0
    %3618 = vmatprep.subr.mxu0 0.0
    %3619 = vmatpush1.msra.mxu0 0.0
    %3620 = vmatprep.subr.mxu0 0.0
    %3621 = vmatpush1.msra.mxu0 0.0
    %3622 = vmatprep.subr.mxu0 0.0
    %3623 = vmatpush1.msra.mxu0 0.0
    %3624 = vmatprep.mubr.f32.mxu0 0.0
    %3625 = vmatmul.mubr.f32.gmra.mrb[0].mxu0 %v3558
    %v3626 = vpop.f32.mrb[0].mxu0
    %v3627 = vadd.f32 %v3556, %v3626
    %v3628 = vpop.f32.mrb[0].mxu0
    %3629 = vdwg.mxu0
    %s3630 = scalar_lea.vmem [#allocation16], 8
    %3631 = vst [vmem:[%s3630] sm:$0xff] %v3627
    %s3632 = sld [smem:[#allocation5 + $0x1]]
    %p3633 = scmp.gt.s32.totalorder %s3632, 0
    // Predicated region
    $region78: #{_forward_padded.1} parent=1 // pred_check
      %p3634 = pneg %p3633
    $region79: #{_forward_padded.1} parent=1 // pred_check_branch
      %3636 = sbr.rel (%p3634) target = $region81
    $region80: #{_forward_padded.1} parent=1 // pred_region
      %s3637 = scalar_lea.vmem %s2, 8
      %v3638 = vld [vmem:[%s3637] sm:$0xff]
      %3639 = vst.msk [vmem:[#allocation4] sm:$0xff] %vm3057, %v3638
    $region81: #{_forward_padded.1} parent=1 // pred_fallthru
      _
    %s3640 = sld [smem:[#allocation5 + $0x1]]
    %p3641 = scmp.eq.s32.totalorder %s3640, 0
    // Predicated region
    $region82: #{_forward_padded.1} parent=1 // pred_check
      %p3642 = pneg %p3641
    $region83: #{_forward_padded.1} parent=1 // pred_check_branch
      %3644 = sbr.rel (%p3642) target = $region85
    $region84: #{_forward_padded.1} parent=1 // pred_region
      %3645 = vmax.xlane.f32.xlu0 %v3627
      %v3646 = vpop.xlane.xlu0 %3645
      %vm3647 = vcmp.eq.f32.partialorder %v3627, %v3646
      %v3648 = vsel %vm3647, %v134, 128.0
      %3649 = vmin.xlane.f32.xlu0 %v3648
      %v3650 = vpop.xlane.xlu0 %3649
      %v3651 = vcvt.f32.s32.to.zero.pseudo %v3650
      %3652 = vst.msk [vmem:[#allocation4] sm:$0xff] %vm3057, %v3651
    $region85: #{_forward_padded.1} parent=1 // pred_fallthru
      _
    %v3653 = vld [vmem:[#allocation4] sm:$0xff]
    %3654 = vset.pattern.permute.xlu0 0
    %3655 = vperm.xlu0 %3654, %v3653
    %v3656 = vpop.permute.xlu0 %3655
    %vm3657 = vcmp.eq.s32.totalorder %v3656, %v133
    %v3658 = vsel %vm3657, 1, 0
    %v3659 = vcvt.s32.f32 %v3658
    %v3660 = vld [vmem:[#allocation10] sm:$0xff]
    %v3661 = vld [vmem:[#allocation10 + $0x8] sm:$0xff]
    %v3663 = vsel %vm144, %v3659, 0
    %3665 = vmatprep.subr.mxu0 0.0
    %3666 = vmatpush1.msra.mxu0 %v3660
    %3667 = vmatprep.subr.mxu0 0.0
    %3668 = vmatpush1.msra.mxu0 %v3661
    %3669 = vmatprep.subr.mxu0 0.0
    %3670 = vmatpush1.msra.mxu0 0.0
    %3671 = vmatprep.subr.mxu0 0.0
    %3672 = vmatpush1.msra.mxu0 0.0
    %3673 = vmatprep.subr.mxu0 0.0
    %3674 = vmatpush1.msra.mxu0 0.0
    %3675 = vmatprep.subr.mxu0 0.0
    %3676 = vmatpush1.msra.mxu0 0.0
    %3677 = vmatprep.subr.mxu0 0.0
    %3678 = vmatpush1.msra.mxu0 0.0
    %3679 = vmatprep.subr.mxu0 0.0
    %3680 = vmatpush1.msra.mxu0 0.0
    %3681 = vmatprep.subr.mxu0 0.0
    %3682 = vmatpush1.msra.mxu0 0.0
    %3683 = vmatprep.subr.mxu0 0.0
    %3684 = vmatpush1.msra.mxu0 0.0
    %3685 = vmatprep.subr.mxu0 0.0
    %3686 = vmatpush1.msra.mxu0 0.0
    %3687 = vmatprep.subr.mxu0 0.0
    %3688 = vmatpush1.msra.mxu0 0.0
    %3689 = vmatprep.subr.mxu0 0.0
    %3690 = vmatpush1.msra.mxu0 0.0
    %3691 = vmatprep.subr.mxu0 0.0
    %3692 = vmatpush1.msra.mxu0 0.0
    %3693 = vmatprep.subr.mxu0 0.0
    %3694 = vmatpush1.msra.mxu0 0.0
    %3695 = vmatprep.subr.mxu0 0.0
    %3696 = vmatpush1.msra.mxu0 0.0
    %3697 = vmatprep.subr.mxu0 0.0
    %3698 = vmatpush1.msra.mxu0 0.0
    %3699 = vmatprep.subr.mxu0 0.0
    %3700 = vmatpush1.msra.mxu0 0.0
    %3701 = vmatprep.subr.mxu0 0.0
    %3702 = vmatpush1.msra.mxu0 0.0
    %3703 = vmatprep.subr.mxu0 0.0
    %3704 = vmatpush1.msra.mxu0 0.0
    %3705 = vmatprep.subr.mxu0 0.0
    %3706 = vmatpush1.msra.mxu0 0.0
    %3707 = vmatprep.subr.mxu0 0.0
    %3708 = vmatpush1.msra.mxu0 0.0
    %3709 = vmatprep.subr.mxu0 0.0
    %3710 = vmatpush1.msra.mxu0 0.0
    %3711 = vmatprep.subr.mxu0 0.0
    %3712 = vmatpush1.msra.mxu0 0.0
    %3713 = vmatprep.subr.mxu0 0.0
    %3714 = vmatpush1.msra.mxu0 0.0
    %3715 = vmatprep.subr.mxu0 0.0
    %3716 = vmatpush1.msra.mxu0 0.0
    %3717 = vmatprep.subr.mxu0 0.0
    %3718 = vmatpush1.msra.mxu0 0.0
    %3719 = vmatprep.subr.mxu0 0.0
    %3720 = vmatpush1.msra.mxu0 0.0
    %3721 = vmatprep.subr.mxu0 0.0
    %3722 = vmatpush1.msra.mxu0 0.0
    %3723 = vmatprep.subr.mxu0 0.0
    %3724 = vmatpush1.msra.mxu0 0.0
    %3725 = vmatprep.subr.mxu0 0.0
    %3726 = vmatpush1.msra.mxu0 0.0
    %3727 = vmatprep.subr.mxu0 0.0
    %3728 = vmatpush1.msra.mxu0 0.0
    %3729 = vmatprep.mubr.f32.mxu0 0.0
    %3730 = vmatmul.mubr.f32.gmra.mrb[0].mxu0 %v3663
    %v3731 = vpop.f32.mrb[0].mxu0
    %v3732 = vadd.f32 0.0, %v3731
    %v3733 = vpop.f32.mrb[0].mxu0
    %3734 = vdwg.mxu0
    %v3735 = vld [vmem:[%s8] sm:$0xff]
    %v3736 = vld [vmem:[%s8 + $0x8] sm:$0xff]
    %v3737 = vld [vmem:[%s8 + $0x10] sm:$0xff]
    %v3738 = vld [vmem:[%s8 + $0x18] sm:$0xff]
    %v3739 = vld [vmem:[#allocation2] sm:$0xff]
    %v3740 = vld [vmem:[#allocation12] sm:$0xff]
    %v3741 = vld [vmem:[#allocation12 + $0x8] sm:$0xff]
    %v3742 = vld [vmem:[#allocation12 + $0x10] sm:$0xff]
    %v3743 = vld [vmem:[#allocation12 + $0x18] sm:$0xff]
    %v3745 = vsel %vm126, %v3739, 0
    %3747 = vmatprep.subr.mxu0 0.0
    %3748 = vmatpush1.msra.mxu0 %v3740
    %3749 = vmatprep.subr.mxu0 0.0
    %3750 = vmatpush1.msra.mxu0 %v3741
    %3751 = vmatprep.subr.mxu0 0.0
    %3752 = vmatpush1.msra.mxu0 %v3742
    %3753 = vmatprep.subr.mxu0 0.0
    %3754 = vmatpush1.msra.mxu0 %v3743
    %3755 = vmatprep.subr.mxu0 0.0
    %3756 = vmatpush1.msra.mxu0 0.0
    %3757 = vmatprep.subr.mxu0 0.0
    %3758 = vmatpush1.msra.mxu0 0.0
    %3759 = vmatprep.subr.mxu0 0.0
    %3760 = vmatpush1.msra.mxu0 0.0
    %3761 = vmatprep.subr.mxu0 0.0
    %3762 = vmatpush1.msra.mxu0 0.0
    %3763 = vmatprep.subr.mxu0 0.0
    %3764 = vmatpush1.msra.mxu0 0.0
    %3765 = vmatprep.subr.mxu0 0.0
    %3766 = vmatpush1.msra.mxu0 0.0
    %3767 = vmatprep.subr.mxu0 0.0
    %3768 = vmatpush1.msra.mxu0 0.0
    %3769 = vmatprep.subr.mxu0 0.0
    %3770 = vmatpush1.msra.mxu0 0.0
    %3771 = vmatprep.subr.mxu0 0.0
    %3772 = vmatpush1.msra.mxu0 0.0
    %3773 = vmatprep.subr.mxu0 0.0
    %3774 = vmatpush1.msra.mxu0 0.0
    %3775 = vmatprep.subr.mxu0 0.0
    %3776 = vmatpush1.msra.mxu0 0.0
    %3777 = vmatprep.subr.mxu0 0.0
    %3778 = vmatpush1.msra.mxu0 0.0
    %3779 = vmatprep.subr.mxu0 0.0
    %3780 = vmatpush1.msra.mxu0 0.0
    %3781 = vmatprep.subr.mxu0 0.0
    %3782 = vmatpush1.msra.mxu0 0.0
    %3783 = vmatprep.subr.mxu0 0.0
    %3784 = vmatpush1.msra.mxu0 0.0
    %3785 = vmatprep.subr.mxu0 0.0
    %3786 = vmatpush1.msra.mxu0 0.0
    %3787 = vmatprep.subr.mxu0 0.0
    %3788 = vmatpush1.msra.mxu0 0.0
    %3789 = vmatprep.subr.mxu0 0.0
    %3790 = vmatpush1.msra.mxu0 0.0
    %3791 = vmatprep.subr.mxu0 0.0
    %3792 = vmatpush1.msra.mxu0 0.0
    %3793 = vmatprep.subr.mxu0 0.0
    %3794 = vmatpush1.msra.mxu0 0.0
    %3795 = vmatprep.subr.mxu0 0.0
    %3796 = vmatpush1.msra.mxu0 0.0
    %3797 = vmatprep.subr.mxu0 0.0
    %3798 = vmatpush1.msra.mxu0 0.0
    %3799 = vmatprep.subr.mxu0 0.0
    %3800 = vmatpush1.msra.mxu0 0.0
    %3801 = vmatprep.subr.mxu0 0.0
    %3802 = vmatpush1.msra.mxu0 0.0
    %3803 = vmatprep.subr.mxu0 0.0
    %3804 = vmatpush1.msra.mxu0 0.0
    %3805 = vmatprep.subr.mxu0 0.0
    %3806 = vmatpush1.msra.mxu0 0.0
    %3807 = vmatprep.subr.mxu0 0.0
    %3808 = vmatpush1.msra.mxu0 0.0
    %3809 = vmatprep.subr.mxu0 0.0
    %3810 = vmatpush1.msra.mxu0 0.0
    %3811 = vmatprep.mubr.f32.mxu0 0.0
    %3812 = vmatmul.mubr.f32.gmra.mrb[0].mxu0 %v3745
    %v3813 = vpop.f32.mrb[0].mxu0
    %v3814 = vadd.f32 0.0, %v3813
    %v3815 = vpop.f32.mrb[0].mxu0
    %3816 = vdwg.mxu0
    %v3818 = vsel %vm126, %v3732, 0
    %3820 = vmatprep.subr.mxu0 0.0
    %3821 = vmatpush1.msra.mxu0 %v3735
    %3822 = vmatprep.subr.mxu0 0.0
    %3823 = vmatpush1.msra.mxu0 %v3736
    %3824 = vmatprep.subr.mxu0 0.0
    %3825 = vmatpush1.msra.mxu0 %v3737
    %3826 = vmatprep.subr.mxu0 0.0
    %3827 = vmatpush1.msra.mxu0 %v3738
    %3828 = vmatprep.subr.mxu0 0.0
    %3829 = vmatpush1.msra.mxu0 0.0
    %3830 = vmatprep.subr.mxu0 0.0
    %3831 = vmatpush1.msra.mxu0 0.0
    %3832 = vmatprep.subr.mxu0 0.0
    %3833 = vmatpush1.msra.mxu0 0.0
    %3834 = vmatprep.subr.mxu0 0.0
    %3835 = vmatpush1.msra.mxu0 0.0
    %3836 = vmatprep.subr.mxu0 0.0
    %3837 = vmatpush1.msra.mxu0 0.0
    %3838 = vmatprep.subr.mxu0 0.0
    %3839 = vmatpush1.msra.mxu0 0.0
    %3840 = vmatprep.subr.mxu0 0.0
    %3841 = vmatpush1.msra.mxu0 0.0
    %3842 = vmatprep.subr.mxu0 0.0
    %3843 = vmatpush1.msra.mxu0 0.0
    %3844 = vmatprep.subr.mxu0 0.0
    %3845 = vmatpush1.msra.mxu0 0.0
    %3846 = vmatprep.subr.mxu0 0.0
    %3847 = vmatpush1.msra.mxu0 0.0
    %3848 = vmatprep.subr.mxu0 0.0
    %3849 = vmatpush1.msra.mxu0 0.0
    %3850 = vmatprep.subr.mxu0 0.0
    %3851 = vmatpush1.msra.mxu0 0.0
    %3852 = vmatprep.subr.mxu0 0.0
    %3853 = vmatpush1.msra.mxu0 0.0
    %3854 = vmatprep.subr.mxu0 0.0
    %3855 = vmatpush1.msra.mxu0 0.0
    %3856 = vmatprep.subr.mxu0 0.0
    %3857 = vmatpush1.msra.mxu0 0.0
    %3858 = vmatprep.subr.mxu0 0.0
    %3859 = vmatpush1.msra.mxu0 0.0
    %3860 = vmatprep.subr.mxu0 0.0
    %3861 = vmatpush1.msra.mxu0 0.0
    %3862 = vmatprep.subr.mxu0 0.0
    %3863 = vmatpush1.msra.mxu0 0.0
    %3864 = vmatprep.subr.mxu0 0.0
    %3865 = vmatpush1.msra.mxu0 0.0
    %3866 = vmatprep.subr.mxu0 0.0
    %3867 = vmatpush1.msra.mxu0 0.0
    %3868 = vmatprep.subr.mxu0 0.0
    %3869 = vmatpush1.msra.mxu0 0.0
    %3870 = vmatprep.subr.mxu0 0.0
    %3871 = vmatpush1.msra.mxu0 0.0
    %3872 = vmatprep.subr.mxu0 0.0
    %3873 = vmatpush1.msra.mxu0 0.0
    %3874 = vmatprep.subr.mxu0 0.0
    %3875 = vmatpush1.msra.mxu0 0.0
    %3876 = vmatprep.subr.mxu0 0.0
    %3877 = vmatpush1.msra.mxu0 0.0
    %3878 = vmatprep.subr.mxu0 0.0
    %3879 = vmatpush1.msra.mxu0 0.0
    %3880 = vmatprep.subr.mxu0 0.0
    %3881 = vmatpush1.msra.mxu0 0.0
    %3882 = vmatprep.subr.mxu0 0.0
    %3883 = vmatpush1.msra.mxu0 0.0
    %3884 = vmatprep.mubr.f32.mxu0 0.0
    %3885 = vmatmul.mubr.f32.gmra.mrb[0].mxu0 %v3818
    %v3886 = vpop.f32.mrb[0].mxu0
    %v3887 = vadd.f32 %v3814, %v3886
    %v3888 = vpop.f32.mrb[0].mxu0
    %3889 = vdwg.mxu0
    %v3890 = vld [vmem:[#allocation13] sm:$0x1]
    %v3892 = vlaneseq
    %v3893 = vshrl.u32 %v3892, 7
    %v3894 = vsub.s32 0, %v3893
    %v3895 = vrot.slane %v3890, %v3894
    %v3897 = vadd.f32 %v3887, %v3895
    %v3898 = vxor.u32 %v3897, 2147483648
    %v3899 = vmul.f32 %v3898, 1.442695
    %v3900 = vpow.pop %v3899
    %v3901 = vadd.f32 %v3900, 1.0
    %v3902 = vrcp.pop %v3901
    %v3903 = vmul.f32 1.0, %v3902
    %v3904 = vtanh.pop %v3897
    %v3905 = vld [vmem:[#allocation3] sm:$0xff]
    %3907 = vrot.lane.b32.xlu0 %v3905, 32
    %v3908 = vpop.permute.xlu0 %3907
    %v3910 = vmul.f32 %v3903, %v3908
    %3912 = vrot.lane.b32.xlu0 %v3904, 64
    %v3913 = vpop.permute.xlu0 %3912
    %v3915 = vmul.f32 %v3903, %v3913
    %3917 = vrot.lane.b32.xlu0 %v3915, 32
    %v3918 = vpop.permute.xlu0 %3917
    %v3920 = vadd.f32 %v3910, %v3918
    %v3921 = vtanh.pop %v3920
    %3923 = vrot.lane.b32.xlu0 %v3921, 64
    %v3924 = vpop.permute.xlu0 %3923
    %v3926 = vmul.f32 %v3903, %v3924
    %3928 = vrot.lane.b32.xlu0 %v3920, 96
    %v3929 = vpop.permute.xlu0 %3928
    %3931 = vst.msk [vmem:[#allocation3] sm:$0xff] %vm126, %v3929
    %3933 = vrot.lane.b32.xlu0 %v3926, 32
    %v3934 = vpop.permute.xlu0 %3933
    %3936 = vst.msk [vmem:[#allocation2] sm:$0xff] %vm126, %v3934
    %v3937 = vld [vmem:[%s3343] sm:$0xff]
    %v3938 = vld [vmem:[%s3343 + $0x8] sm:$0xff]
    %v3939 = vld [vmem:[%s3343 + $0x10] sm:$0xff]
    %v3940 = vld [vmem:[%s3343 + $0x18] sm:$0xff]
    %v3941 = vld [vmem:[%s425] sm:$0xff]
    %v3942 = vld [vmem:[%s3349] sm:$0xff]
    %v3943 = vld [vmem:[%s3349 + $0x8] sm:$0xff]
    %v3944 = vld [vmem:[%s3349 + $0x10] sm:$0xff]
    %v3945 = vld [vmem:[%s3349 + $0x18] sm:$0xff]
    %v3947 = vsel %vm126, %v3941, 0
    %3949 = vmatprep.subr.mxu0 0.0
    %3950 = vmatpush1.msra.mxu0 %v3942
    %3951 = vmatprep.subr.mxu0 0.0
    %3952 = vmatpush1.msra.mxu0 %v3943
    %3953 = vmatprep.subr.mxu0 0.0
    %3954 = vmatpush1.msra.mxu0 %v3944
    %3955 = vmatprep.subr.mxu0 0.0
    %3956 = vmatpush1.msra.mxu0 %v3945
    %3957 = vmatprep.subr.mxu0 0.0
    %3958 = vmatpush1.msra.mxu0 0.0
    %3959 = vmatprep.subr.mxu0 0.0
    %3960 = vmatpush1.msra.mxu0 0.0
    %3961 = vmatprep.subr.mxu0 0.0
    %3962 = vmatpush1.msra.mxu0 0.0
    %3963 = vmatprep.subr.mxu0 0.0
    %3964 = vmatpush1.msra.mxu0 0.0
    %3965 = vmatprep.subr.mxu0 0.0
    %3966 = vmatpush1.msra.mxu0 0.0
    %3967 = vmatprep.subr.mxu0 0.0
    %3968 = vmatpush1.msra.mxu0 0.0
    %3969 = vmatprep.subr.mxu0 0.0
    %3970 = vmatpush1.msra.mxu0 0.0
    %3971 = vmatprep.subr.mxu0 0.0
    %3972 = vmatpush1.msra.mxu0 0.0
    %3973 = vmatprep.subr.mxu0 0.0
    %3974 = vmatpush1.msra.mxu0 0.0
    %3975 = vmatprep.subr.mxu0 0.0
    %3976 = vmatpush1.msra.mxu0 0.0
    %3977 = vmatprep.subr.mxu0 0.0
    %3978 = vmatpush1.msra.mxu0 0.0
    %3979 = vmatprep.subr.mxu0 0.0
    %3980 = vmatpush1.msra.mxu0 0.0
    %3981 = vmatprep.subr.mxu0 0.0
    %3982 = vmatpush1.msra.mxu0 0.0
    %3983 = vmatprep.subr.mxu0 0.0
    %3984 = vmatpush1.msra.mxu0 0.0
    %3985 = vmatprep.subr.mxu0 0.0
    %3986 = vmatpush1.msra.mxu0 0.0
    %3987 = vmatprep.subr.mxu0 0.0
    %3988 = vmatpush1.msra.mxu0 0.0
    %3989 = vmatprep.subr.mxu0 0.0
    %3990 = vmatpush1.msra.mxu0 0.0
    %3991 = vmatprep.subr.mxu0 0.0
    %3992 = vmatpush1.msra.mxu0 0.0
    %3993 = vmatprep.subr.mxu0 0.0
    %3994 = vmatpush1.msra.mxu0 0.0
    %3995 = vmatprep.subr.mxu0 0.0
    %3996 = vmatpush1.msra.mxu0 0.0
    %3997 = vmatprep.subr.mxu0 0.0
    %3998 = vmatpush1.msra.mxu0 0.0
    %3999 = vmatprep.subr.mxu0 0.0
    %4000 = vmatpush1.msra.mxu0 0.0
    %4001 = vmatprep.subr.mxu0 0.0
    %4002 = vmatpush1.msra.mxu0 0.0
    %4003 = vmatprep.subr.mxu0 0.0
    %4004 = vmatpush1.msra.mxu0 0.0
    %4005 = vmatprep.subr.mxu0 0.0
    %4006 = vmatpush1.msra.mxu0 0.0
    %4007 = vmatprep.subr.mxu0 0.0
    %4008 = vmatpush1.msra.mxu0 0.0
    %4009 = vmatprep.subr.mxu0 0.0
    %4010 = vmatpush1.msra.mxu0 0.0
    %4011 = vmatprep.subr.mxu0 0.0
    %4012 = vmatpush1.msra.mxu0 0.0
    %4013 = vmatprep.mubr.f32.mxu0 0.0
    %4014 = vmatmul.mubr.f32.gmra.mrb[0].mxu0 %v3947
    %v4015 = vpop.f32.mrb[0].mxu0
    %v4016 = vadd.f32 0.0, %v4015
    %v4017 = vpop.f32.mrb[0].mxu0
    %4018 = vdwg.mxu0
    %v4019 = vsel %vm126, %v3934, 0
    %4021 = vmatprep.subr.mxu0 0.0
    %4022 = vmatpush1.msra.mxu0 %v3937
    %4023 = vmatprep.subr.mxu0 0.0
    %4024 = vmatpush1.msra.mxu0 %v3938
    %4025 = vmatprep.subr.mxu0 0.0
    %4026 = vmatpush1.msra.mxu0 %v3939
    %4027 = vmatprep.subr.mxu0 0.0
    %4028 = vmatpush1.msra.mxu0 %v3940
    %4029 = vmatprep.subr.mxu0 0.0
    %4030 = vmatpush1.msra.mxu0 0.0
    %4031 = vmatprep.subr.mxu0 0.0
    %4032 = vmatpush1.msra.mxu0 0.0
    %4033 = vmatprep.subr.mxu0 0.0
    %4034 = vmatpush1.msra.mxu0 0.0
    %4035 = vmatprep.subr.mxu0 0.0
    %4036 = vmatpush1.msra.mxu0 0.0
    %4037 = vmatprep.subr.mxu0 0.0
    %4038 = vmatpush1.msra.mxu0 0.0
    %4039 = vmatprep.subr.mxu0 0.0
    %4040 = vmatpush1.msra.mxu0 0.0
    %4041 = vmatprep.subr.mxu0 0.0
    %4042 = vmatpush1.msra.mxu0 0.0
    %4043 = vmatprep.subr.mxu0 0.0
    %4044 = vmatpush1.msra.mxu0 0.0
    %4045 = vmatprep.subr.mxu0 0.0
    %4046 = vmatpush1.msra.mxu0 0.0
    %4047 = vmatprep.subr.mxu0 0.0
    %4048 = vmatpush1.msra.mxu0 0.0
    %4049 = vmatprep.subr.mxu0 0.0
    %4050 = vmatpush1.msra.mxu0 0.0
    %4051 = vmatprep.subr.mxu0 0.0
    %4052 = vmatpush1.msra.mxu0 0.0
    %4053 = vmatprep.subr.mxu0 0.0
    %4054 = vmatpush1.msra.mxu0 0.0
    %4055 = vmatprep.subr.mxu0 0.0
    %4056 = vmatpush1.msra.mxu0 0.0
    %4057 = vmatprep.subr.mxu0 0.0
    %4058 = vmatpush1.msra.mxu0 0.0
    %4059 = vmatprep.subr.mxu0 0.0
    %4060 = vmatpush1.msra.mxu0 0.0
    %4061 = vmatprep.subr.mxu0 0.0
    %4062 = vmatpush1.msra.mxu0 0.0
    %4063 = vmatprep.subr.mxu0 0.0
    %4064 = vmatpush1.msra.mxu0 0.0
    %4065 = vmatprep.subr.mxu0 0.0
    %4066 = vmatpush1.msra.mxu0 0.0
    %4067 = vmatprep.subr.mxu0 0.0
    %4068 = vmatpush1.msra.mxu0 0.0
    %4069 = vmatprep.subr.mxu0 0.0
    %4070 = vmatpush1.msra.mxu0 0.0
    %4071 = vmatprep.subr.mxu0 0.0
    %4072 = vmatpush1.msra.mxu0 0.0
    %4073 = vmatprep.subr.mxu0 0.0
    %4074 = vmatpush1.msra.mxu0 0.0
    %4075 = vmatprep.subr.mxu0 0.0
    %4076 = vmatpush1.msra.mxu0 0.0
    %4077 = vmatprep.subr.mxu0 0.0
    %4078 = vmatpush1.msra.mxu0 0.0
    %4079 = vmatprep.subr.mxu0 0.0
    %4080 = vmatpush1.msra.mxu0 0.0
    %4081 = vmatprep.subr.mxu0 0.0
    %4082 = vmatpush1.msra.mxu0 0.0
    %4083 = vmatprep.subr.mxu0 0.0
    %4084 = vmatpush1.msra.mxu0 0.0
    %4085 = vmatprep.mubr.f32.mxu0 0.0
    %4086 = vmatmul.mubr.f32.gmra.mrb[0].mxu0 %v4019
    %v4087 = vpop.f32.mrb[0].mxu0
    %v4088 = vadd.f32 %v4016, %v4087
    %v4089 = vpop.f32.mrb[0].mxu0
    %4090 = vdwg.mxu0
    %v4091 = vld [vmem:[%s3499] sm:$0x1]
    %v4093 = vlaneseq
    %v4094 = vshrl.u32 %v4093, 7
    %v4095 = vsub.s32 0, %v4094
    %v4096 = vrot.slane %v4091, %v4095
    %v4098 = vadd.f32 %v4088, %v4096
    %v4099 = vxor.u32 %v4098, 2147483648
    %v4100 = vmul.f32 %v4099, 1.442695
    %v4101 = vpow.pop %v4100
    %v4102 = vadd.f32 %v4101, 1.0
    %v4103 = vrcp.pop %v4102
    %v4104 = vmul.f32 1.0, %v4103
    %v4105 = vtanh.pop %v4098
    %v4106 = vld [vmem:[%s593] sm:$0xff]
    %4108 = vrot.lane.b32.xlu0 %v4106, 32
    %v4109 = vpop.permute.xlu0 %4108
    %v4111 = vmul.f32 %v4104, %v4109
    %4113 = vrot.lane.b32.xlu0 %v4105, 64
    %v4114 = vpop.permute.xlu0 %4113
    %v4116 = vmul.f32 %v4104, %v4114
    %4118 = vrot.lane.b32.xlu0 %v4116, 32
    %v4119 = vpop.permute.xlu0 %4118
    %v4121 = vadd.f32 %v4111, %v4119
    %v4122 = vtanh.pop %v4121
    %4124 = vrot.lane.b32.xlu0 %v4122, 64
    %v4125 = vpop.permute.xlu0 %4124
    %v4127 = vmul.f32 %v4104, %v4125
    %4129 = vrot.lane.b32.xlu0 %v4121, 96
    %v4130 = vpop.permute.xlu0 %4129
    %4132 = vst.msk [vmem:[%s593] sm:$0xff] %vm126, %v4130
    %4134 = vrot.lane.b32.xlu0 %v4127, 32
    %v4135 = vpop.permute.xlu0 %4134
    %4137 = vst.msk [vmem:[%s425] sm:$0xff] %vm126, %v4135
    %v4138 = vld [vmem:[#allocation15] sm:$0xff]
    %v4139 = vld [vmem:[#allocation15 + $0x8] sm:$0xff]
    %v4140 = vld [vmem:[#allocation15 + $0x10] sm:$0xff]
    %v4141 = vld [vmem:[#allocation15 + $0x18] sm:$0xff]
    %v4142 = vld [vmem:[%s12] sm:$0x1]
    %v4144 = vlaneseq
    %v4145 = vshrl.u32 %v4144, 7
    %v4146 = vsub.s32 0, %v4145
    %v4147 = vrot.slane %v4142, %v4146
    %v4149 = vsel %vm126, %v4135, 0
    %4151 = vmatprep.subr.mxu0 0.0
    %4152 = vmatpush1.msra.mxu0 %v4138
    %4153 = vmatprep.subr.mxu0 0.0
    %4154 = vmatpush1.msra.mxu0 %v4139
    %4155 = vmatprep.subr.mxu0 0.0
    %4156 = vmatpush1.msra.mxu0 %v4140
    %4157 = vmatprep.subr.mxu0 0.0
    %4158 = vmatpush1.msra.mxu0 %v4141
    %4159 = vmatprep.subr.mxu0 0.0
    %4160 = vmatpush1.msra.mxu0 0.0
    %4161 = vmatprep.subr.mxu0 0.0
    %4162 = vmatpush1.msra.mxu0 0.0
    %4163 = vmatprep.subr.mxu0 0.0
    %4164 = vmatpush1.msra.mxu0 0.0
    %4165 = vmatprep.subr.mxu0 0.0
    %4166 = vmatpush1.msra.mxu0 0.0
    %4167 = vmatprep.subr.mxu0 0.0
    %4168 = vmatpush1.msra.mxu0 0.0
    %4169 = vmatprep.subr.mxu0 0.0
    %4170 = vmatpush1.msra.mxu0 0.0
    %4171 = vmatprep.subr.mxu0 0.0
    %4172 = vmatpush1.msra.mxu0 0.0
    %4173 = vmatprep.subr.mxu0 0.0
    %4174 = vmatpush1.msra.mxu0 0.0
    %4175 = vmatprep.subr.mxu0 0.0
    %4176 = vmatpush1.msra.mxu0 0.0
    %4177 = vmatprep.subr.mxu0 0.0
    %4178 = vmatpush1.msra.mxu0 0.0
    %4179 = vmatprep.subr.mxu0 0.0
    %4180 = vmatpush1.msra.mxu0 0.0
    %4181 = vmatprep.subr.mxu0 0.0
    %4182 = vmatpush1.msra.mxu0 0.0
    %4183 = vmatprep.subr.mxu0 0.0
    %4184 = vmatpush1.msra.mxu0 0.0
    %4185 = vmatprep.subr.mxu0 0.0
    %4186 = vmatpush1.msra.mxu0 0.0
    %4187 = vmatprep.subr.mxu0 0.0
    %4188 = vmatpush1.msra.mxu0 0.0
    %4189 = vmatprep.subr.mxu0 0.0
    %4190 = vmatpush1.msra.mxu0 0.0
    %4191 = vmatprep.subr.mxu0 0.0
    %4192 = vmatpush1.msra.mxu0 0.0
    %4193 = vmatprep.subr.mxu0 0.0
    %4194 = vmatpush1.msra.mxu0 0.0
    %4195 = vmatprep.subr.mxu0 0.0
    %4196 = vmatpush1.msra.mxu0 0.0
    %4197 = vmatprep.subr.mxu0 0.0
    %4198 = vmatpush1.msra.mxu0 0.0
    %4199 = vmatprep.subr.mxu0 0.0
    %4200 = vmatpush1.msra.mxu0 0.0
    %4201 = vmatprep.subr.mxu0 0.0
    %4202 = vmatpush1.msra.mxu0 0.0
    %4203 = vmatprep.subr.mxu0 0.0
    %4204 = vmatpush1.msra.mxu0 0.0
    %4205 = vmatprep.subr.mxu0 0.0
    %4206 = vmatpush1.msra.mxu0 0.0
    %4207 = vmatprep.subr.mxu0 0.0
    %4208 = vmatpush1.msra.mxu0 0.0
    %4209 = vmatprep.subr.mxu0 0.0
    %4210 = vmatpush1.msra.mxu0 0.0
    %4211 = vmatprep.subr.mxu0 0.0
    %4212 = vmatpush1.msra.mxu0 0.0
    %4213 = vmatprep.subr.mxu0 0.0
    %4214 = vmatpush1.msra.mxu0 0.0
    %4215 = vmatprep.mubr.f32.mxu0 0.0
    %4216 = vmatmul.mubr.f32.gmra.mrb[0].mxu0 %v4149
    %v4217 = vpop.f32.mrb[0].mxu0
    %v4218 = vadd.f32 %v4147, %v4217
    %v4219 = vpop.f32.mrb[0].mxu0
    %4220 = vdwg.mxu0
    %s4221 = scalar_lea.vmem [#allocation16], 16
    %4222 = vst [vmem:[%s4221] sm:$0xff] %v4218
    %s4223 = sld [smem:[#allocation5 + $0x2]]
    %p4224 = scmp.gt.s32.totalorder %s4223, 0
    // Predicated region
    $region86: #{_forward_padded.1} parent=1 // pred_check
      %p4225 = pneg %p4224
    $region87: #{_forward_padded.1} parent=1 // pred_check_branch
      %4227 = sbr.rel (%p4225) target = $region89
    $region88: #{_forward_padded.1} parent=1 // pred_region
      %s4228 = scalar_lea.vmem %s2, 16
      %v4229 = vld [vmem:[%s4228] sm:$0xff]
      %4230 = vst.msk [vmem:[#allocation4] sm:$0xff] %vm3057, %v4229
    $region89: #{_forward_padded.1} parent=1 // pred_fallthru
      _
    %s4231 = sld [smem:[#allocation5 + $0x2]]
    %p4232 = scmp.eq.s32.totalorder %s4231, 0
    // Predicated region
    $region90: #{_forward_padded.1} parent=1 // pred_check
      %p4233 = pneg %p4232
    $region91: #{_forward_padded.1} parent=1 // pred_check_branch
      %4235 = sbr.rel (%p4233) target = $region93
    $region92: #{_forward_padded.1} parent=1 // pred_region
      %4236 = vmax.xlane.f32.xlu0 %v4218
      %v4237 = vpop.xlane.xlu0 %4236
      %vm4238 = vcmp.eq.f32.partialorder %v4218, %v4237
      %v4239 = vsel %vm4238, %v134, 128.0
      %4240 = vmin.xlane.f32.xlu0 %v4239
      %v4241 = vpop.xlane.xlu0 %4240
      %v4242 = vcvt.f32.s32.to.zero.pseudo %v4241
      %4243 = vst.msk [vmem:[#allocation4] sm:$0xff] %vm3057, %v4242
    $region93: #{_forward_padded.1} parent=1 // pred_fallthru
      _
    %v4244 = vld [vmem:[#allocation4] sm:$0xff]
    %4245 = vset.pattern.permute.xlu0 0
    %4246 = vperm.xlu0 %4245, %v4244
    %v4247 = vpop.permute.xlu0 %4246
    %vm4248 = vcmp.eq.s32.totalorder %v4247, %v133
    %v4249 = vsel %vm4248, 1, 0
    %v4250 = vcvt.s32.f32 %v4249
    %v4251 = vld [vmem:[#allocation10] sm:$0xff]
    %v4252 = vld [vmem:[#allocation10 + $0x8] sm:$0xff]
    %v4254 = vsel %vm144, %v4250, 0
    %4256 = vmatprep.subr.mxu0 0.0
    %4257 = vmatpush1.msra.mxu0 %v4251
    %4258 = vmatprep.subr.mxu0 0.0
    %4259 = vmatpush1.msra.mxu0 %v4252
    %4260 = vmatprep.subr.mxu0 0.0
    %4261 = vmatpush1.msra.mxu0 0.0
    %4262 = vmatprep.subr.mxu0 0.0
    %4263 = vmatpush1.msra.mxu0 0.0
    %4264 = vmatprep.subr.mxu0 0.0
    %4265 = vmatpush1.msra.mxu0 0.0
    %4266 = vmatprep.subr.mxu0 0.0
    %4267 = vmatpush1.msra.mxu0 0.0
    %4268 = vmatprep.subr.mxu0 0.0
    %4269 = vmatpush1.msra.mxu0 0.0
    %4270 = vmatprep.subr.mxu0 0.0
    %4271 = vmatpush1.msra.mxu0 0.0
    %4272 = vmatprep.subr.mxu0 0.0
    %4273 = vmatpush1.msra.mxu0 0.0
    %4274 = vmatprep.subr.mxu0 0.0
    %4275 = vmatpush1.msra.mxu0 0.0
    %4276 = vmatprep.subr.mxu0 0.0
    %4277 = vmatpush1.msra.mxu0 0.0
    %4278 = vmatprep.subr.mxu0 0.0
    %4279 = vmatpush1.msra.mxu0 0.0
    %4280 = vmatprep.subr.mxu0 0.0
    %4281 = vmatpush1.msra.mxu0 0.0
    %4282 = vmatprep.subr.mxu0 0.0
    %4283 = vmatpush1.msra.mxu0 0.0
    %4284 = vmatprep.subr.mxu0 0.0
    %4285 = vmatpush1.msra.mxu0 0.0
    %4286 = vmatprep.subr.mxu0 0.0
    %4287 = vmatpush1.msra.mxu0 0.0
    %4288 = vmatprep.subr.mxu0 0.0
    %4289 = vmatpush1.msra.mxu0 0.0
    %4290 = vmatprep.subr.mxu0 0.0
    %4291 = vmatpush1.msra.mxu0 0.0
    %4292 = vmatprep.subr.mxu0 0.0
    %4293 = vmatpush1.msra.mxu0 0.0
    %4294 = vmatprep.subr.mxu0 0.0
    %4295 = vmatpush1.msra.mxu0 0.0
    %4296 = vmatprep.subr.mxu0 0.0
    %4297 = vmatpush1.msra.mxu0 0.0
    %4298 = vmatprep.subr.mxu0 0.0
    %4299 = vmatpush1.msra.mxu0 0.0
    %4300 = vmatprep.subr.mxu0 0.0
    %4301 = vmatpush1.msra.mxu0 0.0
    %4302 = vmatprep.subr.mxu0 0.0
    %4303 = vmatpush1.msra.mxu0 0.0
    %4304 = vmatprep.subr.mxu0 0.0
    %4305 = vmatpush1.msra.mxu0 0.0
    %4306 = vmatprep.subr.mxu0 0.0
    %4307 = vmatpush1.msra.mxu0 0.0
    %4308 = vmatprep.subr.mxu0 0.0
    %4309 = vmatpush1.msra.mxu0 0.0
    %4310 = vmatprep.subr.mxu0 0.0
    %4311 = vmatpush1.msra.mxu0 0.0
    %4312 = vmatprep.subr.mxu0 0.0
    %4313 = vmatpush1.msra.mxu0 0.0
    %4314 = vmatprep.subr.mxu0 0.0
    %4315 = vmatpush1.msra.mxu0 0.0
    %4316 = vmatprep.subr.mxu0 0.0
    %4317 = vmatpush1.msra.mxu0 0.0
    %4318 = vmatprep.subr.mxu0 0.0
    %4319 = vmatpush1.msra.mxu0 0.0
    %4320 = vmatprep.mubr.f32.mxu0 0.0
    %4321 = vmatmul.mubr.f32.gmra.mrb[0].mxu0 %v4254
    %v4322 = vpop.f32.mrb[0].mxu0
    %v4323 = vadd.f32 0.0, %v4322
    %v4324 = vpop.f32.mrb[0].mxu0
    %4325 = vdwg.mxu0
    %v4326 = vld [vmem:[%s8] sm:$0xff]
    %v4327 = vld [vmem:[%s8 + $0x8] sm:$0xff]
    %v4328 = vld [vmem:[%s8 + $0x10] sm:$0xff]
    %v4329 = vld [vmem:[%s8 + $0x18] sm:$0xff]
    %v4330 = vld [vmem:[#allocation2] sm:$0xff]
    %v4331 = vld [vmem:[#allocation12] sm:$0xff]
    %v4332 = vld [vmem:[#allocation12 + $0x8] sm:$0xff]
    %v4333 = vld [vmem:[#allocation12 + $0x10] sm:$0xff]
    %v4334 = vld [vmem:[#allocation12 + $0x18] sm:$0xff]
    %v4336 = vsel %vm126, %v4330, 0
    %4338 = vmatprep.subr.mxu0 0.0
    %4339 = vmatpush1.msra.mxu0 %v4331
    %4340 = vmatprep.subr.mxu0 0.0
    %4341 = vmatpush1.msra.mxu0 %v4332
    %4342 = vmatprep.subr.mxu0 0.0
    %4343 = vmatpush1.msra.mxu0 %v4333
    %4344 = vmatprep.subr.mxu0 0.0
    %4345 = vmatpush1.msra.mxu0 %v4334
    %4346 = vmatprep.subr.mxu0 0.0
    %4347 = vmatpush1.msra.mxu0 0.0
    %4348 = vmatprep.subr.mxu0 0.0
    %4349 = vmatpush1.msra.mxu0 0.0
    %4350 = vmatprep.subr.mxu0 0.0
    %4351 = vmatpush1.msra.mxu0 0.0
    %4352 = vmatprep.subr.mxu0 0.0
    %4353 = vmatpush1.msra.mxu0 0.0
    %4354 = vmatprep.subr.mxu0 0.0
    %4355 = vmatpush1.msra.mxu0 0.0
    %4356 = vmatprep.subr.mxu0 0.0
    %4357 = vmatpush1.msra.mxu0 0.0
    %4358 = vmatprep.subr.mxu0 0.0
    %4359 = vmatpush1.msra.mxu0 0.0
    %4360 = vmatprep.subr.mxu0 0.0
    %4361 = vmatpush1.msra.mxu0 0.0
    %4362 = vmatprep.subr.mxu0 0.0
    %4363 = vmatpush1.msra.mxu0 0.0
    %4364 = vmatprep.subr.mxu0 0.0
    %4365 = vmatpush1.msra.mxu0 0.0
    %4366 = vmatprep.subr.mxu0 0.0
    %4367 = vmatpush1.msra.mxu0 0.0
    %4368 = vmatprep.subr.mxu0 0.0
    %4369 = vmatpush1.msra.mxu0 0.0
    %4370 = vmatprep.subr.mxu0 0.0
    %4371 = vmatpush1.msra.mxu0 0.0
    %4372 = vmatprep.subr.mxu0 0.0
    %4373 = vmatpush1.msra.mxu0 0.0
    %4374 = vmatprep.subr.mxu0 0.0
    %4375 = vmatpush1.msra.mxu0 0.0
    %4376 = vmatprep.subr.mxu0 0.0
    %4377 = vmatpush1.msra.mxu0 0.0
    %4378 = vmatprep.subr.mxu0 0.0
    %4379 = vmatpush1.msra.mxu0 0.0
    %4380 = vmatprep.subr.mxu0 0.0
    %4381 = vmatpush1.msra.mxu0 0.0
    %4382 = vmatprep.subr.mxu0 0.0
    %4383 = vmatpush1.msra.mxu0 0.0
    %4384 = vmatprep.subr.mxu0 0.0
    %4385 = vmatpush1.msra.mxu0 0.0
    %4386 = vmatprep.subr.mxu0 0.0
    %4387 = vmatpush1.msra.mxu0 0.0
    %4388 = vmatprep.subr.mxu0 0.0
    %4389 = vmatpush1.msra.mxu0 0.0
    %4390 = vmatprep.subr.mxu0 0.0
    %4391 = vmatpush1.msra.mxu0 0.0
    %4392 = vmatprep.subr.mxu0 0.0
    %4393 = vmatpush1.msra.mxu0 0.0
    %4394 = vmatprep.subr.mxu0 0.0
    %4395 = vmatpush1.msra.mxu0 0.0
    %4396 = vmatprep.subr.mxu0 0.0
    %4397 = vmatpush1.msra.mxu0 0.0
    %4398 = vmatprep.subr.mxu0 0.0
    %4399 = vmatpush1.msra.mxu0 0.0
    %4400 = vmatprep.subr.mxu0 0.0
    %4401 = vmatpush1.msra.mxu0 0.0
    %4402 = vmatprep.mubr.f32.mxu0 0.0
    %4403 = vmatmul.mubr.f32.gmra.mrb[0].mxu0 %v4336
    %v4404 = vpop.f32.mrb[0].mxu0
    %v4405 = vadd.f32 0.0, %v4404
    %v4406 = vpop.f32.mrb[0].mxu0
    %4407 = vdwg.mxu0
    %v4409 = vsel %vm126, %v4323, 0
    %4411 = vmatprep.subr.mxu0 0.0
    %4412 = vmatpush1.msra.mxu0 %v4326
    %4413 = vmatprep.subr.mxu0 0.0
    %4414 = vmatpush1.msra.mxu0 %v4327
    %4415 = vmatprep.subr.mxu0 0.0
    %4416 = vmatpush1.msra.mxu0 %v4328
    %4417 = vmatprep.subr.mxu0 0.0
    %4418 = vmatpush1.msra.mxu0 %v4329
    %4419 = vmatprep.subr.mxu0 0.0
    %4420 = vmatpush1.msra.mxu0 0.0
    %4421 = vmatprep.subr.mxu0 0.0
    %4422 = vmatpush1.msra.mxu0 0.0
    %4423 = vmatprep.subr.mxu0 0.0
    %4424 = vmatpush1.msra.mxu0 0.0
    %4425 = vmatprep.subr.mxu0 0.0
    %4426 = vmatpush1.msra.mxu0 0.0
    %4427 = vmatprep.subr.mxu0 0.0
    %4428 = vmatpush1.msra.mxu0 0.0
    %4429 = vmatprep.subr.mxu0 0.0
    %4430 = vmatpush1.msra.mxu0 0.0
    %4431 = vmatprep.subr.mxu0 0.0
    %4432 = vmatpush1.msra.mxu0 0.0
    %4433 = vmatprep.subr.mxu0 0.0
    %4434 = vmatpush1.msra.mxu0 0.0
    %4435 = vmatprep.subr.mxu0 0.0
    %4436 = vmatpush1.msra.mxu0 0.0
    %4437 = vmatprep.subr.mxu0 0.0
    %4438 = vmatpush1.msra.mxu0 0.0
    %4439 = vmatprep.subr.mxu0 0.0
    %4440 = vmatpush1.msra.mxu0 0.0
    %4441 = vmatprep.subr.mxu0 0.0
    %4442 = vmatpush1.msra.mxu0 0.0
    %4443 = vmatprep.subr.mxu0 0.0
    %4444 = vmatpush1.msra.mxu0 0.0
    %4445 = vmatprep.subr.mxu0 0.0
    %4446 = vmatpush1.msra.mxu0 0.0
    %4447 = vmatprep.subr.mxu0 0.0
    %4448 = vmatpush1.msra.mxu0 0.0
    %4449 = vmatprep.subr.mxu0 0.0
    %4450 = vmatpush1.msra.mxu0 0.0
    %4451 = vmatprep.subr.mxu0 0.0
    %4452 = vmatpush1.msra.mxu0 0.0
    %4453 = vmatprep.subr.mxu0 0.0
    %4454 = vmatpush1.msra.mxu0 0.0
    %4455 = vmatprep.subr.mxu0 0.0
    %4456 = vmatpush1.msra.mxu0 0.0
    %4457 = vmatprep.subr.mxu0 0.0
    %4458 = vmatpush1.msra.mxu0 0.0
    %4459 = vmatprep.subr.mxu0 0.0
    %4460 = vmatpush1.msra.mxu0 0.0
    %4461 = vmatprep.subr.mxu0 0.0
    %4462 = vmatpush1.msra.mxu0 0.0
    %4463 = vmatprep.subr.mxu0 0.0
    %4464 = vmatpush1.msra.mxu0 0.0
    %4465 = vmatprep.subr.mxu0 0.0
    %4466 = vmatpush1.msra.mxu0 0.0
    %4467 = vmatprep.subr.mxu0 0.0
    %4468 = vmatpush1.msra.mxu0 0.0
    %4469 = vmatprep.subr.mxu0 0.0
    %4470 = vmatpush1.msra.mxu0 0.0
    %4471 = vmatprep.subr.mxu0 0.0
    %4472 = vmatpush1.msra.mxu0 0.0
    %4473 = vmatprep.subr.mxu0 0.0
    %4474 = vmatpush1.msra.mxu0 0.0
    %4475 = vmatprep.mubr.f32.mxu0 0.0
    %4476 = vmatmul.mubr.f32.gmra.mrb[0].mxu0 %v4409
    %v4477 = vpop.f32.mrb[0].mxu0
    %v4478 = vadd.f32 %v4405, %v4477
    %v4479 = vpop.f32.mrb[0].mxu0
    %4480 = vdwg.mxu0
    %v4481 = vld [vmem:[#allocation13] sm:$0x1]
    %v4483 = vlaneseq
    %v4484 = vshrl.u32 %v4483, 7
    %v4485 = vsub.s32 0, %v4484
    %v4486 = vrot.slane %v4481, %v4485
    %v4488 = vadd.f32 %v4478, %v4486
    %v4489 = vxor.u32 %v4488, 2147483648
    %v4490 = vmul.f32 %v4489, 1.442695
    %v4491 = vpow.pop %v4490
    %v4492 = vadd.f32 %v4491, 1.0
    %v4493 = vrcp.pop %v4492
    %v4494 = vmul.f32 1.0, %v4493
    %v4495 = vtanh.pop %v4488
    %v4496 = vld [vmem:[#allocation3] sm:$0xff]
    %4498 = vrot.lane.b32.xlu0 %v4496, 32
    %v4499 = vpop.permute.xlu0 %4498
    %v4501 = vmul.f32 %v4494, %v4499
    %4503 = vrot.lane.b32.xlu0 %v4495, 64
    %v4504 = vpop.permute.xlu0 %4503
    %v4506 = vmul.f32 %v4494, %v4504
    %4508 = vrot.lane.b32.xlu0 %v4506, 32
    %v4509 = vpop.permute.xlu0 %4508
    %v4511 = vadd.f32 %v4501, %v4509
    %v4512 = vtanh.pop %v4511
    %4514 = vrot.lane.b32.xlu0 %v4512, 64
    %v4515 = vpop.permute.xlu0 %4514
    %v4517 = vmul.f32 %v4494, %v4515
    %4519 = vrot.lane.b32.xlu0 %v4511, 96
    %v4520 = vpop.permute.xlu0 %4519
    %4522 = vst.msk [vmem:[#allocation3] sm:$0xff] %vm126, %v4520
    %4524 = vrot.lane.b32.xlu0 %v4517, 32
    %v4525 = vpop.permute.xlu0 %4524
    %4527 = vst.msk [vmem:[#allocation2] sm:$0xff] %vm126, %v4525
    %v4528 = vld [vmem:[%s3343] sm:$0xff]
    %v4529 = vld [vmem:[%s3343 + $0x8] sm:$0xff]
    %v4530 = vld [vmem:[%s3343 + $0x10] sm:$0xff]
    %v4531 = vld [vmem:[%s3343 + $0x18] sm:$0xff]
    %v4532 = vld [vmem:[%s425] sm:$0xff]
    %v4533 = vld [vmem:[%s3349] sm:$0xff]
    %v4534 = vld [vmem:[%s3349 + $0x8] sm:$0xff]
    %v4535 = vld [vmem:[%s3349 + $0x10] sm:$0xff]
    %v4536 = vld [vmem:[%s3349 + $0x18] sm:$0xff]
    %v4538 = vsel %vm126, %v4532, 0
    %4540 = vmatprep.subr.mxu0 0.0
    %4541 = vmatpush1.msra.mxu0 %v4533
    %4542 = vmatprep.subr.mxu0 0.0
    %4543 = vmatpush1.msra.mxu0 %v4534
    %4544 = vmatprep.subr.mxu0 0.0
    %4545 = vmatpush1.msra.mxu0 %v4535
    %4546 = vmatprep.subr.mxu0 0.0
    %4547 = vmatpush1.msra.mxu0 %v4536
    %4548 = vmatprep.subr.mxu0 0.0
    %4549 = vmatpush1.msra.mxu0 0.0
    %4550 = vmatprep.subr.mxu0 0.0
    %4551 = vmatpush1.msra.mxu0 0.0
    %4552 = vmatprep.subr.mxu0 0.0
    %4553 = vmatpush1.msra.mxu0 0.0
    %4554 = vmatprep.subr.mxu0 0.0
    %4555 = vmatpush1.msra.mxu0 0.0
    %4556 = vmatprep.subr.mxu0 0.0
    %4557 = vmatpush1.msra.mxu0 0.0
    %4558 = vmatprep.subr.mxu0 0.0
    %4559 = vmatpush1.msra.mxu0 0.0
    %4560 = vmatprep.subr.mxu0 0.0
    %4561 = vmatpush1.msra.mxu0 0.0
    %4562 = vmatprep.subr.mxu0 0.0
    %4563 = vmatpush1.msra.mxu0 0.0
    %4564 = vmatprep.subr.mxu0 0.0
    %4565 = vmatpush1.msra.mxu0 0.0
    %4566 = vmatprep.subr.mxu0 0.0
    %4567 = vmatpush1.msra.mxu0 0.0
    %4568 = vmatprep.subr.mxu0 0.0
    %4569 = vmatpush1.msra.mxu0 0.0
    %4570 = vmatprep.subr.mxu0 0.0
    %4571 = vmatpush1.msra.mxu0 0.0
    %4572 = vmatprep.subr.mxu0 0.0
    %4573 = vmatpush1.msra.mxu0 0.0
    %4574 = vmatprep.subr.mxu0 0.0
    %4575 = vmatpush1.msra.mxu0 0.0
    %4576 = vmatprep.subr.mxu0 0.0
    %4577 = vmatpush1.msra.mxu0 0.0
    %4578 = vmatprep.subr.mxu0 0.0
    %4579 = vmatpush1.msra.mxu0 0.0
    %4580 = vmatprep.subr.mxu0 0.0
    %4581 = vmatpush1.msra.mxu0 0.0
    %4582 = vmatprep.subr.mxu0 0.0
    %4583 = vmatpush1.msra.mxu0 0.0
    %4584 = vmatprep.subr.mxu0 0.0
    %4585 = vmatpush1.msra.mxu0 0.0
    %4586 = vmatprep.subr.mxu0 0.0
    %4587 = vmatpush1.msra.mxu0 0.0
    %4588 = vmatprep.subr.mxu0 0.0
    %4589 = vmatpush1.msra.mxu0 0.0
    %4590 = vmatprep.subr.mxu0 0.0
    %4591 = vmatpush1.msra.mxu0 0.0
    %4592 = vmatprep.subr.mxu0 0.0
    %4593 = vmatpush1.msra.mxu0 0.0
    %4594 = vmatprep.subr.mxu0 0.0
    %4595 = vmatpush1.msra.mxu0 0.0
    %4596 = vmatprep.subr.mxu0 0.0
    %4597 = vmatpush1.msra.mxu0 0.0
    %4598 = vmatprep.subr.mxu0 0.0
    %4599 = vmatpush1.msra.mxu0 0.0
    %4600 = vmatprep.subr.mxu0 0.0
    %4601 = vmatpush1.msra.mxu0 0.0
    %4602 = vmatprep.subr.mxu0 0.0
    %4603 = vmatpush1.msra.mxu0 0.0
    %4604 = vmatprep.mubr.f32.mxu0 0.0
    %4605 = vmatmul.mubr.f32.gmra.mrb[0].mxu0 %v4538
    %v4606 = vpop.f32.mrb[0].mxu0
    %v4607 = vadd.f32 0.0, %v4606
    %v4608 = vpop.f32.mrb[0].mxu0
    %4609 = vdwg.mxu0
    %v4610 = vsel %vm126, %v4525, 0
    %4612 = vmatprep.subr.mxu0 0.0
    %4613 = vmatpush1.msra.mxu0 %v4528
    %4614 = vmatprep.subr.mxu0 0.0
    %4615 = vmatpush1.msra.mxu0 %v4529
    %4616 = vmatprep.subr.mxu0 0.0
    %4617 = vmatpush1.msra.mxu0 %v4530
    %4618 = vmatprep.subr.mxu0 0.0
    %4619 = vmatpush1.msra.mxu0 %v4531
    %4620 = vmatprep.subr.mxu0 0.0
    %4621 = vmatpush1.msra.mxu0 0.0
    %4622 = vmatprep.subr.mxu0 0.0
    %4623 = vmatpush1.msra.mxu0 0.0
    %4624 = vmatprep.subr.mxu0 0.0
    %4625 = vmatpush1.msra.mxu0 0.0
    %4626 = vmatprep.subr.mxu0 0.0
    %4627 = vmatpush1.msra.mxu0 0.0
    %4628 = vmatprep.subr.mxu0 0.0
    %4629 = vmatpush1.msra.mxu0 0.0
    %4630 = vmatprep.subr.mxu0 0.0
    %4631 = vmatpush1.msra.mxu0 0.0
    %4632 = vmatprep.subr.mxu0 0.0
    %4633 = vmatpush1.msra.mxu0 0.0
    %4634 = vmatprep.subr.mxu0 0.0
    %4635 = vmatpush1.msra.mxu0 0.0
    %4636 = vmatprep.subr.mxu0 0.0
    %4637 = vmatpush1.msra.mxu0 0.0
    %4638 = vmatprep.subr.mxu0 0.0
    %4639 = vmatpush1.msra.mxu0 0.0
    %4640 = vmatprep.subr.mxu0 0.0
    %4641 = vmatpush1.msra.mxu0 0.0
    %4642 = vmatprep.subr.mxu0 0.0
    %4643 = vmatpush1.msra.mxu0 0.0
    %4644 = vmatprep.subr.mxu0 0.0
    %4645 = vmatpush1.msra.mxu0 0.0
    %4646 = vmatprep.subr.mxu0 0.0
    %4647 = vmatpush1.msra.mxu0 0.0
    %4648 = vmatprep.subr.mxu0 0.0
    %4649 = vmatpush1.msra.mxu0 0.0
    %4650 = vmatprep.subr.mxu0 0.0
    %4651 = vmatpush1.msra.mxu0 0.0
    %4652 = vmatprep.subr.mxu0 0.0
    %4653 = vmatpush1.msra.mxu0 0.0
    %4654 = vmatprep.subr.mxu0 0.0
    %4655 = vmatpush1.msra.mxu0 0.0
    %4656 = vmatprep.subr.mxu0 0.0
    %4657 = vmatpush1.msra.mxu0 0.0
    %4658 = vmatprep.subr.mxu0 0.0
    %4659 = vmatpush1.msra.mxu0 0.0
    %4660 = vmatprep.subr.mxu0 0.0
    %4661 = vmatpush1.msra.mxu0 0.0
    %4662 = vmatprep.subr.mxu0 0.0
    %4663 = vmatpush1.msra.mxu0 0.0
    %4664 = vmatprep.subr.mxu0 0.0
    %4665 = vmatpush1.msra.mxu0 0.0
    %4666 = vmatprep.subr.mxu0 0.0
    %4667 = vmatpush1.msra.mxu0 0.0
    %4668 = vmatprep.subr.mxu0 0.0
    %4669 = vmatpush1.msra.mxu0 0.0
    %4670 = vmatprep.subr.mxu0 0.0
    %4671 = vmatpush1.msra.mxu0 0.0
    %4672 = vmatprep.subr.mxu0 0.0
    %4673 = vmatpush1.msra.mxu0 0.0
    %4674 = vmatprep.subr.mxu0 0.0
    %4675 = vmatpush1.msra.mxu0 0.0
    %4676 = vmatprep.mubr.f32.mxu0 0.0
    %4677 = vmatmul.mubr.f32.gmra.mrb[0].mxu0 %v4610
    %v4678 = vpop.f32.mrb[0].mxu0
    %v4679 = vadd.f32 %v4607, %v4678
    %v4680 = vpop.f32.mrb[0].mxu0
    %4681 = vdwg.mxu0
    %v4682 = vld [vmem:[%s3499] sm:$0x1]
    %v4684 = vlaneseq
    %v4685 = vshrl.u32 %v4684, 7
    %v4686 = vsub.s32 0, %v4685
    %v4687 = vrot.slane %v4682, %v4686
    %v4689 = vadd.f32 %v4679, %v4687
    %v4690 = vxor.u32 %v4689, 2147483648
    %v4691 = vmul.f32 %v4690, 1.442695
    %v4692 = vpow.pop %v4691
    %v4693 = vadd.f32 %v4692, 1.0
    %v4694 = vrcp.pop %v4693
    %v4695 = vmul.f32 1.0, %v4694
    %v4696 = vtanh.pop %v4689
    %v4697 = vld [vmem:[%s593] sm:$0xff]
    %4699 = vrot.lane.b32.xlu0 %v4697, 32
    %v4700 = vpop.permute.xlu0 %4699
    %v4702 = vmul.f32 %v4695, %v4700
    %4704 = vrot.lane.b32.xlu0 %v4696, 64
    %v4705 = vpop.permute.xlu0 %4704
    %v4707 = vmul.f32 %v4695, %v4705
    %4709 = vrot.lane.b32.xlu0 %v4707, 32
    %v4710 = vpop.permute.xlu0 %4709
    %v4712 = vadd.f32 %v4702, %v4710
    %v4713 = vtanh.pop %v4712
    %4715 = vrot.lane.b32.xlu0 %v4713, 64
    %v4716 = vpop.permute.xlu0 %4715
    %v4718 = vmul.f32 %v4695, %v4716
    %4720 = vrot.lane.b32.xlu0 %v4712, 96
    %v4721 = vpop.permute.xlu0 %4720
    %4723 = vst.msk [vmem:[%s593] sm:$0xff] %vm126, %v4721
    %4725 = vrot.lane.b32.xlu0 %v4718, 32
    %v4726 = vpop.permute.xlu0 %4725
    %4728 = vst.msk [vmem:[%s425] sm:$0xff] %vm126, %v4726
    %v4729 = vld [vmem:[#allocation15] sm:$0xff]
    %v4730 = vld [vmem:[#allocation15 + $0x8] sm:$0xff]
    %v4731 = vld [vmem:[#allocation15 + $0x10] sm:$0xff]
    %v4732 = vld [vmem:[#allocation15 + $0x18] sm:$0xff]
    %v4733 = vld [vmem:[%s12] sm:$0x1]
    %v4735 = vlaneseq
    %v4736 = vshrl.u32 %v4735, 7
    %v4737 = vsub.s32 0, %v4736
    %v4738 = vrot.slane %v4733, %v4737
    %v4740 = vsel %vm126, %v4726, 0
    %4742 = vmatprep.subr.mxu0 0.0
    %4743 = vmatpush1.msra.mxu0 %v4729
    %4744 = vmatprep.subr.mxu0 0.0
    %4745 = vmatpush1.msra.mxu0 %v4730
    %4746 = vmatprep.subr.mxu0 0.0
    %4747 = vmatpush1.msra.mxu0 %v4731
    %4748 = vmatprep.subr.mxu0 0.0
    %4749 = vmatpush1.msra.mxu0 %v4732
    %4750 = vmatprep.subr.mxu0 0.0
    %4751 = vmatpush1.msra.mxu0 0.0
    %4752 = vmatprep.subr.mxu0 0.0
    %4753 = vmatpush1.msra.mxu0 0.0
    %4754 = vmatprep.subr.mxu0 0.0
    %4755 = vmatpush1.msra.mxu0 0.0
    %4756 = vmatprep.subr.mxu0 0.0
    %4757 = vmatpush1.msra.mxu0 0.0
    %4758 = vmatprep.subr.mxu0 0.0
    %4759 = vmatpush1.msra.mxu0 0.0
    %4760 = vmatprep.subr.mxu0 0.0
    %4761 = vmatpush1.msra.mxu0 0.0
    %4762 = vmatprep.subr.mxu0 0.0
    %4763 = vmatpush1.msra.mxu0 0.0
    %4764 = vmatprep.subr.mxu0 0.0
    %4765 = vmatpush1.msra.mxu0 0.0
    %4766 = vmatprep.subr.mxu0 0.0
    %4767 = vmatpush1.msra.mxu0 0.0
    %4768 = vmatprep.subr.mxu0 0.0
    %4769 = vmatpush1.msra.mxu0 0.0
    %4770 = vmatprep.subr.mxu0 0.0
    %4771 = vmatpush1.msra.mxu0 0.0
    %4772 = vmatprep.subr.mxu0 0.0
    %4773 = vmatpush1.msra.mxu0 0.0
    %4774 = vmatprep.subr.mxu0 0.0
    %4775 = vmatpush1.msra.mxu0 0.0
    %4776 = vmatprep.subr.mxu0 0.0
    %4777 = vmatpush1.msra.mxu0 0.0
    %4778 = vmatprep.subr.mxu0 0.0
    %4779 = vmatpush1.msra.mxu0 0.0
    %4780 = vmatprep.subr.mxu0 0.0
    %4781 = vmatpush1.msra.mxu0 0.0
    %4782 = vmatprep.subr.mxu0 0.0
    %4783 = vmatpush1.msra.mxu0 0.0
    %4784 = vmatprep.subr.mxu0 0.0
    %4785 = vmatpush1.msra.mxu0 0.0
    %4786 = vmatprep.subr.mxu0 0.0
    %4787 = vmatpush1.msra.mxu0 0.0
    %4788 = vmatprep.subr.mxu0 0.0
    %4789 = vmatpush1.msra.mxu0 0.0
    %4790 = vmatprep.subr.mxu0 0.0
    %4791 = vmatpush1.msra.mxu0 0.0
    %4792 = vmatprep.subr.mxu0 0.0
    %4793 = vmatpush1.msra.mxu0 0.0
    %4794 = vmatprep.subr.mxu0 0.0
    %4795 = vmatpush1.msra.mxu0 0.0
    %4796 = vmatprep.subr.mxu0 0.0
    %4797 = vmatpush1.msra.mxu0 0.0
    %4798 = vmatprep.subr.mxu0 0.0
    %4799 = vmatpush1.msra.mxu0 0.0
    %4800 = vmatprep.subr.mxu0 0.0
    %4801 = vmatpush1.msra.mxu0 0.0
    %4802 = vmatprep.subr.mxu0 0.0
    %4803 = vmatpush1.msra.mxu0 0.0
    %4804 = vmatprep.subr.mxu0 0.0
    %4805 = vmatpush1.msra.mxu0 0.0
    %4806 = vmatprep.mubr.f32.mxu0 0.0
    %4807 = vmatmul.mubr.f32.gmra.mrb[0].mxu0 %v4740
    %v4808 = vpop.f32.mrb[0].mxu0
    %v4809 = vadd.f32 %v4738, %v4808
    %v4810 = vpop.f32.mrb[0].mxu0
    %4811 = vdwg.mxu0
    %s4812 = scalar_lea.vmem [#allocation16], 24
    %4813 = vst [vmem:[%s4812] sm:$0xff] %v4809
    %s4814 = sld [smem:[#allocation5 + $0x3]]
    %p4815 = scmp.gt.s32.totalorder %s4814, 0
    // Predicated region
    $region94: #{_forward_padded.1} parent=1 // pred_check
      %p4816 = pneg %p4815
    $region95: #{_forward_padded.1} parent=1 // pred_check_branch
      %4818 = sbr.rel (%p4816) target = $region97
    $region96: #{_forward_padded.1} parent=1 // pred_region
      %s4819 = scalar_lea.vmem %s2, 24
      %v4820 = vld [vmem:[%s4819] sm:$0xff]
      %4821 = vst.msk [vmem:[#allocation4] sm:$0xff] %vm3057, %v4820
    $region97: #{_forward_padded.1} parent=1 // pred_fallthru
      _
    %s4822 = sld [smem:[#allocation5 + $0x3]]
    %p4823 = scmp.eq.s32.totalorder %s4822, 0
    // Predicated region
    $region98: #{_forward_padded.1} parent=1 // pred_check
      %p4824 = pneg %p4823
    $region99: #{_forward_padded.1} parent=1 // pred_check_branch
      %4826 = sbr.rel (%p4824) target = $region101
    $region100: #{_forward_padded.1} parent=1 // pred_region
      %4827 = vmax.xlane.f32.xlu0 %v4809
      %v4828 = vpop.xlane.xlu0 %4827
      %vm4829 = vcmp.eq.f32.partialorder %v4809, %v4828
      %v4830 = vsel %vm4829, %v134, 128.0
      %4831 = vmin.xlane.f32.xlu0 %v4830
      %v4832 = vpop.xlane.xlu0 %4831
      %v4833 = vcvt.f32.s32.to.zero.pseudo %v4832
      %4834 = vst.msk [vmem:[#allocation4] sm:$0xff] %vm3057, %v4833
    $region101: #{_forward_padded.1} parent=1 // pred_fallthru
      _
    %v4835 = vld [vmem:[#allocation4] sm:$0xff]
    %4836 = vset.pattern.permute.xlu0 0
    %4837 = vperm.xlu0 %4836, %v4835
    %v4838 = vpop.permute.xlu0 %4837
    %vm4839 = vcmp.eq.s32.totalorder %v4838, %v133
    %v4840 = vsel %vm4839, 1, 0
    %v4841 = vcvt.s32.f32 %v4840
    %v4842 = vld [vmem:[#allocation10] sm:$0xff]
    %v4843 = vld [vmem:[#allocation10 + $0x8] sm:$0xff]
    %v4845 = vsel %vm144, %v4841, 0
    %4847 = vmatprep.subr.mxu0 0.0
    %4848 = vmatpush1.msra.mxu0 %v4842
    %4849 = vmatprep.subr.mxu0 0.0
    %4850 = vmatpush1.msra.mxu0 %v4843
    %4851 = vmatprep.subr.mxu0 0.0
    %4852 = vmatpush1.msra.mxu0 0.0
    %4853 = vmatprep.subr.mxu0 0.0
    %4854 = vmatpush1.msra.mxu0 0.0
    %4855 = vmatprep.subr.mxu0 0.0
    %4856 = vmatpush1.msra.mxu0 0.0
    %4857 = vmatprep.subr.mxu0 0.0
    %4858 = vmatpush1.msra.mxu0 0.0
    %4859 = vmatprep.subr.mxu0 0.0
    %4860 = vmatpush1.msra.mxu0 0.0
    %4861 = vmatprep.subr.mxu0 0.0
    %4862 = vmatpush1.msra.mxu0 0.0
    %4863 = vmatprep.subr.mxu0 0.0
    %4864 = vmatpush1.msra.mxu0 0.0
    %4865 = vmatprep.subr.mxu0 0.0
    %4866 = vmatpush1.msra.mxu0 0.0
    %4867 = vmatprep.subr.mxu0 0.0
    %4868 = vmatpush1.msra.mxu0 0.0
    %4869 = vmatprep.subr.mxu0 0.0
    %4870 = vmatpush1.msra.mxu0 0.0
    %4871 = vmatprep.subr.mxu0 0.0
    %4872 = vmatpush1.msra.mxu0 0.0
    %4873 = vmatprep.subr.mxu0 0.0
    %4874 = vmatpush1.msra.mxu0 0.0
    %4875 = vmatprep.subr.mxu0 0.0
    %4876 = vmatpush1.msra.mxu0 0.0
    %4877 = vmatprep.subr.mxu0 0.0
    %4878 = vmatpush1.msra.mxu0 0.0
    %4879 = vmatprep.subr.mxu0 0.0
    %4880 = vmatpush1.msra.mxu0 0.0
    %4881 = vmatprep.subr.mxu0 0.0
    %4882 = vmatpush1.msra.mxu0 0.0
    %4883 = vmatprep.subr.mxu0 0.0
    %4884 = vmatpush1.msra.mxu0 0.0
    %4885 = vmatprep.subr.mxu0 0.0
    %4886 = vmatpush1.msra.mxu0 0.0
    %4887 = vmatprep.subr.mxu0 0.0
    %4888 = vmatpush1.msra.mxu0 0.0
    %4889 = vmatprep.subr.mxu0 0.0
    %4890 = vmatpush1.msra.mxu0 0.0
    %4891 = vmatprep.subr.mxu0 0.0
    %4892 = vmatpush1.msra.mxu0 0.0
    %4893 = vmatprep.subr.mxu0 0.0
    %4894 = vmatpush1.msra.mxu0 0.0
    %4895 = vmatprep.subr.mxu0 0.0
    %4896 = vmatpush1.msra.mxu0 0.0
    %4897 = vmatprep.subr.mxu0 0.0
    %4898 = vmatpush1.msra.mxu0 0.0
    %4899 = vmatprep.subr.mxu0 0.0
    %4900 = vmatpush1.msra.mxu0 0.0
    %4901 = vmatprep.subr.mxu0 0.0
    %4902 = vmatpush1.msra.mxu0 0.0
    %4903 = vmatprep.subr.mxu0 0.0
    %4904 = vmatpush1.msra.mxu0 0.0
    %4905 = vmatprep.subr.mxu0 0.0
    %4906 = vmatpush1.msra.mxu0 0.0
    %4907 = vmatprep.subr.mxu0 0.0
    %4908 = vmatpush1.msra.mxu0 0.0
    %4909 = vmatprep.subr.mxu0 0.0
    %4910 = vmatpush1.msra.mxu0 0.0
    %4911 = vmatprep.mubr.f32.mxu0 0.0
    %4912 = vmatmul.mubr.f32.gmra.mrb[0].mxu0 %v4845
    %v4913 = vpop.f32.mrb[0].mxu0
    %v4914 = vadd.f32 0.0, %v4913
    %v4915 = vpop.f32.mrb[0].mxu0
    %4916 = vdwg.mxu0
    %v4917 = vld [vmem:[%s8] sm:$0xff]
    %v4918 = vld [vmem:[%s8 + $0x8] sm:$0xff]
    %v4919 = vld [vmem:[%s8 + $0x10] sm:$0xff]
    %v4920 = vld [vmem:[%s8 + $0x18] sm:$0xff]
    %v4921 = vld [vmem:[#allocation2] sm:$0xff]
    %v4922 = vld [vmem:[#allocation12] sm:$0xff]
    %v4923 = vld [vmem:[#allocation12 + $0x8] sm:$0xff]
    %v4924 = vld [vmem:[#allocation12 + $0x10] sm:$0xff]
    %v4925 = vld [vmem:[#allocation12 + $0x18] sm:$0xff]
    %v4927 = vsel %vm126, %v4921, 0
    %4929 = vmatprep.subr.mxu0 0.0
    %4930 = vmatpush1.msra.mxu0 %v4922
    %4931 = vmatprep.subr.mxu0 0.0
    %4932 = vmatpush1.msra.mxu0 %v4923
    %4933 = vmatprep.subr.mxu0 0.0
    %4934 = vmatpush1.msra.mxu0 %v4924
    %4935 = vmatprep.subr.mxu0 0.0
    %4936 = vmatpush1.msra.mxu0 %v4925
    %4937 = vmatprep.subr.mxu0 0.0
    %4938 = vmatpush1.msra.mxu0 0.0
    %4939 = vmatprep.subr.mxu0 0.0
    %4940 = vmatpush1.msra.mxu0 0.0
    %4941 = vmatprep.subr.mxu0 0.0
    %4942 = vmatpush1.msra.mxu0 0.0
    %4943 = vmatprep.subr.mxu0 0.0
    %4944 = vmatpush1.msra.mxu0 0.0
    %4945 = vmatprep.subr.mxu0 0.0
    %4946 = vmatpush1.msra.mxu0 0.0
    %4947 = vmatprep.subr.mxu0 0.0
    %4948 = vmatpush1.msra.mxu0 0.0
    %4949 = vmatprep.subr.mxu0 0.0
    %4950 = vmatpush1.msra.mxu0 0.0
    %4951 = vmatprep.subr.mxu0 0.0
    %4952 = vmatpush1.msra.mxu0 0.0
    %4953 = vmatprep.subr.mxu0 0.0
    %4954 = vmatpush1.msra.mxu0 0.0
    %4955 = vmatprep.subr.mxu0 0.0
    %4956 = vmatpush1.msra.mxu0 0.0
    %4957 = vmatprep.subr.mxu0 0.0
    %4958 = vmatpush1.msra.mxu0 0.0
    %4959 = vmatprep.subr.mxu0 0.0
    %4960 = vmatpush1.msra.mxu0 0.0
    %4961 = vmatprep.subr.mxu0 0.0
    %4962 = vmatpush1.msra.mxu0 0.0
    %4963 = vmatprep.subr.mxu0 0.0
    %4964 = vmatpush1.msra.mxu0 0.0
    %4965 = vmatprep.subr.mxu0 0.0
    %4966 = vmatpush1.msra.mxu0 0.0
    %4967 = vmatprep.subr.mxu0 0.0
    %4968 = vmatpush1.msra.mxu0 0.0
    %4969 = vmatprep.subr.mxu0 0.0
    %4970 = vmatpush1.msra.mxu0 0.0
    %4971 = vmatprep.subr.mxu0 0.0
    %4972 = vmatpush1.msra.mxu0 0.0
    %4973 = vmatprep.subr.mxu0 0.0
    %4974 = vmatpush1.msra.mxu0 0.0
    %4975 = vmatprep.subr.mxu0 0.0
    %4976 = vmatpush1.msra.mxu0 0.0
    %4977 = vmatprep.subr.mxu0 0.0
    %4978 = vmatpush1.msra.mxu0 0.0
    %4979 = vmatprep.subr.mxu0 0.0
    %4980 = vmatpush1.msra.mxu0 0.0
    %4981 = vmatprep.subr.mxu0 0.0
    %4982 = vmatpush1.msra.mxu0 0.0
    %4983 = vmatprep.subr.mxu0 0.0
    %4984 = vmatpush1.msra.mxu0 0.0
    %4985 = vmatprep.subr.mxu0 0.0
    %4986 = vmatpush1.msra.mxu0 0.0
    %4987 = vmatprep.subr.mxu0 0.0
    %4988 = vmatpush1.msra.mxu0 0.0
    %4989 = vmatprep.subr.mxu0 0.0
    %4990 = vmatpush1.msra.mxu0 0.0
    %4991 = vmatprep.subr.mxu0 0.0
    %4992 = vmatpush1.msra.mxu0 0.0
    %4993 = vmatprep.mubr.f32.mxu0 0.0
    %4994 = vmatmul.mubr.f32.gmra.mrb[0].mxu0 %v4927
    %v4995 = vpop.f32.mrb[0].mxu0
    %v4996 = vadd.f32 0.0, %v4995
    %v4997 = vpop.f32.mrb[0].mxu0
    %4998 = vdwg.mxu0
    %v5000 = vsel %vm126, %v4914, 0
    %5002 = vmatprep.subr.mxu0 0.0
    %5003 = vmatpush1.msra.mxu0 %v4917
    %5004 = vmatprep.subr.mxu0 0.0
    %5005 = vmatpush1.msra.mxu0 %v4918
    %5006 = vmatprep.subr.mxu0 0.0
    %5007 = vmatpush1.msra.mxu0 %v4919
    %5008 = vmatprep.subr.mxu0 0.0
    %5009 = vmatpush1.msra.mxu0 %v4920
    %5010 = vmatprep.subr.mxu0 0.0
    %5011 = vmatpush1.msra.mxu0 0.0
    %5012 = vmatprep.subr.mxu0 0.0
    %5013 = vmatpush1.msra.mxu0 0.0
    %5014 = vmatprep.subr.mxu0 0.0
    %5015 = vmatpush1.msra.mxu0 0.0
    %5016 = vmatprep.subr.mxu0 0.0
    %5017 = vmatpush1.msra.mxu0 0.0
    %5018 = vmatprep.subr.mxu0 0.0
    %5019 = vmatpush1.msra.mxu0 0.0
    %5020 = vmatprep.subr.mxu0 0.0
    %5021 = vmatpush1.msra.mxu0 0.0
    %5022 = vmatprep.subr.mxu0 0.0
    %5023 = vmatpush1.msra.mxu0 0.0
    %5024 = vmatprep.subr.mxu0 0.0
    %5025 = vmatpush1.msra.mxu0 0.0
    %5026 = vmatprep.subr.mxu0 0.0
    %5027 = vmatpush1.msra.mxu0 0.0
    %5028 = vmatprep.subr.mxu0 0.0
    %5029 = vmatpush1.msra.mxu0 0.0
    %5030 = vmatprep.subr.mxu0 0.0
    %5031 = vmatpush1.msra.mxu0 0.0
    %5032 = vmatprep.subr.mxu0 0.0
    %5033 = vmatpush1.msra.mxu0 0.0
    %5034 = vmatprep.subr.mxu0 0.0
    %5035 = vmatpush1.msra.mxu0 0.0
    %5036 = vmatprep.subr.mxu0 0.0
    %5037 = vmatpush1.msra.mxu0 0.0
    %5038 = vmatprep.subr.mxu0 0.0
    %5039 = vmatpush1.msra.mxu0 0.0
    %5040 = vmatprep.subr.mxu0 0.0
    %5041 = vmatpush1.msra.mxu0 0.0
    %5042 = vmatprep.subr.mxu0 0.0
    %5043 = vmatpush1.msra.mxu0 0.0
    %5044 = vmatprep.subr.mxu0 0.0
    %5045 = vmatpush1.msra.mxu0 0.0
    %5046 = vmatprep.subr.mxu0 0.0
    %5047 = vmatpush1.msra.mxu0 0.0
    %5048 = vmatprep.subr.mxu0 0.0
    %5049 = vmatpush1.msra.mxu0 0.0
    %5050 = vmatprep.subr.mxu0 0.0
    %5051 = vmatpush1.msra.mxu0 0.0
    %5052 = vmatprep.subr.mxu0 0.0
    %5053 = vmatpush1.msra.mxu0 0.0
    %5054 = vmatprep.subr.mxu0 0.0
    %5055 = vmatpush1.msra.mxu0 0.0
    %5056 = vmatprep.subr.mxu0 0.0
    %5057 = vmatpush1.msra.mxu0 0.0
    %5058 = vmatprep.subr.mxu0 0.0
    %5059 = vmatpush1.msra.mxu0 0.0
    %5060 = vmatprep.subr.mxu0 0.0
    %5061 = vmatpush1.msra.mxu0 0.0
    %5062 = vmatprep.subr.mxu0 0.0
    %5063 = vmatpush1.msra.mxu0 0.0
    %5064 = vmatprep.subr.mxu0 0.0
    %5065 = vmatpush1.msra.mxu0 0.0
    %5066 = vmatprep.mubr.f32.mxu0 0.0
    %5067 = vmatmul.mubr.f32.gmra.mrb[0].mxu0 %v5000
    %v5068 = vpop.f32.mrb[0].mxu0
    %v5069 = vadd.f32 %v4996, %v5068
    %v5070 = vpop.f32.mrb[0].mxu0
    %5071 = vdwg.mxu0
    %v5072 = vld [vmem:[#allocation13] sm:$0x1]
    %v5074 = vlaneseq
    %v5075 = vshrl.u32 %v5074, 7
    %v5076 = vsub.s32 0, %v5075
    %v5077 = vrot.slane %v5072, %v5076
    %v5079 = vadd.f32 %v5069, %v5077
    %v5080 = vxor.u32 %v5079, 2147483648
    %v5081 = vmul.f32 %v5080, 1.442695
    %v5082 = vpow.pop %v5081
    %v5083 = vadd.f32 %v5082, 1.0
    %v5084 = vrcp.pop %v5083
    %v5085 = vmul.f32 1.0, %v5084
    %v5086 = vtanh.pop %v5079
    %v5087 = vld [vmem:[#allocation3] sm:$0xff]
    %5089 = vrot.lane.b32.xlu0 %v5087, 32
    %v5090 = vpop.permute.xlu0 %5089
    %v5092 = vmul.f32 %v5085, %v5090
    %5094 = vrot.lane.b32.xlu0 %v5086, 64
    %v5095 = vpop.permute.xlu0 %5094
    %v5097 = vmul.f32 %v5085, %v5095
    %5099 = vrot.lane.b32.xlu0 %v5097, 32
    %v5100 = vpop.permute.xlu0 %5099
    %v5102 = vadd.f32 %v5092, %v5100
    %v5103 = vtanh.pop %v5102
    %5105 = vrot.lane.b32.xlu0 %v5103, 64
    %v5106 = vpop.permute.xlu0 %5105
    %v5108 = vmul.f32 %v5085, %v5106
    %5110 = vrot.lane.b32.xlu0 %v5102, 96
    %v5111 = vpop.permute.xlu0 %5110
    %5113 = vst.msk [vmem:[#allocation3] sm:$0xff] %vm126, %v5111
    %5115 = vrot.lane.b32.xlu0 %v5108, 32
    %v5116 = vpop.permute.xlu0 %5115
    %5118 = vst.msk [vmem:[#allocation2] sm:$0xff] %vm126, %v5116
    %v5119 = vld [vmem:[%s3343] sm:$0xff]
    %v5120 = vld [vmem:[%s3343 + $0x8] sm:$0xff]
    %v5121 = vld [vmem:[%s3343 + $0x10] sm:$0xff]
    %v5122 = vld [vmem:[%s3343 + $0x18] sm:$0xff]
    %v5123 = vld [vmem:[%s425] sm:$0xff]
    %v5124 = vld [vmem:[%s3349] sm:$0xff]
    %v5125 = vld [vmem:[%s3349 + $0x8] sm:$0xff]
    %v5126 = vld [vmem:[%s3349 + $0x10] sm:$0xff]
    %v5127 = vld [vmem:[%s3349 + $0x18] sm:$0xff]
    %v5129 = vsel %vm126, %v5123, 0
    %5131 = vmatprep.subr.mxu0 0.0
    %5132 = vmatpush1.msra.mxu0 %v5124
    %5133 = vmatprep.subr.mxu0 0.0
    %5134 = vmatpush1.msra.mxu0 %v5125
    %5135 = vmatprep.subr.mxu0 0.0
    %5136 = vmatpush1.msra.mxu0 %v5126
    %5137 = vmatprep.subr.mxu0 0.0
    %5138 = vmatpush1.msra.mxu0 %v5127
    %5139 = vmatprep.subr.mxu0 0.0
    %5140 = vmatpush1.msra.mxu0 0.0
    %5141 = vmatprep.subr.mxu0 0.0
    %5142 = vmatpush1.msra.mxu0 0.0
    %5143 = vmatprep.subr.mxu0 0.0
    %5144 = vmatpush1.msra.mxu0 0.0
    %5145 = vmatprep.subr.mxu0 0.0
    %5146 = vmatpush1.msra.mxu0 0.0
    %5147 = vmatprep.subr.mxu0 0.0
    %5148 = vmatpush1.msra.mxu0 0.0
    %5149 = vmatprep.subr.mxu0 0.0
    %5150 = vmatpush1.msra.mxu0 0.0
    %5151 = vmatprep.subr.mxu0 0.0
    %5152 = vmatpush1.msra.mxu0 0.0
    %5153 = vmatprep.subr.mxu0 0.0
    %5154 = vmatpush1.msra.mxu0 0.0
    %5155 = vmatprep.subr.mxu0 0.0
    %5156 = vmatpush1.msra.mxu0 0.0
    %5157 = vmatprep.subr.mxu0 0.0
    %5158 = vmatpush1.msra.mxu0 0.0
    %5159 = vmatprep.subr.mxu0 0.0
    %5160 = vmatpush1.msra.mxu0 0.0
    %5161 = vmatprep.subr.mxu0 0.0
    %5162 = vmatpush1.msra.mxu0 0.0
    %5163 = vmatprep.subr.mxu0 0.0
    %5164 = vmatpush1.msra.mxu0 0.0
    %5165 = vmatprep.subr.mxu0 0.0
    %5166 = vmatpush1.msra.mxu0 0.0
    %5167 = vmatprep.subr.mxu0 0.0
    %5168 = vmatpush1.msra.mxu0 0.0
    %5169 = vmatprep.subr.mxu0 0.0
    %5170 = vmatpush1.msra.mxu0 0.0
    %5171 = vmatprep.subr.mxu0 0.0
    %5172 = vmatpush1.msra.mxu0 0.0
    %5173 = vmatprep.subr.mxu0 0.0
    %5174 = vmatpush1.msra.mxu0 0.0
    %5175 = vmatprep.subr.mxu0 0.0
    %5176 = vmatpush1.msra.mxu0 0.0
    %5177 = vmatprep.subr.mxu0 0.0
    %5178 = vmatpush1.msra.mxu0 0.0
    %5179 = vmatprep.subr.mxu0 0.0
    %5180 = vmatpush1.msra.mxu0 0.0
    %5181 = vmatprep.subr.mxu0 0.0
    %5182 = vmatpush1.msra.mxu0 0.0
    %5183 = vmatprep.subr.mxu0 0.0
    %5184 = vmatpush1.msra.mxu0 0.0
    %5185 = vmatprep.subr.mxu0 0.0
    %5186 = vmatpush1.msra.mxu0 0.0
    %5187 = vmatprep.subr.mxu0 0.0
    %5188 = vmatpush1.msra.mxu0 0.0
    %5189 = vmatprep.subr.mxu0 0.0
    %5190 = vmatpush1.msra.mxu0 0.0
    %5191 = vmatprep.subr.mxu0 0.0
    %5192 = vmatpush1.msra.mxu0 0.0
    %5193 = vmatprep.subr.mxu0 0.0
    %5194 = vmatpush1.msra.mxu0 0.0
    %5195 = vmatprep.mubr.f32.mxu0 0.0
    %5196 = vmatmul.mubr.f32.gmra.mrb[0].mxu0 %v5129
    %v5197 = vpop.f32.mrb[0].mxu0
    %v5198 = vadd.f32 0.0, %v5197
    %v5199 = vpop.f32.mrb[0].mxu0
    %5200 = vdwg.mxu0
    %v5201 = vsel %vm126, %v5116, 0
    %5203 = vmatprep.subr.mxu0 0.0
    %5204 = vmatpush1.msra.mxu0 %v5119
    %5205 = vmatprep.subr.mxu0 0.0
    %5206 = vmatpush1.msra.mxu0 %v5120
    %5207 = vmatprep.subr.mxu0 0.0
    %5208 = vmatpush1.msra.mxu0 %v5121
    %5209 = vmatprep.subr.mxu0 0.0
    %5210 = vmatpush1.msra.mxu0 %v5122
    %5211 = vmatprep.subr.mxu0 0.0
    %5212 = vmatpush1.msra.mxu0 0.0
    %5213 = vmatprep.subr.mxu0 0.0
    %5214 = vmatpush1.msra.mxu0 0.0
    %5215 = vmatprep.subr.mxu0 0.0
    %5216 = vmatpush1.msra.mxu0 0.0
    %5217 = vmatprep.subr.mxu0 0.0
    %5218 = vmatpush1.msra.mxu0 0.0
    %5219 = vmatprep.subr.mxu0 0.0
    %5220 = vmatpush1.msra.mxu0 0.0
    %5221 = vmatprep.subr.mxu0 0.0
    %5222 = vmatpush1.msra.mxu0 0.0
    %5223 = vmatprep.subr.mxu0 0.0
    %5224 = vmatpush1.msra.mxu0 0.0
    %5225 = vmatprep.subr.mxu0 0.0
    %5226 = vmatpush1.msra.mxu0 0.0
    %5227 = vmatprep.subr.mxu0 0.0
    %5228 = vmatpush1.msra.mxu0 0.0
    %5229 = vmatprep.subr.mxu0 0.0
    %5230 = vmatpush1.msra.mxu0 0.0
    %5231 = vmatprep.subr.mxu0 0.0
    %5232 = vmatpush1.msra.mxu0 0.0
    %5233 = vmatprep.subr.mxu0 0.0
    %5234 = vmatpush1.msra.mxu0 0.0
    %5235 = vmatprep.subr.mxu0 0.0
    %5236 = vmatpush1.msra.mxu0 0.0
    %5237 = vmatprep.subr.mxu0 0.0
    %5238 = vmatpush1.msra.mxu0 0.0
    %5239 = vmatprep.subr.mxu0 0.0
    %5240 = vmatpush1.msra.mxu0 0.0
    %5241 = vmatprep.subr.mxu0 0.0
    %5242 = vmatpush1.msra.mxu0 0.0
    %5243 = vmatprep.subr.mxu0 0.0
    %5244 = vmatpush1.msra.mxu0 0.0
    %5245 = vmatprep.subr.mxu0 0.0
    %5246 = vmatpush1.msra.mxu0 0.0
    %5247 = vmatprep.subr.mxu0 0.0
    %5248 = vmatpush1.msra.mxu0 0.0
    %5249 = vmatprep.subr.mxu0 0.0
    %5250 = vmatpush1.msra.mxu0 0.0
    %5251 = vmatprep.subr.mxu0 0.0
    %5252 = vmatpush1.msra.mxu0 0.0
    %5253 = vmatprep.subr.mxu0 0.0
    %5254 = vmatpush1.msra.mxu0 0.0
    %5255 = vmatprep.subr.mxu0 0.0
    %5256 = vmatpush1.msra.mxu0 0.0
    %5257 = vmatprep.subr.mxu0 0.0
    %5258 = vmatpush1.msra.mxu0 0.0
    %5259 = vmatprep.subr.mxu0 0.0
    %5260 = vmatpush1.msra.mxu0 0.0
    %5261 = vmatprep.subr.mxu0 0.0
    %5262 = vmatpush1.msra.mxu0 0.0
    %5263 = vmatprep.subr.mxu0 0.0
    %5264 = vmatpush1.msra.mxu0 0.0
    %5265 = vmatprep.subr.mxu0 0.0
    %5266 = vmatpush1.msra.mxu0 0.0
    %5267 = vmatprep.mubr.f32.mxu0 0.0
    %5268 = vmatmul.mubr.f32.gmra.mrb[0].mxu0 %v5201
    %v5269 = vpop.f32.mrb[0].mxu0
    %v5270 = vadd.f32 %v5198, %v5269
    %v5271 = vpop.f32.mrb[0].mxu0
    %5272 = vdwg.mxu0
    %v5273 = vld [vmem:[%s3499] sm:$0x1]
    %v5275 = vlaneseq
    %v5276 = vshrl.u32 %v5275, 7
    %v5277 = vsub.s32 0, %v5276
    %v5278 = vrot.slane %v5273, %v5277
    %v5280 = vadd.f32 %v5270, %v5278
    %v5281 = vxor.u32 %v5280, 2147483648
    %v5282 = vmul.f32 %v5281, 1.442695
    %v5283 = vpow.pop %v5282
    %v5284 = vadd.f32 %v5283, 1.0
    %v5285 = vrcp.pop %v5284
    %v5286 = vmul.f32 1.0, %v5285
    %v5287 = vtanh.pop %v5280
    %v5288 = vld [vmem:[%s593] sm:$0xff]
    %5290 = vrot.lane.b32.xlu0 %v5288, 32
    %v5291 = vpop.permute.xlu0 %5290
    %v5293 = vmul.f32 %v5286, %v5291
    %5295 = vrot.lane.b32.xlu0 %v5287, 64
    %v5296 = vpop.permute.xlu0 %5295
    %v5298 = vmul.f32 %v5286, %v5296
    %5300 = vrot.lane.b32.xlu0 %v5298, 32
    %v5301 = vpop.permute.xlu0 %5300
    %v5303 = vadd.f32 %v5293, %v5301
    %v5304 = vtanh.pop %v5303
    %5306 = vrot.lane.b32.xlu0 %v5304, 64
    %v5307 = vpop.permute.xlu0 %5306
    %v5309 = vmul.f32 %v5286, %v5307
    %5311 = vrot.lane.b32.xlu0 %v5303, 96
    %v5312 = vpop.permute.xlu0 %5311
    %5314 = vst.msk [vmem:[%s593] sm:$0xff] %vm126, %v5312
    %5316 = vrot.lane.b32.xlu0 %v5309, 32
    %v5317 = vpop.permute.xlu0 %5316
    %5319 = vst.msk [vmem:[%s425] sm:$0xff] %vm126, %v5317
    %v5320 = vld [vmem:[#allocation15] sm:$0xff]
    %v5321 = vld [vmem:[#allocation15 + $0x8] sm:$0xff]
    %v5322 = vld [vmem:[#allocation15 + $0x10] sm:$0xff]
    %v5323 = vld [vmem:[#allocation15 + $0x18] sm:$0xff]
    %v5324 = vld [vmem:[%s12] sm:$0x1]
    %v5326 = vlaneseq
    %v5327 = vshrl.u32 %v5326, 7
    %v5328 = vsub.s32 0, %v5327
    %v5329 = vrot.slane %v5324, %v5328
    %v5331 = vsel %vm126, %v5317, 0
    %5333 = vmatprep.subr.mxu0 0.0
    %5334 = vmatpush1.msra.mxu0 %v5320
    %5335 = vmatprep.subr.mxu0 0.0
    %5336 = vmatpush1.msra.mxu0 %v5321
    %5337 = vmatprep.subr.mxu0 0.0
    %5338 = vmatpush1.msra.mxu0 %v5322
    %5339 = vmatprep.subr.mxu0 0.0
    %5340 = vmatpush1.msra.mxu0 %v5323
    %5341 = vmatprep.subr.mxu0 0.0
    %5342 = vmatpush1.msra.mxu0 0.0
    %5343 = vmatprep.subr.mxu0 0.0
    %5344 = vmatpush1.msra.mxu0 0.0
    %5345 = vmatprep.subr.mxu0 0.0
    %5346 = vmatpush1.msra.mxu0 0.0
    %5347 = vmatprep.subr.mxu0 0.0
    %5348 = vmatpush1.msra.mxu0 0.0
    %5349 = vmatprep.subr.mxu0 0.0
    %5350 = vmatpush1.msra.mxu0 0.0
    %5351 = vmatprep.subr.mxu0 0.0
    %5352 = vmatpush1.msra.mxu0 0.0
    %5353 = vmatprep.subr.mxu0 0.0
    %5354 = vmatpush1.msra.mxu0 0.0
    %5355 = vmatprep.subr.mxu0 0.0
    %5356 = vmatpush1.msra.mxu0 0.0
    %5357 = vmatprep.subr.mxu0 0.0
    %5358 = vmatpush1.msra.mxu0 0.0
    %5359 = vmatprep.subr.mxu0 0.0
    %5360 = vmatpush1.msra.mxu0 0.0
    %5361 = vmatprep.subr.mxu0 0.0
    %5362 = vmatpush1.msra.mxu0 0.0
    %5363 = vmatprep.subr.mxu0 0.0
    %5364 = vmatpush1.msra.mxu0 0.0
    %5365 = vmatprep.subr.mxu0 0.0
    %5366 = vmatpush1.msra.mxu0 0.0
    %5367 = vmatprep.subr.mxu0 0.0
    %5368 = vmatpush1.msra.mxu0 0.0
    %5369 = vmatprep.subr.mxu0 0.0
    %5370 = vmatpush1.msra.mxu0 0.0
    %5371 = vmatprep.subr.mxu0 0.0
    %5372 = vmatpush1.msra.mxu0 0.0
    %5373 = vmatprep.subr.mxu0 0.0
    %5374 = vmatpush1.msra.mxu0 0.0
    %5375 = vmatprep.subr.mxu0 0.0
    %5376 = vmatpush1.msra.mxu0 0.0
    %5377 = vmatprep.subr.mxu0 0.0
    %5378 = vmatpush1.msra.mxu0 0.0
    %5379 = vmatprep.subr.mxu0 0.0
    %5380 = vmatpush1.msra.mxu0 0.0
    %5381 = vmatprep.subr.mxu0 0.0
    %5382 = vmatpush1.msra.mxu0 0.0
    %5383 = vmatprep.subr.mxu0 0.0
    %5384 = vmatpush1.msra.mxu0 0.0
    %5385 = vmatprep.subr.mxu0 0.0
    %5386 = vmatpush1.msra.mxu0 0.0
    %5387 = vmatprep.subr.mxu0 0.0
    %5388 = vmatpush1.msra.mxu0 0.0
    %5389 = vmatprep.subr.mxu0 0.0
    %5390 = vmatpush1.msra.mxu0 0.0
    %5391 = vmatprep.subr.mxu0 0.0
    %5392 = vmatpush1.msra.mxu0 0.0
    %5393 = vmatprep.subr.mxu0 0.0
    %5394 = vmatpush1.msra.mxu0 0.0
    %5395 = vmatprep.subr.mxu0 0.0
    %5396 = vmatpush1.msra.mxu0 0.0
    %5397 = vmatprep.mubr.f32.mxu0 0.0
    %5398 = vmatmul.mubr.f32.gmra.mrb[0].mxu0 %v5331
    %v5399 = vpop.f32.mrb[0].mxu0
    %v5400 = vadd.f32 %v5329, %v5399
    %v5401 = vpop.f32.mrb[0].mxu0
    %5402 = vdwg.mxu0
    %s5403 = scalar_lea.vmem [#allocation16], 32
    %5404 = vst [vmem:[%s5403] sm:$0xff] %v5400
    %s5405 = sld [smem:[#allocation5 + $0x4]]
    %p5406 = scmp.gt.s32.totalorder %s5405, 0
    // Predicated region
    $region102: #{_forward_padded.1} parent=1 // pred_check
      %p5407 = pneg %p5406
    $region103: #{_forward_padded.1} parent=1 // pred_check_branch
      %5409 = sbr.rel (%p5407) target = $region105
    $region104: #{_forward_padded.1} parent=1 // pred_region
      %s5410 = scalar_lea.vmem %s2, 32
      %v5411 = vld [vmem:[%s5410] sm:$0xff]
      %5412 = vst.msk [vmem:[#allocation4] sm:$0xff] %vm3057, %v5411
    $region105: #{_forward_padded.1} parent=1 // pred_fallthru
      _
    %s5413 = sld [smem:[#allocation5 + $0x4]]
    %p5414 = scmp.eq.s32.totalorder %s5413, 0
    // Predicated region
    $region106: #{_forward_padded.1} parent=1 // pred_check
      %p5415 = pneg %p5414
    $region107: #{_forward_padded.1} parent=1 // pred_check_branch
      %5417 = sbr.rel (%p5415) target = $region109
    $region108: #{_forward_padded.1} parent=1 // pred_region
      %5418 = vmax.xlane.f32.xlu0 %v5400
      %v5419 = vpop.xlane.xlu0 %5418
      %vm5420 = vcmp.eq.f32.partialorder %v5400, %v5419
      %v5421 = vsel %vm5420, %v134, 128.0
      %5422 = vmin.xlane.f32.xlu0 %v5421
      %v5423 = vpop.xlane.xlu0 %5422
      %v5424 = vcvt.f32.s32.to.zero.pseudo %v5423
      %5425 = vst.msk [vmem:[#allocation4] sm:$0xff] %vm3057, %v5424
    $region109: #{_forward_padded.1} parent=1 // pred_fallthru
      _
    %v5426 = vld [vmem:[#allocation4] sm:$0xff]
    %5427 = vset.pattern.permute.xlu0 0
    %5428 = vperm.xlu0 %5427, %v5426
    %v5429 = vpop.permute.xlu0 %5428
    %vm5430 = vcmp.eq.s32.totalorder %v5429, %v133
    %v5431 = vsel %vm5430, 1, 0
    %v5432 = vcvt.s32.f32 %v5431
    %v5433 = vld [vmem:[#allocation10] sm:$0xff]
    %v5434 = vld [vmem:[#allocation10 + $0x8] sm:$0xff]
    %v5436 = vsel %vm144, %v5432, 0
    %5438 = vmatprep.subr.mxu0 0.0
    %5439 = vmatpush1.msra.mxu0 %v5433
    %5440 = vmatprep.subr.mxu0 0.0
    %5441 = vmatpush1.msra.mxu0 %v5434
    %5442 = vmatprep.subr.mxu0 0.0
    %5443 = vmatpush1.msra.mxu0 0.0
    %5444 = vmatprep.subr.mxu0 0.0
    %5445 = vmatpush1.msra.mxu0 0.0
    %5446 = vmatprep.subr.mxu0 0.0
    %5447 = vmatpush1.msra.mxu0 0.0
    %5448 = vmatprep.subr.mxu0 0.0
    %5449 = vmatpush1.msra.mxu0 0.0
    %5450 = vmatprep.subr.mxu0 0.0
    %5451 = vmatpush1.msra.mxu0 0.0
    %5452 = vmatprep.subr.mxu0 0.0
    %5453 = vmatpush1.msra.mxu0 0.0
    %5454 = vmatprep.subr.mxu0 0.0
    %5455 = vmatpush1.msra.mxu0 0.0
    %5456 = vmatprep.subr.mxu0 0.0
    %5457 = vmatpush1.msra.mxu0 0.0
    %5458 = vmatprep.subr.mxu0 0.0
    %5459 = vmatpush1.msra.mxu0 0.0
    %5460 = vmatprep.subr.mxu0 0.0
    %5461 = vmatpush1.msra.mxu0 0.0
    %5462 = vmatprep.subr.mxu0 0.0
    %5463 = vmatpush1.msra.mxu0 0.0
    %5464 = vmatprep.subr.mxu0 0.0
    %5465 = vmatpush1.msra.mxu0 0.0
    %5466 = vmatprep.subr.mxu0 0.0
    %5467 = vmatpush1.msra.mxu0 0.0
    %5468 = vmatprep.subr.mxu0 0.0
    %5469 = vmatpush1.msra.mxu0 0.0
    %5470 = vmatprep.subr.mxu0 0.0
    %5471 = vmatpush1.msra.mxu0 0.0
    %5472 = vmatprep.subr.mxu0 0.0
    %5473 = vmatpush1.msra.mxu0 0.0
    %5474 = vmatprep.subr.mxu0 0.0
    %5475 = vmatpush1.msra.mxu0 0.0
    %5476 = vmatprep.subr.mxu0 0.0
    %5477 = vmatpush1.msra.mxu0 0.0
    %5478 = vmatprep.subr.mxu0 0.0
    %5479 = vmatpush1.msra.mxu0 0.0
    %5480 = vmatprep.subr.mxu0 0.0
    %5481 = vmatpush1.msra.mxu0 0.0
    %5482 = vmatprep.subr.mxu0 0.0
    %5483 = vmatpush1.msra.mxu0 0.0
    %5484 = vmatprep.subr.mxu0 0.0
    %5485 = vmatpush1.msra.mxu0 0.0
    %5486 = vmatprep.subr.mxu0 0.0
    %5487 = vmatpush1.msra.mxu0 0.0
    %5488 = vmatprep.subr.mxu0 0.0
    %5489 = vmatpush1.msra.mxu0 0.0
    %5490 = vmatprep.subr.mxu0 0.0
    %5491 = vmatpush1.msra.mxu0 0.0
    %5492 = vmatprep.subr.mxu0 0.0
    %5493 = vmatpush1.msra.mxu0 0.0
    %5494 = vmatprep.subr.mxu0 0.0
    %5495 = vmatpush1.msra.mxu0 0.0
    %5496 = vmatprep.subr.mxu0 0.0
    %5497 = vmatpush1.msra.mxu0 0.0
    %5498 = vmatprep.subr.mxu0 0.0
    %5499 = vmatpush1.msra.mxu0 0.0
    %5500 = vmatprep.subr.mxu0 0.0
    %5501 = vmatpush1.msra.mxu0 0.0
    %5502 = vmatprep.mubr.f32.mxu0 0.0
    %5503 = vmatmul.mubr.f32.gmra.mrb[0].mxu0 %v5436
    %v5504 = vpop.f32.mrb[0].mxu0
    %v5505 = vadd.f32 0.0, %v5504
    %v5506 = vpop.f32.mrb[0].mxu0
    %5507 = vdwg.mxu0
    %v5508 = vld [vmem:[%s8] sm:$0xff]
    %v5509 = vld [vmem:[%s8 + $0x8] sm:$0xff]
    %v5510 = vld [vmem:[%s8 + $0x10] sm:$0xff]
    %v5511 = vld [vmem:[%s8 + $0x18] sm:$0xff]
    %v5512 = vld [vmem:[#allocation2] sm:$0xff]
    %v5513 = vld [vmem:[#allocation12] sm:$0xff]
    %v5514 = vld [vmem:[#allocation12 + $0x8] sm:$0xff]
    %v5515 = vld [vmem:[#allocation12 + $0x10] sm:$0xff]
    %v5516 = vld [vmem:[#allocation12 + $0x18] sm:$0xff]
    %v5518 = vsel %vm126, %v5512, 0
    %5520 = vmatprep.subr.mxu0 0.0
    %5521 = vmatpush1.msra.mxu0 %v5513
    %5522 = vmatprep.subr.mxu0 0.0
    %5523 = vmatpush1.msra.mxu0 %v5514
    %5524 = vmatprep.subr.mxu0 0.0
    %5525 = vmatpush1.msra.mxu0 %v5515
    %5526 = vmatprep.subr.mxu0 0.0
    %5527 = vmatpush1.msra.mxu0 %v5516
    %5528 = vmatprep.subr.mxu0 0.0
    %5529 = vmatpush1.msra.mxu0 0.0
    %5530 = vmatprep.subr.mxu0 0.0
    %5531 = vmatpush1.msra.mxu0 0.0
    %5532 = vmatprep.subr.mxu0 0.0
    %5533 = vmatpush1.msra.mxu0 0.0
    %5534 = vmatprep.subr.mxu0 0.0
    %5535 = vmatpush1.msra.mxu0 0.0
    %5536 = vmatprep.subr.mxu0 0.0
    %5537 = vmatpush1.msra.mxu0 0.0
    %5538 = vmatprep.subr.mxu0 0.0
    %5539 = vmatpush1.msra.mxu0 0.0
    %5540 = vmatprep.subr.mxu0 0.0
    %5541 = vmatpush1.msra.mxu0 0.0
    %5542 = vmatprep.subr.mxu0 0.0
    %5543 = vmatpush1.msra.mxu0 0.0
    %5544 = vmatprep.subr.mxu0 0.0
    %5545 = vmatpush1.msra.mxu0 0.0
    %5546 = vmatprep.subr.mxu0 0.0
    %5547 = vmatpush1.msra.mxu0 0.0
    %5548 = vmatprep.subr.mxu0 0.0
    %5549 = vmatpush1.msra.mxu0 0.0
    %5550 = vmatprep.subr.mxu0 0.0
    %5551 = vmatpush1.msra.mxu0 0.0
    %5552 = vmatprep.subr.mxu0 0.0
    %5553 = vmatpush1.msra.mxu0 0.0
    %5554 = vmatprep.subr.mxu0 0.0
    %5555 = vmatpush1.msra.mxu0 0.0
    %5556 = vmatprep.subr.mxu0 0.0
    %5557 = vmatpush1.msra.mxu0 0.0
    %5558 = vmatprep.subr.mxu0 0.0
    %5559 = vmatpush1.msra.mxu0 0.0
    %5560 = vmatprep.subr.mxu0 0.0
    %5561 = vmatpush1.msra.mxu0 0.0
    %5562 = vmatprep.subr.mxu0 0.0
    %5563 = vmatpush1.msra.mxu0 0.0
    %5564 = vmatprep.subr.mxu0 0.0
    %5565 = vmatpush1.msra.mxu0 0.0
    %5566 = vmatprep.subr.mxu0 0.0
    %5567 = vmatpush1.msra.mxu0 0.0
    %5568 = vmatprep.subr.mxu0 0.0
    %5569 = vmatpush1.msra.mxu0 0.0
    %5570 = vmatprep.subr.mxu0 0.0
    %5571 = vmatpush1.msra.mxu0 0.0
    %5572 = vmatprep.subr.mxu0 0.0
    %5573 = vmatpush1.msra.mxu0 0.0
    %5574 = vmatprep.subr.mxu0 0.0
    %5575 = vmatpush1.msra.mxu0 0.0
    %5576 = vmatprep.subr.mxu0 0.0
    %5577 = vmatpush1.msra.mxu0 0.0
    %5578 = vmatprep.subr.mxu0 0.0
    %5579 = vmatpush1.msra.mxu0 0.0
    %5580 = vmatprep.subr.mxu0 0.0
    %5581 = vmatpush1.msra.mxu0 0.0
    %5582 = vmatprep.subr.mxu0 0.0
    %5583 = vmatpush1.msra.mxu0 0.0
    %5584 = vmatprep.mubr.f32.mxu0 0.0
    %5585 = vmatmul.mubr.f32.gmra.mrb[0].mxu0 %v5518
    %v5586 = vpop.f32.mrb[0].mxu0
    %v5587 = vadd.f32 0.0, %v5586
    %v5588 = vpop.f32.mrb[0].mxu0
    %5589 = vdwg.mxu0
    %v5591 = vsel %vm126, %v5505, 0
    %5593 = vmatprep.subr.mxu0 0.0
    %5594 = vmatpush1.msra.mxu0 %v5508
    %5595 = vmatprep.subr.mxu0 0.0
    %5596 = vmatpush1.msra.mxu0 %v5509
    %5597 = vmatprep.subr.mxu0 0.0
    %5598 = vmatpush1.msra.mxu0 %v5510
    %5599 = vmatprep.subr.mxu0 0.0
    %5600 = vmatpush1.msra.mxu0 %v5511
    %5601 = vmatprep.subr.mxu0 0.0
    %5602 = vmatpush1.msra.mxu0 0.0
    %5603 = vmatprep.subr.mxu0 0.0
    %5604 = vmatpush1.msra.mxu0 0.0
    %5605 = vmatprep.subr.mxu0 0.0
    %5606 = vmatpush1.msra.mxu0 0.0
    %5607 = vmatprep.subr.mxu0 0.0
    %5608 = vmatpush1.msra.mxu0 0.0
    %5609 = vmatprep.subr.mxu0 0.0
    %5610 = vmatpush1.msra.mxu0 0.0
    %5611 = vmatprep.subr.mxu0 0.0
    %5612 = vmatpush1.msra.mxu0 0.0
    %5613 = vmatprep.subr.mxu0 0.0
    %5614 = vmatpush1.msra.mxu0 0.0
    %5615 = vmatprep.subr.mxu0 0.0
    %5616 = vmatpush1.msra.mxu0 0.0
    %5617 = vmatprep.subr.mxu0 0.0
    %5618 = vmatpush1.msra.mxu0 0.0
    %5619 = vmatprep.subr.mxu0 0.0
    %5620 = vmatpush1.msra.mxu0 0.0
    %5621 = vmatprep.subr.mxu0 0.0
    %5622 = vmatpush1.msra.mxu0 0.0
    %5623 = vmatprep.subr.mxu0 0.0
    %5624 = vmatpush1.msra.mxu0 0.0
    %5625 = vmatprep.subr.mxu0 0.0
    %5626 = vmatpush1.msra.mxu0 0.0
    %5627 = vmatprep.subr.mxu0 0.0
    %5628 = vmatpush1.msra.mxu0 0.0
    %5629 = vmatprep.subr.mxu0 0.0
    %5630 = vmatpush1.msra.mxu0 0.0
    %5631 = vmatprep.subr.mxu0 0.0
    %5632 = vmatpush1.msra.mxu0 0.0
    %5633 = vmatprep.subr.mxu0 0.0
    %5634 = vmatpush1.msra.mxu0 0.0
    %5635 = vmatprep.subr.mxu0 0.0
    %5636 = vmatpush1.msra.mxu0 0.0
    %5637 = vmatprep.subr.mxu0 0.0
    %5638 = vmatpush1.msra.mxu0 0.0
    %5639 = vmatprep.subr.mxu0 0.0
    %5640 = vmatpush1.msra.mxu0 0.0
    %5641 = vmatprep.subr.mxu0 0.0
    %5642 = vmatpush1.msra.mxu0 0.0
    %5643 = vmatprep.subr.mxu0 0.0
    %5644 = vmatpush1.msra.mxu0 0.0
    %5645 = vmatprep.subr.mxu0 0.0
    %5646 = vmatpush1.msra.mxu0 0.0
    %5647 = vmatprep.subr.mxu0 0.0
    %5648 = vmatpush1.msra.mxu0 0.0
    %5649 = vmatprep.subr.mxu0 0.0
    %5650 = vmatpush1.msra.mxu0 0.0
    %5651 = vmatprep.subr.mxu0 0.0
    %5652 = vmatpush1.msra.mxu0 0.0
    %5653 = vmatprep.subr.mxu0 0.0
    %5654 = vmatpush1.msra.mxu0 0.0
    %5655 = vmatprep.subr.mxu0 0.0
    %5656 = vmatpush1.msra.mxu0 0.0
    %5657 = vmatprep.mubr.f32.mxu0 0.0
    %5658 = vmatmul.mubr.f32.gmra.mrb[0].mxu0 %v5591
    %v5659 = vpop.f32.mrb[0].mxu0
    %v5660 = vadd.f32 %v5587, %v5659
    %v5661 = vpop.f32.mrb[0].mxu0
    %5662 = vdwg.mxu0
    %v5663 = vld [vmem:[#allocation13] sm:$0x1]
    %v5665 = vlaneseq
    %v5666 = vshrl.u32 %v5665, 7
    %v5667 = vsub.s32 0, %v5666
    %v5668 = vrot.slane %v5663, %v5667
    %v5670 = vadd.f32 %v5660, %v5668
    %v5671 = vxor.u32 %v5670, 2147483648
    %v5672 = vmul.f32 %v5671, 1.442695
    %v5673 = vpow.pop %v5672
    %v5674 = vadd.f32 %v5673, 1.0
    %v5675 = vrcp.pop %v5674
    %v5676 = vmul.f32 1.0, %v5675
    %v5677 = vtanh.pop %v5670
    %v5678 = vld [vmem:[#allocation3] sm:$0xff]
    %5680 = vrot.lane.b32.xlu0 %v5678, 32
    %v5681 = vpop.permute.xlu0 %5680
    %v5683 = vmul.f32 %v5676, %v5681
    %5685 = vrot.lane.b32.xlu0 %v5677, 64
    %v5686 = vpop.permute.xlu0 %5685
    %v5688 = vmul.f32 %v5676, %v5686
    %5690 = vrot.lane.b32.xlu0 %v5688, 32
    %v5691 = vpop.permute.xlu0 %5690
    %v5693 = vadd.f32 %v5683, %v5691
    %v5694 = vtanh.pop %v5693
    %5696 = vrot.lane.b32.xlu0 %v5694, 64
    %v5697 = vpop.permute.xlu0 %5696
    %v5699 = vmul.f32 %v5676, %v5697
    %5701 = vrot.lane.b32.xlu0 %v5693, 96
    %v5702 = vpop.permute.xlu0 %5701
    %5704 = vst.msk [vmem:[#allocation3] sm:$0xff] %vm126, %v5702
    %5706 = vrot.lane.b32.xlu0 %v5699, 32
    %v5707 = vpop.permute.xlu0 %5706
    %5709 = vst.msk [vmem:[#allocation2] sm:$0xff] %vm126, %v5707
    %v5710 = vld [vmem:[%s3343] sm:$0xff]
    %v5711 = vld [vmem:[%s3343 + $0x8] sm:$0xff]
    %v5712 = vld [vmem:[%s3343 + $0x10] sm:$0xff]
    %v5713 = vld [vmem:[%s3343 + $0x18] sm:$0xff]
    %v5714 = vld [vmem:[%s425] sm:$0xff]
    %v5715 = vld [vmem:[%s3349] sm:$0xff]
    %v5716 = vld [vmem:[%s3349 + $0x8] sm:$0xff]
    %v5717 = vld [vmem:[%s3349 + $0x10] sm:$0xff]
    %v5718 = vld [vmem:[%s3349 + $0x18] sm:$0xff]
    %v5720 = vsel %vm126, %v5714, 0
    %5722 = vmatprep.subr.mxu0 0.0
    %5723 = vmatpush1.msra.mxu0 %v5715
    %5724 = vmatprep.subr.mxu0 0.0
    %5725 = vmatpush1.msra.mxu0 %v5716
    %5726 = vmatprep.subr.mxu0 0.0
    %5727 = vmatpush1.msra.mxu0 %v5717
    %5728 = vmatprep.subr.mxu0 0.0
    %5729 = vmatpush1.msra.mxu0 %v5718
    %5730 = vmatprep.subr.mxu0 0.0
    %5731 = vmatpush1.msra.mxu0 0.0
    %5732 = vmatprep.subr.mxu0 0.0
    %5733 = vmatpush1.msra.mxu0 0.0
    %5734 = vmatprep.subr.mxu0 0.0
    %5735 = vmatpush1.msra.mxu0 0.0
    %5736 = vmatprep.subr.mxu0 0.0
    %5737 = vmatpush1.msra.mxu0 0.0
    %5738 = vmatprep.subr.mxu0 0.0
    %5739 = vmatpush1.msra.mxu0 0.0
    %5740 = vmatprep.subr.mxu0 0.0
    %5741 = vmatpush1.msra.mxu0 0.0
    %5742 = vmatprep.subr.mxu0 0.0
    %5743 = vmatpush1.msra.mxu0 0.0
    %5744 = vmatprep.subr.mxu0 0.0
    %5745 = vmatpush1.msra.mxu0 0.0
    %5746 = vmatprep.subr.mxu0 0.0
    %5747 = vmatpush1.msra.mxu0 0.0
    %5748 = vmatprep.subr.mxu0 0.0
    %5749 = vmatpush1.msra.mxu0 0.0
    %5750 = vmatprep.subr.mxu0 0.0
    %5751 = vmatpush1.msra.mxu0 0.0
    %5752 = vmatprep.subr.mxu0 0.0
    %5753 = vmatpush1.msra.mxu0 0.0
    %5754 = vmatprep.subr.mxu0 0.0
    %5755 = vmatpush1.msra.mxu0 0.0
    %5756 = vmatprep.subr.mxu0 0.0
    %5757 = vmatpush1.msra.mxu0 0.0
    %5758 = vmatprep.subr.mxu0 0.0
    %5759 = vmatpush1.msra.mxu0 0.0
    %5760 = vmatprep.subr.mxu0 0.0
    %5761 = vmatpush1.msra.mxu0 0.0
    %5762 = vmatprep.subr.mxu0 0.0
    %5763 = vmatpush1.msra.mxu0 0.0
    %5764 = vmatprep.subr.mxu0 0.0
    %5765 = vmatpush1.msra.mxu0 0.0
    %5766 = vmatprep.subr.mxu0 0.0
    %5767 = vmatpush1.msra.mxu0 0.0
    %5768 = vmatprep.subr.mxu0 0.0
    %5769 = vmatpush1.msra.mxu0 0.0
    %5770 = vmatprep.subr.mxu0 0.0
    %5771 = vmatpush1.msra.mxu0 0.0
    %5772 = vmatprep.subr.mxu0 0.0
    %5773 = vmatpush1.msra.mxu0 0.0
    %5774 = vmatprep.subr.mxu0 0.0
    %5775 = vmatpush1.msra.mxu0 0.0
    %5776 = vmatprep.subr.mxu0 0.0
    %5777 = vmatpush1.msra.mxu0 0.0
    %5778 = vmatprep.subr.mxu0 0.0
    %5779 = vmatpush1.msra.mxu0 0.0
    %5780 = vmatprep.subr.mxu0 0.0
    %5781 = vmatpush1.msra.mxu0 0.0
    %5782 = vmatprep.subr.mxu0 0.0
    %5783 = vmatpush1.msra.mxu0 0.0
    %5784 = vmatprep.subr.mxu0 0.0
    %5785 = vmatpush1.msra.mxu0 0.0
    %5786 = vmatprep.mubr.f32.mxu0 0.0
    %5787 = vmatmul.mubr.f32.gmra.mrb[0].mxu0 %v5720
    %v5788 = vpop.f32.mrb[0].mxu0
    %v5789 = vadd.f32 0.0, %v5788
    %v5790 = vpop.f32.mrb[0].mxu0
    %5791 = vdwg.mxu0
    %v5792 = vsel %vm126, %v5707, 0
    %5794 = vmatprep.subr.mxu0 0.0
    %5795 = vmatpush1.msra.mxu0 %v5710
    %5796 = vmatprep.subr.mxu0 0.0
    %5797 = vmatpush1.msra.mxu0 %v5711
    %5798 = vmatprep.subr.mxu0 0.0
    %5799 = vmatpush1.msra.mxu0 %v5712
    %5800 = vmatprep.subr.mxu0 0.0
    %5801 = vmatpush1.msra.mxu0 %v5713
    %5802 = vmatprep.subr.mxu0 0.0
    %5803 = vmatpush1.msra.mxu0 0.0
    %5804 = vmatprep.subr.mxu0 0.0
    %5805 = vmatpush1.msra.mxu0 0.0
    %5806 = vmatprep.subr.mxu0 0.0
    %5807 = vmatpush1.msra.mxu0 0.0
    %5808 = vmatprep.subr.mxu0 0.0
    %5809 = vmatpush1.msra.mxu0 0.0
    %5810 = vmatprep.subr.mxu0 0.0
    %5811 = vmatpush1.msra.mxu0 0.0
    %5812 = vmatprep.subr.mxu0 0.0
    %5813 = vmatpush1.msra.mxu0 0.0
    %5814 = vmatprep.subr.mxu0 0.0
    %5815 = vmatpush1.msra.mxu0 0.0
    %5816 = vmatprep.subr.mxu0 0.0
    %5817 = vmatpush1.msra.mxu0 0.0
    %5818 = vmatprep.subr.mxu0 0.0
    %5819 = vmatpush1.msra.mxu0 0.0
    %5820 = vmatprep.subr.mxu0 0.0
    %5821 = vmatpush1.msra.mxu0 0.0
    %5822 = vmatprep.subr.mxu0 0.0
    %5823 = vmatpush1.msra.mxu0 0.0
    %5824 = vmatprep.subr.mxu0 0.0
    %5825 = vmatpush1.msra.mxu0 0.0
    %5826 = vmatprep.subr.mxu0 0.0
    %5827 = vmatpush1.msra.mxu0 0.0
    %5828 = vmatprep.subr.mxu0 0.0
    %5829 = vmatpush1.msra.mxu0 0.0
    %5830 = vmatprep.subr.mxu0 0.0
    %5831 = vmatpush1.msra.mxu0 0.0
    %5832 = vmatprep.subr.mxu0 0.0
    %5833 = vmatpush1.msra.mxu0 0.0
    %5834 = vmatprep.subr.mxu0 0.0
    %5835 = vmatpush1.msra.mxu0 0.0
    %5836 = vmatprep.subr.mxu0 0.0
    %5837 = vmatpush1.msra.mxu0 0.0
    %5838 = vmatprep.subr.mxu0 0.0
    %5839 = vmatpush1.msra.mxu0 0.0
    %5840 = vmatprep.subr.mxu0 0.0
    %5841 = vmatpush1.msra.mxu0 0.0
    %5842 = vmatprep.subr.mxu0 0.0
    %5843 = vmatpush1.msra.mxu0 0.0
    %5844 = vmatprep.subr.mxu0 0.0
    %5845 = vmatpush1.msra.mxu0 0.0
    %5846 = vmatprep.subr.mxu0 0.0
    %5847 = vmatpush1.msra.mxu0 0.0
    %5848 = vmatprep.subr.mxu0 0.0
    %5849 = vmatpush1.msra.mxu0 0.0
    %5850 = vmatprep.subr.mxu0 0.0
    %5851 = vmatpush1.msra.mxu0 0.0
    %5852 = vmatprep.subr.mxu0 0.0
    %5853 = vmatpush1.msra.mxu0 0.0
    %5854 = vmatprep.subr.mxu0 0.0
    %5855 = vmatpush1.msra.mxu0 0.0
    %5856 = vmatprep.subr.mxu0 0.0
    %5857 = vmatpush1.msra.mxu0 0.0
    %5858 = vmatprep.mubr.f32.mxu0 0.0
    %5859 = vmatmul.mubr.f32.gmra.mrb[0].mxu0 %v5792
    %v5860 = vpop.f32.mrb[0].mxu0
    %v5861 = vadd.f32 %v5789, %v5860
    %v5862 = vpop.f32.mrb[0].mxu0
    %5863 = vdwg.mxu0
    %v5864 = vld [vmem:[%s3499] sm:$0x1]
    %v5866 = vlaneseq
    %v5867 = vshrl.u32 %v5866, 7
    %v5868 = vsub.s32 0, %v5867
    %v5869 = vrot.slane %v5864, %v5868
    %v5871 = vadd.f32 %v5861, %v5869
    %v5872 = vxor.u32 %v5871, 2147483648
    %v5873 = vmul.f32 %v5872, 1.442695
    %v5874 = vpow.pop %v5873
    %v5875 = vadd.f32 %v5874, 1.0
    %v5876 = vrcp.pop %v5875
    %v5877 = vmul.f32 1.0, %v5876
    %v5878 = vtanh.pop %v5871
    %v5879 = vld [vmem:[%s593] sm:$0xff]
    %5881 = vrot.lane.b32.xlu0 %v5879, 32
    %v5882 = vpop.permute.xlu0 %5881
    %v5884 = vmul.f32 %v5877, %v5882
    %5886 = vrot.lane.b32.xlu0 %v5878, 64
    %v5887 = vpop.permute.xlu0 %5886
    %v5889 = vmul.f32 %v5877, %v5887
    %5891 = vrot.lane.b32.xlu0 %v5889, 32
    %v5892 = vpop.permute.xlu0 %5891
    %v5894 = vadd.f32 %v5884, %v5892
    %v5895 = vtanh.pop %v5894
    %5897 = vrot.lane.b32.xlu0 %v5895, 64
    %v5898 = vpop.permute.xlu0 %5897
    %v5900 = vmul.f32 %v5877, %v5898
    %5902 = vrot.lane.b32.xlu0 %v5894, 96
    %v5903 = vpop.permute.xlu0 %5902
    %5905 = vst.msk [vmem:[%s593] sm:$0xff] %vm126, %v5903
    %5907 = vrot.lane.b32.xlu0 %v5900, 32
    %v5908 = vpop.permute.xlu0 %5907
    %5910 = vst.msk [vmem:[%s425] sm:$0xff] %vm126, %v5908
    %v5911 = vld [vmem:[#allocation15] sm:$0xff]
    %v5912 = vld [vmem:[#allocation15 + $0x8] sm:$0xff]
    %v5913 = vld [vmem:[#allocation15 + $0x10] sm:$0xff]
    %v5914 = vld [vmem:[#allocation15 + $0x18] sm:$0xff]
    %v5915 = vld [vmem:[%s12] sm:$0x1]
    %v5917 = vlaneseq
    %v5918 = vshrl.u32 %v5917, 7
    %v5919 = vsub.s32 0, %v5918
    %v5920 = vrot.slane %v5915, %v5919
    %v5922 = vsel %vm126, %v5908, 0
    %5924 = vmatprep.subr.mxu0 0.0
    %5925 = vmatpush1.msra.mxu0 %v5911
    %5926 = vmatprep.subr.mxu0 0.0
    %5927 = vmatpush1.msra.mxu0 %v5912
    %5928 = vmatprep.subr.mxu0 0.0
    %5929 = vmatpush1.msra.mxu0 %v5913
    %5930 = vmatprep.subr.mxu0 0.0
    %5931 = vmatpush1.msra.mxu0 %v5914
    %5932 = vmatprep.subr.mxu0 0.0
    %5933 = vmatpush1.msra.mxu0 0.0
    %5934 = vmatprep.subr.mxu0 0.0
    %5935 = vmatpush1.msra.mxu0 0.0
    %5936 = vmatprep.subr.mxu0 0.0
    %5937 = vmatpush1.msra.mxu0 0.0
    %5938 = vmatprep.subr.mxu0 0.0
    %5939 = vmatpush1.msra.mxu0 0.0
    %5940 = vmatprep.subr.mxu0 0.0
    %5941 = vmatpush1.msra.mxu0 0.0
    %5942 = vmatprep.subr.mxu0 0.0
    %5943 = vmatpush1.msra.mxu0 0.0
    %5944 = vmatprep.subr.mxu0 0.0
    %5945 = vmatpush1.msra.mxu0 0.0
    %5946 = vmatprep.subr.mxu0 0.0
    %5947 = vmatpush1.msra.mxu0 0.0
    %5948 = vmatprep.subr.mxu0 0.0
    %5949 = vmatpush1.msra.mxu0 0.0
    %5950 = vmatprep.subr.mxu0 0.0
    %5951 = vmatpush1.msra.mxu0 0.0
    %5952 = vmatprep.subr.mxu0 0.0
    %5953 = vmatpush1.msra.mxu0 0.0
    %5954 = vmatprep.subr.mxu0 0.0
    %5955 = vmatpush1.msra.mxu0 0.0
    %5956 = vmatprep.subr.mxu0 0.0
    %5957 = vmatpush1.msra.mxu0 0.0
    %5958 = vmatprep.subr.mxu0 0.0
    %5959 = vmatpush1.msra.mxu0 0.0
    %5960 = vmatprep.subr.mxu0 0.0
    %5961 = vmatpush1.msra.mxu0 0.0
    %5962 = vmatprep.subr.mxu0 0.0
    %5963 = vmatpush1.msra.mxu0 0.0
    %5964 = vmatprep.subr.mxu0 0.0
    %5965 = vmatpush1.msra.mxu0 0.0
    %5966 = vmatprep.subr.mxu0 0.0
    %5967 = vmatpush1.msra.mxu0 0.0
    %5968 = vmatprep.subr.mxu0 0.0
    %5969 = vmatpush1.msra.mxu0 0.0
    %5970 = vmatprep.subr.mxu0 0.0
    %5971 = vmatpush1.msra.mxu0 0.0
    %5972 = vmatprep.subr.mxu0 0.0
    %5973 = vmatpush1.msra.mxu0 0.0
    %5974 = vmatprep.subr.mxu0 0.0
    %5975 = vmatpush1.msra.mxu0 0.0
    %5976 = vmatprep.subr.mxu0 0.0
    %5977 = vmatpush1.msra.mxu0 0.0
    %5978 = vmatprep.subr.mxu0 0.0
    %5979 = vmatpush1.msra.mxu0 0.0
    %5980 = vmatprep.subr.mxu0 0.0
    %5981 = vmatpush1.msra.mxu0 0.0
    %5982 = vmatprep.subr.mxu0 0.0
    %5983 = vmatpush1.msra.mxu0 0.0
    %5984 = vmatprep.subr.mxu0 0.0
    %5985 = vmatpush1.msra.mxu0 0.0
    %5986 = vmatprep.subr.mxu0 0.0
    %5987 = vmatpush1.msra.mxu0 0.0
    %5988 = vmatprep.mubr.f32.mxu0 0.0
    %5989 = vmatmul.mubr.f32.gmra.mrb[0].mxu0 %v5922
    %v5990 = vpop.f32.mrb[0].mxu0
    %v5991 = vadd.f32 %v5920, %v5990
    %v5992 = vpop.f32.mrb[0].mxu0
    %5993 = vdwg.mxu0
    %s5994 = scalar_lea.vmem [#allocation16], 40
    %5995 = vst [vmem:[%s5994] sm:$0xff] %v5991
    %s5996 = sld [smem:[#allocation5 + $0x5]]
    %p5997 = scmp.gt.s32.totalorder %s5996, 0
    // Predicated region
    $region110: #{_forward_padded.1} parent=1 // pred_check
      %p5998 = pneg %p5997
    $region111: #{_forward_padded.1} parent=1 // pred_check_branch
      %6000 = sbr.rel (%p5998) target = $region113
    $region112: #{_forward_padded.1} parent=1 // pred_region
      %s6001 = scalar_lea.vmem %s2, 40
      %v6002 = vld [vmem:[%s6001] sm:$0xff]
      %6003 = vst.msk [vmem:[#allocation4] sm:$0xff] %vm3057, %v6002
    $region113: #{_forward_padded.1} parent=1 // pred_fallthru
      _
    %s6004 = sld [smem:[#allocation5 + $0x5]]
    %p6005 = scmp.eq.s32.totalorder %s6004, 0
    // Predicated region
    $region114: #{_forward_padded.1} parent=1 // pred_check
      %p6006 = pneg %p6005
    $region115: #{_forward_padded.1} parent=1 // pred_check_branch
      %6008 = sbr.rel (%p6006) target = $region117
    $region116: #{_forward_padded.1} parent=1 // pred_region
      %6009 = vmax.xlane.f32.xlu0 %v5991
      %v6010 = vpop.xlane.xlu0 %6009
      %vm6011 = vcmp.eq.f32.partialorder %v5991, %v6010
      %v6012 = vsel %vm6011, %v134, 128.0
      %6013 = vmin.xlane.f32.xlu0 %v6012
      %v6014 = vpop.xlane.xlu0 %6013
      %v6015 = vcvt.f32.s32.to.zero.pseudo %v6014
      %6016 = vst.msk [vmem:[#allocation4] sm:$0xff] %vm3057, %v6015
    $region117: #{_forward_padded.1} parent=1 // pred_fallthru
      _
    %v6017 = vld [vmem:[#allocation4] sm:$0xff]
    %6018 = vset.pattern.permute.xlu0 0
    %6019 = vperm.xlu0 %6018, %v6017
    %v6020 = vpop.permute.xlu0 %6019
    %vm6021 = vcmp.eq.s32.totalorder %v6020, %v133
    %v6022 = vsel %vm6021, 1, 0
    %v6023 = vcvt.s32.f32 %v6022
    %v6024 = vld [vmem:[#allocation10] sm:$0xff]
    %v6025 = vld [vmem:[#allocation10 + $0x8] sm:$0xff]
    %v6027 = vsel %vm144, %v6023, 0
    %6029 = vmatprep.subr.mxu0 0.0
    %6030 = vmatpush1.msra.mxu0 %v6024
    %6031 = vmatprep.subr.mxu0 0.0
    %6032 = vmatpush1.msra.mxu0 %v6025
    %6033 = vmatprep.subr.mxu0 0.0
    %6034 = vmatpush1.msra.mxu0 0.0
    %6035 = vmatprep.subr.mxu0 0.0
    %6036 = vmatpush1.msra.mxu0 0.0
    %6037 = vmatprep.subr.mxu0 0.0
    %6038 = vmatpush1.msra.mxu0 0.0
    %6039 = vmatprep.subr.mxu0 0.0
    %6040 = vmatpush1.msra.mxu0 0.0
    %6041 = vmatprep.subr.mxu0 0.0
    %6042 = vmatpush1.msra.mxu0 0.0
    %6043 = vmatprep.subr.mxu0 0.0
    %6044 = vmatpush1.msra.mxu0 0.0
    %6045 = vmatprep.subr.mxu0 0.0
    %6046 = vmatpush1.msra.mxu0 0.0
    %6047 = vmatprep.subr.mxu0 0.0
    %6048 = vmatpush1.msra.mxu0 0.0
    %6049 = vmatprep.subr.mxu0 0.0
    %6050 = vmatpush1.msra.mxu0 0.0
    %6051 = vmatprep.subr.mxu0 0.0
    %6052 = vmatpush1.msra.mxu0 0.0
    %6053 = vmatprep.subr.mxu0 0.0
    %6054 = vmatpush1.msra.mxu0 0.0
    %6055 = vmatprep.subr.mxu0 0.0
    %6056 = vmatpush1.msra.mxu0 0.0
    %6057 = vmatprep.subr.mxu0 0.0
    %6058 = vmatpush1.msra.mxu0 0.0
    %6059 = vmatprep.subr.mxu0 0.0
    %6060 = vmatpush1.msra.mxu0 0.0
    %6061 = vmatprep.subr.mxu0 0.0
    %6062 = vmatpush1.msra.mxu0 0.0
    %6063 = vmatprep.subr.mxu0 0.0
    %6064 = vmatpush1.msra.mxu0 0.0
    %6065 = vmatprep.subr.mxu0 0.0
    %6066 = vmatpush1.msra.mxu0 0.0
    %6067 = vmatprep.subr.mxu0 0.0
    %6068 = vmatpush1.msra.mxu0 0.0
    %6069 = vmatprep.subr.mxu0 0.0
    %6070 = vmatpush1.msra.mxu0 0.0
    %6071 = vmatprep.subr.mxu0 0.0
    %6072 = vmatpush1.msra.mxu0 0.0
    %6073 = vmatprep.subr.mxu0 0.0
    %6074 = vmatpush1.msra.mxu0 0.0
    %6075 = vmatprep.subr.mxu0 0.0
    %6076 = vmatpush1.msra.mxu0 0.0
    %6077 = vmatprep.subr.mxu0 0.0
    %6078 = vmatpush1.msra.mxu0 0.0
    %6079 = vmatprep.subr.mxu0 0.0
    %6080 = vmatpush1.msra.mxu0 0.0
    %6081 = vmatprep.subr.mxu0 0.0
    %6082 = vmatpush1.msra.mxu0 0.0
    %6083 = vmatprep.subr.mxu0 0.0
    %6084 = vmatpush1.msra.mxu0 0.0
    %6085 = vmatprep.subr.mxu0 0.0
    %6086 = vmatpush1.msra.mxu0 0.0
    %6087 = vmatprep.subr.mxu0 0.0
    %6088 = vmatpush1.msra.mxu0 0.0
    %6089 = vmatprep.subr.mxu0 0.0
    %6090 = vmatpush1.msra.mxu0 0.0
    %6091 = vmatprep.subr.mxu0 0.0
    %6092 = vmatpush1.msra.mxu0 0.0
    %6093 = vmatprep.mubr.f32.mxu0 0.0
    %6094 = vmatmul.mubr.f32.gmra.mrb[0].mxu0 %v6027
    %v6095 = vpop.f32.mrb[0].mxu0
    %v6096 = vadd.f32 0.0, %v6095
    %v6097 = vpop.f32.mrb[0].mxu0
    %6098 = vdwg.mxu0
    %v6099 = vld [vmem:[%s8] sm:$0xff]
    %v6100 = vld [vmem:[%s8 + $0x8] sm:$0xff]
    %v6101 = vld [vmem:[%s8 + $0x10] sm:$0xff]
    %v6102 = vld [vmem:[%s8 + $0x18] sm:$0xff]
    %v6103 = vld [vmem:[#allocation2] sm:$0xff]
    %v6104 = vld [vmem:[#allocation12] sm:$0xff]
    %v6105 = vld [vmem:[#allocation12 + $0x8] sm:$0xff]
    %v6106 = vld [vmem:[#allocation12 + $0x10] sm:$0xff]
    %v6107 = vld [vmem:[#allocation12 + $0x18] sm:$0xff]
    %v6109 = vsel %vm126, %v6103, 0
    %6111 = vmatprep.subr.mxu0 0.0
    %6112 = vmatpush1.msra.mxu0 %v6104
    %6113 = vmatprep.subr.mxu0 0.0
    %6114 = vmatpush1.msra.mxu0 %v6105
    %6115 = vmatprep.subr.mxu0 0.0
    %6116 = vmatpush1.msra.mxu0 %v6106
    %6117 = vmatprep.subr.mxu0 0.0
    %6118 = vmatpush1.msra.mxu0 %v6107
    %6119 = vmatprep.subr.mxu0 0.0
    %6120 = vmatpush1.msra.mxu0 0.0
    %6121 = vmatprep.subr.mxu0 0.0
    %6122 = vmatpush1.msra.mxu0 0.0
    %6123 = vmatprep.subr.mxu0 0.0
    %6124 = vmatpush1.msra.mxu0 0.0
    %6125 = vmatprep.subr.mxu0 0.0
    %6126 = vmatpush1.msra.mxu0 0.0
    %6127 = vmatprep.subr.mxu0 0.0
    %6128 = vmatpush1.msra.mxu0 0.0
    %6129 = vmatprep.subr.mxu0 0.0
    %6130 = vmatpush1.msra.mxu0 0.0
    %6131 = vmatprep.subr.mxu0 0.0
    %6132 = vmatpush1.msra.mxu0 0.0
    %6133 = vmatprep.subr.mxu0 0.0
    %6134 = vmatpush1.msra.mxu0 0.0
    %6135 = vmatprep.subr.mxu0 0.0
    %6136 = vmatpush1.msra.mxu0 0.0
    %6137 = vmatprep.subr.mxu0 0.0
    %6138 = vmatpush1.msra.mxu0 0.0
    %6139 = vmatprep.subr.mxu0 0.0
    %6140 = vmatpush1.msra.mxu0 0.0
    %6141 = vmatprep.subr.mxu0 0.0
    %6142 = vmatpush1.msra.mxu0 0.0
    %6143 = vmatprep.subr.mxu0 0.0
    %6144 = vmatpush1.msra.mxu0 0.0
    %6145 = vmatprep.subr.mxu0 0.0
    %6146 = vmatpush1.msra.mxu0 0.0
    %6147 = vmatprep.subr.mxu0 0.0
    %6148 = vmatpush1.msra.mxu0 0.0
    %6149 = vmatprep.subr.mxu0 0.0
    %6150 = vmatpush1.msra.mxu0 0.0
    %6151 = vmatprep.subr.mxu0 0.0
    %6152 = vmatpush1.msra.mxu0 0.0
    %6153 = vmatprep.subr.mxu0 0.0
    %6154 = vmatpush1.msra.mxu0 0.0
    %6155 = vmatprep.subr.mxu0 0.0
    %6156 = vmatpush1.msra.mxu0 0.0
    %6157 = vmatprep.subr.mxu0 0.0
    %6158 = vmatpush1.msra.mxu0 0.0
    %6159 = vmatprep.subr.mxu0 0.0
    %6160 = vmatpush1.msra.mxu0 0.0
    %6161 = vmatprep.subr.mxu0 0.0
    %6162 = vmatpush1.msra.mxu0 0.0
    %6163 = vmatprep.subr.mxu0 0.0
    %6164 = vmatpush1.msra.mxu0 0.0
    %6165 = vmatprep.subr.mxu0 0.0
    %6166 = vmatpush1.msra.mxu0 0.0
    %6167 = vmatprep.subr.mxu0 0.0
    %6168 = vmatpush1.msra.mxu0 0.0
    %6169 = vmatprep.subr.mxu0 0.0
    %6170 = vmatpush1.msra.mxu0 0.0
    %6171 = vmatprep.subr.mxu0 0.0
    %6172 = vmatpush1.msra.mxu0 0.0
    %6173 = vmatprep.subr.mxu0 0.0
    %6174 = vmatpush1.msra.mxu0 0.0
    %6175 = vmatprep.mubr.f32.mxu0 0.0
    %6176 = vmatmul.mubr.f32.gmra.mrb[0].mxu0 %v6109
    %v6177 = vpop.f32.mrb[0].mxu0
    %v6178 = vadd.f32 0.0, %v6177
    %v6179 = vpop.f32.mrb[0].mxu0
    %6180 = vdwg.mxu0
    %v6182 = vsel %vm126, %v6096, 0
    %6184 = vmatprep.subr.mxu0 0.0
    %6185 = vmatpush1.msra.mxu0 %v6099
    %6186 = vmatprep.subr.mxu0 0.0
    %6187 = vmatpush1.msra.mxu0 %v6100
    %6188 = vmatprep.subr.mxu0 0.0
    %6189 = vmatpush1.msra.mxu0 %v6101
    %6190 = vmatprep.subr.mxu0 0.0
    %6191 = vmatpush1.msra.mxu0 %v6102
    %6192 = vmatprep.subr.mxu0 0.0
    %6193 = vmatpush1.msra.mxu0 0.0
    %6194 = vmatprep.subr.mxu0 0.0
    %6195 = vmatpush1.msra.mxu0 0.0
    %6196 = vmatprep.subr.mxu0 0.0
    %6197 = vmatpush1.msra.mxu0 0.0
    %6198 = vmatprep.subr.mxu0 0.0
    %6199 = vmatpush1.msra.mxu0 0.0
    %6200 = vmatprep.subr.mxu0 0.0
    %6201 = vmatpush1.msra.mxu0 0.0
    %6202 = vmatprep.subr.mxu0 0.0
    %6203 = vmatpush1.msra.mxu0 0.0
    %6204 = vmatprep.subr.mxu0 0.0
    %6205 = vmatpush1.msra.mxu0 0.0
    %6206 = vmatprep.subr.mxu0 0.0
    %6207 = vmatpush1.msra.mxu0 0.0
    %6208 = vmatprep.subr.mxu0 0.0
    %6209 = vmatpush1.msra.mxu0 0.0
    %6210 = vmatprep.subr.mxu0 0.0
    %6211 = vmatpush1.msra.mxu0 0.0
    %6212 = vmatprep.subr.mxu0 0.0
    %6213 = vmatpush1.msra.mxu0 0.0
    %6214 = vmatprep.subr.mxu0 0.0
    %6215 = vmatpush1.msra.mxu0 0.0
    %6216 = vmatprep.subr.mxu0 0.0
    %6217 = vmatpush1.msra.mxu0 0.0
    %6218 = vmatprep.subr.mxu0 0.0
    %6219 = vmatpush1.msra.mxu0 0.0
    %6220 = vmatprep.subr.mxu0 0.0
    %6221 = vmatpush1.msra.mxu0 0.0
    %6222 = vmatprep.subr.mxu0 0.0
    %6223 = vmatpush1.msra.mxu0 0.0
    %6224 = vmatprep.subr.mxu0 0.0
    %6225 = vmatpush1.msra.mxu0 0.0
    %6226 = vmatprep.subr.mxu0 0.0
    %6227 = vmatpush1.msra.mxu0 0.0
    %6228 = vmatprep.subr.mxu0 0.0
    %6229 = vmatpush1.msra.mxu0 0.0
    %6230 = vmatprep.subr.mxu0 0.0
    %6231 = vmatpush1.msra.mxu0 0.0
    %6232 = vmatprep.subr.mxu0 0.0
    %6233 = vmatpush1.msra.mxu0 0.0
    %6234 = vmatprep.subr.mxu0 0.0
    %6235 = vmatpush1.msra.mxu0 0.0
    %6236 = vmatprep.subr.mxu0 0.0
    %6237 = vmatpush1.msra.mxu0 0.0
    %6238 = vmatprep.subr.mxu0 0.0
    %6239 = vmatpush1.msra.mxu0 0.0
    %6240 = vmatprep.subr.mxu0 0.0
    %6241 = vmatpush1.msra.mxu0 0.0
    %6242 = vmatprep.subr.mxu0 0.0
    %6243 = vmatpush1.msra.mxu0 0.0
    %6244 = vmatprep.subr.mxu0 0.0
    %6245 = vmatpush1.msra.mxu0 0.0
    %6246 = vmatprep.subr.mxu0 0.0
    %6247 = vmatpush1.msra.mxu0 0.0
    %6248 = vmatprep.mubr.f32.mxu0 0.0
    %6249 = vmatmul.mubr.f32.gmra.mrb[0].mxu0 %v6182
    %v6250 = vpop.f32.mrb[0].mxu0
    %v6251 = vadd.f32 %v6178, %v6250
    %v6252 = vpop.f32.mrb[0].mxu0
    %6253 = vdwg.mxu0
    %v6254 = vld [vmem:[#allocation13] sm:$0x1]
    %v6256 = vlaneseq
    %v6257 = vshrl.u32 %v6256, 7
    %v6258 = vsub.s32 0, %v6257
    %v6259 = vrot.slane %v6254, %v6258
    %v6261 = vadd.f32 %v6251, %v6259
    %v6262 = vxor.u32 %v6261, 2147483648
    %v6263 = vmul.f32 %v6262, 1.442695
    %v6264 = vpow.pop %v6263
    %v6265 = vadd.f32 %v6264, 1.0
    %v6266 = vrcp.pop %v6265
    %v6267 = vmul.f32 1.0, %v6266
    %v6268 = vtanh.pop %v6261
    %v6269 = vld [vmem:[#allocation3] sm:$0xff]
    %6271 = vrot.lane.b32.xlu0 %v6269, 32
    %v6272 = vpop.permute.xlu0 %6271
    %v6274 = vmul.f32 %v6267, %v6272
    %6276 = vrot.lane.b32.xlu0 %v6268, 64
    %v6277 = vpop.permute.xlu0 %6276
    %v6279 = vmul.f32 %v6267, %v6277
    %6281 = vrot.lane.b32.xlu0 %v6279, 32
    %v6282 = vpop.permute.xlu0 %6281
    %v6284 = vadd.f32 %v6274, %v6282
    %v6285 = vtanh.pop %v6284
    %6287 = vrot.lane.b32.xlu0 %v6285, 64
    %v6288 = vpop.permute.xlu0 %6287
    %v6290 = vmul.f32 %v6267, %v6288
    %6292 = vrot.lane.b32.xlu0 %v6284, 96
    %v6293 = vpop.permute.xlu0 %6292
    %6295 = vst.msk [vmem:[#allocation3] sm:$0xff] %vm126, %v6293
    %6297 = vrot.lane.b32.xlu0 %v6290, 32
    %v6298 = vpop.permute.xlu0 %6297
    %6300 = vst.msk [vmem:[#allocation2] sm:$0xff] %vm126, %v6298
    %v6301 = vld [vmem:[%s3343] sm:$0xff]
    %v6302 = vld [vmem:[%s3343 + $0x8] sm:$0xff]
    %v6303 = vld [vmem:[%s3343 + $0x10] sm:$0xff]
    %v6304 = vld [vmem:[%s3343 + $0x18] sm:$0xff]
    %v6305 = vld [vmem:[%s425] sm:$0xff]
    %v6306 = vld [vmem:[%s3349] sm:$0xff]
    %v6307 = vld [vmem:[%s3349 + $0x8] sm:$0xff]
    %v6308 = vld [vmem:[%s3349 + $0x10] sm:$0xff]
    %v6309 = vld [vmem:[%s3349 + $0x18] sm:$0xff]
    %v6311 = vsel %vm126, %v6305, 0
    %6313 = vmatprep.subr.mxu0 0.0
    %6314 = vmatpush1.msra.mxu0 %v6306
    %6315 = vmatprep.subr.mxu0 0.0
    %6316 = vmatpush1.msra.mxu0 %v6307
    %6317 = vmatprep.subr.mxu0 0.0
    %6318 = vmatpush1.msra.mxu0 %v6308
    %6319 = vmatprep.subr.mxu0 0.0
    %6320 = vmatpush1.msra.mxu0 %v6309
    %6321 = vmatprep.subr.mxu0 0.0
    %6322 = vmatpush1.msra.mxu0 0.0
    %6323 = vmatprep.subr.mxu0 0.0
    %6324 = vmatpush1.msra.mxu0 0.0
    %6325 = vmatprep.subr.mxu0 0.0
    %6326 = vmatpush1.msra.mxu0 0.0
    %6327 = vmatprep.subr.mxu0 0.0
    %6328 = vmatpush1.msra.mxu0 0.0
    %6329 = vmatprep.subr.mxu0 0.0
    %6330 = vmatpush1.msra.mxu0 0.0
    %6331 = vmatprep.subr.mxu0 0.0
    %6332 = vmatpush1.msra.mxu0 0.0
    %6333 = vmatprep.subr.mxu0 0.0
    %6334 = vmatpush1.msra.mxu0 0.0
    %6335 = vmatprep.subr.mxu0 0.0
    %6336 = vmatpush1.msra.mxu0 0.0
    %6337 = vmatprep.subr.mxu0 0.0
    %6338 = vmatpush1.msra.mxu0 0.0
    %6339 = vmatprep.subr.mxu0 0.0
    %6340 = vmatpush1.msra.mxu0 0.0
    %6341 = vmatprep.subr.mxu0 0.0
    %6342 = vmatpush1.msra.mxu0 0.0
    %6343 = vmatprep.subr.mxu0 0.0
    %6344 = vmatpush1.msra.mxu0 0.0
    %6345 = vmatprep.subr.mxu0 0.0
    %6346 = vmatpush1.msra.mxu0 0.0
    %6347 = vmatprep.subr.mxu0 0.0
    %6348 = vmatpush1.msra.mxu0 0.0
    %6349 = vmatprep.subr.mxu0 0.0
    %6350 = vmatpush1.msra.mxu0 0.0
    %6351 = vmatprep.subr.mxu0 0.0
    %6352 = vmatpush1.msra.mxu0 0.0
    %6353 = vmatprep.subr.mxu0 0.0
    %6354 = vmatpush1.msra.mxu0 0.0
    %6355 = vmatprep.subr.mxu0 0.0
    %6356 = vmatpush1.msra.mxu0 0.0
    %6357 = vmatprep.subr.mxu0 0.0
    %6358 = vmatpush1.msra.mxu0 0.0
    %6359 = vmatprep.subr.mxu0 0.0
    %6360 = vmatpush1.msra.mxu0 0.0
    %6361 = vmatprep.subr.mxu0 0.0
    %6362 = vmatpush1.msra.mxu0 0.0
    %6363 = vmatprep.subr.mxu0 0.0
    %6364 = vmatpush1.msra.mxu0 0.0
    %6365 = vmatprep.subr.mxu0 0.0
    %6366 = vmatpush1.msra.mxu0 0.0
    %6367 = vmatprep.subr.mxu0 0.0
    %6368 = vmatpush1.msra.mxu0 0.0
    %6369 = vmatprep.subr.mxu0 0.0
    %6370 = vmatpush1.msra.mxu0 0.0
    %6371 = vmatprep.subr.mxu0 0.0
    %6372 = vmatpush1.msra.mxu0 0.0
    %6373 = vmatprep.subr.mxu0 0.0
    %6374 = vmatpush1.msra.mxu0 0.0
    %6375 = vmatprep.subr.mxu0 0.0
    %6376 = vmatpush1.msra.mxu0 0.0
    %6377 = vmatprep.mubr.f32.mxu0 0.0
    %6378 = vmatmul.mubr.f32.gmra.mrb[0].mxu0 %v6311
    %v6379 = vpop.f32.mrb[0].mxu0
    %v6380 = vadd.f32 0.0, %v6379
    %v6381 = vpop.f32.mrb[0].mxu0
    %6382 = vdwg.mxu0
    %v6383 = vsel %vm126, %v6298, 0
    %6385 = vmatprep.subr.mxu0 0.0
    %6386 = vmatpush1.msra.mxu0 %v6301
    %6387 = vmatprep.subr.mxu0 0.0
    %6388 = vmatpush1.msra.mxu0 %v6302
    %6389 = vmatprep.subr.mxu0 0.0
    %6390 = vmatpush1.msra.mxu0 %v6303
    %6391 = vmatprep.subr.mxu0 0.0
    %6392 = vmatpush1.msra.mxu0 %v6304
    %6393 = vmatprep.subr.mxu0 0.0
    %6394 = vmatpush1.msra.mxu0 0.0
    %6395 = vmatprep.subr.mxu0 0.0
    %6396 = vmatpush1.msra.mxu0 0.0
    %6397 = vmatprep.subr.mxu0 0.0
    %6398 = vmatpush1.msra.mxu0 0.0
    %6399 = vmatprep.subr.mxu0 0.0
    %6400 = vmatpush1.msra.mxu0 0.0
    %6401 = vmatprep.subr.mxu0 0.0
    %6402 = vmatpush1.msra.mxu0 0.0
    %6403 = vmatprep.subr.mxu0 0.0
    %6404 = vmatpush1.msra.mxu0 0.0
    %6405 = vmatprep.subr.mxu0 0.0
    %6406 = vmatpush1.msra.mxu0 0.0
    %6407 = vmatprep.subr.mxu0 0.0
    %6408 = vmatpush1.msra.mxu0 0.0
    %6409 = vmatprep.subr.mxu0 0.0
    %6410 = vmatpush1.msra.mxu0 0.0
    %6411 = vmatprep.subr.mxu0 0.0
    %6412 = vmatpush1.msra.mxu0 0.0
    %6413 = vmatprep.subr.mxu0 0.0
    %6414 = vmatpush1.msra.mxu0 0.0
    %6415 = vmatprep.subr.mxu0 0.0
    %6416 = vmatpush1.msra.mxu0 0.0
    %6417 = vmatprep.subr.mxu0 0.0
    %6418 = vmatpush1.msra.mxu0 0.0
    %6419 = vmatprep.subr.mxu0 0.0
    %6420 = vmatpush1.msra.mxu0 0.0
    %6421 = vmatprep.subr.mxu0 0.0
    %6422 = vmatpush1.msra.mxu0 0.0
    %6423 = vmatprep.subr.mxu0 0.0
    %6424 = vmatpush1.msra.mxu0 0.0
    %6425 = vmatprep.subr.mxu0 0.0
    %6426 = vmatpush1.msra.mxu0 0.0
    %6427 = vmatprep.subr.mxu0 0.0
    %6428 = vmatpush1.msra.mxu0 0.0
    %6429 = vmatprep.subr.mxu0 0.0
    %6430 = vmatpush1.msra.mxu0 0.0
    %6431 = vmatprep.subr.mxu0 0.0
    %6432 = vmatpush1.msra.mxu0 0.0
    %6433 = vmatprep.subr.mxu0 0.0
    %6434 = vmatpush1.msra.mxu0 0.0
    %6435 = vmatprep.subr.mxu0 0.0
    %6436 = vmatpush1.msra.mxu0 0.0
    %6437 = vmatprep.subr.mxu0 0.0
    %6438 = vmatpush1.msra.mxu0 0.0
    %6439 = vmatprep.subr.mxu0 0.0
    %6440 = vmatpush1.msra.mxu0 0.0
    %6441 = vmatprep.subr.mxu0 0.0
    %6442 = vmatpush1.msra.mxu0 0.0
    %6443 = vmatprep.subr.mxu0 0.0
    %6444 = vmatpush1.msra.mxu0 0.0
    %6445 = vmatprep.subr.mxu0 0.0
    %6446 = vmatpush1.msra.mxu0 0.0
    %6447 = vmatprep.subr.mxu0 0.0
    %6448 = vmatpush1.msra.mxu0 0.0
    %6449 = vmatprep.mubr.f32.mxu0 0.0
    %6450 = vmatmul.mubr.f32.gmra.mrb[0].mxu0 %v6383
    %v6451 = vpop.f32.mrb[0].mxu0
    %v6452 = vadd.f32 %v6380, %v6451
    %v6453 = vpop.f32.mrb[0].mxu0
    %6454 = vdwg.mxu0
    %v6455 = vld [vmem:[%s3499] sm:$0x1]
    %v6457 = vlaneseq
    %v6458 = vshrl.u32 %v6457, 7
    %v6459 = vsub.s32 0, %v6458
    %v6460 = vrot.slane %v6455, %v6459
    %v6462 = vadd.f32 %v6452, %v6460
    %v6463 = vxor.u32 %v6462, 2147483648
    %v6464 = vmul.f32 %v6463, 1.442695
    %v6465 = vpow.pop %v6464
    %v6466 = vadd.f32 %v6465, 1.0
    %v6467 = vrcp.pop %v6466
    %v6468 = vmul.f32 1.0, %v6467
    %v6469 = vtanh.pop %v6462
    %v6470 = vld [vmem:[%s593] sm:$0xff]
    %6472 = vrot.lane.b32.xlu0 %v6470, 32
    %v6473 = vpop.permute.xlu0 %6472
    %v6475 = vmul.f32 %v6468, %v6473
    %6477 = vrot.lane.b32.xlu0 %v6469, 64
    %v6478 = vpop.permute.xlu0 %6477
    %v6480 = vmul.f32 %v6468, %v6478
    %6482 = vrot.lane.b32.xlu0 %v6480, 32
    %v6483 = vpop.permute.xlu0 %6482
    %v6485 = vadd.f32 %v6475, %v6483
    %v6486 = vtanh.pop %v6485
    %6488 = vrot.lane.b32.xlu0 %v6486, 64
    %v6489 = vpop.permute.xlu0 %6488
    %v6491 = vmul.f32 %v6468, %v6489
    %6493 = vrot.lane.b32.xlu0 %v6485, 96
    %v6494 = vpop.permute.xlu0 %6493
    %6496 = vst.msk [vmem:[%s593] sm:$0xff] %vm126, %v6494
    %6498 = vrot.lane.b32.xlu0 %v6491, 32
    %v6499 = vpop.permute.xlu0 %6498
    %6501 = vst.msk [vmem:[%s425] sm:$0xff] %vm126, %v6499
    %v6502 = vld [vmem:[#allocation15] sm:$0xff]
    %v6503 = vld [vmem:[#allocation15 + $0x8] sm:$0xff]
    %v6504 = vld [vmem:[#allocation15 + $0x10] sm:$0xff]
    %v6505 = vld [vmem:[#allocation15 + $0x18] sm:$0xff]
    %v6506 = vld [vmem:[%s12] sm:$0x1]
    %v6508 = vlaneseq
    %v6509 = vshrl.u32 %v6508, 7
    %v6510 = vsub.s32 0, %v6509
    %v6511 = vrot.slane %v6506, %v6510
    %v6513 = vsel %vm126, %v6499, 0
    %6515 = vmatprep.subr.mxu0 0.0
    %6516 = vmatpush1.msra.mxu0 %v6502
    %6517 = vmatprep.subr.mxu0 0.0
    %6518 = vmatpush1.msra.mxu0 %v6503
    %6519 = vmatprep.subr.mxu0 0.0
    %6520 = vmatpush1.msra.mxu0 %v6504
    %6521 = vmatprep.subr.mxu0 0.0
    %6522 = vmatpush1.msra.mxu0 %v6505
    %6523 = vmatprep.subr.mxu0 0.0
    %6524 = vmatpush1.msra.mxu0 0.0
    %6525 = vmatprep.subr.mxu0 0.0
    %6526 = vmatpush1.msra.mxu0 0.0
    %6527 = vmatprep.subr.mxu0 0.0
    %6528 = vmatpush1.msra.mxu0 0.0
    %6529 = vmatprep.subr.mxu0 0.0
    %6530 = vmatpush1.msra.mxu0 0.0
    %6531 = vmatprep.subr.mxu0 0.0
    %6532 = vmatpush1.msra.mxu0 0.0
    %6533 = vmatprep.subr.mxu0 0.0
    %6534 = vmatpush1.msra.mxu0 0.0
    %6535 = vmatprep.subr.mxu0 0.0
    %6536 = vmatpush1.msra.mxu0 0.0
    %6537 = vmatprep.subr.mxu0 0.0
    %6538 = vmatpush1.msra.mxu0 0.0
    %6539 = vmatprep.subr.mxu0 0.0
    %6540 = vmatpush1.msra.mxu0 0.0
    %6541 = vmatprep.subr.mxu0 0.0
    %6542 = vmatpush1.msra.mxu0 0.0
    %6543 = vmatprep.subr.mxu0 0.0
    %6544 = vmatpush1.msra.mxu0 0.0
    %6545 = vmatprep.subr.mxu0 0.0
    %6546 = vmatpush1.msra.mxu0 0.0
    %6547 = vmatprep.subr.mxu0 0.0
    %6548 = vmatpush1.msra.mxu0 0.0
    %6549 = vmatprep.subr.mxu0 0.0
    %6550 = vmatpush1.msra.mxu0 0.0
    %6551 = vmatprep.subr.mxu0 0.0
    %6552 = vmatpush1.msra.mxu0 0.0
    %6553 = vmatprep.subr.mxu0 0.0
    %6554 = vmatpush1.msra.mxu0 0.0
    %6555 = vmatprep.subr.mxu0 0.0
    %6556 = vmatpush1.msra.mxu0 0.0
    %6557 = vmatprep.subr.mxu0 0.0
    %6558 = vmatpush1.msra.mxu0 0.0
    %6559 = vmatprep.subr.mxu0 0.0
    %6560 = vmatpush1.msra.mxu0 0.0
    %6561 = vmatprep.subr.mxu0 0.0
    %6562 = vmatpush1.msra.mxu0 0.0
    %6563 = vmatprep.subr.mxu0 0.0
    %6564 = vmatpush1.msra.mxu0 0.0
    %6565 = vmatprep.subr.mxu0 0.0
    %6566 = vmatpush1.msra.mxu0 0.0
    %6567 = vmatprep.subr.mxu0 0.0
    %6568 = vmatpush1.msra.mxu0 0.0
    %6569 = vmatprep.subr.mxu0 0.0
    %6570 = vmatpush1.msra.mxu0 0.0
    %6571 = vmatprep.subr.mxu0 0.0
    %6572 = vmatpush1.msra.mxu0 0.0
    %6573 = vmatprep.subr.mxu0 0.0
    %6574 = vmatpush1.msra.mxu0 0.0
    %6575 = vmatprep.subr.mxu0 0.0
    %6576 = vmatpush1.msra.mxu0 0.0
    %6577 = vmatprep.subr.mxu0 0.0
    %6578 = vmatpush1.msra.mxu0 0.0
    %6579 = vmatprep.mubr.f32.mxu0 0.0
    %6580 = vmatmul.mubr.f32.gmra.mrb[0].mxu0 %v6513
    %v6581 = vpop.f32.mrb[0].mxu0
    %v6582 = vadd.f32 %v6511, %v6581
    %v6583 = vpop.f32.mrb[0].mxu0
    %6584 = vdwg.mxu0
    %s6585 = scalar_lea.vmem [#allocation16], 48
    %6586 = vst [vmem:[%s6585] sm:$0xff] %v6582
    %s6587 = sld [smem:[#allocation5 + $0x6]]
    %p6588 = scmp.gt.s32.totalorder %s6587, 0
    // Predicated region
    $region118: #{_forward_padded.1} parent=1 // pred_check
      %p6589 = pneg %p6588
    $region119: #{_forward_padded.1} parent=1 // pred_check_branch
      %6591 = sbr.rel (%p6589) target = $region121
    $region120: #{_forward_padded.1} parent=1 // pred_region
      %s6592 = scalar_lea.vmem %s2, 48
      %v6593 = vld [vmem:[%s6592] sm:$0xff]
      %6594 = vst.msk [vmem:[#allocation4] sm:$0xff] %vm3057, %v6593
    $region121: #{_forward_padded.1} parent=1 // pred_fallthru
      _
    %s6595 = sld [smem:[#allocation5 + $0x6]]
    %p6596 = scmp.eq.s32.totalorder %s6595, 0
    // Predicated region
    $region122: #{_forward_padded.1} parent=1 // pred_check
      %p6597 = pneg %p6596
    $region123: #{_forward_padded.1} parent=1 // pred_check_branch
      %6599 = sbr.rel (%p6597) target = $region125
    $region124: #{_forward_padded.1} parent=1 // pred_region
      %6600 = vmax.xlane.f32.xlu0 %v6582
      %v6601 = vpop.xlane.xlu0 %6600
      %vm6602 = vcmp.eq.f32.partialorder %v6582, %v6601
      %v6603 = vsel %vm6602, %v134, 128.0
      %6604 = vmin.xlane.f32.xlu0 %v6603
      %v6605 = vpop.xlane.xlu0 %6604
      %v6606 = vcvt.f32.s32.to.zero.pseudo %v6605
      %6607 = vst.msk [vmem:[#allocation4] sm:$0xff] %vm3057, %v6606
    $region125: #{_forward_padded.1} parent=1 // pred_fallthru
      _
    %v6608 = vld [vmem:[#allocation4] sm:$0xff]
    %6609 = vset.pattern.permute.xlu0 0
    %6610 = vperm.xlu0 %6609, %v6608
    %v6611 = vpop.permute.xlu0 %6610
    %vm6612 = vcmp.eq.s32.totalorder %v6611, %v133
    %v6613 = vsel %vm6612, 1, 0
    %v6614 = vcvt.s32.f32 %v6613
    %v6615 = vld [vmem:[#allocation10] sm:$0xff]
    %v6616 = vld [vmem:[#allocation10 + $0x8] sm:$0xff]
    %v6618 = vsel %vm144, %v6614, 0
    %6620 = vmatprep.subr.mxu0 0.0
    %6621 = vmatpush1.msra.mxu0 %v6615
    %6622 = vmatprep.subr.mxu0 0.0
    %6623 = vmatpush1.msra.mxu0 %v6616
    %6624 = vmatprep.subr.mxu0 0.0
    %6625 = vmatpush1.msra.mxu0 0.0
    %6626 = vmatprep.subr.mxu0 0.0
    %6627 = vmatpush1.msra.mxu0 0.0
    %6628 = vmatprep.subr.mxu0 0.0
    %6629 = vmatpush1.msra.mxu0 0.0
    %6630 = vmatprep.subr.mxu0 0.0
    %6631 = vmatpush1.msra.mxu0 0.0
    %6632 = vmatprep.subr.mxu0 0.0
    %6633 = vmatpush1.msra.mxu0 0.0
    %6634 = vmatprep.subr.mxu0 0.0
    %6635 = vmatpush1.msra.mxu0 0.0
    %6636 = vmatprep.subr.mxu0 0.0
    %6637 = vmatpush1.msra.mxu0 0.0
    %6638 = vmatprep.subr.mxu0 0.0
    %6639 = vmatpush1.msra.mxu0 0.0
    %6640 = vmatprep.subr.mxu0 0.0
    %6641 = vmatpush1.msra.mxu0 0.0
    %6642 = vmatprep.subr.mxu0 0.0
    %6643 = vmatpush1.msra.mxu0 0.0
    %6644 = vmatprep.subr.mxu0 0.0
    %6645 = vmatpush1.msra.mxu0 0.0
    %6646 = vmatprep.subr.mxu0 0.0
    %6647 = vmatpush1.msra.mxu0 0.0
    %6648 = vmatprep.subr.mxu0 0.0
    %6649 = vmatpush1.msra.mxu0 0.0
    %6650 = vmatprep.subr.mxu0 0.0
    %6651 = vmatpush1.msra.mxu0 0.0
    %6652 = vmatprep.subr.mxu0 0.0
    %6653 = vmatpush1.msra.mxu0 0.0
    %6654 = vmatprep.subr.mxu0 0.0
    %6655 = vmatpush1.msra.mxu0 0.0
    %6656 = vmatprep.subr.mxu0 0.0
    %6657 = vmatpush1.msra.mxu0 0.0
    %6658 = vmatprep.subr.mxu0 0.0
    %6659 = vmatpush1.msra.mxu0 0.0
    %6660 = vmatprep.subr.mxu0 0.0
    %6661 = vmatpush1.msra.mxu0 0.0
    %6662 = vmatprep.subr.mxu0 0.0
    %6663 = vmatpush1.msra.mxu0 0.0
    %6664 = vmatprep.subr.mxu0 0.0
    %6665 = vmatpush1.msra.mxu0 0.0
    %6666 = vmatprep.subr.mxu0 0.0
    %6667 = vmatpush1.msra.mxu0 0.0
    %6668 = vmatprep.subr.mxu0 0.0
    %6669 = vmatpush1.msra.mxu0 0.0
    %6670 = vmatprep.subr.mxu0 0.0
    %6671 = vmatpush1.msra.mxu0 0.0
    %6672 = vmatprep.subr.mxu0 0.0
    %6673 = vmatpush1.msra.mxu0 0.0
    %6674 = vmatprep.subr.mxu0 0.0
    %6675 = vmatpush1.msra.mxu0 0.0
    %6676 = vmatprep.subr.mxu0 0.0
    %6677 = vmatpush1.msra.mxu0 0.0
    %6678 = vmatprep.subr.mxu0 0.0
    %6679 = vmatpush1.msra.mxu0 0.0
    %6680 = vmatprep.subr.mxu0 0.0
    %6681 = vmatpush1.msra.mxu0 0.0
    %6682 = vmatprep.subr.mxu0 0.0
    %6683 = vmatpush1.msra.mxu0 0.0
    %6684 = vmatprep.mubr.f32.mxu0 0.0
    %6685 = vmatmul.mubr.f32.gmra.mrb[0].mxu0 %v6618
    %v6686 = vpop.f32.mrb[0].mxu0
    %v6687 = vadd.f32 0.0, %v6686
    %v6688 = vpop.f32.mrb[0].mxu0
    %6689 = vdwg.mxu0
    %v6690 = vld [vmem:[%s8] sm:$0xff]
    %v6691 = vld [vmem:[%s8 + $0x8] sm:$0xff]
    %v6692 = vld [vmem:[%s8 + $0x10] sm:$0xff]
    %v6693 = vld [vmem:[%s8 + $0x18] sm:$0xff]
    %v6694 = vld [vmem:[#allocation2] sm:$0xff]
    %v6695 = vld [vmem:[#allocation12] sm:$0xff]
    %v6696 = vld [vmem:[#allocation12 + $0x8] sm:$0xff]
    %v6697 = vld [vmem:[#allocation12 + $0x10] sm:$0xff]
    %v6698 = vld [vmem:[#allocation12 + $0x18] sm:$0xff]
    %v6700 = vsel %vm126, %v6694, 0
    %6702 = vmatprep.subr.mxu0 0.0
    %6703 = vmatpush1.msra.mxu0 %v6695
    %6704 = vmatprep.subr.mxu0 0.0
    %6705 = vmatpush1.msra.mxu0 %v6696
    %6706 = vmatprep.subr.mxu0 0.0
    %6707 = vmatpush1.msra.mxu0 %v6697
    %6708 = vmatprep.subr.mxu0 0.0
    %6709 = vmatpush1.msra.mxu0 %v6698
    %6710 = vmatprep.subr.mxu0 0.0
    %6711 = vmatpush1.msra.mxu0 0.0
    %6712 = vmatprep.subr.mxu0 0.0
    %6713 = vmatpush1.msra.mxu0 0.0
    %6714 = vmatprep.subr.mxu0 0.0
    %6715 = vmatpush1.msra.mxu0 0.0
    %6716 = vmatprep.subr.mxu0 0.0
    %6717 = vmatpush1.msra.mxu0 0.0
    %6718 = vmatprep.subr.mxu0 0.0
    %6719 = vmatpush1.msra.mxu0 0.0
    %6720 = vmatprep.subr.mxu0 0.0
    %6721 = vmatpush1.msra.mxu0 0.0
    %6722 = vmatprep.subr.mxu0 0.0
    %6723 = vmatpush1.msra.mxu0 0.0
    %6724 = vmatprep.subr.mxu0 0.0
    %6725 = vmatpush1.msra.mxu0 0.0
    %6726 = vmatprep.subr.mxu0 0.0
    %6727 = vmatpush1.msra.mxu0 0.0
    %6728 = vmatprep.subr.mxu0 0.0
    %6729 = vmatpush1.msra.mxu0 0.0
    %6730 = vmatprep.subr.mxu0 0.0
    %6731 = vmatpush1.msra.mxu0 0.0
    %6732 = vmatprep.subr.mxu0 0.0
    %6733 = vmatpush1.msra.mxu0 0.0
    %6734 = vmatprep.subr.mxu0 0.0
    %6735 = vmatpush1.msra.mxu0 0.0
    %6736 = vmatprep.subr.mxu0 0.0
    %6737 = vmatpush1.msra.mxu0 0.0
    %6738 = vmatprep.subr.mxu0 0.0
    %6739 = vmatpush1.msra.mxu0 0.0
    %6740 = vmatprep.subr.mxu0 0.0
    %6741 = vmatpush1.msra.mxu0 0.0
    %6742 = vmatprep.subr.mxu0 0.0
    %6743 = vmatpush1.msra.mxu0 0.0
    %6744 = vmatprep.subr.mxu0 0.0
    %6745 = vmatpush1.msra.mxu0 0.0
    %6746 = vmatprep.subr.mxu0 0.0
    %6747 = vmatpush1.msra.mxu0 0.0
    %6748 = vmatprep.subr.mxu0 0.0
    %6749 = vmatpush1.msra.mxu0 0.0
    %6750 = vmatprep.subr.mxu0 0.0
    %6751 = vmatpush1.msra.mxu0 0.0
    %6752 = vmatprep.subr.mxu0 0.0
    %6753 = vmatpush1.msra.mxu0 0.0
    %6754 = vmatprep.subr.mxu0 0.0
    %6755 = vmatpush1.msra.mxu0 0.0
    %6756 = vmatprep.subr.mxu0 0.0
    %6757 = vmatpush1.msra.mxu0 0.0
    %6758 = vmatprep.subr.mxu0 0.0
    %6759 = vmatpush1.msra.mxu0 0.0
    %6760 = vmatprep.subr.mxu0 0.0
    %6761 = vmatpush1.msra.mxu0 0.0
    %6762 = vmatprep.subr.mxu0 0.0
    %6763 = vmatpush1.msra.mxu0 0.0
    %6764 = vmatprep.subr.mxu0 0.0
    %6765 = vmatpush1.msra.mxu0 0.0
    %6766 = vmatprep.mubr.f32.mxu0 0.0
    %6767 = vmatmul.mubr.f32.gmra.mrb[0].mxu0 %v6700
    %v6768 = vpop.f32.mrb[0].mxu0
    %v6769 = vadd.f32 0.0, %v6768
    %v6770 = vpop.f32.mrb[0].mxu0
    %6771 = vdwg.mxu0
    %v6773 = vsel %vm126, %v6687, 0
    %6775 = vmatprep.subr.mxu0 0.0
    %6776 = vmatpush1.msra.mxu0 %v6690
    %6777 = vmatprep.subr.mxu0 0.0
    %6778 = vmatpush1.msra.mxu0 %v6691
    %6779 = vmatprep.subr.mxu0 0.0
    %6780 = vmatpush1.msra.mxu0 %v6692
    %6781 = vmatprep.subr.mxu0 0.0
    %6782 = vmatpush1.msra.mxu0 %v6693
    %6783 = vmatprep.subr.mxu0 0.0
    %6784 = vmatpush1.msra.mxu0 0.0
    %6785 = vmatprep.subr.mxu0 0.0
    %6786 = vmatpush1.msra.mxu0 0.0
    %6787 = vmatprep.subr.mxu0 0.0
    %6788 = vmatpush1.msra.mxu0 0.0
    %6789 = vmatprep.subr.mxu0 0.0
    %6790 = vmatpush1.msra.mxu0 0.0
    %6791 = vmatprep.subr.mxu0 0.0
    %6792 = vmatpush1.msra.mxu0 0.0
    %6793 = vmatprep.subr.mxu0 0.0
    %6794 = vmatpush1.msra.mxu0 0.0
    %6795 = vmatprep.subr.mxu0 0.0
    %6796 = vmatpush1.msra.mxu0 0.0
    %6797 = vmatprep.subr.mxu0 0.0
    %6798 = vmatpush1.msra.mxu0 0.0
    %6799 = vmatprep.subr.mxu0 0.0
    %6800 = vmatpush1.msra.mxu0 0.0
    %6801 = vmatprep.subr.mxu0 0.0
    %6802 = vmatpush1.msra.mxu0 0.0
    %6803 = vmatprep.subr.mxu0 0.0
    %6804 = vmatpush1.msra.mxu0 0.0
    %6805 = vmatprep.subr.mxu0 0.0
    %6806 = vmatpush1.msra.mxu0 0.0
    %6807 = vmatprep.subr.mxu0 0.0
    %6808 = vmatpush1.msra.mxu0 0.0
    %6809 = vmatprep.subr.mxu0 0.0
    %6810 = vmatpush1.msra.mxu0 0.0
    %6811 = vmatprep.subr.mxu0 0.0
    %6812 = vmatpush1.msra.mxu0 0.0
    %6813 = vmatprep.subr.mxu0 0.0
    %6814 = vmatpush1.msra.mxu0 0.0
    %6815 = vmatprep.subr.mxu0 0.0
    %6816 = vmatpush1.msra.mxu0 0.0
    %6817 = vmatprep.subr.mxu0 0.0
    %6818 = vmatpush1.msra.mxu0 0.0
    %6819 = vmatprep.subr.mxu0 0.0
    %6820 = vmatpush1.msra.mxu0 0.0
    %6821 = vmatprep.subr.mxu0 0.0
    %6822 = vmatpush1.msra.mxu0 0.0
    %6823 = vmatprep.subr.mxu0 0.0
    %6824 = vmatpush1.msra.mxu0 0.0
    %6825 = vmatprep.subr.mxu0 0.0
    %6826 = vmatpush1.msra.mxu0 0.0
    %6827 = vmatprep.subr.mxu0 0.0
    %6828 = vmatpush1.msra.mxu0 0.0
    %6829 = vmatprep.subr.mxu0 0.0
    %6830 = vmatpush1.msra.mxu0 0.0
    %6831 = vmatprep.subr.mxu0 0.0
    %6832 = vmatpush1.msra.mxu0 0.0
    %6833 = vmatprep.subr.mxu0 0.0
    %6834 = vmatpush1.msra.mxu0 0.0
    %6835 = vmatprep.subr.mxu0 0.0
    %6836 = vmatpush1.msra.mxu0 0.0
    %6837 = vmatprep.subr.mxu0 0.0
    %6838 = vmatpush1.msra.mxu0 0.0
    %6839 = vmatprep.mubr.f32.mxu0 0.0
    %6840 = vmatmul.mubr.f32.gmra.mrb[0].mxu0 %v6773
    %v6841 = vpop.f32.mrb[0].mxu0
    %v6842 = vadd.f32 %v6769, %v6841
    %v6843 = vpop.f32.mrb[0].mxu0
    %6844 = vdwg.mxu0
    %v6845 = vld [vmem:[#allocation13] sm:$0x1]
    %v6847 = vlaneseq
    %v6848 = vshrl.u32 %v6847, 7
    %v6849 = vsub.s32 0, %v6848
    %v6850 = vrot.slane %v6845, %v6849
    %v6852 = vadd.f32 %v6842, %v6850
    %v6853 = vxor.u32 %v6852, 2147483648
    %v6854 = vmul.f32 %v6853, 1.442695
    %v6855 = vpow.pop %v6854
    %v6856 = vadd.f32 %v6855, 1.0
    %v6857 = vrcp.pop %v6856
    %v6858 = vmul.f32 1.0, %v6857
    %v6859 = vtanh.pop %v6852
    %v6860 = vld [vmem:[#allocation3] sm:$0xff]
    %6862 = vrot.lane.b32.xlu0 %v6860, 32
    %v6863 = vpop.permute.xlu0 %6862
    %v6865 = vmul.f32 %v6858, %v6863
    %6867 = vrot.lane.b32.xlu0 %v6859, 64
    %v6868 = vpop.permute.xlu0 %6867
    %v6870 = vmul.f32 %v6858, %v6868
    %6872 = vrot.lane.b32.xlu0 %v6870, 32
    %v6873 = vpop.permute.xlu0 %6872
    %v6875 = vadd.f32 %v6865, %v6873
    %v6876 = vtanh.pop %v6875
    %6878 = vrot.lane.b32.xlu0 %v6876, 64
    %v6879 = vpop.permute.xlu0 %6878
    %v6881 = vmul.f32 %v6858, %v6879
    %6883 = vrot.lane.b32.xlu0 %v6875, 96
    %v6884 = vpop.permute.xlu0 %6883
    %6886 = vst.msk [vmem:[#allocation3] sm:$0xff] %vm126, %v6884
    %6888 = vrot.lane.b32.xlu0 %v6881, 32
    %v6889 = vpop.permute.xlu0 %6888
    %6891 = vst.msk [vmem:[#allocation2] sm:$0xff] %vm126, %v6889
    %v6892 = vld [vmem:[%s3343] sm:$0xff]
    %v6893 = vld [vmem:[%s3343 + $0x8] sm:$0xff]
    %v6894 = vld [vmem:[%s3343 + $0x10] sm:$0xff]
    %v6895 = vld [vmem:[%s3343 + $0x18] sm:$0xff]
    %v6896 = vld [vmem:[%s425] sm:$0xff]
    %v6897 = vld [vmem:[%s3349] sm:$0xff]
    %v6898 = vld [vmem:[%s3349 + $0x8] sm:$0xff]
    %v6899 = vld [vmem:[%s3349 + $0x10] sm:$0xff]
    %v6900 = vld [vmem:[%s3349 + $0x18] sm:$0xff]
    %v6902 = vsel %vm126, %v6896, 0
    %6904 = vmatprep.subr.mxu0 0.0
    %6905 = vmatpush1.msra.mxu0 %v6897
    %6906 = vmatprep.subr.mxu0 0.0
    %6907 = vmatpush1.msra.mxu0 %v6898
    %6908 = vmatprep.subr.mxu0 0.0
    %6909 = vmatpush1.msra.mxu0 %v6899
    %6910 = vmatprep.subr.mxu0 0.0
    %6911 = vmatpush1.msra.mxu0 %v6900
    %6912 = vmatprep.subr.mxu0 0.0
    %6913 = vmatpush1.msra.mxu0 0.0
    %6914 = vmatprep.subr.mxu0 0.0
    %6915 = vmatpush1.msra.mxu0 0.0
    %6916 = vmatprep.subr.mxu0 0.0
    %6917 = vmatpush1.msra.mxu0 0.0
    %6918 = vmatprep.subr.mxu0 0.0
    %6919 = vmatpush1.msra.mxu0 0.0
    %6920 = vmatprep.subr.mxu0 0.0
    %6921 = vmatpush1.msra.mxu0 0.0
    %6922 = vmatprep.subr.mxu0 0.0
    %6923 = vmatpush1.msra.mxu0 0.0
    %6924 = vmatprep.subr.mxu0 0.0
    %6925 = vmatpush1.msra.mxu0 0.0
    %6926 = vmatprep.subr.mxu0 0.0
    %6927 = vmatpush1.msra.mxu0 0.0
    %6928 = vmatprep.subr.mxu0 0.0
    %6929 = vmatpush1.msra.mxu0 0.0
    %6930 = vmatprep.subr.mxu0 0.0
    %6931 = vmatpush1.msra.mxu0 0.0
    %6932 = vmatprep.subr.mxu0 0.0
    %6933 = vmatpush1.msra.mxu0 0.0
    %6934 = vmatprep.subr.mxu0 0.0
    %6935 = vmatpush1.msra.mxu0 0.0
    %6936 = vmatprep.subr.mxu0 0.0
    %6937 = vmatpush1.msra.mxu0 0.0
    %6938 = vmatprep.subr.mxu0 0.0
    %6939 = vmatpush1.msra.mxu0 0.0
    %6940 = vmatprep.subr.mxu0 0.0
    %6941 = vmatpush1.msra.mxu0 0.0
    %6942 = vmatprep.subr.mxu0 0.0
    %6943 = vmatpush1.msra.mxu0 0.0
    %6944 = vmatprep.subr.mxu0 0.0
    %6945 = vmatpush1.msra.mxu0 0.0
    %6946 = vmatprep.subr.mxu0 0.0
    %6947 = vmatpush1.msra.mxu0 0.0
    %6948 = vmatprep.subr.mxu0 0.0
    %6949 = vmatpush1.msra.mxu0 0.0
    %6950 = vmatprep.subr.mxu0 0.0
    %6951 = vmatpush1.msra.mxu0 0.0
    %6952 = vmatprep.subr.mxu0 0.0
    %6953 = vmatpush1.msra.mxu0 0.0
    %6954 = vmatprep.subr.mxu0 0.0
    %6955 = vmatpush1.msra.mxu0 0.0
    %6956 = vmatprep.subr.mxu0 0.0
    %6957 = vmatpush1.msra.mxu0 0.0
    %6958 = vmatprep.subr.mxu0 0.0
    %6959 = vmatpush1.msra.mxu0 0.0
    %6960 = vmatprep.subr.mxu0 0.0
    %6961 = vmatpush1.msra.mxu0 0.0
    %6962 = vmatprep.subr.mxu0 0.0
    %6963 = vmatpush1.msra.mxu0 0.0
    %6964 = vmatprep.subr.mxu0 0.0
    %6965 = vmatpush1.msra.mxu0 0.0
    %6966 = vmatprep.subr.mxu0 0.0
    %6967 = vmatpush1.msra.mxu0 0.0
    %6968 = vmatprep.mubr.f32.mxu0 0.0
    %6969 = vmatmul.mubr.f32.gmra.mrb[0].mxu0 %v6902
    %v6970 = vpop.f32.mrb[0].mxu0
    %v6971 = vadd.f32 0.0, %v6970
    %v6972 = vpop.f32.mrb[0].mxu0
    %6973 = vdwg.mxu0
    %v6974 = vsel %vm126, %v6889, 0
    %6976 = vmatprep.subr.mxu0 0.0
    %6977 = vmatpush1.msra.mxu0 %v6892
    %6978 = vmatprep.subr.mxu0 0.0
    %6979 = vmatpush1.msra.mxu0 %v6893
    %6980 = vmatprep.subr.mxu0 0.0
    %6981 = vmatpush1.msra.mxu0 %v6894
    %6982 = vmatprep.subr.mxu0 0.0
    %6983 = vmatpush1.msra.mxu0 %v6895
    %6984 = vmatprep.subr.mxu0 0.0
    %6985 = vmatpush1.msra.mxu0 0.0
    %6986 = vmatprep.subr.mxu0 0.0
    %6987 = vmatpush1.msra.mxu0 0.0
    %6988 = vmatprep.subr.mxu0 0.0
    %6989 = vmatpush1.msra.mxu0 0.0
    %6990 = vmatprep.subr.mxu0 0.0
    %6991 = vmatpush1.msra.mxu0 0.0
    %6992 = vmatprep.subr.mxu0 0.0
    %6993 = vmatpush1.msra.mxu0 0.0
    %6994 = vmatprep.subr.mxu0 0.0
    %6995 = vmatpush1.msra.mxu0 0.0
    %6996 = vmatprep.subr.mxu0 0.0
    %6997 = vmatpush1.msra.mxu0 0.0
    %6998 = vmatprep.subr.mxu0 0.0
    %6999 = vmatpush1.msra.mxu0 0.0
    %7000 = vmatprep.subr.mxu0 0.0
    %7001 = vmatpush1.msra.mxu0 0.0
    %7002 = vmatprep.subr.mxu0 0.0
    %7003 = vmatpush1.msra.mxu0 0.0
    %7004 = vmatprep.subr.mxu0 0.0
    %7005 = vmatpush1.msra.mxu0 0.0
    %7006 = vmatprep.subr.mxu0 0.0
    %7007 = vmatpush1.msra.mxu0 0.0
    %7008 = vmatprep.subr.mxu0 0.0
    %7009 = vmatpush1.msra.mxu0 0.0
    %7010 = vmatprep.subr.mxu0 0.0
    %7011 = vmatpush1.msra.mxu0 0.0
    %7012 = vmatprep.subr.mxu0 0.0
    %7013 = vmatpush1.msra.mxu0 0.0
    %7014 = vmatprep.subr.mxu0 0.0
    %7015 = vmatpush1.msra.mxu0 0.0
    %7016 = vmatprep.subr.mxu0 0.0
    %7017 = vmatpush1.msra.mxu0 0.0
    %7018 = vmatprep.subr.mxu0 0.0
    %7019 = vmatpush1.msra.mxu0 0.0
    %7020 = vmatprep.subr.mxu0 0.0
    %7021 = vmatpush1.msra.mxu0 0.0
    %7022 = vmatprep.subr.mxu0 0.0
    %7023 = vmatpush1.msra.mxu0 0.0
    %7024 = vmatprep.subr.mxu0 0.0
    %7025 = vmatpush1.msra.mxu0 0.0
    %7026 = vmatprep.subr.mxu0 0.0
    %7027 = vmatpush1.msra.mxu0 0.0
    %7028 = vmatprep.subr.mxu0 0.0
    %7029 = vmatpush1.msra.mxu0 0.0
    %7030 = vmatprep.subr.mxu0 0.0
    %7031 = vmatpush1.msra.mxu0 0.0
    %7032 = vmatprep.subr.mxu0 0.0
    %7033 = vmatpush1.msra.mxu0 0.0
    %7034 = vmatprep.subr.mxu0 0.0
    %7035 = vmatpush1.msra.mxu0 0.0
    %7036 = vmatprep.subr.mxu0 0.0
    %7037 = vmatpush1.msra.mxu0 0.0
    %7038 = vmatprep.subr.mxu0 0.0
    %7039 = vmatpush1.msra.mxu0 0.0
    %7040 = vmatprep.mubr.f32.mxu0 0.0
    %7041 = vmatmul.mubr.f32.gmra.mrb[0].mxu0 %v6974
    %v7042 = vpop.f32.mrb[0].mxu0
    %v7043 = vadd.f32 %v6971, %v7042
    %v7044 = vpop.f32.mrb[0].mxu0
    %7045 = vdwg.mxu0
    %v7046 = vld [vmem:[%s3499] sm:$0x1]
    %v7048 = vlaneseq
    %v7049 = vshrl.u32 %v7048, 7
    %v7050 = vsub.s32 0, %v7049
    %v7051 = vrot.slane %v7046, %v7050
    %v7053 = vadd.f32 %v7043, %v7051
    %v7054 = vxor.u32 %v7053, 2147483648
    %v7055 = vmul.f32 %v7054, 1.442695
    %v7056 = vpow.pop %v7055
    %v7057 = vadd.f32 %v7056, 1.0
    %v7058 = vrcp.pop %v7057
    %v7059 = vmul.f32 1.0, %v7058
    %v7060 = vtanh.pop %v7053
    %v7061 = vld [vmem:[%s593] sm:$0xff]
    %7063 = vrot.lane.b32.xlu0 %v7061, 32
    %v7064 = vpop.permute.xlu0 %7063
    %v7066 = vmul.f32 %v7059, %v7064
    %7068 = vrot.lane.b32.xlu0 %v7060, 64
    %v7069 = vpop.permute.xlu0 %7068
    %v7071 = vmul.f32 %v7059, %v7069
    %7073 = vrot.lane.b32.xlu0 %v7071, 32
    %v7074 = vpop.permute.xlu0 %7073
    %v7076 = vadd.f32 %v7066, %v7074
    %v7077 = vtanh.pop %v7076
    %7079 = vrot.lane.b32.xlu0 %v7077, 64
    %v7080 = vpop.permute.xlu0 %7079
    %v7082 = vmul.f32 %v7059, %v7080
    %7084 = vrot.lane.b32.xlu0 %v7076, 96
    %v7085 = vpop.permute.xlu0 %7084
    %7087 = vst.msk [vmem:[%s593] sm:$0xff] %vm126, %v7085
    %7089 = vrot.lane.b32.xlu0 %v7082, 32
    %v7090 = vpop.permute.xlu0 %7089
    %7092 = vst.msk [vmem:[%s425] sm:$0xff] %vm126, %v7090
    %v7093 = vld [vmem:[#allocation15] sm:$0xff]
    %v7094 = vld [vmem:[#allocation15 + $0x8] sm:$0xff]
    %v7095 = vld [vmem:[#allocation15 + $0x10] sm:$0xff]
    %v7096 = vld [vmem:[#allocation15 + $0x18] sm:$0xff]
    %v7097 = vld [vmem:[%s12] sm:$0x1]
    %v7099 = vlaneseq
    %v7100 = vshrl.u32 %v7099, 7
    %v7101 = vsub.s32 0, %v7100
    %v7102 = vrot.slane %v7097, %v7101
    %v7104 = vsel %vm126, %v7090, 0
    %7106 = vmatprep.subr.mxu0 0.0
    %7107 = vmatpush1.msra.mxu0 %v7093
    %7108 = vmatprep.subr.mxu0 0.0
    %7109 = vmatpush1.msra.mxu0 %v7094
    %7110 = vmatprep.subr.mxu0 0.0
    %7111 = vmatpush1.msra.mxu0 %v7095
    %7112 = vmatprep.subr.mxu0 0.0
    %7113 = vmatpush1.msra.mxu0 %v7096
    %7114 = vmatprep.subr.mxu0 0.0
    %7115 = vmatpush1.msra.mxu0 0.0
    %7116 = vmatprep.subr.mxu0 0.0
    %7117 = vmatpush1.msra.mxu0 0.0
    %7118 = vmatprep.subr.mxu0 0.0
    %7119 = vmatpush1.msra.mxu0 0.0
    %7120 = vmatprep.subr.mxu0 0.0
    %7121 = vmatpush1.msra.mxu0 0.0
    %7122 = vmatprep.subr.mxu0 0.0
    %7123 = vmatpush1.msra.mxu0 0.0
    %7124 = vmatprep.subr.mxu0 0.0
    %7125 = vmatpush1.msra.mxu0 0.0
    %7126 = vmatprep.subr.mxu0 0.0
    %7127 = vmatpush1.msra.mxu0 0.0
    %7128 = vmatprep.subr.mxu0 0.0
    %7129 = vmatpush1.msra.mxu0 0.0
    %7130 = vmatprep.subr.mxu0 0.0
    %7131 = vmatpush1.msra.mxu0 0.0
    %7132 = vmatprep.subr.mxu0 0.0
    %7133 = vmatpush1.msra.mxu0 0.0
    %7134 = vmatprep.subr.mxu0 0.0
    %7135 = vmatpush1.msra.mxu0 0.0
    %7136 = vmatprep.subr.mxu0 0.0
    %7137 = vmatpush1.msra.mxu0 0.0
    %7138 = vmatprep.subr.mxu0 0.0
    %7139 = vmatpush1.msra.mxu0 0.0
    %7140 = vmatprep.subr.mxu0 0.0
    %7141 = vmatpush1.msra.mxu0 0.0
    %7142 = vmatprep.subr.mxu0 0.0
    %7143 = vmatpush1.msra.mxu0 0.0
    %7144 = vmatprep.subr.mxu0 0.0
    %7145 = vmatpush1.msra.mxu0 0.0
    %7146 = vmatprep.subr.mxu0 0.0
    %7147 = vmatpush1.msra.mxu0 0.0
    %7148 = vmatprep.subr.mxu0 0.0
    %7149 = vmatpush1.msra.mxu0 0.0
    %7150 = vmatprep.subr.mxu0 0.0
    %7151 = vmatpush1.msra.mxu0 0.0
    %7152 = vmatprep.subr.mxu0 0.0
    %7153 = vmatpush1.msra.mxu0 0.0
    %7154 = vmatprep.subr.mxu0 0.0
    %7155 = vmatpush1.msra.mxu0 0.0
    %7156 = vmatprep.subr.mxu0 0.0
    %7157 = vmatpush1.msra.mxu0 0.0
    %7158 = vmatprep.subr.mxu0 0.0
    %7159 = vmatpush1.msra.mxu0 0.0
    %7160 = vmatprep.subr.mxu0 0.0
    %7161 = vmatpush1.msra.mxu0 0.0
    %7162 = vmatprep.subr.mxu0 0.0
    %7163 = vmatpush1.msra.mxu0 0.0
    %7164 = vmatprep.subr.mxu0 0.0
    %7165 = vmatpush1.msra.mxu0 0.0
    %7166 = vmatprep.subr.mxu0 0.0
    %7167 = vmatpush1.msra.mxu0 0.0
    %7168 = vmatprep.subr.mxu0 0.0
    %7169 = vmatpush1.msra.mxu0 0.0
    %7170 = vmatprep.mubr.f32.mxu0 0.0
    %7171 = vmatmul.mubr.f32.gmra.mrb[0].mxu0 %v7104
    %v7172 = vpop.f32.mrb[0].mxu0
    %v7173 = vadd.f32 %v7102, %v7172
    %v7174 = vpop.f32.mrb[0].mxu0
    %7175 = vdwg.mxu0
    %s7176 = scalar_lea.vmem [#allocation16], 56
    %7177 = vst [vmem:[%s7176] sm:$0xff] %v7173
    // Predicated region
    $region126: #{_forward_padded.1} parent=1 // pred_check
      _
    $region127: #{_forward_padded.1} parent=1 // pred_check_branch
      %7179 = sbr.rel (0) target = $region129
    $region128: #{_forward_padded.1} parent=1 // pred_region
      %s7181 = ssub.s32 1024, 1024
      %7182 = vsyncadd [#allocation7], %s7181
      %s7183 = sshll.u32 [#allocation16], 4
      %s7184 = int_to_ptr.vmem [resolvable:$true] %s7183
      %7189 = dma.vmem_to_hbm [thread:$0]  %s7184, 1024, %s13, [#allocation7], 128, 128, 8
    $region129: #{_forward_padded.1} parent=1 // pred_fallthru
      _
    // Predicated region
    $region130: #{_forward_padded.1} parent=1 // pred_check
      _
    $region131: #{_forward_padded.1} parent=1 // pred_check_branch
      %7191 = sbr.rel (0) target = $region133
    $region132: #{_forward_padded.1} parent=1 // pred_region
      %7192 = dma.done [#allocation7], 1024
    $region133: #{_forward_padded.1} parent=1 // pred_fallthru
      _
    %7193 = vsyncpa [#allocation6], 1
    %7194 = vsyncpa [#allocation11], 1
    %7195 = vsyncpa [#allocation14], 1
    %7196 = vsyncpa [#allocation7], 1
    %7197 = vsyncpa [#allocation8], 1

</llo_original>
